<compile_context>
chip_gen: v7x
topology: tpu7x:2x2x1
jax: 0.10.0
libtpu: 0.0.40
codegen_flags: <defaults>
</compile_context>

<pallas_src>
import functools

import numpy as np

import jax
import jax.numpy as jnp
from jax import lax
from jax.experimental import pallas as pl
from jax.experimental.pallas import tpu as pltpu


_CONV_DEFS = ((8, 4), (4, 2), (3, 1))       # (kernel, stride) of the 3 convs


def _conv_out(size, k, s):
    return (size - k) // s + 1


# ----------------------------- fused kernel -------------------------------- #

def _convpong_kernel(
        p1_ref,                      # (TB*R1, k1*k1*C)  conv1 im2col patches
        w1_ref, b1_ref,              # (k1*k1*C, 32), (1, 32)
        s2_ref, w2_ref, b2_ref,      # (16, TB*R2, TB*R1), (16*32, 64), (1, 64)
        s3_ref, w3_ref, b3_ref,      # (9,  TB*R3, TB*R2), (9*64, 64),  (1, 64)
        sf_ref, wf_ref, bf_ref,      # (R3, TB, TB*R3),    (R3*64, 128), (1, 128)
        wh_ref, bh_ref,              # (128, A+1), (1, A+1)   merged actor|critic
        out_ref,                     # (TB, A+1)   [probs | value]
        *, scale, num_actions):
    f32 = jnp.float32

    def conv_as_selection_matmuls(h, s_ref, w_ref, b_ref):
        """sum_t (S_t @ h) @ W_t + b  — patch gather + conv, all on the MXU."""
        taps = s_ref.shape[0]
        cin = w_ref.shape[0] // taps
        acc = None
        for t in range(taps):
            g = jnp.dot(s_ref[t], h, preferred_element_type=f32)   # row gather
            y = jnp.dot(g, w_ref[t * cin:(t + 1) * cin, :],
                        preferred_element_type=f32)
            acc = y if acc is None else acc + y
        return acc + b_ref[...]

    # conv1 (x/255 folded in as `scale`) + ReLU
    h = jnp.dot(p1_ref[...], w1_ref[...], preferred_element_type=f32)
    h = jnp.maximum(h * scale + b1_ref[...], 0.0)                  # (TB*R1, 32)

    # conv2 + ReLU, conv3 + ReLU — patch gather stays on-chip
    h = jnp.maximum(conv_as_selection_matmuls(h, s2_ref, w2_ref, b2_ref), 0.0)
    h = jnp.maximum(conv_as_selection_matmuls(h, s3_ref, w3_ref, b3_ref), 0.0)

    # Flatten + fc + ReLU (flatten ordering folded into wf's row layout)
    feat = jnp.maximum(conv_as_selection_matmuls(h, sf_ref, wf_ref, bf_ref), 0.0)

    # merged actor + critic head, softmax on the actor lanes only
    z = jnp.dot(feat, wh_ref[...], preferred_element_type=f32) + bh_ref[...]
    logits = z[:, :num_actions]
    m = jnp.max(logits, axis=-1, keepdims=True)
    e = jnp.exp(logits - m)
    probs = e / jnp.sum(e, axis=-1, keepdims=True)
    out_ref[:, :num_actions] = probs
    out_ref[:, num_actions:] = z[:, num_actions:]


# ------------------------- one-time plan building -------------------------- #

def _flatten_conv_weight(w):
    """PyTorch (O, C, kh, kw) -> (kh*kw*C, O), row index = (i*kw + j)*C + c."""
    o, c, kh, kw = w.shape
    return jnp.transpose(w, (2, 3, 1, 0)).reshape(kh * kw * c, o)


def _selection_mats(tb, hi, wi, kh, kw, stride):
    """Constant 0/1 gather matrices: S[t, r, q] = 1 iff input row q (rows are
    (n, y, x) row-major over a TB-sample block) feeds output row r at kernel
    offset t = (i*kw + j)."""
    ho = _conv_out(hi, kh, stride)
    wo = _conv_out(wi, kw, stride)
    sel = np.zeros((kh * kw, tb * ho * wo, tb * hi * wi), np.float32)
    for n in range(tb):
        for oh in range(ho):
            for ow in range(wo):
                r = (n * ho + oh) * wo + ow
                for i in range(kh):
                    for j in range(kw):
                        q = (n * hi + oh * stride + i) * wi + (ow * stride + j)
                        sel[i * kw + j, r, q] = 1.0
    return jnp.asarray(sel)


def build_plan(params, input_shape, num_actions, block_batch=8):
    """Hoists every weight re-layout + gather-matrix build out of the forward."""
    c, h, w = input_shape
    (k1, s1), (k2, s2), (k3, s3) = _CONV_DEFS
    h1, w1 = _conv_out(h, k1, s1), _conv_out(w, k1, s1)
    h2, w2 = _conv_out(h1, k2, s2), _conv_out(w1, k2, s2)
    h3, w3 = _conv_out(h2, k3, s3), _conv_out(w2, k3, s3)
    tb = block_batch

    # fc weight (128, 64*h3*w3) -> per-spatial-position (64, 128) slices so the
    # PyTorch Flatten (c, h, w) ordering is absorbed at prep time.
    wf = jnp.transpose(params["fc_w"].reshape(128, 64, h3, w3), (2, 3, 1, 0))
    wf = wf.reshape(h3 * w3 * 64, 128)

    consts = {
        "w1": _flatten_conv_weight(params["c1_w"]),
        "b1": params["c1_b"].reshape(1, -1),
        "s2": _selection_mats(tb, h1, w1, k2, k2, s2),
        "w2": _flatten_conv_weight(params["c2_w"]),
        "b2": params["c2_b"].reshape(1, -1),
        "s3": _selection_mats(tb, h2, w2, k3, k3, s3),
        "w3": _flatten_conv_weight(params["c3_w"]),
        "b3": params["c3_b"].reshape(1, -1),
        "sf": _selection_mats(tb, h3, w3, h3, w3, 1),
        "wf": wf,
        "bf": params["fc_b"].reshape(1, -1),
        "wh": jnp.concatenate([params["actor_w"].T, params["critic_w"].T], axis=1),
        "bh": jnp.concatenate([params["actor_b"], params["critic_b"]]).reshape(1, -1),
    }
    geom = {"tb": tb, "r1": h1 * w1, "k1": k1, "s1": s1,
            "num_actions": num_actions}
    return consts, geom


# ------------------------------ forward pass -------------------------------- #

def _im2col_nhwc(x, k, s):
    """(N, H, W, C) -> (N*Ho*Wo, k*k*C); columns ordered (kh, kw, c)."""
    n, h, w, c = x.shape
    ho, wo = _conv_out(h, k, s), _conv_out(w, k, s)
    cols = []
    for i in range(k):
        for j in range(k):
            cols.append(x[:, i:i + s * (ho - 1) + 1:s,
                          j:j + s * (wo - 1) + 1:s, :])
    patches = jnp.concatenate(cols, axis=-1)            # (N, Ho, Wo, k*k*C)
    return patches.reshape(n * ho * wo, k * k * c)


def conv_pong_forward(consts, x, *, geom):
    """Returns (probs, value).
    # TODO(synk): torch.distributions.Categorical has no Pallas equivalent;
    # the kernel returns the (already softmaxed) probs it would wrap.
    """
    shape = x.shape
    if x.ndim == 5:                                     # (T, B, C, H, W)
        x = x.reshape(shape[0] * shape[1], shape[2], shape[3], shape[4])
    n = x.shape[0]
    x = x.astype(jnp.float32).transpose(0, 2, 3, 1)     # NCHW -> NHWC, once

    patches = _im2col_nhwc(x, geom["k1"], geom["s1"])
    tb, r1, a = geom["tb"], geom["r1"], geom["num_actions"]
    n_pad = ((n + tb - 1) // tb) * tb
    if n_pad != n:                                      # pad batch to a block multiple
        patches = jnp.pad(patches, ((0, (n_pad - n) * r1), (0, 0)))

    operands = (patches, consts["w1"], consts["b1"],
                consts["s2"], consts["w2"], consts["b2"],
                consts["s3"], consts["w3"], consts["b3"],
                consts["sf"], consts["wf"], consts["bf"],
                consts["wh"], consts["bh"])

    def _const_index_map(ndim):
        def imap(i):
            return (0,) * ndim
        return imap

    in_specs = [pl.BlockSpec((tb * r1, patches.shape[1]), lambda i: (i, 0))]
    in_specs += [pl.BlockSpec(op.shape, _const_index_map(op.ndim))
                 for op in operands[1:]]

    out = pl.pallas_call(
        functools.partial(_convpong_kernel, scale=1.0 / 255.0, num_actions=a),
        out_shape=jax.ShapeDtypeStruct((n_pad, a + 1), jnp.float32),
        grid=(n_pad // tb,),
        in_specs=in_specs,
        out_specs=pl.BlockSpec((tb, a + 1), lambda i: (i, 0)),
        compiler_params=pltpu.CompilerParams(
            dimension_semantics=("parallel",)),
    )(*operands)

    probs, value = out[:n, :a], out[:n, a:]
    if len(shape) == 5:
        probs = probs.reshape(shape[0], shape[1], a)
        value = value.reshape(shape[0], shape[1], 1)
    return probs, value


# ------------------------------- parameters -------------------------------- #

def init_params(key, input_shape, num_actions):
    """PyTorch-style U(-1/sqrt(fan_in), 1/sqrt(fan_in)) init, PyTorch layouts."""
    c, h, w = input_shape
    h3, w3 = h, w
    for k, s in _CONV_DEFS:
        h3, w3 = _conv_out(h3, k, s), _conv_out(w3, k, s)
    feature_size = 64 * h3 * w3
    ks = jax.random.split(key, 12)

    def u(k, shape, fan_in):
        bound = 1.0 / float(fan_in) ** 0.5
        return jax.random.uniform(k, shape, jnp.float32, -bound, bound)

    return {
        "c1_w": u(ks[0], (32, c, 8, 8), c * 64),
        "c1_b": u(ks[1], (32,), c * 64),
        "c2_w": u(ks[2], (64, 32, 4, 4), 32 * 16),
        "c2_b": u(ks[3], (64,), 32 * 16),
        "c3_w": u(ks[4], (64, 64, 3, 3), 64 * 9),
        "c3_b": u(ks[5], (64,), 64 * 9),
        "fc_w": u(ks[6], (128, feature_size), feature_size),
        "fc_b": u(ks[7], (128,), feature_size),
        "actor_w": u(ks[8], (num_actions, 128), 128),
        "actor_b": u(ks[9], (num_actions,), 128),
        "critic_w": u(ks[10], (1, 128), 128),
        "critic_b": u(ks[11], (1,), 128),
    }


# ------------------------- plain-JAX reference ------------------------------ #

def _reference_forward(params, x):
    hi = lax.Precision.HIGHEST
    x = x.astype(jnp.float32) / 255.0

    def conv(h, w, b, s):
        y = lax.conv_general_dilated(h, w, (s, s), "VALID",
                                     dimension_numbers=("NCHW", "OIHW", "NCHW"),
                                     precision=hi)
        return jax.nn.relu(y + b[None, :, None, None])

    h = conv(x, params["c1_w"], params["c1_b"], 4)
    h = conv(h, params["c2_w"], params["c2_b"], 2)
    h = conv(h, params["c3_w"], params["c3_b"], 1)
    feat = h.reshape(h.shape[0], -1)
    feat = jax.nn.relu(jnp.dot(feat, params["fc_w"].T, precision=hi)
                       + params["fc_b"])
    logits = jnp.dot(feat, params["actor_w"].T, precision=hi) + params["actor_b"]
    probs = jax.nn.softmax(logits, axis=-1)
    value = jnp.dot(feat, params["critic_w"].T, precision=hi) + params["critic_b"]
    return probs, value


# ---------------------------------- main ------------------------------------ #

if __name__ == "__main__":
    key = jax.random.PRNGKey(0)
    k_params, k_x = jax.random.split(key)

    # Smallest shapes consistent with the conv chain: 36 -(8,4)-> 8 -(4,2)-> 3 -(3,1)-> 1
    N, C, H, W = 2, 4, 36, 36
    num_actions = 6

    params = init_params(k_params, (C, H, W), num_actions)
    consts, geom = build_plan(params, (C, H, W), num_actions, block_batch=8)

    x = jax.random.uniform(k_x, (N, C, H, W), jnp.float32, 0.0, 255.0)

    fwd = jax.jit(functools.partial(conv_pong_forward, geom=geom))
    probs, value = fwd(consts, x)
    probs = jax.block_until_ready(probs)
    value = jax.block_until_ready(value)

    assert probs.shape == (N, num_actions) and value.shape == (N, 1)
    assert bool(jnp.all(jnp.isfinite(probs))) and bool(jnp.all(jnp.isfinite(value)))
    assert bool(jnp.allclose(jnp.sum(probs, axis=-1), 1.0, atol=1e-5))

    # correctness vs a plain-JAX replica of the PyTorch module
    ref_probs, ref_value = _reference_forward(params, x)
    assert bool(jnp.allclose(probs, ref_probs, atol=2e-3, rtol=2e-2))
    assert bool(jnp.allclose(value, ref_value, atol=2e-3, rtol=2e-2))

    print("KERNEL_OK")
</pallas_src>

<mosaic_0001>
module attributes {stable_mosaic.version = 11 : i64} {
  func.func @_convpong_kernel(%arg0: i32, %arg1: memref<512x256xf32, #tpu.memory_space<vmem>>, %arg2: memref<256x32xf32, #tpu.memory_space<vmem>>, %arg3: memref<1x32xf32, #tpu.memory_space<vmem>>, %arg4: memref<16x72x512xf32, #tpu.memory_space<vmem>>, %arg5: memref<512x64xf32, #tpu.memory_space<vmem>>, %arg6: memref<1x64xf32, #tpu.memory_space<vmem>>, %arg7: memref<9x8x72xf32, #tpu.memory_space<vmem>>, %arg8: memref<576x64xf32, #tpu.memory_space<vmem>>, %arg9: memref<1x64xf32, #tpu.memory_space<vmem>>, %arg10: memref<1x8x8xf32, #tpu.memory_space<vmem>>, %arg11: memref<64x128xf32, #tpu.memory_space<vmem>>, %arg12: memref<1x128xf32, #tpu.memory_space<vmem>>, %arg13: memref<128x7xf32, #tpu.memory_space<vmem>>, %arg14: memref<1x7xf32, #tpu.memory_space<vmem>>, %arg15: memref<8x7xf32, #tpu.memory_space<vmem>>) attributes {dimension_semantics = [#tpu.dimension_semantics<parallel>], iteration_bounds = array<i64: 1>, scalar_prefetch = 0 : i64, scratch_operands = 0 : i64, tpu.core_type = #tpu.core_type<tc>, window_params = [{transform_indices = @transform_0, window_bounds = array<i64: 512, 256>}, {pipeline_mode = #tpu.pipeline_mode<synchronous>, transform_indices = @transform_1, window_bounds = array<i64: 256, 32>}, {pipeline_mode = #tpu.pipeline_mode<synchronous>, transform_indices = @transform_2, window_bounds = array<i64: 1, 32>}, {pipeline_mode = #tpu.pipeline_mode<synchronous>, transform_indices = @transform_3, window_bounds = array<i64: 16, 72, 512>}, {pipeline_mode = #tpu.pipeline_mode<synchronous>, transform_indices = @transform_4, window_bounds = array<i64: 512, 64>}, {pipeline_mode = #tpu.pipeline_mode<synchronous>, transform_indices = @transform_5, window_bounds = array<i64: 1, 64>}, {pipeline_mode = #tpu.pipeline_mode<synchronous>, transform_indices = @transform_6, window_bounds = array<i64: 9, 8, 72>}, {pipeline_mode = #tpu.pipeline_mode<synchronous>, transform_indices = @transform_7, window_bounds = array<i64: 576, 64>}, {pipeline_mode = #tpu.pipeline_mode<synchronous>, transform_indices = @transform_8, window_bounds = array<i64: 1, 64>}, {pipeline_mode = #tpu.pipeline_mode<synchronous>, transform_indices = @transform_9, window_bounds = array<i64: 1, 8, 8>}, {pipeline_mode = #tpu.pipeline_mode<synchronous>, transform_indices = @transform_10, window_bounds = array<i64: 64, 128>}, {pipeline_mode = #tpu.pipeline_mode<synchronous>, transform_indices = @transform_11, window_bounds = array<i64: 1, 128>}, {pipeline_mode = #tpu.pipeline_mode<synchronous>, transform_indices = @transform_12, window_bounds = array<i64: 128, 7>}, {pipeline_mode = #tpu.pipeline_mode<synchronous>, transform_indices = @transform_13, window_bounds = array<i64: 1, 7>}, {transform_indices = @transform_14, window_bounds = array<i64: 8, 7>}]} {
    %c0 = arith.constant 0 : index
    %c0_0 = arith.constant 0 : index
    %0 = vector.load %arg1[%c0, %c0_0] : memref<512x256xf32, #tpu.memory_space<vmem>>, vector<512x256xf32>
    %c0_1 = arith.constant 0 : index
    %c0_2 = arith.constant 0 : index
    %1 = vector.load %arg2[%c0_1, %c0_2] : memref<256x32xf32, #tpu.memory_space<vmem>>, vector<256x32xf32>
    %cst = arith.constant dense<0.000000e+00> : vector<512x32xf32>
    %2 = tpu.matmul %0, %1, %cst {dimension_numbers = #tpu.dot_dimension_numbers<[1], [0], [0], [1], [0, 0, 1, 1], [], []>} : vector<512x256xf32>, vector<256x32xf32>, vector<512x32xf32> -> vector<512x32xf32>
    %cst_3 = arith.constant 0.00392156886 : f32
    %3 = vector.broadcast %cst_3 : f32 to vector<512x32xf32>
    %4 = arith.mulf %2, %3 : vector<512x32xf32>
    %c0_4 = arith.constant 0 : index
    %c0_5 = arith.constant 0 : index
    %5 = vector.load %arg3[%c0_4, %c0_5] : memref<1x32xf32, #tpu.memory_space<vmem>>, vector<1x32xf32>
    %6 = vector.broadcast %5 : vector<1x32xf32> to vector<512x32xf32>
    %7 = arith.addf %4, %6 : vector<512x32xf32>
    %cst_6 = arith.constant 0.000000e+00 : f32
    %8 = vector.broadcast %cst_6 : f32 to vector<512x32xf32>
    %9 = arith.maximumf %7, %8 : vector<512x32xf32>
    %c0_7 = arith.constant 0 : index
    %c0_8 = arith.constant 0 : index
    %c0_9 = arith.constant 0 : index
    %10 = vector.load %arg4[%c0_7, %c0_8, %c0_9] : memref<16x72x512xf32, #tpu.memory_space<vmem>>, vector<1x72x512xf32>
    %11 = vector.shape_cast %10 : vector<1x72x512xf32> to vector<72x512xf32>
    %cst_10 = arith.constant dense<0.000000e+00> : vector<72x32xf32>
    %12 = tpu.matmul %11, %9, %cst_10 {dimension_numbers = #tpu.dot_dimension_numbers<[1], [0], [0], [1], [0, 0, 1, 1], [], []>} : vector<72x512xf32>, vector<512x32xf32>, vector<72x32xf32> -> vector<72x32xf32>
    %c0_11 = arith.constant 0 : index
    %c0_12 = arith.constant 0 : index
    %13 = vector.load %arg5[%c0_11, %c0_12] : memref<512x64xf32, #tpu.memory_space<vmem>>, vector<32x64xf32>
    %cst_13 = arith.constant dense<0.000000e+00> : vector<72x64xf32>
    %14 = tpu.matmul %12, %13, %cst_13 {dimension_numbers = #tpu.dot_dimension_numbers<[1], [0], [0], [1], [0, 0, 1, 1], [], []>} : vector<72x32xf32>, vector<32x64xf32>, vector<72x64xf32> -> vector<72x64xf32>
    %c1 = arith.constant 1 : index
    %c0_14 = arith.constant 0 : index
    %c0_15 = arith.constant 0 : index
    %15 = vector.load %arg4[%c1, %c0_14, %c0_15] : memref<16x72x512xf32, #tpu.memory_space<vmem>>, vector<1x72x512xf32>
    %16 = vector.shape_cast %15 : vector<1x72x512xf32> to vector<72x512xf32>
    %cst_16 = arith.constant dense<0.000000e+00> : vector<72x32xf32>
    %17 = tpu.matmul %16, %9, %cst_16 {dimension_numbers = #tpu.dot_dimension_numbers<[1], [0], [0], [1], [0, 0, 1, 1], [], []>} : vector<72x512xf32>, vector<512x32xf32>, vector<72x32xf32> -> vector<72x32xf32>
    %c32 = arith.constant 32 : index
    %c0_17 = arith.constant 0 : index
    %18 = vector.load %arg5[%c32, %c0_17] : memref<512x64xf32, #tpu.memory_space<vmem>>, vector<32x64xf32>
    %cst_18 = arith.constant dense<0.000000e+00> : vector<72x64xf32>
    %19 = tpu.matmul %17, %18, %cst_18 {dimension_numbers = #tpu.dot_dimension_numbers<[1], [0], [0], [1], [0, 0, 1, 1], [], []>} : vector<72x32xf32>, vector<32x64xf32>, vector<72x64xf32> -> vector<72x64xf32>
    %20 = arith.addf %14, %19 : vector<72x64xf32>
    %c2 = arith.constant 2 : index
    %c0_19 = arith.constant 0 : index
    %c0_20 = arith.constant 0 : index
    %21 = vector.load %arg4[%c2, %c0_19, %c0_20] : memref<16x72x512xf32, #tpu.memory_space<vmem>>, vector<1x72x512xf32>
    %22 = vector.shape_cast %21 : vector<1x72x512xf32> to vector<72x512xf32>
    %cst_21 = arith.constant dense<0.000000e+00> : vector<72x32xf32>
    %23 = tpu.matmul %22, %9, %cst_21 {dimension_numbers = #tpu.dot_dimension_numbers<[1], [0], [0], [1], [0, 0, 1, 1], [], []>} : vector<72x512xf32>, vector<512x32xf32>, vector<72x32xf32> -> vector<72x32xf32>
    %c64 = arith.constant 64 : index
    %c0_22 = arith.constant 0 : index
    %24 = vector.load %arg5[%c64, %c0_22] : memref<512x64xf32, #tpu.memory_space<vmem>>, vector<32x64xf32>
    %cst_23 = arith.constant dense<0.000000e+00> : vector<72x64xf32>
    %25 = tpu.matmul %23, %24, %cst_23 {dimension_numbers = #tpu.dot_dimension_numbers<[1], [0], [0], [1], [0, 0, 1, 1], [], []>} : vector<72x32xf32>, vector<32x64xf32>, vector<72x64xf32> -> vector<72x64xf32>
    %26 = arith.addf %20, %25 : vector<72x64xf32>
    %c3 = arith.constant 3 : index
    %c0_24 = arith.constant 0 : index
    %c0_25 = arith.constant 0 : index
    %27 = vector.load %arg4[%c3, %c0_24, %c0_25] : memref<16x72x512xf32, #tpu.memory_space<vmem>>, vector<1x72x512xf32>
    %28 = vector.shape_cast %27 : vector<1x72x512xf32> to vector<72x512xf32>
    %cst_26 = arith.constant dense<0.000000e+00> : vector<72x32xf32>
    %29 = tpu.matmul %28, %9, %cst_26 {dimension_numbers = #tpu.dot_dimension_numbers<[1], [0], [0], [1], [0, 0, 1, 1], [], []>} : vector<72x512xf32>, vector<512x32xf32>, vector<72x32xf32> -> vector<72x32xf32>
    %c96 = arith.constant 96 : index
    %c0_27 = arith.constant 0 : index
    %30 = vector.load %arg5[%c96, %c0_27] : memref<512x64xf32, #tpu.memory_space<vmem>>, vector<32x64xf32>
    %cst_28 = arith.constant dense<0.000000e+00> : vector<72x64xf32>
    %31 = tpu.matmul %29, %30, %cst_28 {dimension_numbers = #tpu.dot_dimension_numbers<[1], [0], [0], [1], [0, 0, 1, 1], [], []>} : vector<72x32xf32>, vector<32x64xf32>, vector<72x64xf32> -> vector<72x64xf32>
    %32 = arith.addf %26, %31 : vector<72x64xf32>
    %c4 = arith.constant 4 : index
    %c0_29 = arith.constant 0 : index
    %c0_30 = arith.constant 0 : index
    %33 = vector.load %arg4[%c4, %c0_29, %c0_30] : memref<16x72x512xf32, #tpu.memory_space<vmem>>, vector<1x72x512xf32>
    %34 = vector.shape_cast %33 : vector<1x72x512xf32> to vector<72x512xf32>
    %cst_31 = arith.constant dense<0.000000e+00> : vector<72x32xf32>
    %35 = tpu.matmul %34, %9, %cst_31 {dimension_numbers = #tpu.dot_dimension_numbers<[1], [0], [0], [1], [0, 0, 1, 1], [], []>} : vector<72x512xf32>, vector<512x32xf32>, vector<72x32xf32> -> vector<72x32xf32>
    %c128 = arith.constant 128 : index
    %c0_32 = arith.constant 0 : index
    %36 = vector.load %arg5[%c128, %c0_32] : memref<512x64xf32, #tpu.memory_space<vmem>>, vector<32x64xf32>
    %cst_33 = arith.constant dense<0.000000e+00> : vector<72x64xf32>
    %37 = tpu.matmul %35, %36, %cst_33 {dimension_numbers = #tpu.dot_dimension_numbers<[1], [0], [0], [1], [0, 0, 1, 1], [], []>} : vector<72x32xf32>, vector<32x64xf32>, vector<72x64xf32> -> vector<72x64xf32>
    %38 = arith.addf %32, %37 : vector<72x64xf32>
    %c5 = arith.constant 5 : index
    %c0_34 = arith.constant 0 : index
    %c0_35 = arith.constant 0 : index
    %39 = vector.load %arg4[%c5, %c0_34, %c0_35] : memref<16x72x512xf32, #tpu.memory_space<vmem>>, vector<1x72x512xf32>
    %40 = vector.shape_cast %39 : vector<1x72x512xf32> to vector<72x512xf32>
    %cst_36 = arith.constant dense<0.000000e+00> : vector<72x32xf32>
    %41 = tpu.matmul %40, %9, %cst_36 {dimension_numbers = #tpu.dot_dimension_numbers<[1], [0], [0], [1], [0, 0, 1, 1], [], []>} : vector<72x512xf32>, vector<512x32xf32>, vector<72x32xf32> -> vector<72x32xf32>
    %c160 = arith.constant 160 : index
    %c0_37 = arith.constant 0 : index
    %42 = vector.load %arg5[%c160, %c0_37] : memref<512x64xf32, #tpu.memory_space<vmem>>, vector<32x64xf32>
    %cst_38 = arith.constant dense<0.000000e+00> : vector<72x64xf32>
    %43 = tpu.matmul %41, %42, %cst_38 {dimension_numbers = #tpu.dot_dimension_numbers<[1], [0], [0], [1], [0, 0, 1, 1], [], []>} : vector<72x32xf32>, vector<32x64xf32>, vector<72x64xf32> -> vector<72x64xf32>
    %44 = arith.addf %38, %43 : vector<72x64xf32>
    %c6 = arith.constant 6 : index
    %c0_39 = arith.constant 0 : index
    %c0_40 = arith.constant 0 : index
    %45 = vector.load %arg4[%c6, %c0_39, %c0_40] : memref<16x72x512xf32, #tpu.memory_space<vmem>>, vector<1x72x512xf32>
    %46 = vector.shape_cast %45 : vector<1x72x512xf32> to vector<72x512xf32>
    %cst_41 = arith.constant dense<0.000000e+00> : vector<72x32xf32>
    %47 = tpu.matmul %46, %9, %cst_41 {dimension_numbers = #tpu.dot_dimension_numbers<[1], [0], [0], [1], [0, 0, 1, 1], [], []>} : vector<72x512xf32>, vector<512x32xf32>, vector<72x32xf32> -> vector<72x32xf32>
    %c192 = arith.constant 192 : index
    %c0_42 = arith.constant 0 : index
    %48 = vector.load %arg5[%c192, %c0_42] : memref<512x64xf32, #tpu.memory_space<vmem>>, vector<32x64xf32>
    %cst_43 = arith.constant dense<0.000000e+00> : vector<72x64xf32>
    %49 = tpu.matmul %47, %48, %cst_43 {dimension_numbers = #tpu.dot_dimension_numbers<[1], [0], [0], [1], [0, 0, 1, 1], [], []>} : vector<72x32xf32>, vector<32x64xf32>, vector<72x64xf32> -> vector<72x64xf32>
    %50 = arith.addf %44, %49 : vector<72x64xf32>
    %c7 = arith.constant 7 : index
    %c0_44 = arith.constant 0 : index
    %c0_45 = arith.constant 0 : index
    %51 = vector.load %arg4[%c7, %c0_44, %c0_45] : memref<16x72x512xf32, #tpu.memory_space<vmem>>, vector<1x72x512xf32>
    %52 = vector.shape_cast %51 : vector<1x72x512xf32> to vector<72x512xf32>
    %cst_46 = arith.constant dense<0.000000e+00> : vector<72x32xf32>
    %53 = tpu.matmul %52, %9, %cst_46 {dimension_numbers = #tpu.dot_dimension_numbers<[1], [0], [0], [1], [0, 0, 1, 1], [], []>} : vector<72x512xf32>, vector<512x32xf32>, vector<72x32xf32> -> vector<72x32xf32>
    %c224 = arith.constant 224 : index
    %c0_47 = arith.constant 0 : index
    %54 = vector.load %arg5[%c224, %c0_47] : memref<512x64xf32, #tpu.memory_space<vmem>>, vector<32x64xf32>
    %cst_48 = arith.constant dense<0.000000e+00> : vector<72x64xf32>
    %55 = tpu.matmul %53, %54, %cst_48 {dimension_numbers = #tpu.dot_dimension_numbers<[1], [0], [0], [1], [0, 0, 1, 1], [], []>} : vector<72x32xf32>, vector<32x64xf32>, vector<72x64xf32> -> vector<72x64xf32>
    %56 = arith.addf %50, %55 : vector<72x64xf32>
    %c8 = arith.constant 8 : index
    %c0_49 = arith.constant 0 : index
    %c0_50 = arith.constant 0 : index
    %57 = vector.load %arg4[%c8, %c0_49, %c0_50] : memref<16x72x512xf32, #tpu.memory_space<vmem>>, vector<1x72x512xf32>
    %58 = vector.shape_cast %57 : vector<1x72x512xf32> to vector<72x512xf32>
    %cst_51 = arith.constant dense<0.000000e+00> : vector<72x32xf32>
    %59 = tpu.matmul %58, %9, %cst_51 {dimension_numbers = #tpu.dot_dimension_numbers<[1], [0], [0], [1], [0, 0, 1, 1], [], []>} : vector<72x512xf32>, vector<512x32xf32>, vector<72x32xf32> -> vector<72x32xf32>
    %c256 = arith.constant 256 : index
    %c0_52 = arith.constant 0 : index
    %60 = vector.load %arg5[%c256, %c0_52] : memref<512x64xf32, #tpu.memory_space<vmem>>, vector<32x64xf32>
    %cst_53 = arith.constant dense<0.000000e+00> : vector<72x64xf32>
    %61 = tpu.matmul %59, %60, %cst_53 {dimension_numbers = #tpu.dot_dimension_numbers<[1], [0], [0], [1], [0, 0, 1, 1], [], []>} : vector<72x32xf32>, vector<32x64xf32>, vector<72x64xf32> -> vector<72x64xf32>
    %62 = arith.addf %56, %61 : vector<72x64xf32>
    %c9 = arith.constant 9 : index
    %c0_54 = arith.constant 0 : index
    %c0_55 = arith.constant 0 : index
    %63 = vector.load %arg4[%c9, %c0_54, %c0_55] : memref<16x72x512xf32, #tpu.memory_space<vmem>>, vector<1x72x512xf32>
    %64 = vector.shape_cast %63 : vector<1x72x512xf32> to vector<72x512xf32>
    %cst_56 = arith.constant dense<0.000000e+00> : vector<72x32xf32>
    %65 = tpu.matmul %64, %9, %cst_56 {dimension_numbers = #tpu.dot_dimension_numbers<[1], [0], [0], [1], [0, 0, 1, 1], [], []>} : vector<72x512xf32>, vector<512x32xf32>, vector<72x32xf32> -> vector<72x32xf32>
    %c288 = arith.constant 288 : index
    %c0_57 = arith.constant 0 : index
    %66 = vector.load %arg5[%c288, %c0_57] : memref<512x64xf32, #tpu.memory_space<vmem>>, vector<32x64xf32>
    %cst_58 = arith.constant dense<0.000000e+00> : vector<72x64xf32>
    %67 = tpu.matmul %65, %66, %cst_58 {dimension_numbers = #tpu.dot_dimension_numbers<[1], [0], [0], [1], [0, 0, 1, 1], [], []>} : vector<72x32xf32>, vector<32x64xf32>, vector<72x64xf32> -> vector<72x64xf32>
    %68 = arith.addf %62, %67 : vector<72x64xf32>
    %c10 = arith.constant 10 : index
    %c0_59 = arith.constant 0 : index
    %c0_60 = arith.constant 0 : index
    %69 = vector.load %arg4[%c10, %c0_59, %c0_60] : memref<16x72x512xf32, #tpu.memory_space<vmem>>, vector<1x72x512xf32>
    %70 = vector.shape_cast %69 : vector<1x72x512xf32> to vector<72x512xf32>
    %cst_61 = arith.constant dense<0.000000e+00> : vector<72x32xf32>
    %71 = tpu.matmul %70, %9, %cst_61 {dimension_numbers = #tpu.dot_dimension_numbers<[1], [0], [0], [1], [0, 0, 1, 1], [], []>} : vector<72x512xf32>, vector<512x32xf32>, vector<72x32xf32> -> vector<72x32xf32>
    %c320 = arith.constant 320 : index
    %c0_62 = arith.constant 0 : index
    %72 = vector.load %arg5[%c320, %c0_62] : memref<512x64xf32, #tpu.memory_space<vmem>>, vector<32x64xf32>
    %cst_63 = arith.constant dense<0.000000e+00> : vector<72x64xf32>
    %73 = tpu.matmul %71, %72, %cst_63 {dimension_numbers = #tpu.dot_dimension_numbers<[1], [0], [0], [1], [0, 0, 1, 1], [], []>} : vector<72x32xf32>, vector<32x64xf32>, vector<72x64xf32> -> vector<72x64xf32>
    %74 = arith.addf %68, %73 : vector<72x64xf32>
    %c11 = arith.constant 11 : index
    %c0_64 = arith.constant 0 : index
    %c0_65 = arith.constant 0 : index
    %75 = vector.load %arg4[%c11, %c0_64, %c0_65] : memref<16x72x512xf32, #tpu.memory_space<vmem>>, vector<1x72x512xf32>
    %76 = vector.shape_cast %75 : vector<1x72x512xf32> to vector<72x512xf32>
    %cst_66 = arith.constant dense<0.000000e+00> : vector<72x32xf32>
    %77 = tpu.matmul %76, %9, %cst_66 {dimension_numbers = #tpu.dot_dimension_numbers<[1], [0], [0], [1], [0, 0, 1, 1], [], []>} : vector<72x512xf32>, vector<512x32xf32>, vector<72x32xf32> -> vector<72x32xf32>
    %c352 = arith.constant 352 : index
    %c0_67 = arith.constant 0 : index
    %78 = vector.load %arg5[%c352, %c0_67] : memref<512x64xf32, #tpu.memory_space<vmem>>, vector<32x64xf32>
    %cst_68 = arith.constant dense<0.000000e+00> : vector<72x64xf32>
    %79 = tpu.matmul %77, %78, %cst_68 {dimension_numbers = #tpu.dot_dimension_numbers<[1], [0], [0], [1], [0, 0, 1, 1], [], []>} : vector<72x32xf32>, vector<32x64xf32>, vector<72x64xf32> -> vector<72x64xf32>
    %80 = arith.addf %74, %79 : vector<72x64xf32>
    %c12 = arith.constant 12 : index
    %c0_69 = arith.constant 0 : index
    %c0_70 = arith.constant 0 : index
    %81 = vector.load %arg4[%c12, %c0_69, %c0_70] : memref<16x72x512xf32, #tpu.memory_space<vmem>>, vector<1x72x512xf32>
    %82 = vector.shape_cast %81 : vector<1x72x512xf32> to vector<72x512xf32>
    %cst_71 = arith.constant dense<0.000000e+00> : vector<72x32xf32>
    %83 = tpu.matmul %82, %9, %cst_71 {dimension_numbers = #tpu.dot_dimension_numbers<[1], [0], [0], [1], [0, 0, 1, 1], [], []>} : vector<72x512xf32>, vector<512x32xf32>, vector<72x32xf32> -> vector<72x32xf32>
    %c384 = arith.constant 384 : index
    %c0_72 = arith.constant 0 : index
    %84 = vector.load %arg5[%c384, %c0_72] : memref<512x64xf32, #tpu.memory_space<vmem>>, vector<32x64xf32>
    %cst_73 = arith.constant dense<0.000000e+00> : vector<72x64xf32>
    %85 = tpu.matmul %83, %84, %cst_73 {dimension_numbers = #tpu.dot_dimension_numbers<[1], [0], [0], [1], [0, 0, 1, 1], [], []>} : vector<72x32xf32>, vector<32x64xf32>, vector<72x64xf32> -> vector<72x64xf32>
    %86 = arith.addf %80, %85 : vector<72x64xf32>
    %c13 = arith.constant 13 : index
    %c0_74 = arith.constant 0 : index
    %c0_75 = arith.constant 0 : index
    %87 = vector.load %arg4[%c13, %c0_74, %c0_75] : memref<16x72x512xf32, #tpu.memory_space<vmem>>, vector<1x72x512xf32>
    %88 = vector.shape_cast %87 : vector<1x72x512xf32> to vector<72x512xf32>
    %cst_76 = arith.constant dense<0.000000e+00> : vector<72x32xf32>
    %89 = tpu.matmul %88, %9, %cst_76 {dimension_numbers = #tpu.dot_dimension_numbers<[1], [0], [0], [1], [0, 0, 1, 1], [], []>} : vector<72x512xf32>, vector<512x32xf32>, vector<72x32xf32> -> vector<72x32xf32>
    %c416 = arith.constant 416 : index
    %c0_77 = arith.constant 0 : index
    %90 = vector.load %arg5[%c416, %c0_77] : memref<512x64xf32, #tpu.memory_space<vmem>>, vector<32x64xf32>
    %cst_78 = arith.constant dense<0.000000e+00> : vector<72x64xf32>
    %91 = tpu.matmul %89, %90, %cst_78 {dimension_numbers = #tpu.dot_dimension_numbers<[1], [0], [0], [1], [0, 0, 1, 1], [], []>} : vector<72x32xf32>, vector<32x64xf32>, vector<72x64xf32> -> vector<72x64xf32>
    %92 = arith.addf %86, %91 : vector<72x64xf32>
    %c14 = arith.constant 14 : index
    %c0_79 = arith.constant 0 : index
    %c0_80 = arith.constant 0 : index
    %93 = vector.load %arg4[%c14, %c0_79, %c0_80] : memref<16x72x512xf32, #tpu.memory_space<vmem>>, vector<1x72x512xf32>
    %94 = vector.shape_cast %93 : vector<1x72x512xf32> to vector<72x512xf32>
    %cst_81 = arith.constant dense<0.000000e+00> : vector<72x32xf32>
    %95 = tpu.matmul %94, %9, %cst_81 {dimension_numbers = #tpu.dot_dimension_numbers<[1], [0], [0], [1], [0, 0, 1, 1], [], []>} : vector<72x512xf32>, vector<512x32xf32>, vector<72x32xf32> -> vector<72x32xf32>
    %c448 = arith.constant 448 : index
    %c0_82 = arith.constant 0 : index
    %96 = vector.load %arg5[%c448, %c0_82] : memref<512x64xf32, #tpu.memory_space<vmem>>, vector<32x64xf32>
    %cst_83 = arith.constant dense<0.000000e+00> : vector<72x64xf32>
    %97 = tpu.matmul %95, %96, %cst_83 {dimension_numbers = #tpu.dot_dimension_numbers<[1], [0], [0], [1], [0, 0, 1, 1], [], []>} : vector<72x32xf32>, vector<32x64xf32>, vector<72x64xf32> -> vector<72x64xf32>
    %98 = arith.addf %92, %97 : vector<72x64xf32>
    %c15 = arith.constant 15 : index
    %c0_84 = arith.constant 0 : index
    %c0_85 = arith.constant 0 : index
    %99 = vector.load %arg4[%c15, %c0_84, %c0_85] : memref<16x72x512xf32, #tpu.memory_space<vmem>>, vector<1x72x512xf32>
    %100 = vector.shape_cast %99 : vector<1x72x512xf32> to vector<72x512xf32>
    %cst_86 = arith.constant dense<0.000000e+00> : vector<72x32xf32>
    %101 = tpu.matmul %100, %9, %cst_86 {dimension_numbers = #tpu.dot_dimension_numbers<[1], [0], [0], [1], [0, 0, 1, 1], [], []>} : vector<72x512xf32>, vector<512x32xf32>, vector<72x32xf32> -> vector<72x32xf32>
    %c480 = arith.constant 480 : index
    %c0_87 = arith.constant 0 : index
    %102 = vector.load %arg5[%c480, %c0_87] : memref<512x64xf32, #tpu.memory_space<vmem>>, vector<32x64xf32>
    %cst_88 = arith.constant dense<0.000000e+00> : vector<72x64xf32>
    %103 = tpu.matmul %101, %102, %cst_88 {dimension_numbers = #tpu.dot_dimension_numbers<[1], [0], [0], [1], [0, 0, 1, 1], [], []>} : vector<72x32xf32>, vector<32x64xf32>, vector<72x64xf32> -> vector<72x64xf32>
    %104 = arith.addf %98, %103 : vector<72x64xf32>
    %c0_89 = arith.constant 0 : index
    %c0_90 = arith.constant 0 : index
    %105 = vector.load %arg6[%c0_89, %c0_90] : memref<1x64xf32, #tpu.memory_space<vmem>>, vector<1x64xf32>
    %106 = vector.broadcast %105 : vector<1x64xf32> to vector<72x64xf32>
    %107 = arith.addf %104, %106 : vector<72x64xf32>
    %cst_91 = arith.constant 0.000000e+00 : f32
    %108 = vector.broadcast %cst_91 : f32 to vector<72x64xf32>
    %109 = arith.maximumf %107, %108 : vector<72x64xf32>
    %c0_92 = arith.constant 0 : index
    %c0_93 = arith.constant 0 : index
    %c0_94 = arith.constant 0 : index
    %110 = vector.load %arg7[%c0_92, %c0_93, %c0_94] : memref<9x8x72xf32, #tpu.memory_space<vmem>>, vector<1x8x72xf32>
    %111 = vector.shape_cast %110 : vector<1x8x72xf32> to vector<8x72xf32>
    %cst_95 = arith.constant dense<0.000000e+00> : vector<8x64xf32>
    %112 = tpu.matmul %111, %109, %cst_95 {dimension_numbers = #tpu.dot_dimension_numbers<[1], [0], [0], [1], [0, 0, 1, 1], [], []>} : vector<8x72xf32>, vector<72x64xf32>, vector<8x64xf32> -> vector<8x64xf32>
    %c0_96 = arith.constant 0 : index
    %c0_97 = arith.constant 0 : index
    %113 = vector.load %arg8[%c0_96, %c0_97] : memref<576x64xf32, #tpu.memory_space<vmem>>, vector<64x64xf32>
    %cst_98 = arith.constant dense<0.000000e+00> : vector<8x64xf32>
    %114 = tpu.matmul %112, %113, %cst_98 {dimension_numbers = #tpu.dot_dimension_numbers<[1], [0], [0], [1], [0, 0, 1, 1], [], []>} : vector<8x64xf32>, vector<64x64xf32>, vector<8x64xf32> -> vector<8x64xf32>
    %c1_99 = arith.constant 1 : index
    %c0_100 = arith.constant 0 : index
    %c0_101 = arith.constant 0 : index
    %115 = vector.load %arg7[%c1_99, %c0_100, %c0_101] : memref<9x8x72xf32, #tpu.memory_space<vmem>>, vector<1x8x72xf32>
    %116 = vector.shape_cast %115 : vector<1x8x72xf32> to vector<8x72xf32>
    %cst_102 = arith.constant dense<0.000000e+00> : vector<8x64xf32>
    %117 = tpu.matmul %116, %109, %cst_102 {dimension_numbers = #tpu.dot_dimension_numbers<[1], [0], [0], [1], [0, 0, 1, 1], [], []>} : vector<8x72xf32>, vector<72x64xf32>, vector<8x64xf32> -> vector<8x64xf32>
    %c64_103 = arith.constant 64 : index
    %c0_104 = arith.constant 0 : index
    %118 = vector.load %arg8[%c64_103, %c0_104] : memref<576x64xf32, #tpu.memory_space<vmem>>, vector<64x64xf32>
    %cst_105 = arith.constant dense<0.000000e+00> : vector<8x64xf32>
    %119 = tpu.matmul %117, %118, %cst_105 {dimension_numbers = #tpu.dot_dimension_numbers<[1], [0], [0], [1], [0, 0, 1, 1], [], []>} : vector<8x64xf32>, vector<64x64xf32>, vector<8x64xf32> -> vector<8x64xf32>
    %120 = arith.addf %114, %119 : vector<8x64xf32>
    %c2_106 = arith.constant 2 : index
    %c0_107 = arith.constant 0 : index
    %c0_108 = arith.constant 0 : index
    %121 = vector.load %arg7[%c2_106, %c0_107, %c0_108] : memref<9x8x72xf32, #tpu.memory_space<vmem>>, vector<1x8x72xf32>
    %122 = vector.shape_cast %121 : vector<1x8x72xf32> to vector<8x72xf32>
    %cst_109 = arith.constant dense<0.000000e+00> : vector<8x64xf32>
    %123 = tpu.matmul %122, %109, %cst_109 {dimension_numbers = #tpu.dot_dimension_numbers<[1], [0], [0], [1], [0, 0, 1, 1], [], []>} : vector<8x72xf32>, vector<72x64xf32>, vector<8x64xf32> -> vector<8x64xf32>
    %c128_110 = arith.constant 128 : index
    %c0_111 = arith.constant 0 : index
    %124 = vector.load %arg8[%c128_110, %c0_111] : memref<576x64xf32, #tpu.memory_space<vmem>>, vector<64x64xf32>
    %cst_112 = arith.constant dense<0.000000e+00> : vector<8x64xf32>
    %125 = tpu.matmul %123, %124, %cst_112 {dimension_numbers = #tpu.dot_dimension_numbers<[1], [0], [0], [1], [0, 0, 1, 1], [], []>} : vector<8x64xf32>, vector<64x64xf32>, vector<8x64xf32> -> vector<8x64xf32>
    %126 = arith.addf %120, %125 : vector<8x64xf32>
    %c3_113 = arith.constant 3 : index
    %c0_114 = arith.constant 0 : index
    %c0_115 = arith.constant 0 : index
    %127 = vector.load %arg7[%c3_113, %c0_114, %c0_115] : memref<9x8x72xf32, #tpu.memory_space<vmem>>, vector<1x8x72xf32>
    %128 = vector.shape_cast %127 : vector<1x8x72xf32> to vector<8x72xf32>
    %cst_116 = arith.constant dense<0.000000e+00> : vector<8x64xf32>
    %129 = tpu.matmul %128, %109, %cst_116 {dimension_numbers = #tpu.dot_dimension_numbers<[1], [0], [0], [1], [0, 0, 1, 1], [], []>} : vector<8x72xf32>, vector<72x64xf32>, vector<8x64xf32> -> vector<8x64xf32>
    %c192_117 = arith.constant 192 : index
    %c0_118 = arith.constant 0 : index
    %130 = vector.load %arg8[%c192_117, %c0_118] : memref<576x64xf32, #tpu.memory_space<vmem>>, vector<64x64xf32>
    %cst_119 = arith.constant dense<0.000000e+00> : vector<8x64xf32>
    %131 = tpu.matmul %129, %130, %cst_119 {dimension_numbers = #tpu.dot_dimension_numbers<[1], [0], [0], [1], [0, 0, 1, 1], [], []>} : vector<8x64xf32>, vector<64x64xf32>, vector<8x64xf32> -> vector<8x64xf32>
    %132 = arith.addf %126, %131 : vector<8x64xf32>
    %c4_120 = arith.constant 4 : index
    %c0_121 = arith.constant 0 : index
    %c0_122 = arith.constant 0 : index
    %133 = vector.load %arg7[%c4_120, %c0_121, %c0_122] : memref<9x8x72xf32, #tpu.memory_space<vmem>>, vector<1x8x72xf32>
    %134 = vector.shape_cast %133 : vector<1x8x72xf32> to vector<8x72xf32>
    %cst_123 = arith.constant dense<0.000000e+00> : vector<8x64xf32>
    %135 = tpu.matmul %134, %109, %cst_123 {dimension_numbers = #tpu.dot_dimension_numbers<[1], [0], [0], [1], [0, 0, 1, 1], [], []>} : vector<8x72xf32>, vector<72x64xf32>, vector<8x64xf32> -> vector<8x64xf32>
    %c256_124 = arith.constant 256 : index
    %c0_125 = arith.constant 0 : index
    %136 = vector.load %arg8[%c256_124, %c0_125] : memref<576x64xf32, #tpu.memory_space<vmem>>, vector<64x64xf32>
    %cst_126 = arith.constant dense<0.000000e+00> : vector<8x64xf32>
    %137 = tpu.matmul %135, %136, %cst_126 {dimension_numbers = #tpu.dot_dimension_numbers<[1], [0], [0], [1], [0, 0, 1, 1], [], []>} : vector<8x64xf32>, vector<64x64xf32>, vector<8x64xf32> -> vector<8x64xf32>
    %138 = arith.addf %132, %137 : vector<8x64xf32>
    %c5_127 = arith.constant 5 : index
    %c0_128 = arith.constant 0 : index
    %c0_129 = arith.constant 0 : index
    %139 = vector.load %arg7[%c5_127, %c0_128, %c0_129] : memref<9x8x72xf32, #tpu.memory_space<vmem>>, vector<1x8x72xf32>
    %140 = vector.shape_cast %139 : vector<1x8x72xf32> to vector<8x72xf32>
    %cst_130 = arith.constant dense<0.000000e+00> : vector<8x64xf32>
    %141 = tpu.matmul %140, %109, %cst_130 {dimension_numbers = #tpu.dot_dimension_numbers<[1], [0], [0], [1], [0, 0, 1, 1], [], []>} : vector<8x72xf32>, vector<72x64xf32>, vector<8x64xf32> -> vector<8x64xf32>
    %c320_131 = arith.constant 320 : index
    %c0_132 = arith.constant 0 : index
    %142 = vector.load %arg8[%c320_131, %c0_132] : memref<576x64xf32, #tpu.memory_space<vmem>>, vector<64x64xf32>
    %cst_133 = arith.constant dense<0.000000e+00> : vector<8x64xf32>
    %143 = tpu.matmul %141, %142, %cst_133 {dimension_numbers = #tpu.dot_dimension_numbers<[1], [0], [0], [1], [0, 0, 1, 1], [], []>} : vector<8x64xf32>, vector<64x64xf32>, vector<8x64xf32> -> vector<8x64xf32>
    %144 = arith.addf %138, %143 : vector<8x64xf32>
    %c6_134 = arith.constant 6 : index
    %c0_135 = arith.constant 0 : index
    %c0_136 = arith.constant 0 : index
    %145 = vector.load %arg7[%c6_134, %c0_135, %c0_136] : memref<9x8x72xf32, #tpu.memory_space<vmem>>, vector<1x8x72xf32>
    %146 = vector.shape_cast %145 : vector<1x8x72xf32> to vector<8x72xf32>
    %cst_137 = arith.constant dense<0.000000e+00> : vector<8x64xf32>
    %147 = tpu.matmul %146, %109, %cst_137 {dimension_numbers = #tpu.dot_dimension_numbers<[1], [0], [0], [1], [0, 0, 1, 1], [], []>} : vector<8x72xf32>, vector<72x64xf32>, vector<8x64xf32> -> vector<8x64xf32>
    %c384_138 = arith.constant 384 : index
    %c0_139 = arith.constant 0 : index
    %148 = vector.load %arg8[%c384_138, %c0_139] : memref<576x64xf32, #tpu.memory_space<vmem>>, vector<64x64xf32>
    %cst_140 = arith.constant dense<0.000000e+00> : vector<8x64xf32>
    %149 = tpu.matmul %147, %148, %cst_140 {dimension_numbers = #tpu.dot_dimension_numbers<[1], [0], [0], [1], [0, 0, 1, 1], [], []>} : vector<8x64xf32>, vector<64x64xf32>, vector<8x64xf32> -> vector<8x64xf32>
    %150 = arith.addf %144, %149 : vector<8x64xf32>
    %c7_141 = arith.constant 7 : index
    %c0_142 = arith.constant 0 : index
    %c0_143 = arith.constant 0 : index
    %151 = vector.load %arg7[%c7_141, %c0_142, %c0_143] : memref<9x8x72xf32, #tpu.memory_space<vmem>>, vector<1x8x72xf32>
    %152 = vector.shape_cast %151 : vector<1x8x72xf32> to vector<8x72xf32>
    %cst_144 = arith.constant dense<0.000000e+00> : vector<8x64xf32>
    %153 = tpu.matmul %152, %109, %cst_144 {dimension_numbers = #tpu.dot_dimension_numbers<[1], [0], [0], [1], [0, 0, 1, 1], [], []>} : vector<8x72xf32>, vector<72x64xf32>, vector<8x64xf32> -> vector<8x64xf32>
    %c448_145 = arith.constant 448 : index
    %c0_146 = arith.constant 0 : index
    %154 = vector.load %arg8[%c448_145, %c0_146] : memref<576x64xf32, #tpu.memory_space<vmem>>, vector<64x64xf32>
    %cst_147 = arith.constant dense<0.000000e+00> : vector<8x64xf32>
    %155 = tpu.matmul %153, %154, %cst_147 {dimension_numbers = #tpu.dot_dimension_numbers<[1], [0], [0], [1], [0, 0, 1, 1], [], []>} : vector<8x64xf32>, vector<64x64xf32>, vector<8x64xf32> -> vector<8x64xf32>
    %156 = arith.addf %150, %155 : vector<8x64xf32>
    %c8_148 = arith.constant 8 : index
    %c0_149 = arith.constant 0 : index
    %c0_150 = arith.constant 0 : index
    %157 = vector.load %arg7[%c8_148, %c0_149, %c0_150] : memref<9x8x72xf32, #tpu.memory_space<vmem>>, vector<1x8x72xf32>
    %158 = vector.shape_cast %157 : vector<1x8x72xf32> to vector<8x72xf32>
    %cst_151 = arith.constant dense<0.000000e+00> : vector<8x64xf32>
    %159 = tpu.matmul %158, %109, %cst_151 {dimension_numbers = #tpu.dot_dimension_numbers<[1], [0], [0], [1], [0, 0, 1, 1], [], []>} : vector<8x72xf32>, vector<72x64xf32>, vector<8x64xf32> -> vector<8x64xf32>
    %c512 = arith.constant 512 : index
    %c0_152 = arith.constant 0 : index
    %160 = vector.load %arg8[%c512, %c0_152] : memref<576x64xf32, #tpu.memory_space<vmem>>, vector<64x64xf32>
    %cst_153 = arith.constant dense<0.000000e+00> : vector<8x64xf32>
    %161 = tpu.matmul %159, %160, %cst_153 {dimension_numbers = #tpu.dot_dimension_numbers<[1], [0], [0], [1], [0, 0, 1, 1], [], []>} : vector<8x64xf32>, vector<64x64xf32>, vector<8x64xf32> -> vector<8x64xf32>
    %162 = arith.addf %156, %161 : vector<8x64xf32>
    %c0_154 = arith.constant 0 : index
    %c0_155 = arith.constant 0 : index
    %163 = vector.load %arg9[%c0_154, %c0_155] : memref<1x64xf32, #tpu.memory_space<vmem>>, vector<1x64xf32>
    %164 = vector.broadcast %163 : vector<1x64xf32> to vector<8x64xf32>
    %165 = arith.addf %162, %164 : vector<8x64xf32>
    %cst_156 = arith.constant 0.000000e+00 : f32
    %166 = vector.broadcast %cst_156 : f32 to vector<8x64xf32>
    %167 = arith.maximumf %165, %166 : vector<8x64xf32>
    %c0_157 = arith.constant 0 : index
    %c0_158 = arith.constant 0 : index
    %c0_159 = arith.constant 0 : index
    %168 = vector.load %arg10[%c0_157, %c0_158, %c0_159] : memref<1x8x8xf32, #tpu.memory_space<vmem>>, vector<1x8x8xf32>
    %169 = vector.shape_cast %168 : vector<1x8x8xf32> to vector<8x8xf32>
    %cst_160 = arith.constant dense<0.000000e+00> : vector<8x64xf32>
    %170 = tpu.matmul %169, %167, %cst_160 {dimension_numbers = #tpu.dot_dimension_numbers<[1], [0], [0], [1], [0, 0, 1, 1], [], []>} : vector<8x8xf32>, vector<8x64xf32>, vector<8x64xf32> -> vector<8x64xf32>
    %c0_161 = arith.constant 0 : index
    %c0_162 = arith.constant 0 : index
    %171 = vector.load %arg11[%c0_161, %c0_162] : memref<64x128xf32, #tpu.memory_space<vmem>>, vector<64x128xf32>
    %cst_163 = arith.constant dense<0.000000e+00> : vector<8x128xf32>
    %172 = tpu.matmul %170, %171, %cst_163 {dimension_numbers = #tpu.dot_dimension_numbers<[1], [0], [0], [1], [0, 0, 1, 1], [], []>} : vector<8x64xf32>, vector<64x128xf32>, vector<8x128xf32> -> vector<8x128xf32>
    %c0_164 = arith.constant 0 : index
    %c0_165 = arith.constant 0 : index
    %173 = vector.load %arg12[%c0_164, %c0_165] : memref<1x128xf32, #tpu.memory_space<vmem>>, vector<1x128xf32>
    %174 = vector.broadcast %173 : vector<1x128xf32> to vector<8x128xf32>
    %175 = arith.addf %172, %174 : vector<8x128xf32>
    %cst_166 = arith.constant 0.000000e+00 : f32
    %176 = vector.broadcast %cst_166 : f32 to vector<8x128xf32>
    %177 = arith.maximumf %175, %176 : vector<8x128xf32>
    %c0_167 = arith.constant 0 : index
    %c0_168 = arith.constant 0 : index
    %178 = vector.load %arg13[%c0_167, %c0_168] : memref<128x7xf32, #tpu.memory_space<vmem>>, vector<128x7xf32>
    %cst_169 = arith.constant dense<0.000000e+00> : vector<8x7xf32>
    %179 = tpu.matmul %177, %178, %cst_169 {dimension_numbers = #tpu.dot_dimension_numbers<[1], [0], [0], [1], [0, 0, 1, 1], [], []>} : vector<8x128xf32>, vector<128x7xf32>, vector<8x7xf32> -> vector<8x7xf32>
    %c0_170 = arith.constant 0 : index
    %c0_171 = arith.constant 0 : index
    %180 = vector.load %arg14[%c0_170, %c0_171] : memref<1x7xf32, #tpu.memory_space<vmem>>, vector<1x7xf32>
    %181 = vector.broadcast %180 : vector<1x7xf32> to vector<8x7xf32>
    %182 = arith.addf %179, %181 : vector<8x7xf32>
    %183 = vector.extract_strided_slice %182 {offsets = [0, 0], sizes = [8, 6], strides = [1, 1]} : vector<8x7xf32> to vector<8x6xf32>
    %cst_172 = arith.constant dense<0xFF800000> : vector<8xf32>
    %184 = vector.multi_reduction <maximumf>, %183, %cst_172 [1] : vector<8x6xf32> to vector<8xf32>
    %185 = vector.shape_cast %184 : vector<8xf32> to vector<8x1xf32>
    %186 = vector.broadcast %185 : vector<8x1xf32> to vector<8x6xf32>
    %187 = arith.subf %183, %186 : vector<8x6xf32>
    %188 = math.exp %187 : vector<8x6xf32>
    %cst_173 = arith.constant dense<0.000000e+00> : vector<8xf32>
    %189 = vector.multi_reduction <add>, %188, %cst_173 [1] : vector<8x6xf32> to vector<8xf32>
    %190 = vector.shape_cast %189 : vector<8xf32> to vector<8x1xf32>
    %191 = vector.broadcast %190 : vector<8x1xf32> to vector<8x6xf32>
    %192 = arith.divf %188, %191 : vector<8x6xf32>
    %c0_174 = arith.constant 0 : index
    %c0_175 = arith.constant 0 : index
    %193 = vector.load %arg15[%c0_174, %c0_175] : memref<8x7xf32, #tpu.memory_space<vmem>>, vector<8x6xf32>
    tpu.vector_store %arg15[%c0_174, %c0_175], %192 {strides = array<i32>} : memref<8x7xf32, #tpu.memory_space<vmem>>, vector<8x6xf32>,
    %194 = vector.extract_strided_slice %182 {offsets = [0, 6], sizes = [8, 1], strides = [1, 1]} : vector<8x7xf32> to vector<8x1xf32>
    %c0_176 = arith.constant 0 : index
    %c6_177 = arith.constant 6 : index
    %195 = vector.load %arg15[%c0_176, %c6_177] : memref<8x7xf32, #tpu.memory_space<vmem>>, vector<8x1xf32>
    tpu.vector_store %arg15[%c0_176, %c6_177], %194 {strides = array<i32>} : memref<8x7xf32, #tpu.memory_space<vmem>>, vector<8x1xf32>,
    return
  }
  func.func @transform_0(%arg0: i32) -> (i32, i32) {
    %c0_i32 = arith.constant 0 : i32
    %c0_i32_0 = arith.constant 0 : i32
    return %arg0, %c0_i32 : i32, i32
  }
  func.func @transform_1(%arg0: i32) -> (i32, i32) {
    %c0_i32 = arith.constant 0 : i32
    %c0_i32_0 = arith.constant 0 : i32
    %c0_i32_1 = arith.constant 0 : i32
    return %c0_i32, %c0_i32_0 : i32, i32
  }
  func.func @transform_2(%arg0: i32) -> (i32, i32) {
    %c0_i32 = arith.constant 0 : i32
    %c0_i32_0 = arith.constant 0 : i32
    %c0_i32_1 = arith.constant 0 : i32
    return %c0_i32, %c0_i32_0 : i32, i32
  }
  func.func @transform_3(%arg0: i32) -> (i32, i32, i32) {
    %c0_i32 = arith.constant 0 : i32
    %c0_i32_0 = arith.constant 0 : i32
    %c0_i32_1 = arith.constant 0 : i32
    %c0_i32_2 = arith.constant 0 : i32
    return %c0_i32, %c0_i32_0, %c0_i32_1 : i32, i32, i32
  }
  func.func @transform_4(%arg0: i32) -> (i32, i32) {
    %c0_i32 = arith.constant 0 : i32
    %c0_i32_0 = arith.constant 0 : i32
    %c0_i32_1 = arith.constant 0 : i32
    return %c0_i32, %c0_i32_0 : i32, i32
  }
  func.func @transform_5(%arg0: i32) -> (i32, i32) {
    %c0_i32 = arith.constant 0 : i32
    %c0_i32_0 = arith.constant 0 : i32
    %c0_i32_1 = arith.constant 0 : i32
    return %c0_i32, %c0_i32_0 : i32, i32
  }
  func.func @transform_6(%arg0: i32) -> (i32, i32, i32) {
    %c0_i32 = arith.constant 0 : i32
    %c0_i32_0 = arith.constant 0 : i32
    %c0_i32_1 = arith.constant 0 : i32
    %c0_i32_2 = arith.constant 0 : i32
    return %c0_i32, %c0_i32_0, %c0_i32_1 : i32, i32, i32
  }
  func.func @transform_7(%arg0: i32) -> (i32, i32) {
    %c0_i32 = arith.constant 0 : i32
    %c0_i32_0 = arith.constant 0 : i32
    %c0_i32_1 = arith.constant 0 : i32
    return %c0_i32, %c0_i32_0 : i32, i32
  }
  func.func @transform_8(%arg0: i32) -> (i32, i32) {
    %c0_i32 = arith.constant 0 : i32
    %c0_i32_0 = arith.constant 0 : i32
    %c0_i32_1 = arith.constant 0 : i32
    return %c0_i32, %c0_i32_0 : i32, i32
  }
  func.func @transform_9(%arg0: i32) -> (i32, i32, i32) {
    %c0_i32 = arith.constant 0 : i32
    %c0_i32_0 = arith.constant 0 : i32
    %c0_i32_1 = arith.constant 0 : i32
    %c0_i32_2 = arith.constant 0 : i32
    return %c0_i32, %c0_i32_0, %c0_i32_1 : i32, i32, i32
  }
  func.func @transform_10(%arg0: i32) -> (i32, i32) {
    %c0_i32 = arith.constant 0 : i32
    %c0_i32_0 = arith.constant 0 : i32
    %c0_i32_1 = arith.constant 0 : i32
    return %c0_i32, %c0_i32_0 : i32, i32
  }
  func.func @transform_11(%arg0: i32) -> (i32, i32) {
    %c0_i32 = arith.constant 0 : i32
    %c0_i32_0 = arith.constant 0 : i32
    %c0_i32_1 = arith.constant 0 : i32
    return %c0_i32, %c0_i32_0 : i32, i32
  }
  func.func @transform_12(%arg0: i32) -> (i32, i32) {
    %c0_i32 = arith.constant 0 : i32
    %c0_i32_0 = arith.constant 0 : i32
    %c0_i32_1 = arith.constant 0 : i32
    return %c0_i32, %c0_i32_0 : i32, i32
  }
  func.func @transform_13(%arg0: i32) -> (i32, i32) {
    %c0_i32 = arith.constant 0 : i32
    %c0_i32_0 = arith.constant 0 : i32
    %c0_i32_1 = arith.constant 0 : i32
    return %c0_i32, %c0_i32_0 : i32, i32
  }
  func.func @transform_14(%arg0: i32) -> (i32, i32) {
    %c0_i32 = arith.constant 0 : i32
    %c0_i32_0 = arith.constant 0 : i32
    return %arg0, %c0_i32 : i32, i32
  }
}

</mosaic_0001>

<llo_original>
// kernel: conv_pong_forward.1
$region0: #{conv_pong_forward.1}
  #allocation0 [shape = 'u32[]', space=smem, size = 0x4, offset = 0x4, fixed_abs, tag = 'smem constant byte address 0x4 - core index']
  #allocation1 [shape = 'u32[144,128]{1,0:T(1,128)}', space=vmem, size = 0x12000, scoped, tag = 'internal scratch']
  %s0 = inlined_call_operand.vmem [shape: f32[512,256], index: 0, kind: input, shape index: {}]
  %s1 = inlined_call_operand.vmem [shape: f32[256,32], index: 1, kind: input, shape index: {}]
  %s2 = inlined_call_operand.vmem [shape: f32[1,32], index: 2, kind: input, shape index: {}]
  %s3 = inlined_call_operand.vmem [shape: f32[16,72,512], index: 3, kind: input, shape index: {}]
  %s4 = inlined_call_operand.vmem [shape: f32[512,64], index: 4, kind: input, shape index: {}]
  %s5 = inlined_call_operand.vmem [shape: f32[1,64], index: 5, kind: input, shape index: {}]
  %s6 = inlined_call_operand.vmem [shape: f32[9,8,72], index: 6, kind: input, shape index: {}]
  %s7 = inlined_call_operand.vmem [shape: f32[576,64], index: 7, kind: input, shape index: {}]
  %s8 = inlined_call_operand.vmem [shape: f32[1,64], index: 8, kind: input, shape index: {}]
  %s9 = inlined_call_operand.vmem [shape: f32[1,8,8], index: 9, kind: input, shape index: {}]
  %s10 = inlined_call_operand.vmem [shape: f32[64,128], index: 10, kind: input, shape index: {}]
  %s11 = inlined_call_operand.vmem [shape: f32[1,128], index: 11, kind: input, shape index: {}]
  %s12 = inlined_call_operand.vmem [shape: f32[128,7], index: 12, kind: input, shape index: {}]
  %s13 = inlined_call_operand.vmem [shape: f32[1,7], index: 13, kind: input, shape index: {}]
  %s14 = inlined_call_operand.vmem [shape: f32[8,7], index: 14, kind: output, shape index: {}]
  %s15 = sld [smem:[#allocation0]]
  $region66: #{conv_pong_forward.1} parent=0
    _
  %s17 = ssub.s32 1, %s15
  %s18 = scalar_select 0, %s17, %s15
  // Predicated region
  $region2: #{conv_pong_forward.1} parent=0 // pred_check
    _
  $region3: #{conv_pong_forward.1} parent=0 // pred_check_branch
    %20 = sbr.rel (0) target = $region5
  $region4: #{conv_pong_forward.1} parent=0 // pred_region
    _
  $region5: #{conv_pong_forward.1} parent=0 // pred_fallthru
    _
  // Predicated region
  $region6: #{conv_pong_forward.1} parent=0 // pred_check
    _
  $region7: #{conv_pong_forward.1} parent=0 // pred_check_branch
    %22 = sbr.rel (0) target = $region9
  $region8: #{conv_pong_forward.1} parent=0 // pred_region
    _
  $region9: #{conv_pong_forward.1} parent=0 // pred_fallthru
    _
  // Predicated region
  $region10: #{conv_pong_forward.1} parent=0 // pred_check
    _
  $region11: #{conv_pong_forward.1} parent=0 // pred_check_branch
    %24 = sbr.rel (0) target = $region13
  $region12: #{conv_pong_forward.1} parent=0 // pred_region
    _
  $region13: #{conv_pong_forward.1} parent=0 // pred_fallthru
    _
  // Predicated region
  $region14: #{conv_pong_forward.1} parent=0 // pred_check
    _
  $region15: #{conv_pong_forward.1} parent=0 // pred_check_branch
    %26 = sbr.rel (0) target = $region17
  $region16: #{conv_pong_forward.1} parent=0 // pred_region
    _
  $region17: #{conv_pong_forward.1} parent=0 // pred_fallthru
    _
  // Predicated region
  $region18: #{conv_pong_forward.1} parent=0 // pred_check
    _
  $region19: #{conv_pong_forward.1} parent=0 // pred_check_branch
    %28 = sbr.rel (0) target = $region21
  $region20: #{conv_pong_forward.1} parent=0 // pred_region
    _
  $region21: #{conv_pong_forward.1} parent=0 // pred_fallthru
    _
  // Predicated region
  $region22: #{conv_pong_forward.1} parent=0 // pred_check
    _
  $region23: #{conv_pong_forward.1} parent=0 // pred_check_branch
    %30 = sbr.rel (0) target = $region25
  $region24: #{conv_pong_forward.1} parent=0 // pred_region
    _
  $region25: #{conv_pong_forward.1} parent=0 // pred_fallthru
    _
  // Predicated region
  $region26: #{conv_pong_forward.1} parent=0 // pred_check
    _
  $region27: #{conv_pong_forward.1} parent=0 // pred_check_branch
    %32 = sbr.rel (0) target = $region29
  $region28: #{conv_pong_forward.1} parent=0 // pred_region
    _
  $region29: #{conv_pong_forward.1} parent=0 // pred_fallthru
    _
  // Predicated region
  $region30: #{conv_pong_forward.1} parent=0 // pred_check
    _
  $region31: #{conv_pong_forward.1} parent=0 // pred_check_branch
    %34 = sbr.rel (0) target = $region33
  $region32: #{conv_pong_forward.1} parent=0 // pred_region
    _
  $region33: #{conv_pong_forward.1} parent=0 // pred_fallthru
    _
  // Predicated region
  $region34: #{conv_pong_forward.1} parent=0 // pred_check
    _
  $region35: #{conv_pong_forward.1} parent=0 // pred_check_branch
    %36 = sbr.rel (0) target = $region37
  $region36: #{conv_pong_forward.1} parent=0 // pred_region
    _
  $region37: #{conv_pong_forward.1} parent=0 // pred_fallthru
    _
  // Predicated region
  $region38: #{conv_pong_forward.1} parent=0 // pred_check
    _
  $region39: #{conv_pong_forward.1} parent=0 // pred_check_branch
    %38 = sbr.rel (0) target = $region41
  $region40: #{conv_pong_forward.1} parent=0 // pred_region
    _
  $region41: #{conv_pong_forward.1} parent=0 // pred_fallthru
    _
  // Predicated region
  $region42: #{conv_pong_forward.1} parent=0 // pred_check
    _
  $region43: #{conv_pong_forward.1} parent=0 // pred_check_branch
    %40 = sbr.rel (0) target = $region45
  $region44: #{conv_pong_forward.1} parent=0 // pred_region
    _
  $region45: #{conv_pong_forward.1} parent=0 // pred_fallthru
    _
  // Predicated region
  $region46: #{conv_pong_forward.1} parent=0 // pred_check
    _
  $region47: #{conv_pong_forward.1} parent=0 // pred_check_branch
    %42 = sbr.rel (0) target = $region49
  $region48: #{conv_pong_forward.1} parent=0 // pred_region
    _
  $region49: #{conv_pong_forward.1} parent=0 // pred_fallthru
    _
  // Predicated region
  $region50: #{conv_pong_forward.1} parent=0 // pred_check
    _
  $region51: #{conv_pong_forward.1} parent=0 // pred_check_branch
    %44 = sbr.rel (0) target = $region53
  $region52: #{conv_pong_forward.1} parent=0 // pred_region
    _
  $region53: #{conv_pong_forward.1} parent=0 // pred_fallthru
    _
  // Predicated region
  $region54: #{conv_pong_forward.1} parent=0 // pred_check
    _
  $region55: #{conv_pong_forward.1} parent=0 // pred_check_branch
    %46 = sbr.rel (0) target = $region57
  $region56: #{conv_pong_forward.1} parent=0 // pred_region
    _
  $region57: #{conv_pong_forward.1} parent=0 // pred_fallthru
    _
  %v47 = vld [vmem:[%s0] sm:$0xff]
  %v48 = vld [vmem:[%s0 + $0x8] sm:$0xff]
  %v49 = vld [vmem:[%s0 + $0x10] sm:$0xff]
  %v50 = vld [vmem:[%s0 + $0x18] sm:$0xff]
  %v51 = vld [vmem:[%s0 + $0x20] sm:$0xff]
  %v52 = vld [vmem:[%s0 + $0x28] sm:$0xff]
  %v53 = vld [vmem:[%s0 + $0x30] sm:$0xff]
  %v54 = vld [vmem:[%s0 + $0x38] sm:$0xff]
  %v55 = vld [vmem:[%s0 + $0x40] sm:$0xff]
  %v56 = vld [vmem:[%s0 + $0x48] sm:$0xff]
  %v57 = vld [vmem:[%s0 + $0x50] sm:$0xff]
  %v58 = vld [vmem:[%s0 + $0x58] sm:$0xff]
  %v59 = vld [vmem:[%s0 + $0x60] sm:$0xff]
  %v60 = vld [vmem:[%s0 + $0x68] sm:$0xff]
  %v61 = vld [vmem:[%s0 + $0x70] sm:$0xff]
  %v62 = vld [vmem:[%s0 + $0x78] sm:$0xff]
  %v63 = vld [vmem:[%s0 + $0x80] sm:$0xff]
  %v64 = vld [vmem:[%s0 + $0x88] sm:$0xff]
  %v65 = vld [vmem:[%s0 + $0x90] sm:$0xff]
  %v66 = vld [vmem:[%s0 + $0x98] sm:$0xff]
  %v67 = vld [vmem:[%s0 + $0xa0] sm:$0xff]
  %v68 = vld [vmem:[%s0 + $0xa8] sm:$0xff]
  %v69 = vld [vmem:[%s0 + $0xb0] sm:$0xff]
  %v70 = vld [vmem:[%s0 + $0xb8] sm:$0xff]
  %v71 = vld [vmem:[%s0 + $0xc0] sm:$0xff]
  %v72 = vld [vmem:[%s0 + $0xc8] sm:$0xff]
  %v73 = vld [vmem:[%s0 + $0xd0] sm:$0xff]
  %v74 = vld [vmem:[%s0 + $0xd8] sm:$0xff]
  %v75 = vld [vmem:[%s0 + $0xe0] sm:$0xff]
  %v76 = vld [vmem:[%s0 + $0xe8] sm:$0xff]
  %v77 = vld [vmem:[%s0 + $0xf0] sm:$0xff]
  %v78 = vld [vmem:[%s0 + $0xf8] sm:$0xff]
  %v79 = vld [vmem:[%s0 + $0x100] sm:$0xff]
  %v80 = vld [vmem:[%s0 + $0x108] sm:$0xff]
  %v81 = vld [vmem:[%s0 + $0x110] sm:$0xff]
  %v82 = vld [vmem:[%s0 + $0x118] sm:$0xff]
  %v83 = vld [vmem:[%s0 + $0x120] sm:$0xff]
  %v84 = vld [vmem:[%s0 + $0x128] sm:$0xff]
  %v85 = vld [vmem:[%s0 + $0x130] sm:$0xff]
  %v86 = vld [vmem:[%s0 + $0x138] sm:$0xff]
  %v87 = vld [vmem:[%s0 + $0x140] sm:$0xff]
  %v88 = vld [vmem:[%s0 + $0x148] sm:$0xff]
  %v89 = vld [vmem:[%s0 + $0x150] sm:$0xff]
  %v90 = vld [vmem:[%s0 + $0x158] sm:$0xff]
  %v91 = vld [vmem:[%s0 + $0x160] sm:$0xff]
  %v92 = vld [vmem:[%s0 + $0x168] sm:$0xff]
  %v93 = vld [vmem:[%s0 + $0x170] sm:$0xff]
  %v94 = vld [vmem:[%s0 + $0x178] sm:$0xff]
  %v95 = vld [vmem:[%s0 + $0x180] sm:$0xff]
  %v96 = vld [vmem:[%s0 + $0x188] sm:$0xff]
  %v97 = vld [vmem:[%s0 + $0x190] sm:$0xff]
  %v98 = vld [vmem:[%s0 + $0x198] sm:$0xff]
  %v99 = vld [vmem:[%s0 + $0x1a0] sm:$0xff]
  %v100 = vld [vmem:[%s0 + $0x1a8] sm:$0xff]
  %v101 = vld [vmem:[%s0 + $0x1b0] sm:$0xff]
  %v102 = vld [vmem:[%s0 + $0x1b8] sm:$0xff]
  %v103 = vld [vmem:[%s0 + $0x1c0] sm:$0xff]
  %v104 = vld [vmem:[%s0 + $0x1c8] sm:$0xff]
  %v105 = vld [vmem:[%s0 + $0x1d0] sm:$0xff]
  %v106 = vld [vmem:[%s0 + $0x1d8] sm:$0xff]
  %v107 = vld [vmem:[%s0 + $0x1e0] sm:$0xff]
  %v108 = vld [vmem:[%s0 + $0x1e8] sm:$0xff]
  %v109 = vld [vmem:[%s0 + $0x1f0] sm:$0xff]
  %v110 = vld [vmem:[%s0 + $0x1f8] sm:$0xff]
  %v111 = vld [vmem:[%s0 + $0x200] sm:$0xff]
  %v112 = vld [vmem:[%s0 + $0x208] sm:$0xff]
  %v113 = vld [vmem:[%s0 + $0x210] sm:$0xff]
  %v114 = vld [vmem:[%s0 + $0x218] sm:$0xff]
  %v115 = vld [vmem:[%s0 + $0x220] sm:$0xff]
  %v116 = vld [vmem:[%s0 + $0x228] sm:$0xff]
  %v117 = vld [vmem:[%s0 + $0x230] sm:$0xff]
  %v118 = vld [vmem:[%s0 + $0x238] sm:$0xff]
  %v119 = vld [vmem:[%s0 + $0x240] sm:$0xff]
  %v120 = vld [vmem:[%s0 + $0x248] sm:$0xff]
  %v121 = vld [vmem:[%s0 + $0x250] sm:$0xff]
  %v122 = vld [vmem:[%s0 + $0x258] sm:$0xff]
  %v123 = vld [vmem:[%s0 + $0x260] sm:$0xff]
  %v124 = vld [vmem:[%s0 + $0x268] sm:$0xff]
  %v125 = vld [vmem:[%s0 + $0x270] sm:$0xff]
  %v126 = vld [vmem:[%s0 + $0x278] sm:$0xff]
  %v127 = vld [vmem:[%s0 + $0x280] sm:$0xff]
  %v128 = vld [vmem:[%s0 + $0x288] sm:$0xff]
  %v129 = vld [vmem:[%s0 + $0x290] sm:$0xff]
  %v130 = vld [vmem:[%s0 + $0x298] sm:$0xff]
  %v131 = vld [vmem:[%s0 + $0x2a0] sm:$0xff]
  %v132 = vld [vmem:[%s0 + $0x2a8] sm:$0xff]
  %v133 = vld [vmem:[%s0 + $0x2b0] sm:$0xff]
  %v134 = vld [vmem:[%s0 + $0x2b8] sm:$0xff]
  %v135 = vld [vmem:[%s0 + $0x2c0] sm:$0xff]
  %v136 = vld [vmem:[%s0 + $0x2c8] sm:$0xff]
  %v137 = vld [vmem:[%s0 + $0x2d0] sm:$0xff]
  %v138 = vld [vmem:[%s0 + $0x2d8] sm:$0xff]
  %v139 = vld [vmem:[%s0 + $0x2e0] sm:$0xff]
  %v140 = vld [vmem:[%s0 + $0x2e8] sm:$0xff]
  %v141 = vld [vmem:[%s0 + $0x2f0] sm:$0xff]
  %v142 = vld [vmem:[%s0 + $0x2f8] sm:$0xff]
  %v143 = vld [vmem:[%s0 + $0x300] sm:$0xff]
  %v144 = vld [vmem:[%s0 + $0x308] sm:$0xff]
  %v145 = vld [vmem:[%s0 + $0x310] sm:$0xff]
  %v146 = vld [vmem:[%s0 + $0x318] sm:$0xff]
  %v147 = vld [vmem:[%s0 + $0x320] sm:$0xff]
  %v148 = vld [vmem:[%s0 + $0x328] sm:$0xff]
  %v149 = vld [vmem:[%s0 + $0x330] sm:$0xff]
  %v150 = vld [vmem:[%s0 + $0x338] sm:$0xff]
  %v151 = vld [vmem:[%s0 + $0x340] sm:$0xff]
  %v152 = vld [vmem:[%s0 + $0x348] sm:$0xff]
  %v153 = vld [vmem:[%s0 + $0x350] sm:$0xff]
  %v154 = vld [vmem:[%s0 + $0x358] sm:$0xff]
  %v155 = vld [vmem:[%s0 + $0x360] sm:$0xff]
  %v156 = vld [vmem:[%s0 + $0x368] sm:$0xff]
  %v157 = vld [vmem:[%s0 + $0x370] sm:$0xff]
  %v158 = vld [vmem:[%s0 + $0x378] sm:$0xff]
  %v159 = vld [vmem:[%s0 + $0x380] sm:$0xff]
  %v160 = vld [vmem:[%s0 + $0x388] sm:$0xff]
  %v161 = vld [vmem:[%s0 + $0x390] sm:$0xff]
  %v162 = vld [vmem:[%s0 + $0x398] sm:$0xff]
  %v163 = vld [vmem:[%s0 + $0x3a0] sm:$0xff]
  %v164 = vld [vmem:[%s0 + $0x3a8] sm:$0xff]
  %v165 = vld [vmem:[%s0 + $0x3b0] sm:$0xff]
  %v166 = vld [vmem:[%s0 + $0x3b8] sm:$0xff]
  %v167 = vld [vmem:[%s0 + $0x3c0] sm:$0xff]
  %v168 = vld [vmem:[%s0 + $0x3c8] sm:$0xff]
  %v169 = vld [vmem:[%s0 + $0x3d0] sm:$0xff]
  %v170 = vld [vmem:[%s0 + $0x3d8] sm:$0xff]
  %v171 = vld [vmem:[%s0 + $0x3e0] sm:$0xff]
  %v172 = vld [vmem:[%s0 + $0x3e8] sm:$0xff]
  %v173 = vld [vmem:[%s0 + $0x3f0] sm:$0xff]
  %v174 = vld [vmem:[%s0 + $0x3f8] sm:$0xff]
  %v175 = vld [vmem:[%s1] sm:$0xff]
  %v176 = vld [vmem:[%s1 + $0x8] sm:$0xff]
  %v177 = vld [vmem:[%s1 + $0x10] sm:$0xff]
  %v178 = vld [vmem:[%s1 + $0x18] sm:$0xff]
  %v179 = vld [vmem:[%s1 + $0x20] sm:$0xff]
  %v180 = vld [vmem:[%s1 + $0x28] sm:$0xff]
  %v181 = vld [vmem:[%s1 + $0x30] sm:$0xff]
  %v182 = vld [vmem:[%s1 + $0x38] sm:$0xff]
  %v183 = vld [vmem:[%s1 + $0x40] sm:$0xff]
  %v184 = vld [vmem:[%s1 + $0x48] sm:$0xff]
  %v185 = vld [vmem:[%s1 + $0x50] sm:$0xff]
  %v186 = vld [vmem:[%s1 + $0x58] sm:$0xff]
  %v187 = vld [vmem:[%s1 + $0x60] sm:$0xff]
  %v188 = vld [vmem:[%s1 + $0x68] sm:$0xff]
  %v189 = vld [vmem:[%s1 + $0x70] sm:$0xff]
  %v190 = vld [vmem:[%s1 + $0x78] sm:$0xff]
  %v191 = vld [vmem:[%s1 + $0x80] sm:$0xff]
  %v192 = vld [vmem:[%s1 + $0x88] sm:$0xff]
  %v193 = vld [vmem:[%s1 + $0x90] sm:$0xff]
  %v194 = vld [vmem:[%s1 + $0x98] sm:$0xff]
  %v195 = vld [vmem:[%s1 + $0xa0] sm:$0xff]
  %v196 = vld [vmem:[%s1 + $0xa8] sm:$0xff]
  %v197 = vld [vmem:[%s1 + $0xb0] sm:$0xff]
  %v198 = vld [vmem:[%s1 + $0xb8] sm:$0xff]
  %v199 = vld [vmem:[%s1 + $0xc0] sm:$0xff]
  %v200 = vld [vmem:[%s1 + $0xc8] sm:$0xff]
  %v201 = vld [vmem:[%s1 + $0xd0] sm:$0xff]
  %v202 = vld [vmem:[%s1 + $0xd8] sm:$0xff]
  %v203 = vld [vmem:[%s1 + $0xe0] sm:$0xff]
  %v204 = vld [vmem:[%s1 + $0xe8] sm:$0xff]
  %v205 = vld [vmem:[%s1 + $0xf0] sm:$0xff]
  %v206 = vld [vmem:[%s1 + $0xf8] sm:$0xff]
  %207 = vmatprep.subr.mxu0 0.0
  %208 = vmatpush1.msra.mxu0 %v175
  %209 = vmatprep.subr.mxu0 0.0
  %210 = vmatpush1.msra.mxu0 %v176
  %211 = vmatprep.subr.mxu0 0.0
  %212 = vmatpush1.msra.mxu0 %v177
  %213 = vmatprep.subr.mxu0 0.0
  %214 = vmatpush1.msra.mxu0 %v178
  %215 = vmatprep.subr.mxu0 0.0
  %216 = vmatpush1.msra.mxu0 %v179
  %217 = vmatprep.subr.mxu0 0.0
  %218 = vmatpush1.msra.mxu0 %v180
  %219 = vmatprep.subr.mxu0 0.0
  %220 = vmatpush1.msra.mxu0 %v181
  %221 = vmatprep.subr.mxu0 0.0
  %222 = vmatpush1.msra.mxu0 %v182
  %223 = vmatprep.subr.mxu0 0.0
  %224 = vmatpush1.msra.mxu0 %v183
  %225 = vmatprep.subr.mxu0 0.0
  %226 = vmatpush1.msra.mxu0 %v184
  %227 = vmatprep.subr.mxu0 0.0
  %228 = vmatpush1.msra.mxu0 %v185
  %229 = vmatprep.subr.mxu0 0.0
  %230 = vmatpush1.msra.mxu0 %v186
  %231 = vmatprep.subr.mxu0 0.0
  %232 = vmatpush1.msra.mxu0 %v187
  %233 = vmatprep.subr.mxu0 0.0
  %234 = vmatpush1.msra.mxu0 %v188
  %235 = vmatprep.subr.mxu0 0.0
  %236 = vmatpush1.msra.mxu0 %v189
  %237 = vmatprep.subr.mxu0 0.0
  %238 = vmatpush1.msra.mxu0 %v190
  %239 = vmatprep.subr.mxu0 0.0
  %240 = vmatpush1.msra.mxu0 %v191
  %241 = vmatprep.subr.mxu0 0.0
  %242 = vmatpush1.msra.mxu0 %v192
  %243 = vmatprep.subr.mxu0 0.0
  %244 = vmatpush1.msra.mxu0 %v193
  %245 = vmatprep.subr.mxu0 0.0
  %246 = vmatpush1.msra.mxu0 %v194
  %247 = vmatprep.subr.mxu0 0.0
  %248 = vmatpush1.msra.mxu0 %v195
  %249 = vmatprep.subr.mxu0 0.0
  %250 = vmatpush1.msra.mxu0 %v196
  %251 = vmatprep.subr.mxu0 0.0
  %252 = vmatpush1.msra.mxu0 %v197
  %253 = vmatprep.subr.mxu0 0.0
  %254 = vmatpush1.msra.mxu0 %v198
  %255 = vmatprep.subr.mxu0 0.0
  %256 = vmatpush1.msra.mxu0 %v199
  %257 = vmatprep.subr.mxu0 0.0
  %258 = vmatpush1.msra.mxu0 %v200
  %259 = vmatprep.subr.mxu0 0.0
  %260 = vmatpush1.msra.mxu0 %v201
  %261 = vmatprep.subr.mxu0 0.0
  %262 = vmatpush1.msra.mxu0 %v202
  %263 = vmatprep.subr.mxu0 0.0
  %264 = vmatpush1.msra.mxu0 %v203
  %265 = vmatprep.subr.mxu0 0.0
  %266 = vmatpush1.msra.mxu0 %v204
  %267 = vmatprep.subr.mxu0 0.0
  %268 = vmatpush1.msra.mxu0 %v205
  %269 = vmatprep.subr.mxu0 0.0
  %270 = vmatpush1.msra.mxu0 %v206
  %271 = vmatprep.mubr.f32.mxu0 %v48
  %272 = vmatmul.mubr.f32.gmra.mrb[0].mxu0 %v47
  %v273 = vpop.f32.mrb[0].mxu0
  %v274 = vadd.f32 0.0, %v273
  %v275 = vpop.f32.mrb[0].mxu0
  %276 = vmatprep.mubr.f32.mxu0 %v50
  %277 = vmatmul.mubr.f32.gmra.mrb[0].mxu0 %v49
  %v278 = vpop.f32.mrb[0].mxu0
  %v279 = vadd.f32 0.0, %v278
  %v280 = vpop.f32.mrb[0].mxu0
  %281 = vmatprep.mubr.f32.mxu0 %v52
  %282 = vmatmul.mubr.f32.gmra.mrb[0].mxu0 %v51
  %v283 = vpop.f32.mrb[0].mxu0
  %v284 = vadd.f32 0.0, %v283
  %v285 = vpop.f32.mrb[0].mxu0
  %286 = vmatprep.mubr.f32.mxu0 %v54
  %287 = vmatmul.mubr.f32.gmra.mrb[0].mxu0 %v53
  %v288 = vpop.f32.mrb[0].mxu0
  %v289 = vadd.f32 0.0, %v288
  %v290 = vpop.f32.mrb[0].mxu0
  %291 = vmatprep.mubr.f32.mxu0 %v56
  %292 = vmatmul.mubr.f32.gmra.mrb[0].mxu0 %v55
  %v293 = vpop.f32.mrb[0].mxu0
  %v294 = vadd.f32 0.0, %v293
  %v295 = vpop.f32.mrb[0].mxu0
  %296 = vmatprep.mubr.f32.mxu0 %v58
  %297 = vmatmul.mubr.f32.gmra.mrb[0].mxu0 %v57
  %v298 = vpop.f32.mrb[0].mxu0
  %v299 = vadd.f32 0.0, %v298
  %v300 = vpop.f32.mrb[0].mxu0
  %301 = vmatprep.mubr.f32.mxu0 %v60
  %302 = vmatmul.mubr.f32.gmra.mrb[0].mxu0 %v59
  %v303 = vpop.f32.mrb[0].mxu0
  %v304 = vadd.f32 0.0, %v303
  %v305 = vpop.f32.mrb[0].mxu0
  %306 = vmatprep.mubr.f32.mxu0 %v62
  %307 = vmatmul.mubr.f32.gmra.mrb[0].mxu0 %v61
  %v308 = vpop.f32.mrb[0].mxu0
  %v309 = vadd.f32 0.0, %v308
  %v310 = vpop.f32.mrb[0].mxu0
  %311 = vmatprep.mubr.f32.mxu0 %v64
  %312 = vmatmul.mubr.f32.gmra.mrb[0].mxu0 %v63
  %v313 = vpop.f32.mrb[0].mxu0
  %v314 = vadd.f32 0.0, %v313
  %v315 = vpop.f32.mrb[0].mxu0
  %316 = vmatprep.mubr.f32.mxu0 %v66
  %317 = vmatmul.mubr.f32.gmra.mrb[0].mxu0 %v65
  %v318 = vpop.f32.mrb[0].mxu0
  %v319 = vadd.f32 0.0, %v318
  %v320 = vpop.f32.mrb[0].mxu0
  %321 = vmatprep.mubr.f32.mxu0 %v68
  %322 = vmatmul.mubr.f32.gmra.mrb[0].mxu0 %v67
  %v323 = vpop.f32.mrb[0].mxu0
  %v324 = vadd.f32 0.0, %v323
  %v325 = vpop.f32.mrb[0].mxu0
  %326 = vmatprep.mubr.f32.mxu0 %v70
  %327 = vmatmul.mubr.f32.gmra.mrb[0].mxu0 %v69
  %v328 = vpop.f32.mrb[0].mxu0
  %v329 = vadd.f32 0.0, %v328
  %v330 = vpop.f32.mrb[0].mxu0
  %331 = vmatprep.mubr.f32.mxu0 %v72
  %332 = vmatmul.mubr.f32.gmra.mrb[0].mxu0 %v71
  %v333 = vpop.f32.mrb[0].mxu0
  %v334 = vadd.f32 0.0, %v333
  %v335 = vpop.f32.mrb[0].mxu0
  %336 = vmatprep.mubr.f32.mxu0 %v74
  %337 = vmatmul.mubr.f32.gmra.mrb[0].mxu0 %v73
  %v338 = vpop.f32.mrb[0].mxu0
  %v339 = vadd.f32 0.0, %v338
  %v340 = vpop.f32.mrb[0].mxu0
  %341 = vmatprep.mubr.f32.mxu0 %v76
  %342 = vmatmul.mubr.f32.gmra.mrb[0].mxu0 %v75
  %v343 = vpop.f32.mrb[0].mxu0
  %v344 = vadd.f32 0.0, %v343
  %v345 = vpop.f32.mrb[0].mxu0
  %346 = vmatprep.mubr.f32.mxu0 %v78
  %347 = vmatmul.mubr.f32.gmra.mrb[0].mxu0 %v77
  %v348 = vpop.f32.mrb[0].mxu0
  %v349 = vadd.f32 0.0, %v348
  %v350 = vpop.f32.mrb[0].mxu0
  %351 = vmatprep.mubr.f32.mxu0 %v80
  %352 = vmatmul.mubr.f32.gmra.mrb[0].mxu0 %v79
  %v353 = vpop.f32.mrb[0].mxu0
  %v354 = vadd.f32 0.0, %v353
  %v355 = vpop.f32.mrb[0].mxu0
  %356 = vmatprep.mubr.f32.mxu0 %v82
  %357 = vmatmul.mubr.f32.gmra.mrb[0].mxu0 %v81
  %v358 = vpop.f32.mrb[0].mxu0
  %v359 = vadd.f32 0.0, %v358
  %v360 = vpop.f32.mrb[0].mxu0
  %361 = vmatprep.mubr.f32.mxu0 %v84
  %362 = vmatmul.mubr.f32.gmra.mrb[0].mxu0 %v83
  %v363 = vpop.f32.mrb[0].mxu0
  %v364 = vadd.f32 0.0, %v363
  %v365 = vpop.f32.mrb[0].mxu0
  %366 = vmatprep.mubr.f32.mxu0 %v86
  %367 = vmatmul.mubr.f32.gmra.mrb[0].mxu0 %v85
  %v368 = vpop.f32.mrb[0].mxu0
  %v369 = vadd.f32 0.0, %v368
  %v370 = vpop.f32.mrb[0].mxu0
  %371 = vmatprep.mubr.f32.mxu0 %v88
  %372 = vmatmul.mubr.f32.gmra.mrb[0].mxu0 %v87
  %v373 = vpop.f32.mrb[0].mxu0
  %v374 = vadd.f32 0.0, %v373
  %v375 = vpop.f32.mrb[0].mxu0
  %376 = vmatprep.mubr.f32.mxu0 %v90
  %377 = vmatmul.mubr.f32.gmra.mrb[0].mxu0 %v89
  %v378 = vpop.f32.mrb[0].mxu0
  %v379 = vadd.f32 0.0, %v378
  %v380 = vpop.f32.mrb[0].mxu0
  %381 = vmatprep.mubr.f32.mxu0 %v92
  %382 = vmatmul.mubr.f32.gmra.mrb[0].mxu0 %v91
  %v383 = vpop.f32.mrb[0].mxu0
  %v384 = vadd.f32 0.0, %v383
  %v385 = vpop.f32.mrb[0].mxu0
  %386 = vmatprep.mubr.f32.mxu0 %v94
  %387 = vmatmul.mubr.f32.gmra.mrb[0].mxu0 %v93
  %v388 = vpop.f32.mrb[0].mxu0
  %v389 = vadd.f32 0.0, %v388
  %v390 = vpop.f32.mrb[0].mxu0
  %391 = vmatprep.mubr.f32.mxu0 %v96
  %392 = vmatmul.mubr.f32.gmra.mrb[0].mxu0 %v95
  %v393 = vpop.f32.mrb[0].mxu0
  %v394 = vadd.f32 0.0, %v393
  %v395 = vpop.f32.mrb[0].mxu0
  %396 = vmatprep.mubr.f32.mxu0 %v98
  %397 = vmatmul.mubr.f32.gmra.mrb[0].mxu0 %v97
  %v398 = vpop.f32.mrb[0].mxu0
  %v399 = vadd.f32 0.0, %v398
  %v400 = vpop.f32.mrb[0].mxu0
  %401 = vmatprep.mubr.f32.mxu0 %v100
  %402 = vmatmul.mubr.f32.gmra.mrb[0].mxu0 %v99
  %v403 = vpop.f32.mrb[0].mxu0
  %v404 = vadd.f32 0.0, %v403
  %v405 = vpop.f32.mrb[0].mxu0
  %406 = vmatprep.mubr.f32.mxu0 %v102
  %407 = vmatmul.mubr.f32.gmra.mrb[0].mxu0 %v101
  %v408 = vpop.f32.mrb[0].mxu0
  %v409 = vadd.f32 0.0, %v408
  %v410 = vpop.f32.mrb[0].mxu0
  %411 = vmatprep.mubr.f32.mxu0 %v104
  %412 = vmatmul.mubr.f32.gmra.mrb[0].mxu0 %v103
  %v413 = vpop.f32.mrb[0].mxu0
  %v414 = vadd.f32 0.0, %v413
  %v415 = vpop.f32.mrb[0].mxu0
  %416 = vmatprep.mubr.f32.mxu0 %v106
  %417 = vmatmul.mubr.f32.gmra.mrb[0].mxu0 %v105
  %v418 = vpop.f32.mrb[0].mxu0
  %v419 = vadd.f32 0.0, %v418
  %v420 = vpop.f32.mrb[0].mxu0
  %421 = vmatprep.mubr.f32.mxu0 %v108
  %422 = vmatmul.mubr.f32.gmra.mrb[0].mxu0 %v107
  %v423 = vpop.f32.mrb[0].mxu0
  %v424 = vadd.f32 0.0, %v423
  %v425 = vpop.f32.mrb[0].mxu0
  %426 = vmatprep.mubr.f32.mxu0 %v110
  %427 = vmatmul.mubr.f32.gmra.mrb[0].mxu0 %v109
  %v428 = vpop.f32.mrb[0].mxu0
  %v429 = vadd.f32 0.0, %v428
  %v430 = vpop.f32.mrb[0].mxu0
  %431 = vmatprep.mubr.f32.mxu0 %v112
  %432 = vmatmul.mubr.f32.gmra.mrb[0].mxu0 %v111
  %v433 = vpop.f32.mrb[0].mxu0
  %v434 = vadd.f32 0.0, %v433
  %v435 = vpop.f32.mrb[0].mxu0
  %436 = vmatprep.mubr.f32.mxu0 %v114
  %437 = vmatmul.mubr.f32.gmra.mrb[0].mxu0 %v113
  %v438 = vpop.f32.mrb[0].mxu0
  %v439 = vadd.f32 0.0, %v438
  %v440 = vpop.f32.mrb[0].mxu0
  %441 = vmatprep.mubr.f32.mxu0 %v116
  %442 = vmatmul.mubr.f32.gmra.mrb[0].mxu0 %v115
  %v443 = vpop.f32.mrb[0].mxu0
  %v444 = vadd.f32 0.0, %v443
  %v445 = vpop.f32.mrb[0].mxu0
  %446 = vmatprep.mubr.f32.mxu0 %v118
  %447 = vmatmul.mubr.f32.gmra.mrb[0].mxu0 %v117
  %v448 = vpop.f32.mrb[0].mxu0
  %v449 = vadd.f32 0.0, %v448
  %v450 = vpop.f32.mrb[0].mxu0
  %451 = vmatprep.mubr.f32.mxu0 %v120
  %452 = vmatmul.mubr.f32.gmra.mrb[0].mxu0 %v119
  %v453 = vpop.f32.mrb[0].mxu0
  %v454 = vadd.f32 0.0, %v453
  %v455 = vpop.f32.mrb[0].mxu0
  %456 = vmatprep.mubr.f32.mxu0 %v122
  %457 = vmatmul.mubr.f32.gmra.mrb[0].mxu0 %v121
  %v458 = vpop.f32.mrb[0].mxu0
  %v459 = vadd.f32 0.0, %v458
  %v460 = vpop.f32.mrb[0].mxu0
  %461 = vmatprep.mubr.f32.mxu0 %v124
  %462 = vmatmul.mubr.f32.gmra.mrb[0].mxu0 %v123
  %v463 = vpop.f32.mrb[0].mxu0
  %v464 = vadd.f32 0.0, %v463
  %v465 = vpop.f32.mrb[0].mxu0
  %466 = vmatprep.mubr.f32.mxu0 %v126
  %467 = vmatmul.mubr.f32.gmra.mrb[0].mxu0 %v125
  %v468 = vpop.f32.mrb[0].mxu0
  %v469 = vadd.f32 0.0, %v468
  %v470 = vpop.f32.mrb[0].mxu0
  %471 = vmatprep.mubr.f32.mxu0 %v128
  %472 = vmatmul.mubr.f32.gmra.mrb[0].mxu0 %v127
  %v473 = vpop.f32.mrb[0].mxu0
  %v474 = vadd.f32 0.0, %v473
  %v475 = vpop.f32.mrb[0].mxu0
  %476 = vmatprep.mubr.f32.mxu0 %v130
  %477 = vmatmul.mubr.f32.gmra.mrb[0].mxu0 %v129
  %v478 = vpop.f32.mrb[0].mxu0
  %v479 = vadd.f32 0.0, %v478
  %v480 = vpop.f32.mrb[0].mxu0
  %481 = vmatprep.mubr.f32.mxu0 %v132
  %482 = vmatmul.mubr.f32.gmra.mrb[0].mxu0 %v131
  %v483 = vpop.f32.mrb[0].mxu0
  %v484 = vadd.f32 0.0, %v483
  %v485 = vpop.f32.mrb[0].mxu0
  %486 = vmatprep.mubr.f32.mxu0 %v134
  %487 = vmatmul.mubr.f32.gmra.mrb[0].mxu0 %v133
  %v488 = vpop.f32.mrb[0].mxu0
  %v489 = vadd.f32 0.0, %v488
  %v490 = vpop.f32.mrb[0].mxu0
  %491 = vmatprep.mubr.f32.mxu0 %v136
  %492 = vmatmul.mubr.f32.gmra.mrb[0].mxu0 %v135
  %v493 = vpop.f32.mrb[0].mxu0
  %v494 = vadd.f32 0.0, %v493
  %v495 = vpop.f32.mrb[0].mxu0
  %496 = vmatprep.mubr.f32.mxu0 %v138
  %497 = vmatmul.mubr.f32.gmra.mrb[0].mxu0 %v137
  %v498 = vpop.f32.mrb[0].mxu0
  %v499 = vadd.f32 0.0, %v498
  %v500 = vpop.f32.mrb[0].mxu0
  %501 = vmatprep.mubr.f32.mxu0 %v140
  %502 = vmatmul.mubr.f32.gmra.mrb[0].mxu0 %v139
  %v503 = vpop.f32.mrb[0].mxu0
  %v504 = vadd.f32 0.0, %v503
  %v505 = vpop.f32.mrb[0].mxu0
  %506 = vmatprep.mubr.f32.mxu0 %v142
  %507 = vmatmul.mubr.f32.gmra.mrb[0].mxu0 %v141
  %v508 = vpop.f32.mrb[0].mxu0
  %v509 = vadd.f32 0.0, %v508
  %v510 = vpop.f32.mrb[0].mxu0
  %511 = vmatprep.mubr.f32.mxu0 %v144
  %512 = vmatmul.mubr.f32.gmra.mrb[0].mxu0 %v143
  %v513 = vpop.f32.mrb[0].mxu0
  %v514 = vadd.f32 0.0, %v513
  %v515 = vpop.f32.mrb[0].mxu0
  %516 = vmatprep.mubr.f32.mxu0 %v146
  %517 = vmatmul.mubr.f32.gmra.mrb[0].mxu0 %v145
  %v518 = vpop.f32.mrb[0].mxu0
  %v519 = vadd.f32 0.0, %v518
  %v520 = vpop.f32.mrb[0].mxu0
  %521 = vmatprep.mubr.f32.mxu0 %v148
  %522 = vmatmul.mubr.f32.gmra.mrb[0].mxu0 %v147
  %v523 = vpop.f32.mrb[0].mxu0
  %v524 = vadd.f32 0.0, %v523
  %v525 = vpop.f32.mrb[0].mxu0
  %526 = vmatprep.mubr.f32.mxu0 %v150
  %527 = vmatmul.mubr.f32.gmra.mrb[0].mxu0 %v149
  %v528 = vpop.f32.mrb[0].mxu0
  %v529 = vadd.f32 0.0, %v528
  %v530 = vpop.f32.mrb[0].mxu0
  %531 = vmatprep.mubr.f32.mxu0 %v152
  %532 = vmatmul.mubr.f32.gmra.mrb[0].mxu0 %v151
  %v533 = vpop.f32.mrb[0].mxu0
  %v534 = vadd.f32 0.0, %v533
  %v535 = vpop.f32.mrb[0].mxu0
  %536 = vmatprep.mubr.f32.mxu0 %v154
  %537 = vmatmul.mubr.f32.gmra.mrb[0].mxu0 %v153
  %v538 = vpop.f32.mrb[0].mxu0
  %v539 = vadd.f32 0.0, %v538
  %v540 = vpop.f32.mrb[0].mxu0
  %541 = vmatprep.mubr.f32.mxu0 %v156
  %542 = vmatmul.mubr.f32.gmra.mrb[0].mxu0 %v155
  %v543 = vpop.f32.mrb[0].mxu0
  %v544 = vadd.f32 0.0, %v543
  %v545 = vpop.f32.mrb[0].mxu0
  %546 = vmatprep.mubr.f32.mxu0 %v158
  %547 = vmatmul.mubr.f32.gmra.mrb[0].mxu0 %v157
  %v548 = vpop.f32.mrb[0].mxu0
  %v549 = vadd.f32 0.0, %v548
  %v550 = vpop.f32.mrb[0].mxu0
  %551 = vmatprep.mubr.f32.mxu0 %v160
  %552 = vmatmul.mubr.f32.gmra.mrb[0].mxu0 %v159
  %v553 = vpop.f32.mrb[0].mxu0
  %v554 = vadd.f32 0.0, %v553
  %v555 = vpop.f32.mrb[0].mxu0
  %556 = vmatprep.mubr.f32.mxu0 %v162
  %557 = vmatmul.mubr.f32.gmra.mrb[0].mxu0 %v161
  %v558 = vpop.f32.mrb[0].mxu0
  %v559 = vadd.f32 0.0, %v558
  %v560 = vpop.f32.mrb[0].mxu0
  %561 = vmatprep.mubr.f32.mxu0 %v164
  %562 = vmatmul.mubr.f32.gmra.mrb[0].mxu0 %v163
  %v563 = vpop.f32.mrb[0].mxu0
  %v564 = vadd.f32 0.0, %v563
  %v565 = vpop.f32.mrb[0].mxu0
  %566 = vmatprep.mubr.f32.mxu0 %v166
  %567 = vmatmul.mubr.f32.gmra.mrb[0].mxu0 %v165
  %v568 = vpop.f32.mrb[0].mxu0
  %v569 = vadd.f32 0.0, %v568
  %v570 = vpop.f32.mrb[0].mxu0
  %571 = vmatprep.mubr.f32.mxu0 %v168
  %572 = vmatmul.mubr.f32.gmra.mrb[0].mxu0 %v167
  %v573 = vpop.f32.mrb[0].mxu0
  %v574 = vadd.f32 0.0, %v573
  %v575 = vpop.f32.mrb[0].mxu0
  %576 = vmatprep.mubr.f32.mxu0 %v170
  %577 = vmatmul.mubr.f32.gmra.mrb[0].mxu0 %v169
  %v578 = vpop.f32.mrb[0].mxu0
  %v579 = vadd.f32 0.0, %v578
  %v580 = vpop.f32.mrb[0].mxu0
  %581 = vmatprep.mubr.f32.mxu0 %v172
  %582 = vmatmul.mubr.f32.gmra.mrb[0].mxu0 %v171
  %v583 = vpop.f32.mrb[0].mxu0
  %v584 = vadd.f32 0.0, %v583
  %v585 = vpop.f32.mrb[0].mxu0
  %586 = vmatprep.mubr.f32.mxu0 %v174
  %587 = vmatmul.mubr.f32.gmra.mrb[0].mxu0 %v173
  %v588 = vpop.f32.mrb[0].mxu0
  %v589 = vadd.f32 0.0, %v588
  %v590 = vpop.f32.mrb[0].mxu0
  %591 = vdwg.mxu0
  %v592 = vmul.f32 %v274, 0.003921569
  %v593 = vmul.f32 %v279, 0.003921569
  %v594 = vmul.f32 %v284, 0.003921569
  %v595 = vmul.f32 %v289, 0.003921569
  %v596 = vmul.f32 %v294, 0.003921569
  %v597 = vmul.f32 %v299, 0.003921569
  %v598 = vmul.f32 %v304, 0.003921569
  %v599 = vmul.f32 %v309, 0.003921569
  %v600 = vmul.f32 %v314, 0.003921569
  %v601 = vmul.f32 %v319, 0.003921569
  %v602 = vmul.f32 %v324, 0.003921569
  %v603 = vmul.f32 %v329, 0.003921569
  %v604 = vmul.f32 %v334, 0.003921569
  %v605 = vmul.f32 %v339, 0.003921569
  %v606 = vmul.f32 %v344, 0.003921569
  %v607 = vmul.f32 %v349, 0.003921569
  %v608 = vmul.f32 %v354, 0.003921569
  %v609 = vmul.f32 %v359, 0.003921569
  %v610 = vmul.f32 %v364, 0.003921569
  %v611 = vmul.f32 %v369, 0.003921569
  %v612 = vmul.f32 %v374, 0.003921569
  %v613 = vmul.f32 %v379, 0.003921569
  %v614 = vmul.f32 %v384, 0.003921569
  %v615 = vmul.f32 %v389, 0.003921569
  %v616 = vmul.f32 %v394, 0.003921569
  %v617 = vmul.f32 %v399, 0.003921569
  %v618 = vmul.f32 %v404, 0.003921569
  %v619 = vmul.f32 %v409, 0.003921569
  %v620 = vmul.f32 %v414, 0.003921569
  %v621 = vmul.f32 %v419, 0.003921569
  %v622 = vmul.f32 %v424, 0.003921569
  %v623 = vmul.f32 %v429, 0.003921569
  %v624 = vmul.f32 %v434, 0.003921569
  %v625 = vmul.f32 %v439, 0.003921569
  %v626 = vmul.f32 %v444, 0.003921569
  %v627 = vmul.f32 %v449, 0.003921569
  %v628 = vmul.f32 %v454, 0.003921569
  %v629 = vmul.f32 %v459, 0.003921569
  %v630 = vmul.f32 %v464, 0.003921569
  %v631 = vmul.f32 %v469, 0.003921569
  %v632 = vmul.f32 %v474, 0.003921569
  %v633 = vmul.f32 %v479, 0.003921569
  %v634 = vmul.f32 %v484, 0.003921569
  %v635 = vmul.f32 %v489, 0.003921569
  %v636 = vmul.f32 %v494, 0.003921569
  %v637 = vmul.f32 %v499, 0.003921569
  %v638 = vmul.f32 %v504, 0.003921569
  %v639 = vmul.f32 %v509, 0.003921569
  %v640 = vmul.f32 %v514, 0.003921569
  %v641 = vmul.f32 %v519, 0.003921569
  %v642 = vmul.f32 %v524, 0.003921569
  %v643 = vmul.f32 %v529, 0.003921569
  %v644 = vmul.f32 %v534, 0.003921569
  %v645 = vmul.f32 %v539, 0.003921569
  %v646 = vmul.f32 %v544, 0.003921569
  %v647 = vmul.f32 %v549, 0.003921569
  %v648 = vmul.f32 %v554, 0.003921569
  %v649 = vmul.f32 %v559, 0.003921569
  %v650 = vmul.f32 %v564, 0.003921569
  %v651 = vmul.f32 %v569, 0.003921569
  %v652 = vmul.f32 %v574, 0.003921569
  %v653 = vmul.f32 %v579, 0.003921569
  %v654 = vmul.f32 %v584, 0.003921569
  %v655 = vmul.f32 %v589, 0.003921569
  %v656 = vld [vmem:[%s2] sm:$0x1]
  %v658 = vlaneseq
  %v659 = vshrl.u32 %v658, 7
  %v660 = vsub.s32 0, %v659
  %v661 = vrot.slane %v656, %v660
  %v663 = vadd.f32 %v592, %v661
  %v664 = vadd.f32 %v593, %v661
  %v665 = vadd.f32 %v594, %v661
  %v666 = vadd.f32 %v595, %v661
  %v667 = vadd.f32 %v596, %v661
  %v668 = vadd.f32 %v597, %v661
  %v669 = vadd.f32 %v598, %v661
  %v670 = vadd.f32 %v599, %v661
  %v671 = vadd.f32 %v600, %v661
  %v672 = vadd.f32 %v601, %v661
  %v673 = vadd.f32 %v602, %v661
  %v674 = vadd.f32 %v603, %v661
  %v675 = vadd.f32 %v604, %v661
  %v676 = vadd.f32 %v605, %v661
  %v677 = vadd.f32 %v606, %v661
  %v678 = vadd.f32 %v607, %v661
  %v679 = vadd.f32 %v608, %v661
  %v680 = vadd.f32 %v609, %v661
  %v681 = vadd.f32 %v610, %v661
  %v682 = vadd.f32 %v611, %v661
  %v683 = vadd.f32 %v612, %v661
  %v684 = vadd.f32 %v613, %v661
  %v685 = vadd.f32 %v614, %v661
  %v686 = vadd.f32 %v615, %v661
  %v687 = vadd.f32 %v616, %v661
  %v688 = vadd.f32 %v617, %v661
  %v689 = vadd.f32 %v618, %v661
  %v690 = vadd.f32 %v619, %v661
  %v691 = vadd.f32 %v620, %v661
  %v692 = vadd.f32 %v621, %v661
  %v693 = vadd.f32 %v622, %v661
  %v694 = vadd.f32 %v623, %v661
  %v695 = vadd.f32 %v624, %v661
  %v696 = vadd.f32 %v625, %v661
  %v697 = vadd.f32 %v626, %v661
  %v698 = vadd.f32 %v627, %v661
  %v699 = vadd.f32 %v628, %v661
  %v700 = vadd.f32 %v629, %v661
  %v701 = vadd.f32 %v630, %v661
  %v702 = vadd.f32 %v631, %v661
  %v703 = vadd.f32 %v632, %v661
  %v704 = vadd.f32 %v633, %v661
  %v705 = vadd.f32 %v634, %v661
  %v706 = vadd.f32 %v635, %v661
  %v707 = vadd.f32 %v636, %v661
  %v708 = vadd.f32 %v637, %v661
  %v709 = vadd.f32 %v638, %v661
  %v710 = vadd.f32 %v639, %v661
  %v711 = vadd.f32 %v640, %v661
  %v712 = vadd.f32 %v641, %v661
  %v713 = vadd.f32 %v642, %v661
  %v714 = vadd.f32 %v643, %v661
  %v715 = vadd.f32 %v644, %v661
  %v716 = vadd.f32 %v645, %v661
  %v717 = vadd.f32 %v646, %v661
  %v718 = vadd.f32 %v647, %v661
  %v719 = vadd.f32 %v648, %v661
  %v720 = vadd.f32 %v649, %v661
  %v721 = vadd.f32 %v650, %v661
  %v722 = vadd.f32 %v651, %v661
  %v723 = vadd.f32 %v652, %v661
  %v724 = vadd.f32 %v653, %v661
  %v725 = vadd.f32 %v654, %v661
  %v726 = vadd.f32 %v655, %v661
  %v727 = vmax.f32 %v663, 0.0
  %v728 = vmax.f32 %v664, 0.0
  %v729 = vmax.f32 %v665, 0.0
  %v730 = vmax.f32 %v666, 0.0
  %v731 = vmax.f32 %v667, 0.0
  %v732 = vmax.f32 %v668, 0.0
  %v733 = vmax.f32 %v669, 0.0
  %v734 = vmax.f32 %v670, 0.0
  %v735 = vmax.f32 %v671, 0.0
  %v736 = vmax.f32 %v672, 0.0
  %v737 = vmax.f32 %v673, 0.0
  %v738 = vmax.f32 %v674, 0.0
  %v739 = vmax.f32 %v675, 0.0
  %v740 = vmax.f32 %v676, 0.0
  %v741 = vmax.f32 %v677, 0.0
  %v742 = vmax.f32 %v678, 0.0
  %v743 = vmax.f32 %v679, 0.0
  %v744 = vmax.f32 %v680, 0.0
  %v745 = vmax.f32 %v681, 0.0
  %v746 = vmax.f32 %v682, 0.0
  %v747 = vmax.f32 %v683, 0.0
  %v748 = vmax.f32 %v684, 0.0
  %v749 = vmax.f32 %v685, 0.0
  %v750 = vmax.f32 %v686, 0.0
  %v751 = vmax.f32 %v687, 0.0
  %v752 = vmax.f32 %v688, 0.0
  %v753 = vmax.f32 %v689, 0.0
  %v754 = vmax.f32 %v690, 0.0
  %v755 = vmax.f32 %v691, 0.0
  %v756 = vmax.f32 %v692, 0.0
  %v757 = vmax.f32 %v693, 0.0
  %v758 = vmax.f32 %v694, 0.0
  %v759 = vmax.f32 %v695, 0.0
  %v760 = vmax.f32 %v696, 0.0
  %v761 = vmax.f32 %v697, 0.0
  %v762 = vmax.f32 %v698, 0.0
  %v763 = vmax.f32 %v699, 0.0
  %v764 = vmax.f32 %v700, 0.0
  %v765 = vmax.f32 %v701, 0.0
  %v766 = vmax.f32 %v702, 0.0
  %v767 = vmax.f32 %v703, 0.0
  %v768 = vmax.f32 %v704, 0.0
  %v769 = vmax.f32 %v705, 0.0
  %v770 = vmax.f32 %v706, 0.0
  %v771 = vmax.f32 %v707, 0.0
  %v772 = vmax.f32 %v708, 0.0
  %v773 = vmax.f32 %v709, 0.0
  %v774 = vmax.f32 %v710, 0.0
  %v775 = vmax.f32 %v711, 0.0
  %v776 = vmax.f32 %v712, 0.0
  %v777 = vmax.f32 %v713, 0.0
  %v778 = vmax.f32 %v714, 0.0
  %v779 = vmax.f32 %v715, 0.0
  %v780 = vmax.f32 %v716, 0.0
  %v781 = vmax.f32 %v717, 0.0
  %v782 = vmax.f32 %v718, 0.0
  %v783 = vmax.f32 %v719, 0.0
  %v784 = vmax.f32 %v720, 0.0
  %v785 = vmax.f32 %v721, 0.0
  %v786 = vmax.f32 %v722, 0.0
  %v787 = vmax.f32 %v723, 0.0
  %v788 = vmax.f32 %v724, 0.0
  %v789 = vmax.f32 %v725, 0.0
  %v790 = vmax.f32 %v726, 0.0
  %v791 = vld [vmem:[%s3] sm:$0xff]
  %v792 = vld [vmem:[%s3 + $0x8] sm:$0xff]
  %v793 = vld [vmem:[%s3 + $0x10] sm:$0xff]
  %v794 = vld [vmem:[%s3 + $0x18] sm:$0xff]
  %v795 = vld [vmem:[%s3 + $0x20] sm:$0xff]
  %v796 = vld [vmem:[%s3 + $0x28] sm:$0xff]
  %v797 = vld [vmem:[%s3 + $0x30] sm:$0xff]
  %v798 = vld [vmem:[%s3 + $0x38] sm:$0xff]
  %v799 = vld [vmem:[%s3 + $0x40] sm:$0xff]
  %v800 = vld [vmem:[%s3 + $0x48] sm:$0xff]
  %v801 = vld [vmem:[%s3 + $0x50] sm:$0xff]
  %v802 = vld [vmem:[%s3 + $0x58] sm:$0xff]
  %v803 = vld [vmem:[%s3 + $0x60] sm:$0xff]
  %v804 = vld [vmem:[%s3 + $0x68] sm:$0xff]
  %v805 = vld [vmem:[%s3 + $0x70] sm:$0xff]
  %v806 = vld [vmem:[%s3 + $0x78] sm:$0xff]
  %v807 = vld [vmem:[%s3 + $0x80] sm:$0xff]
  %v808 = vld [vmem:[%s3 + $0x88] sm:$0xff]
  %v809 = vld [vmem:[%s3 + $0x90] sm:$0xff]
  %v810 = vld [vmem:[%s3 + $0x98] sm:$0xff]
  %v811 = vld [vmem:[%s3 + $0xa0] sm:$0xff]
  %v812 = vld [vmem:[%s3 + $0xa8] sm:$0xff]
  %v813 = vld [vmem:[%s3 + $0xb0] sm:$0xff]
  %v814 = vld [vmem:[%s3 + $0xb8] sm:$0xff]
  %v815 = vld [vmem:[%s3 + $0xc0] sm:$0xff]
  %v816 = vld [vmem:[%s3 + $0xc8] sm:$0xff]
  %v817 = vld [vmem:[%s3 + $0xd0] sm:$0xff]
  %v818 = vld [vmem:[%s3 + $0xd8] sm:$0xff]
  %v819 = vld [vmem:[%s3 + $0xe0] sm:$0xff]
  %v820 = vld [vmem:[%s3 + $0xe8] sm:$0xff]
  %v821 = vld [vmem:[%s3 + $0xf0] sm:$0xff]
  %v822 = vld [vmem:[%s3 + $0xf8] sm:$0xff]
  %v823 = vld [vmem:[%s3 + $0x100] sm:$0xff]
  %v824 = vld [vmem:[%s3 + $0x108] sm:$0xff]
  %v825 = vld [vmem:[%s3 + $0x110] sm:$0xff]
  %v826 = vld [vmem:[%s3 + $0x118] sm:$0xff]
  %827 = vmatprep.subr.mxu0 0.0
  %828 = vmatpush1.msra.mxu0 %v727
  %829 = vmatprep.subr.mxu0 0.0
  %830 = vmatpush1.msra.mxu0 %v728
  %831 = vmatprep.subr.mxu0 0.0
  %832 = vmatpush1.msra.mxu0 %v729
  %833 = vmatprep.subr.mxu0 0.0
  %834 = vmatpush1.msra.mxu0 %v730
  %835 = vmatprep.subr.mxu0 0.0
  %836 = vmatpush1.msra.mxu0 %v731
  %837 = vmatprep.subr.mxu0 0.0
  %838 = vmatpush1.msra.mxu0 %v732
  %839 = vmatprep.subr.mxu0 0.0
  %840 = vmatpush1.msra.mxu0 %v733
  %841 = vmatprep.subr.mxu0 0.0
  %842 = vmatpush1.msra.mxu0 %v734
  %843 = vmatprep.subr.mxu0 0.0
  %844 = vmatpush1.msra.mxu0 %v735
  %845 = vmatprep.subr.mxu0 0.0
  %846 = vmatpush1.msra.mxu0 %v736
  %847 = vmatprep.subr.mxu0 0.0
  %848 = vmatpush1.msra.mxu0 %v737
  %849 = vmatprep.subr.mxu0 0.0
  %850 = vmatpush1.msra.mxu0 %v738
  %851 = vmatprep.subr.mxu0 0.0
  %852 = vmatpush1.msra.mxu0 %v739
  %853 = vmatprep.subr.mxu0 0.0
  %854 = vmatpush1.msra.mxu0 %v740
  %855 = vmatprep.subr.mxu0 0.0
  %856 = vmatpush1.msra.mxu0 %v741
  %857 = vmatprep.subr.mxu0 0.0
  %858 = vmatpush1.msra.mxu0 %v742
  %859 = vmatprep.subr.mxu0 0.0
  %860 = vmatpush1.msra.mxu0 %v743
  %861 = vmatprep.subr.mxu0 0.0
  %862 = vmatpush1.msra.mxu0 %v744
  %863 = vmatprep.subr.mxu0 0.0
  %864 = vmatpush1.msra.mxu0 %v745
  %865 = vmatprep.subr.mxu0 0.0
  %866 = vmatpush1.msra.mxu0 %v746
  %867 = vmatprep.subr.mxu0 0.0
  %868 = vmatpush1.msra.mxu0 %v747
  %869 = vmatprep.subr.mxu0 0.0
  %870 = vmatpush1.msra.mxu0 %v748
  %871 = vmatprep.subr.mxu0 0.0
  %872 = vmatpush1.msra.mxu0 %v749
  %873 = vmatprep.subr.mxu0 0.0
  %874 = vmatpush1.msra.mxu0 %v750
  %875 = vmatprep.subr.mxu0 0.0
  %876 = vmatpush1.msra.mxu0 %v751
  %877 = vmatprep.subr.mxu0 0.0
  %878 = vmatpush1.msra.mxu0 %v752
  %879 = vmatprep.subr.mxu0 0.0
  %880 = vmatpush1.msra.mxu0 %v753
  %881 = vmatprep.subr.mxu0 0.0
  %882 = vmatpush1.msra.mxu0 %v754
  %883 = vmatprep.subr.mxu0 0.0
  %884 = vmatpush1.msra.mxu0 %v755
  %885 = vmatprep.subr.mxu0 0.0
  %886 = vmatpush1.msra.mxu0 %v756
  %887 = vmatprep.subr.mxu0 0.0
  %888 = vmatpush1.msra.mxu0 %v757
  %889 = vmatprep.subr.mxu0 0.0
  %890 = vmatpush1.msra.mxu0 %v758
  %891 = vmatprep.mubr.f32.mxu0 %v792
  %892 = vmatmul.mubr.f32.gmra.mrb[0].mxu0 %v791
  %v893 = vpop.f32.mrb[0].mxu0
  %v894 = vadd.f32 0.0, %v893
  %v895 = vpop.f32.mrb[0].mxu0
  %896 = vmatprep.mubr.f32.mxu0 %v796
  %897 = vmatmul.mubr.f32.gmra.mrb[0].mxu0 %v795
  %v898 = vpop.f32.mrb[0].mxu0
  %v899 = vadd.f32 0.0, %v898
  %v900 = vpop.f32.mrb[0].mxu0
  %901 = vmatprep.mubr.f32.mxu0 %v800
  %902 = vmatmul.mubr.f32.gmra.mrb[0].mxu0 %v799
  %v903 = vpop.f32.mrb[0].mxu0
  %v904 = vadd.f32 0.0, %v903
  %v905 = vpop.f32.mrb[0].mxu0
  %906 = vmatprep.mubr.f32.mxu0 %v804
  %907 = vmatmul.mubr.f32.gmra.mrb[0].mxu0 %v803
  %v908 = vpop.f32.mrb[0].mxu0
  %v909 = vadd.f32 0.0, %v908
  %v910 = vpop.f32.mrb[0].mxu0
  %911 = vmatprep.mubr.f32.mxu0 %v808
  %912 = vmatmul.mubr.f32.gmra.mrb[0].mxu0 %v807
  %v913 = vpop.f32.mrb[0].mxu0
  %v914 = vadd.f32 0.0, %v913
  %v915 = vpop.f32.mrb[0].mxu0
  %916 = vmatprep.mubr.f32.mxu0 %v812
  %917 = vmatmul.mubr.f32.gmra.mrb[0].mxu0 %v811
  %v918 = vpop.f32.mrb[0].mxu0
  %v919 = vadd.f32 0.0, %v918
  %v920 = vpop.f32.mrb[0].mxu0
  %921 = vmatprep.mubr.f32.mxu0 %v816
  %922 = vmatmul.mubr.f32.gmra.mrb[0].mxu0 %v815
  %v923 = vpop.f32.mrb[0].mxu0
  %v924 = vadd.f32 0.0, %v923
  %v925 = vpop.f32.mrb[0].mxu0
  %926 = vmatprep.mubr.f32.mxu0 %v820
  %927 = vmatmul.mubr.f32.gmra.mrb[0].mxu0 %v819
  %v928 = vpop.f32.mrb[0].mxu0
  %v929 = vadd.f32 0.0, %v928
  %v930 = vpop.f32.mrb[0].mxu0
  %931 = vmatprep.mubr.f32.mxu0 %v824
  %932 = vmatmul.mubr.f32.gmra.mrb[0].mxu0 %v823
  %v933 = vpop.f32.mrb[0].mxu0
  %v934 = vadd.f32 0.0, %v933
  %v935 = vpop.f32.mrb[0].mxu0
  %936 = vdwg.mxu0
  %937 = vmatprep.subr.mxu0 0.0
  %938 = vmatpush1.msra.mxu0 %v759
  %939 = vmatprep.subr.mxu0 0.0
  %940 = vmatpush1.msra.mxu0 %v760
  %941 = vmatprep.subr.mxu0 0.0
  %942 = vmatpush1.msra.mxu0 %v761
  %943 = vmatprep.subr.mxu0 0.0
  %944 = vmatpush1.msra.mxu0 %v762
  %945 = vmatprep.subr.mxu0 0.0
  %946 = vmatpush1.msra.mxu0 %v763
  %947 = vmatprep.subr.mxu0 0.0
  %948 = vmatpush1.msra.mxu0 %v764
  %949 = vmatprep.subr.mxu0 0.0
  %950 = vmatpush1.msra.mxu0 %v765
  %951 = vmatprep.subr.mxu0 0.0
  %952 = vmatpush1.msra.mxu0 %v766
  %953 = vmatprep.subr.mxu0 0.0
  %954 = vmatpush1.msra.mxu0 %v767
  %955 = vmatprep.subr.mxu0 0.0
  %956 = vmatpush1.msra.mxu0 %v768
  %957 = vmatprep.subr.mxu0 0.0
  %958 = vmatpush1.msra.mxu0 %v769
  %959 = vmatprep.subr.mxu0 0.0
  %960 = vmatpush1.msra.mxu0 %v770
  %961 = vmatprep.subr.mxu0 0.0
  %962 = vmatpush1.msra.mxu0 %v771
  %963 = vmatprep.subr.mxu0 0.0
  %964 = vmatpush1.msra.mxu0 %v772
  %965 = vmatprep.subr.mxu0 0.0
  %966 = vmatpush1.msra.mxu0 %v773
  %967 = vmatprep.subr.mxu0 0.0
  %968 = vmatpush1.msra.mxu0 %v774
  %969 = vmatprep.subr.mxu0 0.0
  %970 = vmatpush1.msra.mxu0 %v775
  %971 = vmatprep.subr.mxu0 0.0
  %972 = vmatpush1.msra.mxu0 %v776
  %973 = vmatprep.subr.mxu0 0.0
  %974 = vmatpush1.msra.mxu0 %v777
  %975 = vmatprep.subr.mxu0 0.0
  %976 = vmatpush1.msra.mxu0 %v778
  %977 = vmatprep.subr.mxu0 0.0
  %978 = vmatpush1.msra.mxu0 %v779
  %979 = vmatprep.subr.mxu0 0.0
  %980 = vmatpush1.msra.mxu0 %v780
  %981 = vmatprep.subr.mxu0 0.0
  %982 = vmatpush1.msra.mxu0 %v781
  %983 = vmatprep.subr.mxu0 0.0
  %984 = vmatpush1.msra.mxu0 %v782
  %985 = vmatprep.subr.mxu0 0.0
  %986 = vmatpush1.msra.mxu0 %v783
  %987 = vmatprep.subr.mxu0 0.0
  %988 = vmatpush1.msra.mxu0 %v784
  %989 = vmatprep.subr.mxu0 0.0
  %990 = vmatpush1.msra.mxu0 %v785
  %991 = vmatprep.subr.mxu0 0.0
  %992 = vmatpush1.msra.mxu0 %v786
  %993 = vmatprep.subr.mxu0 0.0
  %994 = vmatpush1.msra.mxu0 %v787
  %995 = vmatprep.subr.mxu0 0.0
  %996 = vmatpush1.msra.mxu0 %v788
  %997 = vmatprep.subr.mxu0 0.0
  %998 = vmatpush1.msra.mxu0 %v789
  %999 = vmatprep.subr.mxu0 0.0
  %1000 = vmatpush1.msra.mxu0 %v790
  %1001 = vmatprep.mubr.f32.mxu0 %v794
  %1002 = vmatmul.mubr.f32.gmra.mrb[0].mxu0 %v793
  %v1003 = vpop.f32.mrb[0].mxu0
  %v1004 = vadd.f32 %v894, %v1003
  %v1005 = vpop.f32.mrb[0].mxu0
  %1006 = vmatprep.mubr.f32.mxu0 %v798
  %1007 = vmatmul.mubr.f32.gmra.mrb[0].mxu0 %v797
  %v1008 = vpop.f32.mrb[0].mxu0
  %v1009 = vadd.f32 %v899, %v1008
  %v1010 = vpop.f32.mrb[0].mxu0
  %1011 = vmatprep.mubr.f32.mxu0 %v802
  %1012 = vmatmul.mubr.f32.gmra.mrb[0].mxu0 %v801
  %v1013 = vpop.f32.mrb[0].mxu0
  %v1014 = vadd.f32 %v904, %v1013
  %v1015 = vpop.f32.mrb[0].mxu0
  %1016 = vmatprep.mubr.f32.mxu0 %v806
  %1017 = vmatmul.mubr.f32.gmra.mrb[0].mxu0 %v805
  %v1018 = vpop.f32.mrb[0].mxu0
  %v1019 = vadd.f32 %v909, %v1018
  %v1020 = vpop.f32.mrb[0].mxu0
  %1021 = vmatprep.mubr.f32.mxu0 %v810
  %1022 = vmatmul.mubr.f32.gmra.mrb[0].mxu0 %v809
  %v1023 = vpop.f32.mrb[0].mxu0
  %v1024 = vadd.f32 %v914, %v1023
  %v1025 = vpop.f32.mrb[0].mxu0
  %1026 = vmatprep.mubr.f32.mxu0 %v814
  %1027 = vmatmul.mubr.f32.gmra.mrb[0].mxu0 %v813
  %v1028 = vpop.f32.mrb[0].mxu0
  %v1029 = vadd.f32 %v919, %v1028
  %v1030 = vpop.f32.mrb[0].mxu0
  %1031 = vmatprep.mubr.f32.mxu0 %v818
  %1032 = vmatmul.mubr.f32.gmra.mrb[0].mxu0 %v817
  %v1033 = vpop.f32.mrb[0].mxu0
  %v1034 = vadd.f32 %v924, %v1033
  %v1035 = vpop.f32.mrb[0].mxu0
  %1036 = vmatprep.mubr.f32.mxu0 %v822
  %1037 = vmatmul.mubr.f32.gmra.mrb[0].mxu0 %v821
  %v1038 = vpop.f32.mrb[0].mxu0
  %v1039 = vadd.f32 %v929, %v1038
  %v1040 = vpop.f32.mrb[0].mxu0
  %1041 = vmatprep.mubr.f32.mxu0 %v826
  %1042 = vmatmul.mubr.f32.gmra.mrb[0].mxu0 %v825
  %v1043 = vpop.f32.mrb[0].mxu0
  %v1044 = vadd.f32 %v934, %v1043
  %v1045 = vpop.f32.mrb[0].mxu0
  %1046 = vdwg.mxu0
  %v1047 = vld [vmem:[%s4] sm:$0xff]
  %v1048 = vld [vmem:[%s4 + $0x8] sm:$0xff]
  %v1049 = vld [vmem:[%s4 + $0x10] sm:$0xff]
  %v1050 = vld [vmem:[%s4 + $0x18] sm:$0xff]
  %s1051 = scalar_lea.vmem %s3, 288
  %v1052 = vld [vmem:[%s1051] sm:$0xff]
  %v1053 = vld [vmem:[%s1051 + $0x8] sm:$0xff]
  %v1054 = vld [vmem:[%s1051 + $0x10] sm:$0xff]
  %v1055 = vld [vmem:[%s1051 + $0x18] sm:$0xff]
  %v1056 = vld [vmem:[%s1051 + $0x20] sm:$0xff]
  %v1057 = vld [vmem:[%s1051 + $0x28] sm:$0xff]
  %v1058 = vld [vmem:[%s1051 + $0x30] sm:$0xff]
  %v1059 = vld [vmem:[%s1051 + $0x38] sm:$0xff]
  %v1060 = vld [vmem:[%s1051 + $0x40] sm:$0xff]
  %v1061 = vld [vmem:[%s1051 + $0x48] sm:$0xff]
  %v1062 = vld [vmem:[%s1051 + $0x50] sm:$0xff]
  %v1063 = vld [vmem:[%s1051 + $0x58] sm:$0xff]
  %v1064 = vld [vmem:[%s1051 + $0x60] sm:$0xff]
  %v1065 = vld [vmem:[%s1051 + $0x68] sm:$0xff]
  %v1066 = vld [vmem:[%s1051 + $0x70] sm:$0xff]
  %v1067 = vld [vmem:[%s1051 + $0x78] sm:$0xff]
  %v1068 = vld [vmem:[%s1051 + $0x80] sm:$0xff]
  %v1069 = vld [vmem:[%s1051 + $0x88] sm:$0xff]
  %v1070 = vld [vmem:[%s1051 + $0x90] sm:$0xff]
  %v1071 = vld [vmem:[%s1051 + $0x98] sm:$0xff]
  %v1072 = vld [vmem:[%s1051 + $0xa0] sm:$0xff]
  %v1073 = vld [vmem:[%s1051 + $0xa8] sm:$0xff]
  %v1074 = vld [vmem:[%s1051 + $0xb0] sm:$0xff]
  %v1075 = vld [vmem:[%s1051 + $0xb8] sm:$0xff]
  %v1076 = vld [vmem:[%s1051 + $0xc0] sm:$0xff]
  %v1077 = vld [vmem:[%s1051 + $0xc8] sm:$0xff]
  %v1078 = vld [vmem:[%s1051 + $0xd0] sm:$0xff]
  %v1079 = vld [vmem:[%s1051 + $0xd8] sm:$0xff]
  %v1080 = vld [vmem:[%s1051 + $0xe0] sm:$0xff]
  %v1081 = vld [vmem:[%s1051 + $0xe8] sm:$0xff]
  %v1082 = vld [vmem:[%s1051 + $0xf0] sm:$0xff]
  %v1083 = vld [vmem:[%s1051 + $0xf8] sm:$0xff]
  %v1084 = vld [vmem:[%s1051 + $0x100] sm:$0xff]
  %v1085 = vld [vmem:[%s1051 + $0x108] sm:$0xff]
  %v1086 = vld [vmem:[%s1051 + $0x110] sm:$0xff]
  %v1087 = vld [vmem:[%s1051 + $0x118] sm:$0xff]
  %1088 = vmatprep.subr.mxu0 0.0
  %1089 = vmatpush1.msra.mxu0 %v727
  %1090 = vmatprep.subr.mxu0 0.0
  %1091 = vmatpush1.msra.mxu0 %v728
  %1092 = vmatprep.subr.mxu0 0.0
  %1093 = vmatpush1.msra.mxu0 %v729
  %1094 = vmatprep.subr.mxu0 0.0
  %1095 = vmatpush1.msra.mxu0 %v730
  %1096 = vmatprep.subr.mxu0 0.0
  %1097 = vmatpush1.msra.mxu0 %v731
  %1098 = vmatprep.subr.mxu0 0.0
  %1099 = vmatpush1.msra.mxu0 %v732
  %1100 = vmatprep.subr.mxu0 0.0
  %1101 = vmatpush1.msra.mxu0 %v733
  %1102 = vmatprep.subr.mxu0 0.0
  %1103 = vmatpush1.msra.mxu0 %v734
  %1104 = vmatprep.subr.mxu0 0.0
  %1105 = vmatpush1.msra.mxu0 %v735
  %1106 = vmatprep.subr.mxu0 0.0
  %1107 = vmatpush1.msra.mxu0 %v736
  %1108 = vmatprep.subr.mxu0 0.0
  %1109 = vmatpush1.msra.mxu0 %v737
  %1110 = vmatprep.subr.mxu0 0.0
  %1111 = vmatpush1.msra.mxu0 %v738
  %1112 = vmatprep.subr.mxu0 0.0
  %1113 = vmatpush1.msra.mxu0 %v739
  %1114 = vmatprep.subr.mxu0 0.0
  %1115 = vmatpush1.msra.mxu0 %v740
  %1116 = vmatprep.subr.mxu0 0.0
  %1117 = vmatpush1.msra.mxu0 %v741
  %1118 = vmatprep.subr.mxu0 0.0
  %1119 = vmatpush1.msra.mxu0 %v742
  %1120 = vmatprep.subr.mxu0 0.0
  %1121 = vmatpush1.msra.mxu0 %v743
  %1122 = vmatprep.subr.mxu0 0.0
  %1123 = vmatpush1.msra.mxu0 %v744
  %1124 = vmatprep.subr.mxu0 0.0
  %1125 = vmatpush1.msra.mxu0 %v745
  %1126 = vmatprep.subr.mxu0 0.0
  %1127 = vmatpush1.msra.mxu0 %v746
  %1128 = vmatprep.subr.mxu0 0.0
  %1129 = vmatpush1.msra.mxu0 %v747
  %1130 = vmatprep.subr.mxu0 0.0
  %1131 = vmatpush1.msra.mxu0 %v748
  %1132 = vmatprep.subr.mxu0 0.0
  %1133 = vmatpush1.msra.mxu0 %v749
  %1134 = vmatprep.subr.mxu0 0.0
  %1135 = vmatpush1.msra.mxu0 %v750
  %1136 = vmatprep.subr.mxu0 0.0
  %1137 = vmatpush1.msra.mxu0 %v751
  %1138 = vmatprep.subr.mxu0 0.0
  %1139 = vmatpush1.msra.mxu0 %v752
  %1140 = vmatprep.subr.mxu0 0.0
  %1141 = vmatpush1.msra.mxu0 %v753
  %1142 = vmatprep.subr.mxu0 0.0
  %1143 = vmatpush1.msra.mxu0 %v754
  %1144 = vmatprep.subr.mxu0 0.0
  %1145 = vmatpush1.msra.mxu0 %v755
  %1146 = vmatprep.subr.mxu0 0.0
  %1147 = vmatpush1.msra.mxu0 %v756
  %1148 = vmatprep.subr.mxu0 0.0
  %1149 = vmatpush1.msra.mxu0 %v757
  %1150 = vmatprep.subr.mxu0 0.0
  %1151 = vmatpush1.msra.mxu0 %v758
  %1152 = vmatprep.mubr.f32.mxu0 %v1053
  %1153 = vmatmul.mubr.f32.gmra.mrb[0].mxu0 %v1052
  %v1154 = vpop.f32.mrb[0].mxu0
  %v1155 = vadd.f32 0.0, %v1154
  %v1156 = vpop.f32.mrb[0].mxu0
  %1157 = vmatprep.mubr.f32.mxu0 %v1057
  %1158 = vmatmul.mubr.f32.gmra.mrb[0].mxu0 %v1056
  %v1159 = vpop.f32.mrb[0].mxu0
  %v1160 = vadd.f32 0.0, %v1159
  %v1161 = vpop.f32.mrb[0].mxu0
  %1162 = vmatprep.mubr.f32.mxu0 %v1061
  %1163 = vmatmul.mubr.f32.gmra.mrb[0].mxu0 %v1060
  %v1164 = vpop.f32.mrb[0].mxu0
  %v1165 = vadd.f32 0.0, %v1164
  %v1166 = vpop.f32.mrb[0].mxu0
  %1167 = vmatprep.mubr.f32.mxu0 %v1065
  %1168 = vmatmul.mubr.f32.gmra.mrb[0].mxu0 %v1064
  %v1169 = vpop.f32.mrb[0].mxu0
  %v1170 = vadd.f32 0.0, %v1169
  %v1171 = vpop.f32.mrb[0].mxu0
  %1172 = vmatprep.mubr.f32.mxu0 %v1069
  %1173 = vmatmul.mubr.f32.gmra.mrb[0].mxu0 %v1068
  %v1174 = vpop.f32.mrb[0].mxu0
  %v1175 = vadd.f32 0.0, %v1174
  %v1176 = vpop.f32.mrb[0].mxu0
  %1177 = vmatprep.mubr.f32.mxu0 %v1073
  %1178 = vmatmul.mubr.f32.gmra.mrb[0].mxu0 %v1072
  %v1179 = vpop.f32.mrb[0].mxu0
  %v1180 = vadd.f32 0.0, %v1179
  %v1181 = vpop.f32.mrb[0].mxu0
  %1182 = vmatprep.mubr.f32.mxu0 %v1077
  %1183 = vmatmul.mubr.f32.gmra.mrb[0].mxu0 %v1076
  %v1184 = vpop.f32.mrb[0].mxu0
  %v1185 = vadd.f32 0.0, %v1184
  %v1186 = vpop.f32.mrb[0].mxu0
  %1187 = vmatprep.mubr.f32.mxu0 %v1081
  %1188 = vmatmul.mubr.f32.gmra.mrb[0].mxu0 %v1080
  %v1189 = vpop.f32.mrb[0].mxu0
  %v1190 = vadd.f32 0.0, %v1189
  %v1191 = vpop.f32.mrb[0].mxu0
  %1192 = vmatprep.mubr.f32.mxu0 %v1085
  %1193 = vmatmul.mubr.f32.gmra.mrb[0].mxu0 %v1084
  %v1194 = vpop.f32.mrb[0].mxu0
  %v1195 = vadd.f32 0.0, %v1194
  %v1196 = vpop.f32.mrb[0].mxu0
  %1197 = vdwg.mxu0
  %1198 = vmatprep.subr.mxu0 0.0
  %1199 = vmatpush1.msra.mxu0 %v759
  %1200 = vmatprep.subr.mxu0 0.0
  %1201 = vmatpush1.msra.mxu0 %v760
  %1202 = vmatprep.subr.mxu0 0.0
  %1203 = vmatpush1.msra.mxu0 %v761
  %1204 = vmatprep.subr.mxu0 0.0
  %1205 = vmatpush1.msra.mxu0 %v762
  %1206 = vmatprep.subr.mxu0 0.0
  %1207 = vmatpush1.msra.mxu0 %v763
  %1208 = vmatprep.subr.mxu0 0.0
  %1209 = vmatpush1.msra.mxu0 %v764
  %1210 = vmatprep.subr.mxu0 0.0
  %1211 = vmatpush1.msra.mxu0 %v765
  %1212 = vmatprep.subr.mxu0 0.0
  %1213 = vmatpush1.msra.mxu0 %v766
  %1214 = vmatprep.subr.mxu0 0.0
  %1215 = vmatpush1.msra.mxu0 %v767
  %1216 = vmatprep.subr.mxu0 0.0
  %1217 = vmatpush1.msra.mxu0 %v768
  %1218 = vmatprep.subr.mxu0 0.0
  %1219 = vmatpush1.msra.mxu0 %v769
  %1220 = vmatprep.subr.mxu0 0.0
  %1221 = vmatpush1.msra.mxu0 %v770
  %1222 = vmatprep.subr.mxu0 0.0
  %1223 = vmatpush1.msra.mxu0 %v771
  %1224 = vmatprep.subr.mxu0 0.0
  %1225 = vmatpush1.msra.mxu0 %v772
  %1226 = vmatprep.subr.mxu0 0.0
  %1227 = vmatpush1.msra.mxu0 %v773
  %1228 = vmatprep.subr.mxu0 0.0
  %1229 = vmatpush1.msra.mxu0 %v774
  %1230 = vmatprep.subr.mxu0 0.0
  %1231 = vmatpush1.msra.mxu0 %v775
  %1232 = vmatprep.subr.mxu0 0.0
  %1233 = vmatpush1.msra.mxu0 %v776
  %1234 = vmatprep.subr.mxu0 0.0
  %1235 = vmatpush1.msra.mxu0 %v777
  %1236 = vmatprep.subr.mxu0 0.0
  %1237 = vmatpush1.msra.mxu0 %v778
  %1238 = vmatprep.subr.mxu0 0.0
  %1239 = vmatpush1.msra.mxu0 %v779
  %1240 = vmatprep.subr.mxu0 0.0
  %1241 = vmatpush1.msra.mxu0 %v780
  %1242 = vmatprep.subr.mxu0 0.0
  %1243 = vmatpush1.msra.mxu0 %v781
  %1244 = vmatprep.subr.mxu0 0.0
  %1245 = vmatpush1.msra.mxu0 %v782
  %1246 = vmatprep.subr.mxu0 0.0
  %1247 = vmatpush1.msra.mxu0 %v783
  %1248 = vmatprep.subr.mxu0 0.0
  %1249 = vmatpush1.msra.mxu0 %v784
  %1250 = vmatprep.subr.mxu0 0.0
  %1251 = vmatpush1.msra.mxu0 %v785
  %1252 = vmatprep.subr.mxu0 0.0
  %1253 = vmatpush1.msra.mxu0 %v786
  %1254 = vmatprep.subr.mxu0 0.0
  %1255 = vmatpush1.msra.mxu0 %v787
  %1256 = vmatprep.subr.mxu0 0.0
  %1257 = vmatpush1.msra.mxu0 %v788
  %1258 = vmatprep.subr.mxu0 0.0
  %1259 = vmatpush1.msra.mxu0 %v789
  %1260 = vmatprep.subr.mxu0 0.0
  %1261 = vmatpush1.msra.mxu0 %v790
  %1262 = vmatprep.mubr.f32.mxu0 %v1055
  %1263 = vmatmul.mubr.f32.gmra.mrb[0].mxu0 %v1054
  %v1264 = vpop.f32.mrb[0].mxu0
  %v1265 = vadd.f32 %v1155, %v1264
  %v1266 = vpop.f32.mrb[0].mxu0
  %1267 = vmatprep.mubr.f32.mxu0 %v1059
  %1268 = vmatmul.mubr.f32.gmra.mrb[0].mxu0 %v1058
  %v1269 = vpop.f32.mrb[0].mxu0
  %v1270 = vadd.f32 %v1160, %v1269
  %v1271 = vpop.f32.mrb[0].mxu0
  %1272 = vmatprep.mubr.f32.mxu0 %v1063
  %1273 = vmatmul.mubr.f32.gmra.mrb[0].mxu0 %v1062
  %v1274 = vpop.f32.mrb[0].mxu0
  %v1275 = vadd.f32 %v1165, %v1274
  %v1276 = vpop.f32.mrb[0].mxu0
  %1277 = vmatprep.mubr.f32.mxu0 %v1067
  %1278 = vmatmul.mubr.f32.gmra.mrb[0].mxu0 %v1066
  %v1279 = vpop.f32.mrb[0].mxu0
  %v1280 = vadd.f32 %v1170, %v1279
  %v1281 = vpop.f32.mrb[0].mxu0
  %1282 = vmatprep.mubr.f32.mxu0 %v1071
  %1283 = vmatmul.mubr.f32.gmra.mrb[0].mxu0 %v1070
  %v1284 = vpop.f32.mrb[0].mxu0
  %v1285 = vadd.f32 %v1175, %v1284
  %v1286 = vpop.f32.mrb[0].mxu0
  %1287 = vmatprep.mubr.f32.mxu0 %v1075
  %1288 = vmatmul.mubr.f32.gmra.mrb[0].mxu0 %v1074
  %v1289 = vpop.f32.mrb[0].mxu0
  %v1290 = vadd.f32 %v1180, %v1289
  %v1291 = vpop.f32.mrb[0].mxu0
  %1292 = vmatprep.mubr.f32.mxu0 %v1079
  %1293 = vmatmul.mubr.f32.gmra.mrb[0].mxu0 %v1078
  %v1294 = vpop.f32.mrb[0].mxu0
  %v1295 = vadd.f32 %v1185, %v1294
  %v1296 = vpop.f32.mrb[0].mxu0
  %1297 = vmatprep.mubr.f32.mxu0 %v1083
  %1298 = vmatmul.mubr.f32.gmra.mrb[0].mxu0 %v1082
  %v1299 = vpop.f32.mrb[0].mxu0
  %v1300 = vadd.f32 %v1190, %v1299
  %v1301 = vpop.f32.mrb[0].mxu0
  %1302 = vmatprep.mubr.f32.mxu0 %v1087
  %1303 = vmatmul.mubr.f32.gmra.mrb[0].mxu0 %v1086
  %v1304 = vpop.f32.mrb[0].mxu0
  %v1305 = vadd.f32 %v1195, %v1304
  %v1306 = vpop.f32.mrb[0].mxu0
  %1307 = vdwg.mxu0
  %v1308 = vld [vmem:[%s4 + $0x20] sm:$0xff]
  %v1309 = vld [vmem:[%s4 + $0x28] sm:$0xff]
  %v1310 = vld [vmem:[%s4 + $0x30] sm:$0xff]
  %v1311 = vld [vmem:[%s4 + $0x38] sm:$0xff]
  %vm1312 = vcmask 261120
  %v1314 = vsel %vm1312, %v1265, 0
  %v1317 = vsel %vm1312, %v1270, 0
  %v1320 = vsel %vm1312, %v1275, 0
  %v1323 = vsel %vm1312, %v1280, 0
  %v1326 = vsel %vm1312, %v1285, 0
  %v1329 = vsel %vm1312, %v1290, 0
  %v1332 = vsel %vm1312, %v1295, 0
  %v1335 = vsel %vm1312, %v1300, 0
  %v1338 = vsel %vm1312, %v1305, 0
  %1340 = vmatprep.subr.mxu0 0.0
  %1341 = vmatpush1.msra.mxu0 %v1308
  %1342 = vmatprep.subr.mxu0 0.0
  %1343 = vmatpush1.msra.mxu0 %v1309
  %1344 = vmatprep.subr.mxu0 0.0
  %1345 = vmatpush1.msra.mxu0 %v1310
  %1346 = vmatprep.subr.mxu0 0.0
  %1347 = vmatpush1.msra.mxu0 %v1311
  %1348 = vmatprep.subr.mxu0 0.0
  %1349 = vmatpush1.msra.mxu0 0.0
  %1350 = vmatprep.subr.mxu0 0.0
  %1351 = vmatpush1.msra.mxu0 0.0
  %1352 = vmatprep.subr.mxu0 0.0
  %1353 = vmatpush1.msra.mxu0 0.0
  %1354 = vmatprep.subr.mxu0 0.0
  %1355 = vmatpush1.msra.mxu0 0.0
  %1356 = vmatprep.subr.mxu0 0.0
  %1357 = vmatpush1.msra.mxu0 0.0
  %1358 = vmatprep.subr.mxu0 0.0
  %1359 = vmatpush1.msra.mxu0 0.0
  %1360 = vmatprep.subr.mxu0 0.0
  %1361 = vmatpush1.msra.mxu0 0.0
  %1362 = vmatprep.subr.mxu0 0.0
  %1363 = vmatpush1.msra.mxu0 0.0
  %1364 = vmatprep.subr.mxu0 0.0
  %1365 = vmatpush1.msra.mxu0 0.0
  %1366 = vmatprep.subr.mxu0 0.0
  %1367 = vmatpush1.msra.mxu0 0.0
  %1368 = vmatprep.subr.mxu0 0.0
  %1369 = vmatpush1.msra.mxu0 0.0
  %1370 = vmatprep.subr.mxu0 0.0
  %1371 = vmatpush1.msra.mxu0 0.0
  %1372 = vmatprep.subr.mxu0 0.0
  %1373 = vmatpush1.msra.mxu0 0.0
  %1374 = vmatprep.subr.mxu0 0.0
  %1375 = vmatpush1.msra.mxu0 0.0
  %1376 = vmatprep.subr.mxu0 0.0
  %1377 = vmatpush1.msra.mxu0 0.0
  %1378 = vmatprep.subr.mxu0 0.0
  %1379 = vmatpush1.msra.mxu0 0.0
  %1380 = vmatprep.subr.mxu0 0.0
  %1381 = vmatpush1.msra.mxu0 0.0
  %1382 = vmatprep.subr.mxu0 0.0
  %1383 = vmatpush1.msra.mxu0 0.0
  %1384 = vmatprep.subr.mxu0 0.0
  %1385 = vmatpush1.msra.mxu0 0.0
  %1386 = vmatprep.subr.mxu0 0.0
  %1387 = vmatpush1.msra.mxu0 0.0
  %1388 = vmatprep.subr.mxu0 0.0
  %1389 = vmatpush1.msra.mxu0 0.0
  %1390 = vmatprep.subr.mxu0 0.0
  %1391 = vmatpush1.msra.mxu0 0.0
  %1392 = vmatprep.subr.mxu0 0.0
  %1393 = vmatpush1.msra.mxu0 0.0
  %1394 = vmatprep.subr.mxu0 0.0
  %1395 = vmatpush1.msra.mxu0 0.0
  %1396 = vmatprep.subr.mxu0 0.0
  %1397 = vmatpush1.msra.mxu0 0.0
  %1398 = vmatprep.subr.mxu0 0.0
  %1399 = vmatpush1.msra.mxu0 0.0
  %1400 = vmatprep.subr.mxu0 0.0
  %1401 = vmatpush1.msra.mxu0 0.0
  %1402 = vmatprep.subr.mxu0 0.0
  %1403 = vmatpush1.msra.mxu0 0.0
  %1404 = vmatprep.mubr.f32.mxu0 0.0
  %1405 = vmatmul.mubr.f32.gmra.mrb[0].mxu0 %v1314
  %v1406 = vpop.f32.mrb[0].mxu0
  %v1407 = vadd.f32 0.0, %v1406
  %v1408 = vpop.f32.mrb[0].mxu0
  %1409 = vmatprep.mubr.f32.mxu0 0.0
  %1410 = vmatmul.mubr.f32.gmra.mrb[0].mxu0 %v1317
  %v1411 = vpop.f32.mrb[0].mxu0
  %v1412 = vadd.f32 0.0, %v1411
  %v1413 = vpop.f32.mrb[0].mxu0
  %1414 = vmatprep.mubr.f32.mxu0 0.0
  %1415 = vmatmul.mubr.f32.gmra.mrb[0].mxu0 %v1320
  %v1416 = vpop.f32.mrb[0].mxu0
  %v1417 = vadd.f32 0.0, %v1416
  %v1418 = vpop.f32.mrb[0].mxu0
  %1419 = vmatprep.mubr.f32.mxu0 0.0
  %1420 = vmatmul.mubr.f32.gmra.mrb[0].mxu0 %v1323
  %v1421 = vpop.f32.mrb[0].mxu0
  %v1422 = vadd.f32 0.0, %v1421
  %v1423 = vpop.f32.mrb[0].mxu0
  %1424 = vmatprep.mubr.f32.mxu0 0.0
  %1425 = vmatmul.mubr.f32.gmra.mrb[0].mxu0 %v1326
  %v1426 = vpop.f32.mrb[0].mxu0
  %v1427 = vadd.f32 0.0, %v1426
  %v1428 = vpop.f32.mrb[0].mxu0
  %1429 = vmatprep.mubr.f32.mxu0 0.0
  %1430 = vmatmul.mubr.f32.gmra.mrb[0].mxu0 %v1329
  %v1431 = vpop.f32.mrb[0].mxu0
  %v1432 = vadd.f32 0.0, %v1431
  %v1433 = vpop.f32.mrb[0].mxu0
  %1434 = vmatprep.mubr.f32.mxu0 0.0
  %1435 = vmatmul.mubr.f32.gmra.mrb[0].mxu0 %v1332
  %v1436 = vpop.f32.mrb[0].mxu0
  %v1437 = vadd.f32 0.0, %v1436
  %v1438 = vpop.f32.mrb[0].mxu0
  %1439 = vmatprep.mubr.f32.mxu0 0.0
  %1440 = vmatmul.mubr.f32.gmra.mrb[0].mxu0 %v1335
  %v1441 = vpop.f32.mrb[0].mxu0
  %v1442 = vadd.f32 0.0, %v1441
  %v1443 = vpop.f32.mrb[0].mxu0
  %1444 = vmatprep.mubr.f32.mxu0 0.0
  %1445 = vmatmul.mubr.f32.gmra.mrb[0].mxu0 %v1338
  %v1446 = vpop.f32.mrb[0].mxu0
  %v1447 = vadd.f32 0.0, %v1446
  %v1448 = vpop.f32.mrb[0].mxu0
  %1449 = vdwg.mxu0
  %v1451 = vsel %vm1312, %v1004, 0
  %v1454 = vsel %vm1312, %v1009, 0
  %v1457 = vsel %vm1312, %v1014, 0
  %v1460 = vsel %vm1312, %v1019, 0
  %v1463 = vsel %vm1312, %v1024, 0
  %v1466 = vsel %vm1312, %v1029, 0
  %v1469 = vsel %vm1312, %v1034, 0
  %v1472 = vsel %vm1312, %v1039, 0
  %v1475 = vsel %vm1312, %v1044, 0
  %1477 = vmatprep.subr.mxu0 0.0
  %1478 = vmatpush1.msra.mxu0 %v1047
  %1479 = vmatprep.subr.mxu0 0.0
  %1480 = vmatpush1.msra.mxu0 %v1048
  %1481 = vmatprep.subr.mxu0 0.0
  %1482 = vmatpush1.msra.mxu0 %v1049
  %1483 = vmatprep.subr.mxu0 0.0
  %1484 = vmatpush1.msra.mxu0 %v1050
  %1485 = vmatprep.subr.mxu0 0.0
  %1486 = vmatpush1.msra.mxu0 0.0
  %1487 = vmatprep.subr.mxu0 0.0
  %1488 = vmatpush1.msra.mxu0 0.0
  %1489 = vmatprep.subr.mxu0 0.0
  %1490 = vmatpush1.msra.mxu0 0.0
  %1491 = vmatprep.subr.mxu0 0.0
  %1492 = vmatpush1.msra.mxu0 0.0
  %1493 = vmatprep.subr.mxu0 0.0
  %1494 = vmatpush1.msra.mxu0 0.0
  %1495 = vmatprep.subr.mxu0 0.0
  %1496 = vmatpush1.msra.mxu0 0.0
  %1497 = vmatprep.subr.mxu0 0.0
  %1498 = vmatpush1.msra.mxu0 0.0
  %1499 = vmatprep.subr.mxu0 0.0
  %1500 = vmatpush1.msra.mxu0 0.0
  %1501 = vmatprep.subr.mxu0 0.0
  %1502 = vmatpush1.msra.mxu0 0.0
  %1503 = vmatprep.subr.mxu0 0.0
  %1504 = vmatpush1.msra.mxu0 0.0
  %1505 = vmatprep.subr.mxu0 0.0
  %1506 = vmatpush1.msra.mxu0 0.0
  %1507 = vmatprep.subr.mxu0 0.0
  %1508 = vmatpush1.msra.mxu0 0.0
  %1509 = vmatprep.subr.mxu0 0.0
  %1510 = vmatpush1.msra.mxu0 0.0
  %1511 = vmatprep.subr.mxu0 0.0
  %1512 = vmatpush1.msra.mxu0 0.0
  %1513 = vmatprep.subr.mxu0 0.0
  %1514 = vmatpush1.msra.mxu0 0.0
  %1515 = vmatprep.subr.mxu0 0.0
  %1516 = vmatpush1.msra.mxu0 0.0
  %1517 = vmatprep.subr.mxu0 0.0
  %1518 = vmatpush1.msra.mxu0 0.0
  %1519 = vmatprep.subr.mxu0 0.0
  %1520 = vmatpush1.msra.mxu0 0.0
  %1521 = vmatprep.subr.mxu0 0.0
  %1522 = vmatpush1.msra.mxu0 0.0
  %1523 = vmatprep.subr.mxu0 0.0
  %1524 = vmatpush1.msra.mxu0 0.0
  %1525 = vmatprep.subr.mxu0 0.0
  %1526 = vmatpush1.msra.mxu0 0.0
  %1527 = vmatprep.subr.mxu0 0.0
  %1528 = vmatpush1.msra.mxu0 0.0
  %1529 = vmatprep.subr.mxu0 0.0
  %1530 = vmatpush1.msra.mxu0 0.0
  %1531 = vmatprep.subr.mxu0 0.0
  %1532 = vmatpush1.msra.mxu0 0.0
  %1533 = vmatprep.subr.mxu0 0.0
  %1534 = vmatpush1.msra.mxu0 0.0
  %1535 = vmatprep.subr.mxu0 0.0
  %1536 = vmatpush1.msra.mxu0 0.0
  %1537 = vmatprep.subr.mxu0 0.0
  %1538 = vmatpush1.msra.mxu0 0.0
  %1539 = vmatprep.subr.mxu0 0.0
  %1540 = vmatpush1.msra.mxu0 0.0
  %1541 = vmatprep.mubr.f32.mxu0 0.0
  %1542 = vmatmul.mubr.f32.gmra.mrb[0].mxu0 %v1451
  %v1543 = vpop.f32.mrb[0].mxu0
  %v1544 = vadd.f32 %v1407, %v1543
  %v1545 = vpop.f32.mrb[0].mxu0
  %1546 = vmatprep.mubr.f32.mxu0 0.0
  %1547 = vmatmul.mubr.f32.gmra.mrb[0].mxu0 %v1454
  %v1548 = vpop.f32.mrb[0].mxu0
  %v1549 = vadd.f32 %v1412, %v1548
  %v1550 = vpop.f32.mrb[0].mxu0
  %1551 = vmatprep.mubr.f32.mxu0 0.0
  %1552 = vmatmul.mubr.f32.gmra.mrb[0].mxu0 %v1457
  %v1553 = vpop.f32.mrb[0].mxu0
  %v1554 = vadd.f32 %v1417, %v1553
  %v1555 = vpop.f32.mrb[0].mxu0
  %1556 = vmatprep.mubr.f32.mxu0 0.0
  %1557 = vmatmul.mubr.f32.gmra.mrb[0].mxu0 %v1460
  %v1558 = vpop.f32.mrb[0].mxu0
  %v1559 = vadd.f32 %v1422, %v1558
  %v1560 = vpop.f32.mrb[0].mxu0
  %1561 = vmatprep.mubr.f32.mxu0 0.0
  %1562 = vmatmul.mubr.f32.gmra.mrb[0].mxu0 %v1463
  %v1563 = vpop.f32.mrb[0].mxu0
  %v1564 = vadd.f32 %v1427, %v1563
  %v1565 = vpop.f32.mrb[0].mxu0
  %1566 = vmatprep.mubr.f32.mxu0 0.0
  %1567 = vmatmul.mubr.f32.gmra.mrb[0].mxu0 %v1466
  %v1568 = vpop.f32.mrb[0].mxu0
  %v1569 = vadd.f32 %v1432, %v1568
  %v1570 = vpop.f32.mrb[0].mxu0
  %1571 = vmatprep.mubr.f32.mxu0 0.0
  %1572 = vmatmul.mubr.f32.gmra.mrb[0].mxu0 %v1469
  %v1573 = vpop.f32.mrb[0].mxu0
  %v1574 = vadd.f32 %v1437, %v1573
  %v1575 = vpop.f32.mrb[0].mxu0
  %1576 = vmatprep.mubr.f32.mxu0 0.0
  %1577 = vmatmul.mubr.f32.gmra.mrb[0].mxu0 %v1472
  %v1578 = vpop.f32.mrb[0].mxu0
  %v1579 = vadd.f32 %v1442, %v1578
  %v1580 = vpop.f32.mrb[0].mxu0
  %1581 = vmatprep.mubr.f32.mxu0 0.0
  %1582 = vmatmul.mubr.f32.gmra.mrb[0].mxu0 %v1475
  %v1583 = vpop.f32.mrb[0].mxu0
  %v1584 = vadd.f32 %v1447, %v1583
  %v1585 = vpop.f32.mrb[0].mxu0
  %1586 = vdwg.mxu0
  %s1587 = scalar_lea.vmem %s3, 576
  %v1588 = vld [vmem:[%s1587] sm:$0xff]
  %v1589 = vld [vmem:[%s1587 + $0x8] sm:$0xff]
  %v1590 = vld [vmem:[%s1587 + $0x10] sm:$0xff]
  %v1591 = vld [vmem:[%s1587 + $0x18] sm:$0xff]
  %v1592 = vld [vmem:[%s1587 + $0x20] sm:$0xff]
  %v1593 = vld [vmem:[%s1587 + $0x28] sm:$0xff]
  %v1594 = vld [vmem:[%s1587 + $0x30] sm:$0xff]
  %v1595 = vld [vmem:[%s1587 + $0x38] sm:$0xff]
  %v1596 = vld [vmem:[%s1587 + $0x40] sm:$0xff]
  %v1597 = vld [vmem:[%s1587 + $0x48] sm:$0xff]
  %v1598 = vld [vmem:[%s1587 + $0x50] sm:$0xff]
  %v1599 = vld [vmem:[%s1587 + $0x58] sm:$0xff]
  %v1600 = vld [vmem:[%s1587 + $0x60] sm:$0xff]
  %v1601 = vld [vmem:[%s1587 + $0x68] sm:$0xff]
  %v1602 = vld [vmem:[%s1587 + $0x70] sm:$0xff]
  %v1603 = vld [vmem:[%s1587 + $0x78] sm:$0xff]
  %v1604 = vld [vmem:[%s1587 + $0x80] sm:$0xff]
  %v1605 = vld [vmem:[%s1587 + $0x88] sm:$0xff]
  %v1606 = vld [vmem:[%s1587 + $0x90] sm:$0xff]
  %v1607 = vld [vmem:[%s1587 + $0x98] sm:$0xff]
  %v1608 = vld [vmem:[%s1587 + $0xa0] sm:$0xff]
  %v1609 = vld [vmem:[%s1587 + $0xa8] sm:$0xff]
  %v1610 = vld [vmem:[%s1587 + $0xb0] sm:$0xff]
  %v1611 = vld [vmem:[%s1587 + $0xb8] sm:$0xff]
  %v1612 = vld [vmem:[%s1587 + $0xc0] sm:$0xff]
  %v1613 = vld [vmem:[%s1587 + $0xc8] sm:$0xff]
  %v1614 = vld [vmem:[%s1587 + $0xd0] sm:$0xff]
  %v1615 = vld [vmem:[%s1587 + $0xd8] sm:$0xff]
  %v1616 = vld [vmem:[%s1587 + $0xe0] sm:$0xff]
  %v1617 = vld [vmem:[%s1587 + $0xe8] sm:$0xff]
  %v1618 = vld [vmem:[%s1587 + $0xf0] sm:$0xff]
  %v1619 = vld [vmem:[%s1587 + $0xf8] sm:$0xff]
  %v1620 = vld [vmem:[%s1587 + $0x100] sm:$0xff]
  %v1621 = vld [vmem:[%s1587 + $0x108] sm:$0xff]
  %v1622 = vld [vmem:[%s1587 + $0x110] sm:$0xff]
  %v1623 = vld [vmem:[%s1587 + $0x118] sm:$0xff]
  %1624 = vmatprep.subr.mxu0 0.0
  %1625 = vmatpush1.msra.mxu0 %v727
  %1626 = vmatprep.subr.mxu0 0.0
  %1627 = vmatpush1.msra.mxu0 %v728
  %1628 = vmatprep.subr.mxu0 0.0
  %1629 = vmatpush1.msra.mxu0 %v729
  %1630 = vmatprep.subr.mxu0 0.0
  %1631 = vmatpush1.msra.mxu0 %v730
  %1632 = vmatprep.subr.mxu0 0.0
  %1633 = vmatpush1.msra.mxu0 %v731
  %1634 = vmatprep.subr.mxu0 0.0
  %1635 = vmatpush1.msra.mxu0 %v732
  %1636 = vmatprep.subr.mxu0 0.0
  %1637 = vmatpush1.msra.mxu0 %v733
  %1638 = vmatprep.subr.mxu0 0.0
  %1639 = vmatpush1.msra.mxu0 %v734
  %1640 = vmatprep.subr.mxu0 0.0
  %1641 = vmatpush1.msra.mxu0 %v735
  %1642 = vmatprep.subr.mxu0 0.0
  %1643 = vmatpush1.msra.mxu0 %v736
  %1644 = vmatprep.subr.mxu0 0.0
  %1645 = vmatpush1.msra.mxu0 %v737
  %1646 = vmatprep.subr.mxu0 0.0
  %1647 = vmatpush1.msra.mxu0 %v738
  %1648 = vmatprep.subr.mxu0 0.0
  %1649 = vmatpush1.msra.mxu0 %v739
  %1650 = vmatprep.subr.mxu0 0.0
  %1651 = vmatpush1.msra.mxu0 %v740
  %1652 = vmatprep.subr.mxu0 0.0
  %1653 = vmatpush1.msra.mxu0 %v741
  %1654 = vmatprep.subr.mxu0 0.0
  %1655 = vmatpush1.msra.mxu0 %v742
  %1656 = vmatprep.subr.mxu0 0.0
  %1657 = vmatpush1.msra.mxu0 %v743
  %1658 = vmatprep.subr.mxu0 0.0
  %1659 = vmatpush1.msra.mxu0 %v744
  %1660 = vmatprep.subr.mxu0 0.0
  %1661 = vmatpush1.msra.mxu0 %v745
  %1662 = vmatprep.subr.mxu0 0.0
  %1663 = vmatpush1.msra.mxu0 %v746
  %1664 = vmatprep.subr.mxu0 0.0
  %1665 = vmatpush1.msra.mxu0 %v747
  %1666 = vmatprep.subr.mxu0 0.0
  %1667 = vmatpush1.msra.mxu0 %v748
  %1668 = vmatprep.subr.mxu0 0.0
  %1669 = vmatpush1.msra.mxu0 %v749
  %1670 = vmatprep.subr.mxu0 0.0
  %1671 = vmatpush1.msra.mxu0 %v750
  %1672 = vmatprep.subr.mxu0 0.0
  %1673 = vmatpush1.msra.mxu0 %v751
  %1674 = vmatprep.subr.mxu0 0.0
  %1675 = vmatpush1.msra.mxu0 %v752
  %1676 = vmatprep.subr.mxu0 0.0
  %1677 = vmatpush1.msra.mxu0 %v753
  %1678 = vmatprep.subr.mxu0 0.0
  %1679 = vmatpush1.msra.mxu0 %v754
  %1680 = vmatprep.subr.mxu0 0.0
  %1681 = vmatpush1.msra.mxu0 %v755
  %1682 = vmatprep.subr.mxu0 0.0
  %1683 = vmatpush1.msra.mxu0 %v756
  %1684 = vmatprep.subr.mxu0 0.0
  %1685 = vmatpush1.msra.mxu0 %v757
  %1686 = vmatprep.subr.mxu0 0.0
  %1687 = vmatpush1.msra.mxu0 %v758
  %1688 = vmatprep.mubr.f32.mxu0 %v1589
  %1689 = vmatmul.mubr.f32.gmra.mrb[0].mxu0 %v1588
  %v1690 = vpop.f32.mrb[0].mxu0
  %v1691 = vadd.f32 0.0, %v1690
  %v1692 = vpop.f32.mrb[0].mxu0
  %1693 = vmatprep.mubr.f32.mxu0 %v1593
  %1694 = vmatmul.mubr.f32.gmra.mrb[0].mxu0 %v1592
  %v1695 = vpop.f32.mrb[0].mxu0
  %v1696 = vadd.f32 0.0, %v1695
  %v1697 = vpop.f32.mrb[0].mxu0
  %1698 = vmatprep.mubr.f32.mxu0 %v1597
  %1699 = vmatmul.mubr.f32.gmra.mrb[0].mxu0 %v1596
  %v1700 = vpop.f32.mrb[0].mxu0
  %v1701 = vadd.f32 0.0, %v1700
  %v1702 = vpop.f32.mrb[0].mxu0
  %1703 = vmatprep.mubr.f32.mxu0 %v1601
  %1704 = vmatmul.mubr.f32.gmra.mrb[0].mxu0 %v1600
  %v1705 = vpop.f32.mrb[0].mxu0
  %v1706 = vadd.f32 0.0, %v1705
  %v1707 = vpop.f32.mrb[0].mxu0
  %1708 = vmatprep.mubr.f32.mxu0 %v1605
  %1709 = vmatmul.mubr.f32.gmra.mrb[0].mxu0 %v1604
  %v1710 = vpop.f32.mrb[0].mxu0
  %v1711 = vadd.f32 0.0, %v1710
  %v1712 = vpop.f32.mrb[0].mxu0
  %1713 = vmatprep.mubr.f32.mxu0 %v1609
  %1714 = vmatmul.mubr.f32.gmra.mrb[0].mxu0 %v1608
  %v1715 = vpop.f32.mrb[0].mxu0
  %v1716 = vadd.f32 0.0, %v1715
  %v1717 = vpop.f32.mrb[0].mxu0
  %1718 = vmatprep.mubr.f32.mxu0 %v1613
  %1719 = vmatmul.mubr.f32.gmra.mrb[0].mxu0 %v1612
  %v1720 = vpop.f32.mrb[0].mxu0
  %v1721 = vadd.f32 0.0, %v1720
  %v1722 = vpop.f32.mrb[0].mxu0
  %1723 = vmatprep.mubr.f32.mxu0 %v1617
  %1724 = vmatmul.mubr.f32.gmra.mrb[0].mxu0 %v1616
  %v1725 = vpop.f32.mrb[0].mxu0
  %v1726 = vadd.f32 0.0, %v1725
  %v1727 = vpop.f32.mrb[0].mxu0
  %1728 = vmatprep.mubr.f32.mxu0 %v1621
  %1729 = vmatmul.mubr.f32.gmra.mrb[0].mxu0 %v1620
  %v1730 = vpop.f32.mrb[0].mxu0
  %v1731 = vadd.f32 0.0, %v1730
  %v1732 = vpop.f32.mrb[0].mxu0
  %1733 = vdwg.mxu0
  %1734 = vmatprep.subr.mxu0 0.0
  %1735 = vmatpush1.msra.mxu0 %v759
  %1736 = vmatprep.subr.mxu0 0.0
  %1737 = vmatpush1.msra.mxu0 %v760
  %1738 = vmatprep.subr.mxu0 0.0
  %1739 = vmatpush1.msra.mxu0 %v761
  %1740 = vmatprep.subr.mxu0 0.0
  %1741 = vmatpush1.msra.mxu0 %v762
  %1742 = vmatprep.subr.mxu0 0.0
  %1743 = vmatpush1.msra.mxu0 %v763
  %1744 = vmatprep.subr.mxu0 0.0
  %1745 = vmatpush1.msra.mxu0 %v764
  %1746 = vmatprep.subr.mxu0 0.0
  %1747 = vmatpush1.msra.mxu0 %v765
  %1748 = vmatprep.subr.mxu0 0.0
  %1749 = vmatpush1.msra.mxu0 %v766
  %1750 = vmatprep.subr.mxu0 0.0
  %1751 = vmatpush1.msra.mxu0 %v767
  %1752 = vmatprep.subr.mxu0 0.0
  %1753 = vmatpush1.msra.mxu0 %v768
  %1754 = vmatprep.subr.mxu0 0.0
  %1755 = vmatpush1.msra.mxu0 %v769
  %1756 = vmatprep.subr.mxu0 0.0
  %1757 = vmatpush1.msra.mxu0 %v770
  %1758 = vmatprep.subr.mxu0 0.0
  %1759 = vmatpush1.msra.mxu0 %v771
  %1760 = vmatprep.subr.mxu0 0.0
  %1761 = vmatpush1.msra.mxu0 %v772
  %1762 = vmatprep.subr.mxu0 0.0
  %1763 = vmatpush1.msra.mxu0 %v773
  %1764 = vmatprep.subr.mxu0 0.0
  %1765 = vmatpush1.msra.mxu0 %v774
  %1766 = vmatprep.subr.mxu0 0.0
  %1767 = vmatpush1.msra.mxu0 %v775
  %1768 = vmatprep.subr.mxu0 0.0
  %1769 = vmatpush1.msra.mxu0 %v776
  %1770 = vmatprep.subr.mxu0 0.0
  %1771 = vmatpush1.msra.mxu0 %v777
  %1772 = vmatprep.subr.mxu0 0.0
  %1773 = vmatpush1.msra.mxu0 %v778
  %1774 = vmatprep.subr.mxu0 0.0
  %1775 = vmatpush1.msra.mxu0 %v779
  %1776 = vmatprep.subr.mxu0 0.0
  %1777 = vmatpush1.msra.mxu0 %v780
  %1778 = vmatprep.subr.mxu0 0.0
  %1779 = vmatpush1.msra.mxu0 %v781
  %1780 = vmatprep.subr.mxu0 0.0
  %1781 = vmatpush1.msra.mxu0 %v782
  %1782 = vmatprep.subr.mxu0 0.0
  %1783 = vmatpush1.msra.mxu0 %v783
  %1784 = vmatprep.subr.mxu0 0.0
  %1785 = vmatpush1.msra.mxu0 %v784
  %1786 = vmatprep.subr.mxu0 0.0
  %1787 = vmatpush1.msra.mxu0 %v785
  %1788 = vmatprep.subr.mxu0 0.0
  %1789 = vmatpush1.msra.mxu0 %v786
  %1790 = vmatprep.subr.mxu0 0.0
  %1791 = vmatpush1.msra.mxu0 %v787
  %1792 = vmatprep.subr.mxu0 0.0
  %1793 = vmatpush1.msra.mxu0 %v788
  %1794 = vmatprep.subr.mxu0 0.0
  %1795 = vmatpush1.msra.mxu0 %v789
  %1796 = vmatprep.subr.mxu0 0.0
  %1797 = vmatpush1.msra.mxu0 %v790
  %1798 = vmatprep.mubr.f32.mxu0 %v1591
  %1799 = vmatmul.mubr.f32.gmra.mrb[0].mxu0 %v1590
  %v1800 = vpop.f32.mrb[0].mxu0
  %v1801 = vadd.f32 %v1691, %v1800
  %v1802 = vpop.f32.mrb[0].mxu0
  %1803 = vmatprep.mubr.f32.mxu0 %v1595
  %1804 = vmatmul.mubr.f32.gmra.mrb[0].mxu0 %v1594
  %v1805 = vpop.f32.mrb[0].mxu0
  %v1806 = vadd.f32 %v1696, %v1805
  %v1807 = vpop.f32.mrb[0].mxu0
  %1808 = vmatprep.mubr.f32.mxu0 %v1599
  %1809 = vmatmul.mubr.f32.gmra.mrb[0].mxu0 %v1598
  %v1810 = vpop.f32.mrb[0].mxu0
  %v1811 = vadd.f32 %v1701, %v1810
  %v1812 = vpop.f32.mrb[0].mxu0
  %1813 = vmatprep.mubr.f32.mxu0 %v1603
  %1814 = vmatmul.mubr.f32.gmra.mrb[0].mxu0 %v1602
  %v1815 = vpop.f32.mrb[0].mxu0
  %v1816 = vadd.f32 %v1706, %v1815
  %v1817 = vpop.f32.mrb[0].mxu0
  %1818 = vmatprep.mubr.f32.mxu0 %v1607
  %1819 = vmatmul.mubr.f32.gmra.mrb[0].mxu0 %v1606
  %v1820 = vpop.f32.mrb[0].mxu0
  %v1821 = vadd.f32 %v1711, %v1820
  %v1822 = vpop.f32.mrb[0].mxu0
  %1823 = vmatprep.mubr.f32.mxu0 %v1611
  %1824 = vmatmul.mubr.f32.gmra.mrb[0].mxu0 %v1610
  %v1825 = vpop.f32.mrb[0].mxu0
  %v1826 = vadd.f32 %v1716, %v1825
  %v1827 = vpop.f32.mrb[0].mxu0
  %1828 = vmatprep.mubr.f32.mxu0 %v1615
  %1829 = vmatmul.mubr.f32.gmra.mrb[0].mxu0 %v1614
  %v1830 = vpop.f32.mrb[0].mxu0
  %v1831 = vadd.f32 %v1721, %v1830
  %v1832 = vpop.f32.mrb[0].mxu0
  %1833 = vmatprep.mubr.f32.mxu0 %v1619
  %1834 = vmatmul.mubr.f32.gmra.mrb[0].mxu0 %v1618
  %v1835 = vpop.f32.mrb[0].mxu0
  %v1836 = vadd.f32 %v1726, %v1835
  %v1837 = vpop.f32.mrb[0].mxu0
  %1838 = vmatprep.mubr.f32.mxu0 %v1623
  %1839 = vmatmul.mubr.f32.gmra.mrb[0].mxu0 %v1622
  %v1840 = vpop.f32.mrb[0].mxu0
  %v1841 = vadd.f32 %v1731, %v1840
  %v1842 = vpop.f32.mrb[0].mxu0
  %1843 = vdwg.mxu0
  %v1844 = vld [vmem:[%s4 + $0x40] sm:$0xff]
  %v1845 = vld [vmem:[%s4 + $0x48] sm:$0xff]
  %v1846 = vld [vmem:[%s4 + $0x50] sm:$0xff]
  %v1847 = vld [vmem:[%s4 + $0x58] sm:$0xff]
  %v1849 = vsel %vm1312, %v1801, 0
  %v1852 = vsel %vm1312, %v1806, 0
  %v1855 = vsel %vm1312, %v1811, 0
  %v1858 = vsel %vm1312, %v1816, 0
  %v1861 = vsel %vm1312, %v1821, 0
  %v1864 = vsel %vm1312, %v1826, 0
  %v1867 = vsel %vm1312, %v1831, 0
  %v1870 = vsel %vm1312, %v1836, 0
  %v1873 = vsel %vm1312, %v1841, 0
  %1875 = vmatprep.subr.mxu0 0.0
  %1876 = vmatpush1.msra.mxu0 %v1844
  %1877 = vmatprep.subr.mxu0 0.0
  %1878 = vmatpush1.msra.mxu0 %v1845
  %1879 = vmatprep.subr.mxu0 0.0
  %1880 = vmatpush1.msra.mxu0 %v1846
  %1881 = vmatprep.subr.mxu0 0.0
  %1882 = vmatpush1.msra.mxu0 %v1847
  %1883 = vmatprep.subr.mxu0 0.0
  %1884 = vmatpush1.msra.mxu0 0.0
  %1885 = vmatprep.subr.mxu0 0.0
  %1886 = vmatpush1.msra.mxu0 0.0
  %1887 = vmatprep.subr.mxu0 0.0
  %1888 = vmatpush1.msra.mxu0 0.0
  %1889 = vmatprep.subr.mxu0 0.0
  %1890 = vmatpush1.msra.mxu0 0.0
  %1891 = vmatprep.subr.mxu0 0.0
  %1892 = vmatpush1.msra.mxu0 0.0
  %1893 = vmatprep.subr.mxu0 0.0
  %1894 = vmatpush1.msra.mxu0 0.0
  %1895 = vmatprep.subr.mxu0 0.0
  %1896 = vmatpush1.msra.mxu0 0.0
  %1897 = vmatprep.subr.mxu0 0.0
  %1898 = vmatpush1.msra.mxu0 0.0
  %1899 = vmatprep.subr.mxu0 0.0
  %1900 = vmatpush1.msra.mxu0 0.0
  %1901 = vmatprep.subr.mxu0 0.0
  %1902 = vmatpush1.msra.mxu0 0.0
  %1903 = vmatprep.subr.mxu0 0.0
  %1904 = vmatpush1.msra.mxu0 0.0
  %1905 = vmatprep.subr.mxu0 0.0
  %1906 = vmatpush1.msra.mxu0 0.0
  %1907 = vmatprep.subr.mxu0 0.0
  %1908 = vmatpush1.msra.mxu0 0.0
  %1909 = vmatprep.subr.mxu0 0.0
  %1910 = vmatpush1.msra.mxu0 0.0
  %1911 = vmatprep.subr.mxu0 0.0
  %1912 = vmatpush1.msra.mxu0 0.0
  %1913 = vmatprep.subr.mxu0 0.0
  %1914 = vmatpush1.msra.mxu0 0.0
  %1915 = vmatprep.subr.mxu0 0.0
  %1916 = vmatpush1.msra.mxu0 0.0
  %1917 = vmatprep.subr.mxu0 0.0
  %1918 = vmatpush1.msra.mxu0 0.0
  %1919 = vmatprep.subr.mxu0 0.0
  %1920 = vmatpush1.msra.mxu0 0.0
  %1921 = vmatprep.subr.mxu0 0.0
  %1922 = vmatpush1.msra.mxu0 0.0
  %1923 = vmatprep.subr.mxu0 0.0
  %1924 = vmatpush1.msra.mxu0 0.0
  %1925 = vmatprep.subr.mxu0 0.0
  %1926 = vmatpush1.msra.mxu0 0.0
  %1927 = vmatprep.subr.mxu0 0.0
  %1928 = vmatpush1.msra.mxu0 0.0
  %1929 = vmatprep.subr.mxu0 0.0
  %1930 = vmatpush1.msra.mxu0 0.0
  %1931 = vmatprep.subr.mxu0 0.0
  %1932 = vmatpush1.msra.mxu0 0.0
  %1933 = vmatprep.subr.mxu0 0.0
  %1934 = vmatpush1.msra.mxu0 0.0
  %1935 = vmatprep.subr.mxu0 0.0
  %1936 = vmatpush1.msra.mxu0 0.0
  %1937 = vmatprep.subr.mxu0 0.0
  %1938 = vmatpush1.msra.mxu0 0.0
  %1939 = vmatprep.mubr.f32.mxu0 0.0
  %1940 = vmatmul.mubr.f32.gmra.mrb[0].mxu0 %v1849
  %v1941 = vpop.f32.mrb[0].mxu0
  %v1942 = vadd.f32 0.0, %v1941
  %v1943 = vpop.f32.mrb[0].mxu0
  %1944 = vmatprep.mubr.f32.mxu0 0.0
  %1945 = vmatmul.mubr.f32.gmra.mrb[0].mxu0 %v1852
  %v1946 = vpop.f32.mrb[0].mxu0
  %v1947 = vadd.f32 0.0, %v1946
  %v1948 = vpop.f32.mrb[0].mxu0
  %1949 = vmatprep.mubr.f32.mxu0 0.0
  %1950 = vmatmul.mubr.f32.gmra.mrb[0].mxu0 %v1855
  %v1951 = vpop.f32.mrb[0].mxu0
  %v1952 = vadd.f32 0.0, %v1951
  %v1953 = vpop.f32.mrb[0].mxu0
  %1954 = vmatprep.mubr.f32.mxu0 0.0
  %1955 = vmatmul.mubr.f32.gmra.mrb[0].mxu0 %v1858
  %v1956 = vpop.f32.mrb[0].mxu0
  %v1957 = vadd.f32 0.0, %v1956
  %v1958 = vpop.f32.mrb[0].mxu0
  %1959 = vmatprep.mubr.f32.mxu0 0.0
  %1960 = vmatmul.mubr.f32.gmra.mrb[0].mxu0 %v1861
  %v1961 = vpop.f32.mrb[0].mxu0
  %v1962 = vadd.f32 0.0, %v1961
  %v1963 = vpop.f32.mrb[0].mxu0
  %1964 = vmatprep.mubr.f32.mxu0 0.0
  %1965 = vmatmul.mubr.f32.gmra.mrb[0].mxu0 %v1864
  %v1966 = vpop.f32.mrb[0].mxu0
  %v1967 = vadd.f32 0.0, %v1966
  %v1968 = vpop.f32.mrb[0].mxu0
  %1969 = vmatprep.mubr.f32.mxu0 0.0
  %1970 = vmatmul.mubr.f32.gmra.mrb[0].mxu0 %v1867
  %v1971 = vpop.f32.mrb[0].mxu0
  %v1972 = vadd.f32 0.0, %v1971
  %v1973 = vpop.f32.mrb[0].mxu0
  %1974 = vmatprep.mubr.f32.mxu0 0.0
  %1975 = vmatmul.mubr.f32.gmra.mrb[0].mxu0 %v1870
  %v1976 = vpop.f32.mrb[0].mxu0
  %v1977 = vadd.f32 0.0, %v1976
  %v1978 = vpop.f32.mrb[0].mxu0
  %1979 = vmatprep.mubr.f32.mxu0 0.0
  %1980 = vmatmul.mubr.f32.gmra.mrb[0].mxu0 %v1873
  %v1981 = vpop.f32.mrb[0].mxu0
  %v1982 = vadd.f32 0.0, %v1981
  %v1983 = vpop.f32.mrb[0].mxu0
  %1984 = vdwg.mxu0
  %v1985 = vadd.f32 %v1544, %v1942
  %v1986 = vadd.f32 %v1549, %v1947
  %v1987 = vadd.f32 %v1554, %v1952
  %v1988 = vadd.f32 %v1559, %v1957
  %v1989 = vadd.f32 %v1564, %v1962
  %v1990 = vadd.f32 %v1569, %v1967
  %v1991 = vadd.f32 %v1574, %v1972
  %v1992 = vadd.f32 %v1579, %v1977
  %v1993 = vadd.f32 %v1584, %v1982
  %s1994 = scalar_lea.vmem %s3, 864
  %v1995 = vld [vmem:[%s1994] sm:$0xff]
  %v1996 = vld [vmem:[%s1994 + $0x8] sm:$0xff]
  %v1997 = vld [vmem:[%s1994 + $0x10] sm:$0xff]
  %v1998 = vld [vmem:[%s1994 + $0x18] sm:$0xff]
  %v1999 = vld [vmem:[%s1994 + $0x20] sm:$0xff]
  %v2000 = vld [vmem:[%s1994 + $0x28] sm:$0xff]
  %v2001 = vld [vmem:[%s1994 + $0x30] sm:$0xff]
  %v2002 = vld [vmem:[%s1994 + $0x38] sm:$0xff]
  %v2003 = vld [vmem:[%s1994 + $0x40] sm:$0xff]
  %v2004 = vld [vmem:[%s1994 + $0x48] sm:$0xff]
  %v2005 = vld [vmem:[%s1994 + $0x50] sm:$0xff]
  %v2006 = vld [vmem:[%s1994 + $0x58] sm:$0xff]
  %v2007 = vld [vmem:[%s1994 + $0x60] sm:$0xff]
  %v2008 = vld [vmem:[%s1994 + $0x68] sm:$0xff]
  %v2009 = vld [vmem:[%s1994 + $0x70] sm:$0xff]
  %v2010 = vld [vmem:[%s1994 + $0x78] sm:$0xff]
  %v2011 = vld [vmem:[%s1994 + $0x80] sm:$0xff]
  %v2012 = vld [vmem:[%s1994 + $0x88] sm:$0xff]
  %v2013 = vld [vmem:[%s1994 + $0x90] sm:$0xff]
  %v2014 = vld [vmem:[%s1994 + $0x98] sm:$0xff]
  %v2015 = vld [vmem:[%s1994 + $0xa0] sm:$0xff]
  %v2016 = vld [vmem:[%s1994 + $0xa8] sm:$0xff]
  %v2017 = vld [vmem:[%s1994 + $0xb0] sm:$0xff]
  %v2018 = vld [vmem:[%s1994 + $0xb8] sm:$0xff]
  %v2019 = vld [vmem:[%s1994 + $0xc0] sm:$0xff]
  %v2020 = vld [vmem:[%s1994 + $0xc8] sm:$0xff]
  %v2021 = vld [vmem:[%s1994 + $0xd0] sm:$0xff]
  %v2022 = vld [vmem:[%s1994 + $0xd8] sm:$0xff]
  %v2023 = vld [vmem:[%s1994 + $0xe0] sm:$0xff]
  %v2024 = vld [vmem:[%s1994 + $0xe8] sm:$0xff]
  %v2025 = vld [vmem:[%s1994 + $0xf0] sm:$0xff]
  %v2026 = vld [vmem:[%s1994 + $0xf8] sm:$0xff]
  %v2027 = vld [vmem:[%s1994 + $0x100] sm:$0xff]
  %v2028 = vld [vmem:[%s1994 + $0x108] sm:$0xff]
  %v2029 = vld [vmem:[%s1994 + $0x110] sm:$0xff]
  %v2030 = vld [vmem:[%s1994 + $0x118] sm:$0xff]
  %2031 = vmatprep.subr.mxu0 0.0
  %2032 = vmatpush1.msra.mxu0 %v727
  %2033 = vmatprep.subr.mxu0 0.0
  %2034 = vmatpush1.msra.mxu0 %v728
  %2035 = vmatprep.subr.mxu0 0.0
  %2036 = vmatpush1.msra.mxu0 %v729
  %2037 = vmatprep.subr.mxu0 0.0
  %2038 = vmatpush1.msra.mxu0 %v730
  %2039 = vmatprep.subr.mxu0 0.0
  %2040 = vmatpush1.msra.mxu0 %v731
  %2041 = vmatprep.subr.mxu0 0.0
  %2042 = vmatpush1.msra.mxu0 %v732
  %2043 = vmatprep.subr.mxu0 0.0
  %2044 = vmatpush1.msra.mxu0 %v733
  %2045 = vmatprep.subr.mxu0 0.0
  %2046 = vmatpush1.msra.mxu0 %v734
  %2047 = vmatprep.subr.mxu0 0.0
  %2048 = vmatpush1.msra.mxu0 %v735
  %2049 = vmatprep.subr.mxu0 0.0
  %2050 = vmatpush1.msra.mxu0 %v736
  %2051 = vmatprep.subr.mxu0 0.0
  %2052 = vmatpush1.msra.mxu0 %v737
  %2053 = vmatprep.subr.mxu0 0.0
  %2054 = vmatpush1.msra.mxu0 %v738
  %2055 = vmatprep.subr.mxu0 0.0
  %2056 = vmatpush1.msra.mxu0 %v739
  %2057 = vmatprep.subr.mxu0 0.0
  %2058 = vmatpush1.msra.mxu0 %v740
  %2059 = vmatprep.subr.mxu0 0.0
  %2060 = vmatpush1.msra.mxu0 %v741
  %2061 = vmatprep.subr.mxu0 0.0
  %2062 = vmatpush1.msra.mxu0 %v742
  %2063 = vmatprep.subr.mxu0 0.0
  %2064 = vmatpush1.msra.mxu0 %v743
  %2065 = vmatprep.subr.mxu0 0.0
  %2066 = vmatpush1.msra.mxu0 %v744
  %2067 = vmatprep.subr.mxu0 0.0
  %2068 = vmatpush1.msra.mxu0 %v745
  %2069 = vmatprep.subr.mxu0 0.0
  %2070 = vmatpush1.msra.mxu0 %v746
  %2071 = vmatprep.subr.mxu0 0.0
  %2072 = vmatpush1.msra.mxu0 %v747
  %2073 = vmatprep.subr.mxu0 0.0
  %2074 = vmatpush1.msra.mxu0 %v748
  %2075 = vmatprep.subr.mxu0 0.0
  %2076 = vmatpush1.msra.mxu0 %v749
  %2077 = vmatprep.subr.mxu0 0.0
  %2078 = vmatpush1.msra.mxu0 %v750
  %2079 = vmatprep.subr.mxu0 0.0
  %2080 = vmatpush1.msra.mxu0 %v751
  %2081 = vmatprep.subr.mxu0 0.0
  %2082 = vmatpush1.msra.mxu0 %v752
  %2083 = vmatprep.subr.mxu0 0.0
  %2084 = vmatpush1.msra.mxu0 %v753
  %2085 = vmatprep.subr.mxu0 0.0
  %2086 = vmatpush1.msra.mxu0 %v754
  %2087 = vmatprep.subr.mxu0 0.0
  %2088 = vmatpush1.msra.mxu0 %v755
  %2089 = vmatprep.subr.mxu0 0.0
  %2090 = vmatpush1.msra.mxu0 %v756
  %2091 = vmatprep.subr.mxu0 0.0
  %2092 = vmatpush1.msra.mxu0 %v757
  %2093 = vmatprep.subr.mxu0 0.0
  %2094 = vmatpush1.msra.mxu0 %v758
  %2095 = vmatprep.mubr.f32.mxu0 %v1996
  %2096 = vmatmul.mubr.f32.gmra.mrb[0].mxu0 %v1995
  %v2097 = vpop.f32.mrb[0].mxu0
  %v2098 = vadd.f32 0.0, %v2097
  %v2099 = vpop.f32.mrb[0].mxu0
  %2100 = vmatprep.mubr.f32.mxu0 %v2000
  %2101 = vmatmul.mubr.f32.gmra.mrb[0].mxu0 %v1999
  %v2102 = vpop.f32.mrb[0].mxu0
  %v2103 = vadd.f32 0.0, %v2102
  %v2104 = vpop.f32.mrb[0].mxu0
  %2105 = vmatprep.mubr.f32.mxu0 %v2004
  %2106 = vmatmul.mubr.f32.gmra.mrb[0].mxu0 %v2003
  %v2107 = vpop.f32.mrb[0].mxu0
  %v2108 = vadd.f32 0.0, %v2107
  %v2109 = vpop.f32.mrb[0].mxu0
  %2110 = vmatprep.mubr.f32.mxu0 %v2008
  %2111 = vmatmul.mubr.f32.gmra.mrb[0].mxu0 %v2007
  %v2112 = vpop.f32.mrb[0].mxu0
  %v2113 = vadd.f32 0.0, %v2112
  %v2114 = vpop.f32.mrb[0].mxu0
  %2115 = vmatprep.mubr.f32.mxu0 %v2012
  %2116 = vmatmul.mubr.f32.gmra.mrb[0].mxu0 %v2011
  %v2117 = vpop.f32.mrb[0].mxu0
  %v2118 = vadd.f32 0.0, %v2117
  %v2119 = vpop.f32.mrb[0].mxu0
  %2120 = vmatprep.mubr.f32.mxu0 %v2016
  %2121 = vmatmul.mubr.f32.gmra.mrb[0].mxu0 %v2015
  %v2122 = vpop.f32.mrb[0].mxu0
  %v2123 = vadd.f32 0.0, %v2122
  %v2124 = vpop.f32.mrb[0].mxu0
  %2125 = vmatprep.mubr.f32.mxu0 %v2020
  %2126 = vmatmul.mubr.f32.gmra.mrb[0].mxu0 %v2019
  %v2127 = vpop.f32.mrb[0].mxu0
  %v2128 = vadd.f32 0.0, %v2127
  %v2129 = vpop.f32.mrb[0].mxu0
  %2130 = vmatprep.mubr.f32.mxu0 %v2024
  %2131 = vmatmul.mubr.f32.gmra.mrb[0].mxu0 %v2023
  %v2132 = vpop.f32.mrb[0].mxu0
  %v2133 = vadd.f32 0.0, %v2132
  %v2134 = vpop.f32.mrb[0].mxu0
  %2135 = vmatprep.mubr.f32.mxu0 %v2028
  %2136 = vmatmul.mubr.f32.gmra.mrb[0].mxu0 %v2027
  %v2137 = vpop.f32.mrb[0].mxu0
  %v2138 = vadd.f32 0.0, %v2137
  %v2139 = vpop.f32.mrb[0].mxu0
  %2140 = vdwg.mxu0
  %2141 = vmatprep.subr.mxu0 0.0
  %2142 = vmatpush1.msra.mxu0 %v759
  %2143 = vmatprep.subr.mxu0 0.0
  %2144 = vmatpush1.msra.mxu0 %v760
  %2145 = vmatprep.subr.mxu0 0.0
  %2146 = vmatpush1.msra.mxu0 %v761
  %2147 = vmatprep.subr.mxu0 0.0
  %2148 = vmatpush1.msra.mxu0 %v762
  %2149 = vmatprep.subr.mxu0 0.0
  %2150 = vmatpush1.msra.mxu0 %v763
  %2151 = vmatprep.subr.mxu0 0.0
  %2152 = vmatpush1.msra.mxu0 %v764
  %2153 = vmatprep.subr.mxu0 0.0
  %2154 = vmatpush1.msra.mxu0 %v765
  %2155 = vmatprep.subr.mxu0 0.0
  %2156 = vmatpush1.msra.mxu0 %v766
  %2157 = vmatprep.subr.mxu0 0.0
  %2158 = vmatpush1.msra.mxu0 %v767
  %2159 = vmatprep.subr.mxu0 0.0
  %2160 = vmatpush1.msra.mxu0 %v768
  %2161 = vmatprep.subr.mxu0 0.0
  %2162 = vmatpush1.msra.mxu0 %v769
  %2163 = vmatprep.subr.mxu0 0.0
  %2164 = vmatpush1.msra.mxu0 %v770
  %2165 = vmatprep.subr.mxu0 0.0
  %2166 = vmatpush1.msra.mxu0 %v771
  %2167 = vmatprep.subr.mxu0 0.0
  %2168 = vmatpush1.msra.mxu0 %v772
  %2169 = vmatprep.subr.mxu0 0.0
  %2170 = vmatpush1.msra.mxu0 %v773
  %2171 = vmatprep.subr.mxu0 0.0
  %2172 = vmatpush1.msra.mxu0 %v774
  %2173 = vmatprep.subr.mxu0 0.0
  %2174 = vmatpush1.msra.mxu0 %v775
  %2175 = vmatprep.subr.mxu0 0.0
  %2176 = vmatpush1.msra.mxu0 %v776
  %2177 = vmatprep.subr.mxu0 0.0
  %2178 = vmatpush1.msra.mxu0 %v777
  %2179 = vmatprep.subr.mxu0 0.0
  %2180 = vmatpush1.msra.mxu0 %v778
  %2181 = vmatprep.subr.mxu0 0.0
  %2182 = vmatpush1.msra.mxu0 %v779
  %2183 = vmatprep.subr.mxu0 0.0
  %2184 = vmatpush1.msra.mxu0 %v780
  %2185 = vmatprep.subr.mxu0 0.0
  %2186 = vmatpush1.msra.mxu0 %v781
  %2187 = vmatprep.subr.mxu0 0.0
  %2188 = vmatpush1.msra.mxu0 %v782
  %2189 = vmatprep.subr.mxu0 0.0
  %2190 = vmatpush1.msra.mxu0 %v783
  %2191 = vmatprep.subr.mxu0 0.0
  %2192 = vmatpush1.msra.mxu0 %v784
  %2193 = vmatprep.subr.mxu0 0.0
  %2194 = vmatpush1.msra.mxu0 %v785
  %2195 = vmatprep.subr.mxu0 0.0
  %2196 = vmatpush1.msra.mxu0 %v786
  %2197 = vmatprep.subr.mxu0 0.0
  %2198 = vmatpush1.msra.mxu0 %v787
  %2199 = vmatprep.subr.mxu0 0.0
  %2200 = vmatpush1.msra.mxu0 %v788
  %2201 = vmatprep.subr.mxu0 0.0
  %2202 = vmatpush1.msra.mxu0 %v789
  %2203 = vmatprep.subr.mxu0 0.0
  %2204 = vmatpush1.msra.mxu0 %v790
  %2205 = vmatprep.mubr.f32.mxu0 %v1998
  %2206 = vmatmul.mubr.f32.gmra.mrb[0].mxu0 %v1997
  %v2207 = vpop.f32.mrb[0].mxu0
  %v2208 = vadd.f32 %v2098, %v2207
  %v2209 = vpop.f32.mrb[0].mxu0
  %2210 = vmatprep.mubr.f32.mxu0 %v2002
  %2211 = vmatmul.mubr.f32.gmra.mrb[0].mxu0 %v2001
  %v2212 = vpop.f32.mrb[0].mxu0
  %v2213 = vadd.f32 %v2103, %v2212
  %v2214 = vpop.f32.mrb[0].mxu0
  %2215 = vmatprep.mubr.f32.mxu0 %v2006
  %2216 = vmatmul.mubr.f32.gmra.mrb[0].mxu0 %v2005
  %v2217 = vpop.f32.mrb[0].mxu0
  %v2218 = vadd.f32 %v2108, %v2217
  %v2219 = vpop.f32.mrb[0].mxu0
  %2220 = vmatprep.mubr.f32.mxu0 %v2010
  %2221 = vmatmul.mubr.f32.gmra.mrb[0].mxu0 %v2009
  %v2222 = vpop.f32.mrb[0].mxu0
  %v2223 = vadd.f32 %v2113, %v2222
  %v2224 = vpop.f32.mrb[0].mxu0
  %2225 = vmatprep.mubr.f32.mxu0 %v2014
  %2226 = vmatmul.mubr.f32.gmra.mrb[0].mxu0 %v2013
  %v2227 = vpop.f32.mrb[0].mxu0
  %v2228 = vadd.f32 %v2118, %v2227
  %v2229 = vpop.f32.mrb[0].mxu0
  %2230 = vmatprep.mubr.f32.mxu0 %v2018
  %2231 = vmatmul.mubr.f32.gmra.mrb[0].mxu0 %v2017
  %v2232 = vpop.f32.mrb[0].mxu0
  %v2233 = vadd.f32 %v2123, %v2232
  %v2234 = vpop.f32.mrb[0].mxu0
  %2235 = vmatprep.mubr.f32.mxu0 %v2022
  %2236 = vmatmul.mubr.f32.gmra.mrb[0].mxu0 %v2021
  %v2237 = vpop.f32.mrb[0].mxu0
  %v2238 = vadd.f32 %v2128, %v2237
  %v2239 = vpop.f32.mrb[0].mxu0
  %2240 = vmatprep.mubr.f32.mxu0 %v2026
  %2241 = vmatmul.mubr.f32.gmra.mrb[0].mxu0 %v2025
  %v2242 = vpop.f32.mrb[0].mxu0
  %v2243 = vadd.f32 %v2133, %v2242
  %v2244 = vpop.f32.mrb[0].mxu0
  %2245 = vmatprep.mubr.f32.mxu0 %v2030
  %2246 = vmatmul.mubr.f32.gmra.mrb[0].mxu0 %v2029
  %v2247 = vpop.f32.mrb[0].mxu0
  %v2248 = vadd.f32 %v2138, %v2247
  %v2249 = vpop.f32.mrb[0].mxu0
  %2250 = vdwg.mxu0
  %v2251 = vld [vmem:[%s4 + $0x60] sm:$0xff]
  %v2252 = vld [vmem:[%s4 + $0x68] sm:$0xff]
  %v2253 = vld [vmem:[%s4 + $0x70] sm:$0xff]
  %v2254 = vld [vmem:[%s4 + $0x78] sm:$0xff]
  %v2256 = vsel %vm1312, %v2208, 0
  %v2259 = vsel %vm1312, %v2213, 0
  %v2262 = vsel %vm1312, %v2218, 0
  %v2265 = vsel %vm1312, %v2223, 0
  %v2268 = vsel %vm1312, %v2228, 0
  %v2271 = vsel %vm1312, %v2233, 0
  %v2274 = vsel %vm1312, %v2238, 0
  %v2277 = vsel %vm1312, %v2243, 0
  %v2280 = vsel %vm1312, %v2248, 0
  %2282 = vmatprep.subr.mxu0 0.0
  %2283 = vmatpush1.msra.mxu0 %v2251
  %2284 = vmatprep.subr.mxu0 0.0
  %2285 = vmatpush1.msra.mxu0 %v2252
  %2286 = vmatprep.subr.mxu0 0.0
  %2287 = vmatpush1.msra.mxu0 %v2253
  %2288 = vmatprep.subr.mxu0 0.0
  %2289 = vmatpush1.msra.mxu0 %v2254
  %2290 = vmatprep.subr.mxu0 0.0
  %2291 = vmatpush1.msra.mxu0 0.0
  %2292 = vmatprep.subr.mxu0 0.0
  %2293 = vmatpush1.msra.mxu0 0.0
  %2294 = vmatprep.subr.mxu0 0.0
  %2295 = vmatpush1.msra.mxu0 0.0
  %2296 = vmatprep.subr.mxu0 0.0
  %2297 = vmatpush1.msra.mxu0 0.0
  %2298 = vmatprep.subr.mxu0 0.0
  %2299 = vmatpush1.msra.mxu0 0.0
  %2300 = vmatprep.subr.mxu0 0.0
  %2301 = vmatpush1.msra.mxu0 0.0
  %2302 = vmatprep.subr.mxu0 0.0
  %2303 = vmatpush1.msra.mxu0 0.0
  %2304 = vmatprep.subr.mxu0 0.0
  %2305 = vmatpush1.msra.mxu0 0.0
  %2306 = vmatprep.subr.mxu0 0.0
  %2307 = vmatpush1.msra.mxu0 0.0
  %2308 = vmatprep.subr.mxu0 0.0
  %2309 = vmatpush1.msra.mxu0 0.0
  %2310 = vmatprep.subr.mxu0 0.0
  %2311 = vmatpush1.msra.mxu0 0.0
  %2312 = vmatprep.subr.mxu0 0.0
  %2313 = vmatpush1.msra.mxu0 0.0
  %2314 = vmatprep.subr.mxu0 0.0
  %2315 = vmatpush1.msra.mxu0 0.0
  %2316 = vmatprep.subr.mxu0 0.0
  %2317 = vmatpush1.msra.mxu0 0.0
  %2318 = vmatprep.subr.mxu0 0.0
  %2319 = vmatpush1.msra.mxu0 0.0
  %2320 = vmatprep.subr.mxu0 0.0
  %2321 = vmatpush1.msra.mxu0 0.0
  %2322 = vmatprep.subr.mxu0 0.0
  %2323 = vmatpush1.msra.mxu0 0.0
  %2324 = vmatprep.subr.mxu0 0.0
  %2325 = vmatpush1.msra.mxu0 0.0
  %2326 = vmatprep.subr.mxu0 0.0
  %2327 = vmatpush1.msra.mxu0 0.0
  %2328 = vmatprep.subr.mxu0 0.0
  %2329 = vmatpush1.msra.mxu0 0.0
  %2330 = vmatprep.subr.mxu0 0.0
  %2331 = vmatpush1.msra.mxu0 0.0
  %2332 = vmatprep.subr.mxu0 0.0
  %2333 = vmatpush1.msra.mxu0 0.0
  %2334 = vmatprep.subr.mxu0 0.0
  %2335 = vmatpush1.msra.mxu0 0.0
  %2336 = vmatprep.subr.mxu0 0.0
  %2337 = vmatpush1.msra.mxu0 0.0
  %2338 = vmatprep.subr.mxu0 0.0
  %2339 = vmatpush1.msra.mxu0 0.0
  %2340 = vmatprep.subr.mxu0 0.0
  %2341 = vmatpush1.msra.mxu0 0.0
  %2342 = vmatprep.subr.mxu0 0.0
  %2343 = vmatpush1.msra.mxu0 0.0
  %2344 = vmatprep.subr.mxu0 0.0
  %2345 = vmatpush1.msra.mxu0 0.0
  %2346 = vmatprep.mubr.f32.mxu0 0.0
  %2347 = vmatmul.mubr.f32.gmra.mrb[0].mxu0 %v2256
  %v2348 = vpop.f32.mrb[0].mxu0
  %v2349 = vadd.f32 0.0, %v2348
  %v2350 = vpop.f32.mrb[0].mxu0
  %2351 = vmatprep.mubr.f32.mxu0 0.0
  %2352 = vmatmul.mubr.f32.gmra.mrb[0].mxu0 %v2259
  %v2353 = vpop.f32.mrb[0].mxu0
  %v2354 = vadd.f32 0.0, %v2353
  %v2355 = vpop.f32.mrb[0].mxu0
  %2356 = vmatprep.mubr.f32.mxu0 0.0
  %2357 = vmatmul.mubr.f32.gmra.mrb[0].mxu0 %v2262
  %v2358 = vpop.f32.mrb[0].mxu0
  %v2359 = vadd.f32 0.0, %v2358
  %v2360 = vpop.f32.mrb[0].mxu0
  %2361 = vmatprep.mubr.f32.mxu0 0.0
  %2362 = vmatmul.mubr.f32.gmra.mrb[0].mxu0 %v2265
  %v2363 = vpop.f32.mrb[0].mxu0
  %v2364 = vadd.f32 0.0, %v2363
  %v2365 = vpop.f32.mrb[0].mxu0
  %2366 = vmatprep.mubr.f32.mxu0 0.0
  %2367 = vmatmul.mubr.f32.gmra.mrb[0].mxu0 %v2268
  %v2368 = vpop.f32.mrb[0].mxu0
  %v2369 = vadd.f32 0.0, %v2368
  %v2370 = vpop.f32.mrb[0].mxu0
  %2371 = vmatprep.mubr.f32.mxu0 0.0
  %2372 = vmatmul.mubr.f32.gmra.mrb[0].mxu0 %v2271
  %v2373 = vpop.f32.mrb[0].mxu0
  %v2374 = vadd.f32 0.0, %v2373
  %v2375 = vpop.f32.mrb[0].mxu0
  %2376 = vmatprep.mubr.f32.mxu0 0.0
  %2377 = vmatmul.mubr.f32.gmra.mrb[0].mxu0 %v2274
  %v2378 = vpop.f32.mrb[0].mxu0
  %v2379 = vadd.f32 0.0, %v2378
  %v2380 = vpop.f32.mrb[0].mxu0
  %2381 = vmatprep.mubr.f32.mxu0 0.0
  %2382 = vmatmul.mubr.f32.gmra.mrb[0].mxu0 %v2277
  %v2383 = vpop.f32.mrb[0].mxu0
  %v2384 = vadd.f32 0.0, %v2383
  %v2385 = vpop.f32.mrb[0].mxu0
  %2386 = vmatprep.mubr.f32.mxu0 0.0
  %2387 = vmatmul.mubr.f32.gmra.mrb[0].mxu0 %v2280
  %v2388 = vpop.f32.mrb[0].mxu0
  %v2389 = vadd.f32 0.0, %v2388
  %v2390 = vpop.f32.mrb[0].mxu0
  %2391 = vdwg.mxu0
  %v2392 = vadd.f32 %v1985, %v2349
  %v2393 = vadd.f32 %v1986, %v2354
  %v2394 = vadd.f32 %v1987, %v2359
  %v2395 = vadd.f32 %v1988, %v2364
  %v2396 = vadd.f32 %v1989, %v2369
  %v2397 = vadd.f32 %v1990, %v2374
  %v2398 = vadd.f32 %v1991, %v2379
  %v2399 = vadd.f32 %v1992, %v2384
  %v2400 = vadd.f32 %v1993, %v2389
  %s2401 = scalar_lea.vmem %s3, 1152
  %v2402 = vld [vmem:[%s2401] sm:$0xff]
  %v2403 = vld [vmem:[%s2401 + $0x8] sm:$0xff]
  %v2404 = vld [vmem:[%s2401 + $0x10] sm:$0xff]
  %v2405 = vld [vmem:[%s2401 + $0x18] sm:$0xff]
  %v2406 = vld [vmem:[%s2401 + $0x20] sm:$0xff]
  %v2407 = vld [vmem:[%s2401 + $0x28] sm:$0xff]
  %v2408 = vld [vmem:[%s2401 + $0x30] sm:$0xff]
  %v2409 = vld [vmem:[%s2401 + $0x38] sm:$0xff]
  %v2410 = vld [vmem:[%s2401 + $0x40] sm:$0xff]
  %v2411 = vld [vmem:[%s2401 + $0x48] sm:$0xff]
  %v2412 = vld [vmem:[%s2401 + $0x50] sm:$0xff]
  %v2413 = vld [vmem:[%s2401 + $0x58] sm:$0xff]
  %v2414 = vld [vmem:[%s2401 + $0x60] sm:$0xff]
  %v2415 = vld [vmem:[%s2401 + $0x68] sm:$0xff]
  %v2416 = vld [vmem:[%s2401 + $0x70] sm:$0xff]
  %v2417 = vld [vmem:[%s2401 + $0x78] sm:$0xff]
  %v2418 = vld [vmem:[%s2401 + $0x80] sm:$0xff]
  %v2419 = vld [vmem:[%s2401 + $0x88] sm:$0xff]
  %v2420 = vld [vmem:[%s2401 + $0x90] sm:$0xff]
  %v2421 = vld [vmem:[%s2401 + $0x98] sm:$0xff]
  %v2422 = vld [vmem:[%s2401 + $0xa0] sm:$0xff]
  %v2423 = vld [vmem:[%s2401 + $0xa8] sm:$0xff]
  %v2424 = vld [vmem:[%s2401 + $0xb0] sm:$0xff]
  %v2425 = vld [vmem:[%s2401 + $0xb8] sm:$0xff]
  %v2426 = vld [vmem:[%s2401 + $0xc0] sm:$0xff]
  %v2427 = vld [vmem:[%s2401 + $0xc8] sm:$0xff]
  %v2428 = vld [vmem:[%s2401 + $0xd0] sm:$0xff]
  %v2429 = vld [vmem:[%s2401 + $0xd8] sm:$0xff]
  %v2430 = vld [vmem:[%s2401 + $0xe0] sm:$0xff]
  %v2431 = vld [vmem:[%s2401 + $0xe8] sm:$0xff]
  %v2432 = vld [vmem:[%s2401 + $0xf0] sm:$0xff]
  %v2433 = vld [vmem:[%s2401 + $0xf8] sm:$0xff]
  %v2434 = vld [vmem:[%s2401 + $0x100] sm:$0xff]
  %v2435 = vld [vmem:[%s2401 + $0x108] sm:$0xff]
  %v2436 = vld [vmem:[%s2401 + $0x110] sm:$0xff]
  %v2437 = vld [vmem:[%s2401 + $0x118] sm:$0xff]
  %2438 = vmatprep.subr.mxu0 0.0
  %2439 = vmatpush1.msra.mxu0 %v727
  %2440 = vmatprep.subr.mxu0 0.0
  %2441 = vmatpush1.msra.mxu0 %v728
  %2442 = vmatprep.subr.mxu0 0.0
  %2443 = vmatpush1.msra.mxu0 %v729
  %2444 = vmatprep.subr.mxu0 0.0
  %2445 = vmatpush1.msra.mxu0 %v730
  %2446 = vmatprep.subr.mxu0 0.0
  %2447 = vmatpush1.msra.mxu0 %v731
  %2448 = vmatprep.subr.mxu0 0.0
  %2449 = vmatpush1.msra.mxu0 %v732
  %2450 = vmatprep.subr.mxu0 0.0
  %2451 = vmatpush1.msra.mxu0 %v733
  %2452 = vmatprep.subr.mxu0 0.0
  %2453 = vmatpush1.msra.mxu0 %v734
  %2454 = vmatprep.subr.mxu0 0.0
  %2455 = vmatpush1.msra.mxu0 %v735
  %2456 = vmatprep.subr.mxu0 0.0
  %2457 = vmatpush1.msra.mxu0 %v736
  %2458 = vmatprep.subr.mxu0 0.0
  %2459 = vmatpush1.msra.mxu0 %v737
  %2460 = vmatprep.subr.mxu0 0.0
  %2461 = vmatpush1.msra.mxu0 %v738
  %2462 = vmatprep.subr.mxu0 0.0
  %2463 = vmatpush1.msra.mxu0 %v739
  %2464 = vmatprep.subr.mxu0 0.0
  %2465 = vmatpush1.msra.mxu0 %v740
  %2466 = vmatprep.subr.mxu0 0.0
  %2467 = vmatpush1.msra.mxu0 %v741
  %2468 = vmatprep.subr.mxu0 0.0
  %2469 = vmatpush1.msra.mxu0 %v742
  %2470 = vmatprep.subr.mxu0 0.0
  %2471 = vmatpush1.msra.mxu0 %v743
  %2472 = vmatprep.subr.mxu0 0.0
  %2473 = vmatpush1.msra.mxu0 %v744
  %2474 = vmatprep.subr.mxu0 0.0
  %2475 = vmatpush1.msra.mxu0 %v745
  %2476 = vmatprep.subr.mxu0 0.0
  %2477 = vmatpush1.msra.mxu0 %v746
  %2478 = vmatprep.subr.mxu0 0.0
  %2479 = vmatpush1.msra.mxu0 %v747
  %2480 = vmatprep.subr.mxu0 0.0
  %2481 = vmatpush1.msra.mxu0 %v748
  %2482 = vmatprep.subr.mxu0 0.0
  %2483 = vmatpush1.msra.mxu0 %v749
  %2484 = vmatprep.subr.mxu0 0.0
  %2485 = vmatpush1.msra.mxu0 %v750
  %2486 = vmatprep.subr.mxu0 0.0
  %2487 = vmatpush1.msra.mxu0 %v751
  %2488 = vmatprep.subr.mxu0 0.0
  %2489 = vmatpush1.msra.mxu0 %v752
  %2490 = vmatprep.subr.mxu0 0.0
  %2491 = vmatpush1.msra.mxu0 %v753
  %2492 = vmatprep.subr.mxu0 0.0
  %2493 = vmatpush1.msra.mxu0 %v754
  %2494 = vmatprep.subr.mxu0 0.0
  %2495 = vmatpush1.msra.mxu0 %v755
  %2496 = vmatprep.subr.mxu0 0.0
  %2497 = vmatpush1.msra.mxu0 %v756
  %2498 = vmatprep.subr.mxu0 0.0
  %2499 = vmatpush1.msra.mxu0 %v757
  %2500 = vmatprep.subr.mxu0 0.0
  %2501 = vmatpush1.msra.mxu0 %v758
  %2502 = vmatprep.mubr.f32.mxu0 %v2403
  %2503 = vmatmul.mubr.f32.gmra.mrb[0].mxu0 %v2402
  %v2504 = vpop.f32.mrb[0].mxu0
  %v2505 = vadd.f32 0.0, %v2504
  %v2506 = vpop.f32.mrb[0].mxu0
  %2507 = vmatprep.mubr.f32.mxu0 %v2407
  %2508 = vmatmul.mubr.f32.gmra.mrb[0].mxu0 %v2406
  %v2509 = vpop.f32.mrb[0].mxu0
  %v2510 = vadd.f32 0.0, %v2509
  %v2511 = vpop.f32.mrb[0].mxu0
  %2512 = vmatprep.mubr.f32.mxu0 %v2411
  %2513 = vmatmul.mubr.f32.gmra.mrb[0].mxu0 %v2410
  %v2514 = vpop.f32.mrb[0].mxu0
  %v2515 = vadd.f32 0.0, %v2514
  %v2516 = vpop.f32.mrb[0].mxu0
  %2517 = vmatprep.mubr.f32.mxu0 %v2415
  %2518 = vmatmul.mubr.f32.gmra.mrb[0].mxu0 %v2414
  %v2519 = vpop.f32.mrb[0].mxu0
  %v2520 = vadd.f32 0.0, %v2519
  %v2521 = vpop.f32.mrb[0].mxu0
  %2522 = vmatprep.mubr.f32.mxu0 %v2419
  %2523 = vmatmul.mubr.f32.gmra.mrb[0].mxu0 %v2418
  %v2524 = vpop.f32.mrb[0].mxu0
  %v2525 = vadd.f32 0.0, %v2524
  %v2526 = vpop.f32.mrb[0].mxu0
  %2527 = vmatprep.mubr.f32.mxu0 %v2423
  %2528 = vmatmul.mubr.f32.gmra.mrb[0].mxu0 %v2422
  %v2529 = vpop.f32.mrb[0].mxu0
  %v2530 = vadd.f32 0.0, %v2529
  %v2531 = vpop.f32.mrb[0].mxu0
  %2532 = vmatprep.mubr.f32.mxu0 %v2427
  %2533 = vmatmul.mubr.f32.gmra.mrb[0].mxu0 %v2426
  %v2534 = vpop.f32.mrb[0].mxu0
  %v2535 = vadd.f32 0.0, %v2534
  %v2536 = vpop.f32.mrb[0].mxu0
  %2537 = vmatprep.mubr.f32.mxu0 %v2431
  %2538 = vmatmul.mubr.f32.gmra.mrb[0].mxu0 %v2430
  %v2539 = vpop.f32.mrb[0].mxu0
  %v2540 = vadd.f32 0.0, %v2539
  %v2541 = vpop.f32.mrb[0].mxu0
  %2542 = vmatprep.mubr.f32.mxu0 %v2435
  %2543 = vmatmul.mubr.f32.gmra.mrb[0].mxu0 %v2434
  %v2544 = vpop.f32.mrb[0].mxu0
  %v2545 = vadd.f32 0.0, %v2544
  %v2546 = vpop.f32.mrb[0].mxu0
  %2547 = vdwg.mxu0
  %2548 = vmatprep.subr.mxu0 0.0
  %2549 = vmatpush1.msra.mxu0 %v759
  %2550 = vmatprep.subr.mxu0 0.0
  %2551 = vmatpush1.msra.mxu0 %v760
  %2552 = vmatprep.subr.mxu0 0.0
  %2553 = vmatpush1.msra.mxu0 %v761
  %2554 = vmatprep.subr.mxu0 0.0
  %2555 = vmatpush1.msra.mxu0 %v762
  %2556 = vmatprep.subr.mxu0 0.0
  %2557 = vmatpush1.msra.mxu0 %v763
  %2558 = vmatprep.subr.mxu0 0.0
  %2559 = vmatpush1.msra.mxu0 %v764
  %2560 = vmatprep.subr.mxu0 0.0
  %2561 = vmatpush1.msra.mxu0 %v765
  %2562 = vmatprep.subr.mxu0 0.0
  %2563 = vmatpush1.msra.mxu0 %v766
  %2564 = vmatprep.subr.mxu0 0.0
  %2565 = vmatpush1.msra.mxu0 %v767
  %2566 = vmatprep.subr.mxu0 0.0
  %2567 = vmatpush1.msra.mxu0 %v768
  %2568 = vmatprep.subr.mxu0 0.0
  %2569 = vmatpush1.msra.mxu0 %v769
  %2570 = vmatprep.subr.mxu0 0.0
  %2571 = vmatpush1.msra.mxu0 %v770
  %2572 = vmatprep.subr.mxu0 0.0
  %2573 = vmatpush1.msra.mxu0 %v771
  %2574 = vmatprep.subr.mxu0 0.0
  %2575 = vmatpush1.msra.mxu0 %v772
  %2576 = vmatprep.subr.mxu0 0.0
  %2577 = vmatpush1.msra.mxu0 %v773
  %2578 = vmatprep.subr.mxu0 0.0
  %2579 = vmatpush1.msra.mxu0 %v774
  %2580 = vmatprep.subr.mxu0 0.0
  %2581 = vmatpush1.msra.mxu0 %v775
  %2582 = vmatprep.subr.mxu0 0.0
  %2583 = vmatpush1.msra.mxu0 %v776
  %2584 = vmatprep.subr.mxu0 0.0
  %2585 = vmatpush1.msra.mxu0 %v777
  %2586 = vmatprep.subr.mxu0 0.0
  %2587 = vmatpush1.msra.mxu0 %v778
  %2588 = vmatprep.subr.mxu0 0.0
  %2589 = vmatpush1.msra.mxu0 %v779
  %2590 = vmatprep.subr.mxu0 0.0
  %2591 = vmatpush1.msra.mxu0 %v780
  %2592 = vmatprep.subr.mxu0 0.0
  %2593 = vmatpush1.msra.mxu0 %v781
  %2594 = vmatprep.subr.mxu0 0.0
  %2595 = vmatpush1.msra.mxu0 %v782
  %2596 = vmatprep.subr.mxu0 0.0
  %2597 = vmatpush1.msra.mxu0 %v783
  %2598 = vmatprep.subr.mxu0 0.0
  %2599 = vmatpush1.msra.mxu0 %v784
  %2600 = vmatprep.subr.mxu0 0.0
  %2601 = vmatpush1.msra.mxu0 %v785
  %2602 = vmatprep.subr.mxu0 0.0
  %2603 = vmatpush1.msra.mxu0 %v786
  %2604 = vmatprep.subr.mxu0 0.0
  %2605 = vmatpush1.msra.mxu0 %v787
  %2606 = vmatprep.subr.mxu0 0.0
  %2607 = vmatpush1.msra.mxu0 %v788
  %2608 = vmatprep.subr.mxu0 0.0
  %2609 = vmatpush1.msra.mxu0 %v789
  %2610 = vmatprep.subr.mxu0 0.0
  %2611 = vmatpush1.msra.mxu0 %v790
  %2612 = vmatprep.mubr.f32.mxu0 %v2405
  %2613 = vmatmul.mubr.f32.gmra.mrb[0].mxu0 %v2404
  %v2614 = vpop.f32.mrb[0].mxu0
  %v2615 = vadd.f32 %v2505, %v2614
  %v2616 = vpop.f32.mrb[0].mxu0
  %2617 = vmatprep.mubr.f32.mxu0 %v2409
  %2618 = vmatmul.mubr.f32.gmra.mrb[0].mxu0 %v2408
  %v2619 = vpop.f32.mrb[0].mxu0
  %v2620 = vadd.f32 %v2510, %v2619
  %v2621 = vpop.f32.mrb[0].mxu0
  %2622 = vmatprep.mubr.f32.mxu0 %v2413
  %2623 = vmatmul.mubr.f32.gmra.mrb[0].mxu0 %v2412
  %v2624 = vpop.f32.mrb[0].mxu0
  %v2625 = vadd.f32 %v2515, %v2624
  %v2626 = vpop.f32.mrb[0].mxu0
  %2627 = vmatprep.mubr.f32.mxu0 %v2417
  %2628 = vmatmul.mubr.f32.gmra.mrb[0].mxu0 %v2416
  %v2629 = vpop.f32.mrb[0].mxu0
  %v2630 = vadd.f32 %v2520, %v2629
  %v2631 = vpop.f32.mrb[0].mxu0
  %2632 = vmatprep.mubr.f32.mxu0 %v2421
  %2633 = vmatmul.mubr.f32.gmra.mrb[0].mxu0 %v2420
  %v2634 = vpop.f32.mrb[0].mxu0
  %v2635 = vadd.f32 %v2525, %v2634
  %v2636 = vpop.f32.mrb[0].mxu0
  %2637 = vmatprep.mubr.f32.mxu0 %v2425
  %2638 = vmatmul.mubr.f32.gmra.mrb[0].mxu0 %v2424
  %v2639 = vpop.f32.mrb[0].mxu0
  %v2640 = vadd.f32 %v2530, %v2639
  %v2641 = vpop.f32.mrb[0].mxu0
  %2642 = vmatprep.mubr.f32.mxu0 %v2429
  %2643 = vmatmul.mubr.f32.gmra.mrb[0].mxu0 %v2428
  %v2644 = vpop.f32.mrb[0].mxu0
  %v2645 = vadd.f32 %v2535, %v2644
  %v2646 = vpop.f32.mrb[0].mxu0
  %2647 = vmatprep.mubr.f32.mxu0 %v2433
  %2648 = vmatmul.mubr.f32.gmra.mrb[0].mxu0 %v2432
  %v2649 = vpop.f32.mrb[0].mxu0
  %v2650 = vadd.f32 %v2540, %v2649
  %v2651 = vpop.f32.mrb[0].mxu0
  %2652 = vmatprep.mubr.f32.mxu0 %v2437
  %2653 = vmatmul.mubr.f32.gmra.mrb[0].mxu0 %v2436
  %v2654 = vpop.f32.mrb[0].mxu0
  %v2655 = vadd.f32 %v2545, %v2654
  %v2656 = vpop.f32.mrb[0].mxu0
  %2657 = vdwg.mxu0
  %v2658 = vld [vmem:[%s4 + $0x80] sm:$0xff]
  %v2659 = vld [vmem:[%s4 + $0x88] sm:$0xff]
  %v2660 = vld [vmem:[%s4 + $0x90] sm:$0xff]
  %v2661 = vld [vmem:[%s4 + $0x98] sm:$0xff]
  %v2663 = vsel %vm1312, %v2615, 0
  %v2666 = vsel %vm1312, %v2620, 0
  %v2669 = vsel %vm1312, %v2625, 0
  %v2672 = vsel %vm1312, %v2630, 0
  %v2675 = vsel %vm1312, %v2635, 0
  %v2678 = vsel %vm1312, %v2640, 0
  %v2681 = vsel %vm1312, %v2645, 0
  %v2684 = vsel %vm1312, %v2650, 0
  %v2687 = vsel %vm1312, %v2655, 0
  %2689 = vmatprep.subr.mxu0 0.0
  %2690 = vmatpush1.msra.mxu0 %v2658
  %2691 = vmatprep.subr.mxu0 0.0
  %2692 = vmatpush1.msra.mxu0 %v2659
  %2693 = vmatprep.subr.mxu0 0.0
  %2694 = vmatpush1.msra.mxu0 %v2660
  %2695 = vmatprep.subr.mxu0 0.0
  %2696 = vmatpush1.msra.mxu0 %v2661
  %2697 = vmatprep.subr.mxu0 0.0
  %2698 = vmatpush1.msra.mxu0 0.0
  %2699 = vmatprep.subr.mxu0 0.0
  %2700 = vmatpush1.msra.mxu0 0.0
  %2701 = vmatprep.subr.mxu0 0.0
  %2702 = vmatpush1.msra.mxu0 0.0
  %2703 = vmatprep.subr.mxu0 0.0
  %2704 = vmatpush1.msra.mxu0 0.0
  %2705 = vmatprep.subr.mxu0 0.0
  %2706 = vmatpush1.msra.mxu0 0.0
  %2707 = vmatprep.subr.mxu0 0.0
  %2708 = vmatpush1.msra.mxu0 0.0
  %2709 = vmatprep.subr.mxu0 0.0
  %2710 = vmatpush1.msra.mxu0 0.0
  %2711 = vmatprep.subr.mxu0 0.0
  %2712 = vmatpush1.msra.mxu0 0.0
  %2713 = vmatprep.subr.mxu0 0.0
  %2714 = vmatpush1.msra.mxu0 0.0
  %2715 = vmatprep.subr.mxu0 0.0
  %2716 = vmatpush1.msra.mxu0 0.0
  %2717 = vmatprep.subr.mxu0 0.0
  %2718 = vmatpush1.msra.mxu0 0.0
  %2719 = vmatprep.subr.mxu0 0.0
  %2720 = vmatpush1.msra.mxu0 0.0
  %2721 = vmatprep.subr.mxu0 0.0
  %2722 = vmatpush1.msra.mxu0 0.0
  %2723 = vmatprep.subr.mxu0 0.0
  %2724 = vmatpush1.msra.mxu0 0.0
  %2725 = vmatprep.subr.mxu0 0.0
  %2726 = vmatpush1.msra.mxu0 0.0
  %2727 = vmatprep.subr.mxu0 0.0
  %2728 = vmatpush1.msra.mxu0 0.0
  %2729 = vmatprep.subr.mxu0 0.0
  %2730 = vmatpush1.msra.mxu0 0.0
  %2731 = vmatprep.subr.mxu0 0.0
  %2732 = vmatpush1.msra.mxu0 0.0
  %2733 = vmatprep.subr.mxu0 0.0
  %2734 = vmatpush1.msra.mxu0 0.0
  %2735 = vmatprep.subr.mxu0 0.0
  %2736 = vmatpush1.msra.mxu0 0.0
  %2737 = vmatprep.subr.mxu0 0.0
  %2738 = vmatpush1.msra.mxu0 0.0
  %2739 = vmatprep.subr.mxu0 0.0
  %2740 = vmatpush1.msra.mxu0 0.0
  %2741 = vmatprep.subr.mxu0 0.0
  %2742 = vmatpush1.msra.mxu0 0.0
  %2743 = vmatprep.subr.mxu0 0.0
  %2744 = vmatpush1.msra.mxu0 0.0
  %2745 = vmatprep.subr.mxu0 0.0
  %2746 = vmatpush1.msra.mxu0 0.0
  %2747 = vmatprep.subr.mxu0 0.0
  %2748 = vmatpush1.msra.mxu0 0.0
  %2749 = vmatprep.subr.mxu0 0.0
  %2750 = vmatpush1.msra.mxu0 0.0
  %2751 = vmatprep.subr.mxu0 0.0
  %2752 = vmatpush1.msra.mxu0 0.0
  %2753 = vmatprep.mubr.f32.mxu0 0.0
  %2754 = vmatmul.mubr.f32.gmra.mrb[0].mxu0 %v2663
  %v2755 = vpop.f32.mrb[0].mxu0
  %v2756 = vadd.f32 0.0, %v2755
  %v2757 = vpop.f32.mrb[0].mxu0
  %2758 = vmatprep.mubr.f32.mxu0 0.0
  %2759 = vmatmul.mubr.f32.gmra.mrb[0].mxu0 %v2666
  %v2760 = vpop.f32.mrb[0].mxu0
  %v2761 = vadd.f32 0.0, %v2760
  %v2762 = vpop.f32.mrb[0].mxu0
  %2763 = vmatprep.mubr.f32.mxu0 0.0
  %2764 = vmatmul.mubr.f32.gmra.mrb[0].mxu0 %v2669
  %v2765 = vpop.f32.mrb[0].mxu0
  %v2766 = vadd.f32 0.0, %v2765
  %v2767 = vpop.f32.mrb[0].mxu0
  %2768 = vmatprep.mubr.f32.mxu0 0.0
  %2769 = vmatmul.mubr.f32.gmra.mrb[0].mxu0 %v2672
  %v2770 = vpop.f32.mrb[0].mxu0
  %v2771 = vadd.f32 0.0, %v2770
  %v2772 = vpop.f32.mrb[0].mxu0
  %2773 = vmatprep.mubr.f32.mxu0 0.0
  %2774 = vmatmul.mubr.f32.gmra.mrb[0].mxu0 %v2675
  %v2775 = vpop.f32.mrb[0].mxu0
  %v2776 = vadd.f32 0.0, %v2775
  %v2777 = vpop.f32.mrb[0].mxu0
  %2778 = vmatprep.mubr.f32.mxu0 0.0
  %2779 = vmatmul.mubr.f32.gmra.mrb[0].mxu0 %v2678
  %v2780 = vpop.f32.mrb[0].mxu0
  %v2781 = vadd.f32 0.0, %v2780
  %v2782 = vpop.f32.mrb[0].mxu0
  %2783 = vmatprep.mubr.f32.mxu0 0.0
  %2784 = vmatmul.mubr.f32.gmra.mrb[0].mxu0 %v2681
  %v2785 = vpop.f32.mrb[0].mxu0
  %v2786 = vadd.f32 0.0, %v2785
  %v2787 = vpop.f32.mrb[0].mxu0
  %2788 = vmatprep.mubr.f32.mxu0 0.0
  %2789 = vmatmul.mubr.f32.gmra.mrb[0].mxu0 %v2684
  %v2790 = vpop.f32.mrb[0].mxu0
  %v2791 = vadd.f32 0.0, %v2790
  %v2792 = vpop.f32.mrb[0].mxu0
  %2793 = vmatprep.mubr.f32.mxu0 0.0
  %2794 = vmatmul.mubr.f32.gmra.mrb[0].mxu0 %v2687
  %v2795 = vpop.f32.mrb[0].mxu0
  %v2796 = vadd.f32 0.0, %v2795
  %v2797 = vpop.f32.mrb[0].mxu0
  %2798 = vdwg.mxu0
  %v2799 = vadd.f32 %v2392, %v2756
  %v2800 = vadd.f32 %v2393, %v2761
  %v2801 = vadd.f32 %v2394, %v2766
  %v2802 = vadd.f32 %v2395, %v2771
  %v2803 = vadd.f32 %v2396, %v2776
  %v2804 = vadd.f32 %v2397, %v2781
  %v2805 = vadd.f32 %v2398, %v2786
  %v2806 = vadd.f32 %v2399, %v2791
  %v2807 = vadd.f32 %v2400, %v2796
  %s2808 = scalar_lea.vmem %s3, 1440
  %v2809 = vld [vmem:[%s2808] sm:$0xff]
  %v2810 = vld [vmem:[%s2808 + $0x8] sm:$0xff]
  %v2811 = vld [vmem:[%s2808 + $0x10] sm:$0xff]
  %v2812 = vld [vmem:[%s2808 + $0x18] sm:$0xff]
  %v2813 = vld [vmem:[%s2808 + $0x20] sm:$0xff]
  %v2814 = vld [vmem:[%s2808 + $0x28] sm:$0xff]
  %v2815 = vld [vmem:[%s2808 + $0x30] sm:$0xff]
  %v2816 = vld [vmem:[%s2808 + $0x38] sm:$0xff]
  %v2817 = vld [vmem:[%s2808 + $0x40] sm:$0xff]
  %v2818 = vld [vmem:[%s2808 + $0x48] sm:$0xff]
  %v2819 = vld [vmem:[%s2808 + $0x50] sm:$0xff]
  %v2820 = vld [vmem:[%s2808 + $0x58] sm:$0xff]
  %v2821 = vld [vmem:[%s2808 + $0x60] sm:$0xff]
  %v2822 = vld [vmem:[%s2808 + $0x68] sm:$0xff]
  %v2823 = vld [vmem:[%s2808 + $0x70] sm:$0xff]
  %v2824 = vld [vmem:[%s2808 + $0x78] sm:$0xff]
  %v2825 = vld [vmem:[%s2808 + $0x80] sm:$0xff]
  %v2826 = vld [vmem:[%s2808 + $0x88] sm:$0xff]
  %v2827 = vld [vmem:[%s2808 + $0x90] sm:$0xff]
  %v2828 = vld [vmem:[%s2808 + $0x98] sm:$0xff]
  %v2829 = vld [vmem:[%s2808 + $0xa0] sm:$0xff]
  %v2830 = vld [vmem:[%s2808 + $0xa8] sm:$0xff]
  %v2831 = vld [vmem:[%s2808 + $0xb0] sm:$0xff]
  %v2832 = vld [vmem:[%s2808 + $0xb8] sm:$0xff]
  %v2833 = vld [vmem:[%s2808 + $0xc0] sm:$0xff]
  %v2834 = vld [vmem:[%s2808 + $0xc8] sm:$0xff]
  %v2835 = vld [vmem:[%s2808 + $0xd0] sm:$0xff]
  %v2836 = vld [vmem:[%s2808 + $0xd8] sm:$0xff]
  %v2837 = vld [vmem:[%s2808 + $0xe0] sm:$0xff]
  %v2838 = vld [vmem:[%s2808 + $0xe8] sm:$0xff]
  %v2839 = vld [vmem:[%s2808 + $0xf0] sm:$0xff]
  %v2840 = vld [vmem:[%s2808 + $0xf8] sm:$0xff]
  %v2841 = vld [vmem:[%s2808 + $0x100] sm:$0xff]
  %v2842 = vld [vmem:[%s2808 + $0x108] sm:$0xff]
  %v2843 = vld [vmem:[%s2808 + $0x110] sm:$0xff]
  %v2844 = vld [vmem:[%s2808 + $0x118] sm:$0xff]
  %2845 = vmatprep.subr.mxu0 0.0
  %2846 = vmatpush1.msra.mxu0 %v727
  %2847 = vmatprep.subr.mxu0 0.0
  %2848 = vmatpush1.msra.mxu0 %v728
  %2849 = vmatprep.subr.mxu0 0.0
  %2850 = vmatpush1.msra.mxu0 %v729
  %2851 = vmatprep.subr.mxu0 0.0
  %2852 = vmatpush1.msra.mxu0 %v730
  %2853 = vmatprep.subr.mxu0 0.0
  %2854 = vmatpush1.msra.mxu0 %v731
  %2855 = vmatprep.subr.mxu0 0.0
  %2856 = vmatpush1.msra.mxu0 %v732
  %2857 = vmatprep.subr.mxu0 0.0
  %2858 = vmatpush1.msra.mxu0 %v733
  %2859 = vmatprep.subr.mxu0 0.0
  %2860 = vmatpush1.msra.mxu0 %v734
  %2861 = vmatprep.subr.mxu0 0.0
  %2862 = vmatpush1.msra.mxu0 %v735
  %2863 = vmatprep.subr.mxu0 0.0
  %2864 = vmatpush1.msra.mxu0 %v736
  %2865 = vmatprep.subr.mxu0 0.0
  %2866 = vmatpush1.msra.mxu0 %v737
  %2867 = vmatprep.subr.mxu0 0.0
  %2868 = vmatpush1.msra.mxu0 %v738
  %2869 = vmatprep.subr.mxu0 0.0
  %2870 = vmatpush1.msra.mxu0 %v739
  %2871 = vmatprep.subr.mxu0 0.0
  %2872 = vmatpush1.msra.mxu0 %v740
  %2873 = vmatprep.subr.mxu0 0.0
  %2874 = vmatpush1.msra.mxu0 %v741
  %2875 = vmatprep.subr.mxu0 0.0
  %2876 = vmatpush1.msra.mxu0 %v742
  %2877 = vmatprep.subr.mxu0 0.0
  %2878 = vmatpush1.msra.mxu0 %v743
  %2879 = vmatprep.subr.mxu0 0.0
  %2880 = vmatpush1.msra.mxu0 %v744
  %2881 = vmatprep.subr.mxu0 0.0
  %2882 = vmatpush1.msra.mxu0 %v745
  %2883 = vmatprep.subr.mxu0 0.0
  %2884 = vmatpush1.msra.mxu0 %v746
  %2885 = vmatprep.subr.mxu0 0.0
  %2886 = vmatpush1.msra.mxu0 %v747
  %2887 = vmatprep.subr.mxu0 0.0
  %2888 = vmatpush1.msra.mxu0 %v748
  %2889 = vmatprep.subr.mxu0 0.0
  %2890 = vmatpush1.msra.mxu0 %v749
  %2891 = vmatprep.subr.mxu0 0.0
  %2892 = vmatpush1.msra.mxu0 %v750
  %2893 = vmatprep.subr.mxu0 0.0
  %2894 = vmatpush1.msra.mxu0 %v751
  %2895 = vmatprep.subr.mxu0 0.0
  %2896 = vmatpush1.msra.mxu0 %v752
  %2897 = vmatprep.subr.mxu0 0.0
  %2898 = vmatpush1.msra.mxu0 %v753
  %2899 = vmatprep.subr.mxu0 0.0
  %2900 = vmatpush1.msra.mxu0 %v754
  %2901 = vmatprep.subr.mxu0 0.0
  %2902 = vmatpush1.msra.mxu0 %v755
  %2903 = vmatprep.subr.mxu0 0.0
  %2904 = vmatpush1.msra.mxu0 %v756
  %2905 = vmatprep.subr.mxu0 0.0
  %2906 = vmatpush1.msra.mxu0 %v757
  %2907 = vmatprep.subr.mxu0 0.0
  %2908 = vmatpush1.msra.mxu0 %v758
  %2909 = vmatprep.mubr.f32.mxu0 %v2810
  %2910 = vmatmul.mubr.f32.gmra.mrb[0].mxu0 %v2809
  %v2911 = vpop.f32.mrb[0].mxu0
  %v2912 = vadd.f32 0.0, %v2911
  %v2913 = vpop.f32.mrb[0].mxu0
  %2914 = vmatprep.mubr.f32.mxu0 %v2814
  %2915 = vmatmul.mubr.f32.gmra.mrb[0].mxu0 %v2813
  %v2916 = vpop.f32.mrb[0].mxu0
  %v2917 = vadd.f32 0.0, %v2916
  %v2918 = vpop.f32.mrb[0].mxu0
  %2919 = vmatprep.mubr.f32.mxu0 %v2818
  %2920 = vmatmul.mubr.f32.gmra.mrb[0].mxu0 %v2817
  %v2921 = vpop.f32.mrb[0].mxu0
  %v2922 = vadd.f32 0.0, %v2921
  %v2923 = vpop.f32.mrb[0].mxu0
  %2924 = vmatprep.mubr.f32.mxu0 %v2822
  %2925 = vmatmul.mubr.f32.gmra.mrb[0].mxu0 %v2821
  %v2926 = vpop.f32.mrb[0].mxu0
  %v2927 = vadd.f32 0.0, %v2926
  %v2928 = vpop.f32.mrb[0].mxu0
  %2929 = vmatprep.mubr.f32.mxu0 %v2826
  %2930 = vmatmul.mubr.f32.gmra.mrb[0].mxu0 %v2825
  %v2931 = vpop.f32.mrb[0].mxu0
  %v2932 = vadd.f32 0.0, %v2931
  %v2933 = vpop.f32.mrb[0].mxu0
  %2934 = vmatprep.mubr.f32.mxu0 %v2830
  %2935 = vmatmul.mubr.f32.gmra.mrb[0].mxu0 %v2829
  %v2936 = vpop.f32.mrb[0].mxu0
  %v2937 = vadd.f32 0.0, %v2936
  %v2938 = vpop.f32.mrb[0].mxu0
  %2939 = vmatprep.mubr.f32.mxu0 %v2834
  %2940 = vmatmul.mubr.f32.gmra.mrb[0].mxu0 %v2833
  %v2941 = vpop.f32.mrb[0].mxu0
  %v2942 = vadd.f32 0.0, %v2941
  %v2943 = vpop.f32.mrb[0].mxu0
  %2944 = vmatprep.mubr.f32.mxu0 %v2838
  %2945 = vmatmul.mubr.f32.gmra.mrb[0].mxu0 %v2837
  %v2946 = vpop.f32.mrb[0].mxu0
  %v2947 = vadd.f32 0.0, %v2946
  %v2948 = vpop.f32.mrb[0].mxu0
  %2949 = vmatprep.mubr.f32.mxu0 %v2842
  %2950 = vmatmul.mubr.f32.gmra.mrb[0].mxu0 %v2841
  %v2951 = vpop.f32.mrb[0].mxu0
  %v2952 = vadd.f32 0.0, %v2951
  %v2953 = vpop.f32.mrb[0].mxu0
  %2954 = vdwg.mxu0
  %2955 = vmatprep.subr.mxu0 0.0
  %2956 = vmatpush1.msra.mxu0 %v759
  %2957 = vmatprep.subr.mxu0 0.0
  %2958 = vmatpush1.msra.mxu0 %v760
  %2959 = vmatprep.subr.mxu0 0.0
  %2960 = vmatpush1.msra.mxu0 %v761
  %2961 = vmatprep.subr.mxu0 0.0
  %2962 = vmatpush1.msra.mxu0 %v762
  %2963 = vmatprep.subr.mxu0 0.0
  %2964 = vmatpush1.msra.mxu0 %v763
  %2965 = vmatprep.subr.mxu0 0.0
  %2966 = vmatpush1.msra.mxu0 %v764
  %2967 = vmatprep.subr.mxu0 0.0
  %2968 = vmatpush1.msra.mxu0 %v765
  %2969 = vmatprep.subr.mxu0 0.0
  %2970 = vmatpush1.msra.mxu0 %v766
  %2971 = vmatprep.subr.mxu0 0.0
  %2972 = vmatpush1.msra.mxu0 %v767
  %2973 = vmatprep.subr.mxu0 0.0
  %2974 = vmatpush1.msra.mxu0 %v768
  %2975 = vmatprep.subr.mxu0 0.0
  %2976 = vmatpush1.msra.mxu0 %v769
  %2977 = vmatprep.subr.mxu0 0.0
  %2978 = vmatpush1.msra.mxu0 %v770
  %2979 = vmatprep.subr.mxu0 0.0
  %2980 = vmatpush1.msra.mxu0 %v771
  %2981 = vmatprep.subr.mxu0 0.0
  %2982 = vmatpush1.msra.mxu0 %v772
  %2983 = vmatprep.subr.mxu0 0.0
  %2984 = vmatpush1.msra.mxu0 %v773
  %2985 = vmatprep.subr.mxu0 0.0
  %2986 = vmatpush1.msra.mxu0 %v774
  %2987 = vmatprep.subr.mxu0 0.0
  %2988 = vmatpush1.msra.mxu0 %v775
  %2989 = vmatprep.subr.mxu0 0.0
  %2990 = vmatpush1.msra.mxu0 %v776
  %2991 = vmatprep.subr.mxu0 0.0
  %2992 = vmatpush1.msra.mxu0 %v777
  %2993 = vmatprep.subr.mxu0 0.0
  %2994 = vmatpush1.msra.mxu0 %v778
  %2995 = vmatprep.subr.mxu0 0.0
  %2996 = vmatpush1.msra.mxu0 %v779
  %2997 = vmatprep.subr.mxu0 0.0
  %2998 = vmatpush1.msra.mxu0 %v780
  %2999 = vmatprep.subr.mxu0 0.0
  %3000 = vmatpush1.msra.mxu0 %v781
  %3001 = vmatprep.subr.mxu0 0.0
  %3002 = vmatpush1.msra.mxu0 %v782
  %3003 = vmatprep.subr.mxu0 0.0
  %3004 = vmatpush1.msra.mxu0 %v783
  %3005 = vmatprep.subr.mxu0 0.0
  %3006 = vmatpush1.msra.mxu0 %v784
  %3007 = vmatprep.subr.mxu0 0.0
  %3008 = vmatpush1.msra.mxu0 %v785
  %3009 = vmatprep.subr.mxu0 0.0
  %3010 = vmatpush1.msra.mxu0 %v786
  %3011 = vmatprep.subr.mxu0 0.0
  %3012 = vmatpush1.msra.mxu0 %v787
  %3013 = vmatprep.subr.mxu0 0.0
  %3014 = vmatpush1.msra.mxu0 %v788
  %3015 = vmatprep.subr.mxu0 0.0
  %3016 = vmatpush1.msra.mxu0 %v789
  %3017 = vmatprep.subr.mxu0 0.0
  %3018 = vmatpush1.msra.mxu0 %v790
  %3019 = vmatprep.mubr.f32.mxu0 %v2812
  %3020 = vmatmul.mubr.f32.gmra.mrb[0].mxu0 %v2811
  %v3021 = vpop.f32.mrb[0].mxu0
  %v3022 = vadd.f32 %v2912, %v3021
  %v3023 = vpop.f32.mrb[0].mxu0
  %3024 = vmatprep.mubr.f32.mxu0 %v2816
  %3025 = vmatmul.mubr.f32.gmra.mrb[0].mxu0 %v2815
  %v3026 = vpop.f32.mrb[0].mxu0
  %v3027 = vadd.f32 %v2917, %v3026
  %v3028 = vpop.f32.mrb[0].mxu0
  %3029 = vmatprep.mubr.f32.mxu0 %v2820
  %3030 = vmatmul.mubr.f32.gmra.mrb[0].mxu0 %v2819
  %v3031 = vpop.f32.mrb[0].mxu0
  %v3032 = vadd.f32 %v2922, %v3031
  %v3033 = vpop.f32.mrb[0].mxu0
  %3034 = vmatprep.mubr.f32.mxu0 %v2824
  %3035 = vmatmul.mubr.f32.gmra.mrb[0].mxu0 %v2823
  %v3036 = vpop.f32.mrb[0].mxu0
  %v3037 = vadd.f32 %v2927, %v3036
  %v3038 = vpop.f32.mrb[0].mxu0
  %3039 = vmatprep.mubr.f32.mxu0 %v2828
  %3040 = vmatmul.mubr.f32.gmra.mrb[0].mxu0 %v2827
  %v3041 = vpop.f32.mrb[0].mxu0
  %v3042 = vadd.f32 %v2932, %v3041
  %v3043 = vpop.f32.mrb[0].mxu0
  %3044 = vmatprep.mubr.f32.mxu0 %v2832
  %3045 = vmatmul.mubr.f32.gmra.mrb[0].mxu0 %v2831
  %v3046 = vpop.f32.mrb[0].mxu0
  %v3047 = vadd.f32 %v2937, %v3046
  %v3048 = vpop.f32.mrb[0].mxu0
  %3049 = vmatprep.mubr.f32.mxu0 %v2836
  %3050 = vmatmul.mubr.f32.gmra.mrb[0].mxu0 %v2835
  %v3051 = vpop.f32.mrb[0].mxu0
  %v3052 = vadd.f32 %v2942, %v3051
  %v3053 = vpop.f32.mrb[0].mxu0
  %3054 = vmatprep.mubr.f32.mxu0 %v2840
  %3055 = vmatmul.mubr.f32.gmra.mrb[0].mxu0 %v2839
  %v3056 = vpop.f32.mrb[0].mxu0
  %v3057 = vadd.f32 %v2947, %v3056
  %v3058 = vpop.f32.mrb[0].mxu0
  %3059 = vmatprep.mubr.f32.mxu0 %v2844
  %3060 = vmatmul.mubr.f32.gmra.mrb[0].mxu0 %v2843
  %v3061 = vpop.f32.mrb[0].mxu0
  %v3062 = vadd.f32 %v2952, %v3061
  %v3063 = vpop.f32.mrb[0].mxu0
  %3064 = vdwg.mxu0
  %v3065 = vld [vmem:[%s4 + $0xa0] sm:$0xff]
  %v3066 = vld [vmem:[%s4 + $0xa8] sm:$0xff]
  %v3067 = vld [vmem:[%s4 + $0xb0] sm:$0xff]
  %v3068 = vld [vmem:[%s4 + $0xb8] sm:$0xff]
  %v3070 = vsel %vm1312, %v3022, 0
  %v3073 = vsel %vm1312, %v3027, 0
  %v3076 = vsel %vm1312, %v3032, 0
  %v3079 = vsel %vm1312, %v3037, 0
  %v3082 = vsel %vm1312, %v3042, 0
  %v3085 = vsel %vm1312, %v3047, 0
  %v3088 = vsel %vm1312, %v3052, 0
  %v3091 = vsel %vm1312, %v3057, 0
  %v3094 = vsel %vm1312, %v3062, 0
  %3096 = vmatprep.subr.mxu0 0.0
  %3097 = vmatpush1.msra.mxu0 %v3065
  %3098 = vmatprep.subr.mxu0 0.0
  %3099 = vmatpush1.msra.mxu0 %v3066
  %3100 = vmatprep.subr.mxu0 0.0
  %3101 = vmatpush1.msra.mxu0 %v3067
  %3102 = vmatprep.subr.mxu0 0.0
  %3103 = vmatpush1.msra.mxu0 %v3068
  %3104 = vmatprep.subr.mxu0 0.0
  %3105 = vmatpush1.msra.mxu0 0.0
  %3106 = vmatprep.subr.mxu0 0.0
  %3107 = vmatpush1.msra.mxu0 0.0
  %3108 = vmatprep.subr.mxu0 0.0
  %3109 = vmatpush1.msra.mxu0 0.0
  %3110 = vmatprep.subr.mxu0 0.0
  %3111 = vmatpush1.msra.mxu0 0.0
  %3112 = vmatprep.subr.mxu0 0.0
  %3113 = vmatpush1.msra.mxu0 0.0
  %3114 = vmatprep.subr.mxu0 0.0
  %3115 = vmatpush1.msra.mxu0 0.0
  %3116 = vmatprep.subr.mxu0 0.0
  %3117 = vmatpush1.msra.mxu0 0.0
  %3118 = vmatprep.subr.mxu0 0.0
  %3119 = vmatpush1.msra.mxu0 0.0
  %3120 = vmatprep.subr.mxu0 0.0
  %3121 = vmatpush1.msra.mxu0 0.0
  %3122 = vmatprep.subr.mxu0 0.0
  %3123 = vmatpush1.msra.mxu0 0.0
  %3124 = vmatprep.subr.mxu0 0.0
  %3125 = vmatpush1.msra.mxu0 0.0
  %3126 = vmatprep.subr.mxu0 0.0
  %3127 = vmatpush1.msra.mxu0 0.0
  %3128 = vmatprep.subr.mxu0 0.0
  %3129 = vmatpush1.msra.mxu0 0.0
  %3130 = vmatprep.subr.mxu0 0.0
  %3131 = vmatpush1.msra.mxu0 0.0
  %3132 = vmatprep.subr.mxu0 0.0
  %3133 = vmatpush1.msra.mxu0 0.0
  %3134 = vmatprep.subr.mxu0 0.0
  %3135 = vmatpush1.msra.mxu0 0.0
  %3136 = vmatprep.subr.mxu0 0.0
  %3137 = vmatpush1.msra.mxu0 0.0
  %3138 = vmatprep.subr.mxu0 0.0
  %3139 = vmatpush1.msra.mxu0 0.0
  %3140 = vmatprep.subr.mxu0 0.0
  %3141 = vmatpush1.msra.mxu0 0.0
  %3142 = vmatprep.subr.mxu0 0.0
  %3143 = vmatpush1.msra.mxu0 0.0
  %3144 = vmatprep.subr.mxu0 0.0
  %3145 = vmatpush1.msra.mxu0 0.0
  %3146 = vmatprep.subr.mxu0 0.0
  %3147 = vmatpush1.msra.mxu0 0.0
  %3148 = vmatprep.subr.mxu0 0.0
  %3149 = vmatpush1.msra.mxu0 0.0
  %3150 = vmatprep.subr.mxu0 0.0
  %3151 = vmatpush1.msra.mxu0 0.0
  %3152 = vmatprep.subr.mxu0 0.0
  %3153 = vmatpush1.msra.mxu0 0.0
  %3154 = vmatprep.subr.mxu0 0.0
  %3155 = vmatpush1.msra.mxu0 0.0
  %3156 = vmatprep.subr.mxu0 0.0
  %3157 = vmatpush1.msra.mxu0 0.0
  %3158 = vmatprep.subr.mxu0 0.0
  %3159 = vmatpush1.msra.mxu0 0.0
  %3160 = vmatprep.mubr.f32.mxu0 0.0
  %3161 = vmatmul.mubr.f32.gmra.mrb[0].mxu0 %v3070
  %v3162 = vpop.f32.mrb[0].mxu0
  %v3163 = vadd.f32 0.0, %v3162
  %v3164 = vpop.f32.mrb[0].mxu0
  %3165 = vmatprep.mubr.f32.mxu0 0.0
  %3166 = vmatmul.mubr.f32.gmra.mrb[0].mxu0 %v3073
  %v3167 = vpop.f32.mrb[0].mxu0
  %v3168 = vadd.f32 0.0, %v3167
  %v3169 = vpop.f32.mrb[0].mxu0
  %3170 = vmatprep.mubr.f32.mxu0 0.0
  %3171 = vmatmul.mubr.f32.gmra.mrb[0].mxu0 %v3076
  %v3172 = vpop.f32.mrb[0].mxu0
  %v3173 = vadd.f32 0.0, %v3172
  %v3174 = vpop.f32.mrb[0].mxu0
  %3175 = vmatprep.mubr.f32.mxu0 0.0
  %3176 = vmatmul.mubr.f32.gmra.mrb[0].mxu0 %v3079
  %v3177 = vpop.f32.mrb[0].mxu0
  %v3178 = vadd.f32 0.0, %v3177
  %v3179 = vpop.f32.mrb[0].mxu0
  %3180 = vmatprep.mubr.f32.mxu0 0.0
  %3181 = vmatmul.mubr.f32.gmra.mrb[0].mxu0 %v3082
  %v3182 = vpop.f32.mrb[0].mxu0
  %v3183 = vadd.f32 0.0, %v3182
  %v3184 = vpop.f32.mrb[0].mxu0
  %3185 = vmatprep.mubr.f32.mxu0 0.0
  %3186 = vmatmul.mubr.f32.gmra.mrb[0].mxu0 %v3085
  %v3187 = vpop.f32.mrb[0].mxu0
  %v3188 = vadd.f32 0.0, %v3187
  %v3189 = vpop.f32.mrb[0].mxu0
  %3190 = vmatprep.mubr.f32.mxu0 0.0
  %3191 = vmatmul.mubr.f32.gmra.mrb[0].mxu0 %v3088
  %v3192 = vpop.f32.mrb[0].mxu0
  %v3193 = vadd.f32 0.0, %v3192
  %v3194 = vpop.f32.mrb[0].mxu0
  %3195 = vmatprep.mubr.f32.mxu0 0.0
  %3196 = vmatmul.mubr.f32.gmra.mrb[0].mxu0 %v3091
  %v3197 = vpop.f32.mrb[0].mxu0
  %v3198 = vadd.f32 0.0, %v3197
  %v3199 = vpop.f32.mrb[0].mxu0
  %3200 = vmatprep.mubr.f32.mxu0 0.0
  %3201 = vmatmul.mubr.f32.gmra.mrb[0].mxu0 %v3094
  %v3202 = vpop.f32.mrb[0].mxu0
  %v3203 = vadd.f32 0.0, %v3202
  %v3204 = vpop.f32.mrb[0].mxu0
  %3205 = vdwg.mxu0
  %v3206 = vadd.f32 %v2799, %v3163
  %v3207 = vadd.f32 %v2800, %v3168
  %v3208 = vadd.f32 %v2801, %v3173
  %v3209 = vadd.f32 %v2802, %v3178
  %v3210 = vadd.f32 %v2803, %v3183
  %v3211 = vadd.f32 %v2804, %v3188
  %v3212 = vadd.f32 %v2805, %v3193
  %v3213 = vadd.f32 %v2806, %v3198
  %v3214 = vadd.f32 %v2807, %v3203
  %s3215 = scalar_lea.vmem %s3, 1728
  %v3216 = vld [vmem:[%s3215] sm:$0xff]
  %v3217 = vld [vmem:[%s3215 + $0x8] sm:$0xff]
  %v3218 = vld [vmem:[%s3215 + $0x10] sm:$0xff]
  %v3219 = vld [vmem:[%s3215 + $0x18] sm:$0xff]
  %v3220 = vld [vmem:[%s3215 + $0x20] sm:$0xff]
  %v3221 = vld [vmem:[%s3215 + $0x28] sm:$0xff]
  %v3222 = vld [vmem:[%s3215 + $0x30] sm:$0xff]
  %v3223 = vld [vmem:[%s3215 + $0x38] sm:$0xff]
  %v3224 = vld [vmem:[%s3215 + $0x40] sm:$0xff]
  %v3225 = vld [vmem:[%s3215 + $0x48] sm:$0xff]
  %v3226 = vld [vmem:[%s3215 + $0x50] sm:$0xff]
  %v3227 = vld [vmem:[%s3215 + $0x58] sm:$0xff]
  %v3228 = vld [vmem:[%s3215 + $0x60] sm:$0xff]
  %v3229 = vld [vmem:[%s3215 + $0x68] sm:$0xff]
  %v3230 = vld [vmem:[%s3215 + $0x70] sm:$0xff]
  %v3231 = vld [vmem:[%s3215 + $0x78] sm:$0xff]
  %v3232 = vld [vmem:[%s3215 + $0x80] sm:$0xff]
  %v3233 = vld [vmem:[%s3215 + $0x88] sm:$0xff]
  %v3234 = vld [vmem:[%s3215 + $0x90] sm:$0xff]
  %v3235 = vld [vmem:[%s3215 + $0x98] sm:$0xff]
  %v3236 = vld [vmem:[%s3215 + $0xa0] sm:$0xff]
  %v3237 = vld [vmem:[%s3215 + $0xa8] sm:$0xff]
  %v3238 = vld [vmem:[%s3215 + $0xb0] sm:$0xff]
  %v3239 = vld [vmem:[%s3215 + $0xb8] sm:$0xff]
  %v3240 = vld [vmem:[%s3215 + $0xc0] sm:$0xff]
  %v3241 = vld [vmem:[%s3215 + $0xc8] sm:$0xff]
  %v3242 = vld [vmem:[%s3215 + $0xd0] sm:$0xff]
  %v3243 = vld [vmem:[%s3215 + $0xd8] sm:$0xff]
  %v3244 = vld [vmem:[%s3215 + $0xe0] sm:$0xff]
  %v3245 = vld [vmem:[%s3215 + $0xe8] sm:$0xff]
  %v3246 = vld [vmem:[%s3215 + $0xf0] sm:$0xff]
  %v3247 = vld [vmem:[%s3215 + $0xf8] sm:$0xff]
  %v3248 = vld [vmem:[%s3215 + $0x100] sm:$0xff]
  %v3249 = vld [vmem:[%s3215 + $0x108] sm:$0xff]
  %v3250 = vld [vmem:[%s3215 + $0x110] sm:$0xff]
  %v3251 = vld [vmem:[%s3215 + $0x118] sm:$0xff]
  %3252 = vmatprep.subr.mxu0 0.0
  %3253 = vmatpush1.msra.mxu0 %v727
  %3254 = vmatprep.subr.mxu0 0.0
  %3255 = vmatpush1.msra.mxu0 %v728
  %3256 = vmatprep.subr.mxu0 0.0
  %3257 = vmatpush1.msra.mxu0 %v729
  %3258 = vmatprep.subr.mxu0 0.0
  %3259 = vmatpush1.msra.mxu0 %v730
  %3260 = vmatprep.subr.mxu0 0.0
  %3261 = vmatpush1.msra.mxu0 %v731
  %3262 = vmatprep.subr.mxu0 0.0
  %3263 = vmatpush1.msra.mxu0 %v732
  %3264 = vmatprep.subr.mxu0 0.0
  %3265 = vmatpush1.msra.mxu0 %v733
  %3266 = vmatprep.subr.mxu0 0.0
  %3267 = vmatpush1.msra.mxu0 %v734
  %3268 = vmatprep.subr.mxu0 0.0
  %3269 = vmatpush1.msra.mxu0 %v735
  %3270 = vmatprep.subr.mxu0 0.0
  %3271 = vmatpush1.msra.mxu0 %v736
  %3272 = vmatprep.subr.mxu0 0.0
  %3273 = vmatpush1.msra.mxu0 %v737
  %3274 = vmatprep.subr.mxu0 0.0
  %3275 = vmatpush1.msra.mxu0 %v738
  %3276 = vmatprep.subr.mxu0 0.0
  %3277 = vmatpush1.msra.mxu0 %v739
  %3278 = vmatprep.subr.mxu0 0.0
  %3279 = vmatpush1.msra.mxu0 %v740
  %3280 = vmatprep.subr.mxu0 0.0
  %3281 = vmatpush1.msra.mxu0 %v741
  %3282 = vmatprep.subr.mxu0 0.0
  %3283 = vmatpush1.msra.mxu0 %v742
  %3284 = vmatprep.subr.mxu0 0.0
  %3285 = vmatpush1.msra.mxu0 %v743
  %3286 = vmatprep.subr.mxu0 0.0
  %3287 = vmatpush1.msra.mxu0 %v744
  %3288 = vmatprep.subr.mxu0 0.0
  %3289 = vmatpush1.msra.mxu0 %v745
  %3290 = vmatprep.subr.mxu0 0.0
  %3291 = vmatpush1.msra.mxu0 %v746
  %3292 = vmatprep.subr.mxu0 0.0
  %3293 = vmatpush1.msra.mxu0 %v747
  %3294 = vmatprep.subr.mxu0 0.0
  %3295 = vmatpush1.msra.mxu0 %v748
  %3296 = vmatprep.subr.mxu0 0.0
  %3297 = vmatpush1.msra.mxu0 %v749
  %3298 = vmatprep.subr.mxu0 0.0
  %3299 = vmatpush1.msra.mxu0 %v750
  %3300 = vmatprep.subr.mxu0 0.0
  %3301 = vmatpush1.msra.mxu0 %v751
  %3302 = vmatprep.subr.mxu0 0.0
  %3303 = vmatpush1.msra.mxu0 %v752
  %3304 = vmatprep.subr.mxu0 0.0
  %3305 = vmatpush1.msra.mxu0 %v753
  %3306 = vmatprep.subr.mxu0 0.0
  %3307 = vmatpush1.msra.mxu0 %v754
  %3308 = vmatprep.subr.mxu0 0.0
  %3309 = vmatpush1.msra.mxu0 %v755
  %3310 = vmatprep.subr.mxu0 0.0
  %3311 = vmatpush1.msra.mxu0 %v756
  %3312 = vmatprep.subr.mxu0 0.0
  %3313 = vmatpush1.msra.mxu0 %v757
  %3314 = vmatprep.subr.mxu0 0.0
  %3315 = vmatpush1.msra.mxu0 %v758
  %3316 = vmatprep.mubr.f32.mxu0 %v3217
  %3317 = vmatmul.mubr.f32.gmra.mrb[0].mxu0 %v3216
  %v3318 = vpop.f32.mrb[0].mxu0
  %v3319 = vadd.f32 0.0, %v3318
  %v3320 = vpop.f32.mrb[0].mxu0
  %3321 = vmatprep.mubr.f32.mxu0 %v3221
  %3322 = vmatmul.mubr.f32.gmra.mrb[0].mxu0 %v3220
  %v3323 = vpop.f32.mrb[0].mxu0
  %v3324 = vadd.f32 0.0, %v3323
  %v3325 = vpop.f32.mrb[0].mxu0
  %3326 = vmatprep.mubr.f32.mxu0 %v3225
  %3327 = vmatmul.mubr.f32.gmra.mrb[0].mxu0 %v3224
  %v3328 = vpop.f32.mrb[0].mxu0
  %v3329 = vadd.f32 0.0, %v3328
  %v3330 = vpop.f32.mrb[0].mxu0
  %3331 = vmatprep.mubr.f32.mxu0 %v3229
  %3332 = vmatmul.mubr.f32.gmra.mrb[0].mxu0 %v3228
  %v3333 = vpop.f32.mrb[0].mxu0
  %v3334 = vadd.f32 0.0, %v3333
  %v3335 = vpop.f32.mrb[0].mxu0
  %3336 = vmatprep.mubr.f32.mxu0 %v3233
  %3337 = vmatmul.mubr.f32.gmra.mrb[0].mxu0 %v3232
  %v3338 = vpop.f32.mrb[0].mxu0
  %v3339 = vadd.f32 0.0, %v3338
  %v3340 = vpop.f32.mrb[0].mxu0
  %3341 = vmatprep.mubr.f32.mxu0 %v3237
  %3342 = vmatmul.mubr.f32.gmra.mrb[0].mxu0 %v3236
  %v3343 = vpop.f32.mrb[0].mxu0
  %v3344 = vadd.f32 0.0, %v3343
  %v3345 = vpop.f32.mrb[0].mxu0
  %3346 = vmatprep.mubr.f32.mxu0 %v3241
  %3347 = vmatmul.mubr.f32.gmra.mrb[0].mxu0 %v3240
  %v3348 = vpop.f32.mrb[0].mxu0
  %v3349 = vadd.f32 0.0, %v3348
  %v3350 = vpop.f32.mrb[0].mxu0
  %3351 = vmatprep.mubr.f32.mxu0 %v3245
  %3352 = vmatmul.mubr.f32.gmra.mrb[0].mxu0 %v3244
  %v3353 = vpop.f32.mrb[0].mxu0
  %v3354 = vadd.f32 0.0, %v3353
  %v3355 = vpop.f32.mrb[0].mxu0
  %3356 = vmatprep.mubr.f32.mxu0 %v3249
  %3357 = vmatmul.mubr.f32.gmra.mrb[0].mxu0 %v3248
  %v3358 = vpop.f32.mrb[0].mxu0
  %v3359 = vadd.f32 0.0, %v3358
  %v3360 = vpop.f32.mrb[0].mxu0
  %3361 = vdwg.mxu0
  %3362 = vmatprep.subr.mxu0 0.0
  %3363 = vmatpush1.msra.mxu0 %v759
  %3364 = vmatprep.subr.mxu0 0.0
  %3365 = vmatpush1.msra.mxu0 %v760
  %3366 = vmatprep.subr.mxu0 0.0
  %3367 = vmatpush1.msra.mxu0 %v761
  %3368 = vmatprep.subr.mxu0 0.0
  %3369 = vmatpush1.msra.mxu0 %v762
  %3370 = vmatprep.subr.mxu0 0.0
  %3371 = vmatpush1.msra.mxu0 %v763
  %3372 = vmatprep.subr.mxu0 0.0
  %3373 = vmatpush1.msra.mxu0 %v764
  %3374 = vmatprep.subr.mxu0 0.0
  %3375 = vmatpush1.msra.mxu0 %v765
  %3376 = vmatprep.subr.mxu0 0.0
  %3377 = vmatpush1.msra.mxu0 %v766
  %3378 = vmatprep.subr.mxu0 0.0
  %3379 = vmatpush1.msra.mxu0 %v767
  %3380 = vmatprep.subr.mxu0 0.0
  %3381 = vmatpush1.msra.mxu0 %v768
  %3382 = vmatprep.subr.mxu0 0.0
  %3383 = vmatpush1.msra.mxu0 %v769
  %3384 = vmatprep.subr.mxu0 0.0
  %3385 = vmatpush1.msra.mxu0 %v770
  %3386 = vmatprep.subr.mxu0 0.0
  %3387 = vmatpush1.msra.mxu0 %v771
  %3388 = vmatprep.subr.mxu0 0.0
  %3389 = vmatpush1.msra.mxu0 %v772
  %3390 = vmatprep.subr.mxu0 0.0
  %3391 = vmatpush1.msra.mxu0 %v773
  %3392 = vmatprep.subr.mxu0 0.0
  %3393 = vmatpush1.msra.mxu0 %v774
  %3394 = vmatprep.subr.mxu0 0.0
  %3395 = vmatpush1.msra.mxu0 %v775
  %3396 = vmatprep.subr.mxu0 0.0
  %3397 = vmatpush1.msra.mxu0 %v776
  %3398 = vmatprep.subr.mxu0 0.0
  %3399 = vmatpush1.msra.mxu0 %v777
  %3400 = vmatprep.subr.mxu0 0.0
  %3401 = vmatpush1.msra.mxu0 %v778
  %3402 = vmatprep.subr.mxu0 0.0
  %3403 = vmatpush1.msra.mxu0 %v779
  %3404 = vmatprep.subr.mxu0 0.0
  %3405 = vmatpush1.msra.mxu0 %v780
  %3406 = vmatprep.subr.mxu0 0.0
  %3407 = vmatpush1.msra.mxu0 %v781
  %3408 = vmatprep.subr.mxu0 0.0
  %3409 = vmatpush1.msra.mxu0 %v782
  %3410 = vmatprep.subr.mxu0 0.0
  %3411 = vmatpush1.msra.mxu0 %v783
  %3412 = vmatprep.subr.mxu0 0.0
  %3413 = vmatpush1.msra.mxu0 %v784
  %3414 = vmatprep.subr.mxu0 0.0
  %3415 = vmatpush1.msra.mxu0 %v785
  %3416 = vmatprep.subr.mxu0 0.0
  %3417 = vmatpush1.msra.mxu0 %v786
  %3418 = vmatprep.subr.mxu0 0.0
  %3419 = vmatpush1.msra.mxu0 %v787
  %3420 = vmatprep.subr.mxu0 0.0
  %3421 = vmatpush1.msra.mxu0 %v788
  %3422 = vmatprep.subr.mxu0 0.0
  %3423 = vmatpush1.msra.mxu0 %v789
  %3424 = vmatprep.subr.mxu0 0.0
  %3425 = vmatpush1.msra.mxu0 %v790
  %3426 = vmatprep.mubr.f32.mxu0 %v3219
  %3427 = vmatmul.mubr.f32.gmra.mrb[0].mxu0 %v3218
  %v3428 = vpop.f32.mrb[0].mxu0
  %v3429 = vadd.f32 %v3319, %v3428
  %v3430 = vpop.f32.mrb[0].mxu0
  %3431 = vmatprep.mubr.f32.mxu0 %v3223
  %3432 = vmatmul.mubr.f32.gmra.mrb[0].mxu0 %v3222
  %v3433 = vpop.f32.mrb[0].mxu0
  %v3434 = vadd.f32 %v3324, %v3433
  %v3435 = vpop.f32.mrb[0].mxu0
  %3436 = vmatprep.mubr.f32.mxu0 %v3227
  %3437 = vmatmul.mubr.f32.gmra.mrb[0].mxu0 %v3226
  %v3438 = vpop.f32.mrb[0].mxu0
  %v3439 = vadd.f32 %v3329, %v3438
  %v3440 = vpop.f32.mrb[0].mxu0
  %3441 = vmatprep.mubr.f32.mxu0 %v3231
  %3442 = vmatmul.mubr.f32.gmra.mrb[0].mxu0 %v3230
  %v3443 = vpop.f32.mrb[0].mxu0
  %v3444 = vadd.f32 %v3334, %v3443
  %v3445 = vpop.f32.mrb[0].mxu0
  %3446 = vmatprep.mubr.f32.mxu0 %v3235
  %3447 = vmatmul.mubr.f32.gmra.mrb[0].mxu0 %v3234
  %v3448 = vpop.f32.mrb[0].mxu0
  %v3449 = vadd.f32 %v3339, %v3448
  %v3450 = vpop.f32.mrb[0].mxu0
  %3451 = vmatprep.mubr.f32.mxu0 %v3239
  %3452 = vmatmul.mubr.f32.gmra.mrb[0].mxu0 %v3238
  %v3453 = vpop.f32.mrb[0].mxu0
  %v3454 = vadd.f32 %v3344, %v3453
  %v3455 = vpop.f32.mrb[0].mxu0
  %3456 = vmatprep.mubr.f32.mxu0 %v3243
  %3457 = vmatmul.mubr.f32.gmra.mrb[0].mxu0 %v3242
  %v3458 = vpop.f32.mrb[0].mxu0
  %v3459 = vadd.f32 %v3349, %v3458
  %v3460 = vpop.f32.mrb[0].mxu0
  %3461 = vmatprep.mubr.f32.mxu0 %v3247
  %3462 = vmatmul.mubr.f32.gmra.mrb[0].mxu0 %v3246
  %v3463 = vpop.f32.mrb[0].mxu0
  %v3464 = vadd.f32 %v3354, %v3463
  %v3465 = vpop.f32.mrb[0].mxu0
  %3466 = vmatprep.mubr.f32.mxu0 %v3251
  %3467 = vmatmul.mubr.f32.gmra.mrb[0].mxu0 %v3250
  %v3468 = vpop.f32.mrb[0].mxu0
  %v3469 = vadd.f32 %v3359, %v3468
  %v3470 = vpop.f32.mrb[0].mxu0
  %3471 = vdwg.mxu0
  %v3472 = vld [vmem:[%s4 + $0xc0] sm:$0xff]
  %v3473 = vld [vmem:[%s4 + $0xc8] sm:$0xff]
  %v3474 = vld [vmem:[%s4 + $0xd0] sm:$0xff]
  %v3475 = vld [vmem:[%s4 + $0xd8] sm:$0xff]
  %v3477 = vsel %vm1312, %v3429, 0
  %v3480 = vsel %vm1312, %v3434, 0
  %v3483 = vsel %vm1312, %v3439, 0
  %v3486 = vsel %vm1312, %v3444, 0
  %v3489 = vsel %vm1312, %v3449, 0
  %v3492 = vsel %vm1312, %v3454, 0
  %v3495 = vsel %vm1312, %v3459, 0
  %v3498 = vsel %vm1312, %v3464, 0
  %v3501 = vsel %vm1312, %v3469, 0
  %3503 = vmatprep.subr.mxu0 0.0
  %3504 = vmatpush1.msra.mxu0 %v3472
  %3505 = vmatprep.subr.mxu0 0.0
  %3506 = vmatpush1.msra.mxu0 %v3473
  %3507 = vmatprep.subr.mxu0 0.0
  %3508 = vmatpush1.msra.mxu0 %v3474
  %3509 = vmatprep.subr.mxu0 0.0
  %3510 = vmatpush1.msra.mxu0 %v3475
  %3511 = vmatprep.subr.mxu0 0.0
  %3512 = vmatpush1.msra.mxu0 0.0
  %3513 = vmatprep.subr.mxu0 0.0
  %3514 = vmatpush1.msra.mxu0 0.0
  %3515 = vmatprep.subr.mxu0 0.0
  %3516 = vmatpush1.msra.mxu0 0.0
  %3517 = vmatprep.subr.mxu0 0.0
  %3518 = vmatpush1.msra.mxu0 0.0
  %3519 = vmatprep.subr.mxu0 0.0
  %3520 = vmatpush1.msra.mxu0 0.0
  %3521 = vmatprep.subr.mxu0 0.0
  %3522 = vmatpush1.msra.mxu0 0.0
  %3523 = vmatprep.subr.mxu0 0.0
  %3524 = vmatpush1.msra.mxu0 0.0
  %3525 = vmatprep.subr.mxu0 0.0
  %3526 = vmatpush1.msra.mxu0 0.0
  %3527 = vmatprep.subr.mxu0 0.0
  %3528 = vmatpush1.msra.mxu0 0.0
  %3529 = vmatprep.subr.mxu0 0.0
  %3530 = vmatpush1.msra.mxu0 0.0
  %3531 = vmatprep.subr.mxu0 0.0
  %3532 = vmatpush1.msra.mxu0 0.0
  %3533 = vmatprep.subr.mxu0 0.0
  %3534 = vmatpush1.msra.mxu0 0.0
  %3535 = vmatprep.subr.mxu0 0.0
  %3536 = vmatpush1.msra.mxu0 0.0
  %3537 = vmatprep.subr.mxu0 0.0
  %3538 = vmatpush1.msra.mxu0 0.0
  %3539 = vmatprep.subr.mxu0 0.0
  %3540 = vmatpush1.msra.mxu0 0.0
  %3541 = vmatprep.subr.mxu0 0.0
  %3542 = vmatpush1.msra.mxu0 0.0
  %3543 = vmatprep.subr.mxu0 0.0
  %3544 = vmatpush1.msra.mxu0 0.0
  %3545 = vmatprep.subr.mxu0 0.0
  %3546 = vmatpush1.msra.mxu0 0.0
  %3547 = vmatprep.subr.mxu0 0.0
  %3548 = vmatpush1.msra.mxu0 0.0
  %3549 = vmatprep.subr.mxu0 0.0
  %3550 = vmatpush1.msra.mxu0 0.0
  %3551 = vmatprep.subr.mxu0 0.0
  %3552 = vmatpush1.msra.mxu0 0.0
  %3553 = vmatprep.subr.mxu0 0.0
  %3554 = vmatpush1.msra.mxu0 0.0
  %3555 = vmatprep.subr.mxu0 0.0
  %3556 = vmatpush1.msra.mxu0 0.0
  %3557 = vmatprep.subr.mxu0 0.0
  %3558 = vmatpush1.msra.mxu0 0.0
  %3559 = vmatprep.subr.mxu0 0.0
  %3560 = vmatpush1.msra.mxu0 0.0
  %3561 = vmatprep.subr.mxu0 0.0
  %3562 = vmatpush1.msra.mxu0 0.0
  %3563 = vmatprep.subr.mxu0 0.0
  %3564 = vmatpush1.msra.mxu0 0.0
  %3565 = vmatprep.subr.mxu0 0.0
  %3566 = vmatpush1.msra.mxu0 0.0
  %3567 = vmatprep.mubr.f32.mxu0 0.0
  %3568 = vmatmul.mubr.f32.gmra.mrb[0].mxu0 %v3477
  %v3569 = vpop.f32.mrb[0].mxu0
  %v3570 = vadd.f32 0.0, %v3569
  %v3571 = vpop.f32.mrb[0].mxu0
  %3572 = vmatprep.mubr.f32.mxu0 0.0
  %3573 = vmatmul.mubr.f32.gmra.mrb[0].mxu0 %v3480
  %v3574 = vpop.f32.mrb[0].mxu0
  %v3575 = vadd.f32 0.0, %v3574
  %v3576 = vpop.f32.mrb[0].mxu0
  %3577 = vmatprep.mubr.f32.mxu0 0.0
  %3578 = vmatmul.mubr.f32.gmra.mrb[0].mxu0 %v3483
  %v3579 = vpop.f32.mrb[0].mxu0
  %v3580 = vadd.f32 0.0, %v3579
  %v3581 = vpop.f32.mrb[0].mxu0
  %3582 = vmatprep.mubr.f32.mxu0 0.0
  %3583 = vmatmul.mubr.f32.gmra.mrb[0].mxu0 %v3486
  %v3584 = vpop.f32.mrb[0].mxu0
  %v3585 = vadd.f32 0.0, %v3584
  %v3586 = vpop.f32.mrb[0].mxu0
  %3587 = vmatprep.mubr.f32.mxu0 0.0
  %3588 = vmatmul.mubr.f32.gmra.mrb[0].mxu0 %v3489
  %v3589 = vpop.f32.mrb[0].mxu0
  %v3590 = vadd.f32 0.0, %v3589
  %v3591 = vpop.f32.mrb[0].mxu0
  %3592 = vmatprep.mubr.f32.mxu0 0.0
  %3593 = vmatmul.mubr.f32.gmra.mrb[0].mxu0 %v3492
  %v3594 = vpop.f32.mrb[0].mxu0
  %v3595 = vadd.f32 0.0, %v3594
  %v3596 = vpop.f32.mrb[0].mxu0
  %3597 = vmatprep.mubr.f32.mxu0 0.0
  %3598 = vmatmul.mubr.f32.gmra.mrb[0].mxu0 %v3495
  %v3599 = vpop.f32.mrb[0].mxu0
  %v3600 = vadd.f32 0.0, %v3599
  %v3601 = vpop.f32.mrb[0].mxu0
  %3602 = vmatprep.mubr.f32.mxu0 0.0
  %3603 = vmatmul.mubr.f32.gmra.mrb[0].mxu0 %v3498
  %v3604 = vpop.f32.mrb[0].mxu0
  %v3605 = vadd.f32 0.0, %v3604
  %v3606 = vpop.f32.mrb[0].mxu0
  %3607 = vmatprep.mubr.f32.mxu0 0.0
  %3608 = vmatmul.mubr.f32.gmra.mrb[0].mxu0 %v3501
  %v3609 = vpop.f32.mrb[0].mxu0
  %v3610 = vadd.f32 0.0, %v3609
  %v3611 = vpop.f32.mrb[0].mxu0
  %3612 = vdwg.mxu0
  %v3613 = vadd.f32 %v3206, %v3570
  %v3614 = vadd.f32 %v3207, %v3575
  %v3615 = vadd.f32 %v3208, %v3580
  %v3616 = vadd.f32 %v3209, %v3585
  %v3617 = vadd.f32 %v3210, %v3590
  %v3618 = vadd.f32 %v3211, %v3595
  %v3619 = vadd.f32 %v3212, %v3600
  %v3620 = vadd.f32 %v3213, %v3605
  %v3621 = vadd.f32 %v3214, %v3610
  %s3622 = scalar_lea.vmem %s3, 2016
  %v3623 = vld [vmem:[%s3622] sm:$0xff]
  %v3624 = vld [vmem:[%s3622 + $0x8] sm:$0xff]
  %v3625 = vld [vmem:[%s3622 + $0x10] sm:$0xff]
  %v3626 = vld [vmem:[%s3622 + $0x18] sm:$0xff]
  %v3627 = vld [vmem:[%s3622 + $0x20] sm:$0xff]
  %v3628 = vld [vmem:[%s3622 + $0x28] sm:$0xff]
  %v3629 = vld [vmem:[%s3622 + $0x30] sm:$0xff]
  %v3630 = vld [vmem:[%s3622 + $0x38] sm:$0xff]
  %v3631 = vld [vmem:[%s3622 + $0x40] sm:$0xff]
  %v3632 = vld [vmem:[%s3622 + $0x48] sm:$0xff]
  %v3633 = vld [vmem:[%s3622 + $0x50] sm:$0xff]
  %v3634 = vld [vmem:[%s3622 + $0x58] sm:$0xff]
  %v3635 = vld [vmem:[%s3622 + $0x60] sm:$0xff]
  %v3636 = vld [vmem:[%s3622 + $0x68] sm:$0xff]
  %v3637 = vld [vmem:[%s3622 + $0x70] sm:$0xff]
  %v3638 = vld [vmem:[%s3622 + $0x78] sm:$0xff]
  %v3639 = vld [vmem:[%s3622 + $0x80] sm:$0xff]
  %v3640 = vld [vmem:[%s3622 + $0x88] sm:$0xff]
  %v3641 = vld [vmem:[%s3622 + $0x90] sm:$0xff]
  %v3642 = vld [vmem:[%s3622 + $0x98] sm:$0xff]
  %v3643 = vld [vmem:[%s3622 + $0xa0] sm:$0xff]
  %v3644 = vld [vmem:[%s3622 + $0xa8] sm:$0xff]
  %v3645 = vld [vmem:[%s3622 + $0xb0] sm:$0xff]
  %v3646 = vld [vmem:[%s3622 + $0xb8] sm:$0xff]
  %v3647 = vld [vmem:[%s3622 + $0xc0] sm:$0xff]
  %v3648 = vld [vmem:[%s3622 + $0xc8] sm:$0xff]
  %v3649 = vld [vmem:[%s3622 + $0xd0] sm:$0xff]
  %v3650 = vld [vmem:[%s3622 + $0xd8] sm:$0xff]
  %v3651 = vld [vmem:[%s3622 + $0xe0] sm:$0xff]
  %v3652 = vld [vmem:[%s3622 + $0xe8] sm:$0xff]
  %v3653 = vld [vmem:[%s3622 + $0xf0] sm:$0xff]
  %v3654 = vld [vmem:[%s3622 + $0xf8] sm:$0xff]
  %v3655 = vld [vmem:[%s3622 + $0x100] sm:$0xff]
  %v3656 = vld [vmem:[%s3622 + $0x108] sm:$0xff]
  %v3657 = vld [vmem:[%s3622 + $0x110] sm:$0xff]
  %v3658 = vld [vmem:[%s3622 + $0x118] sm:$0xff]
  %3659 = vmatprep.subr.mxu0 0.0
  %3660 = vmatpush1.msra.mxu0 %v727
  %3661 = vmatprep.subr.mxu0 0.0
  %3662 = vmatpush1.msra.mxu0 %v728
  %3663 = vmatprep.subr.mxu0 0.0
  %3664 = vmatpush1.msra.mxu0 %v729
  %3665 = vmatprep.subr.mxu0 0.0
  %3666 = vmatpush1.msra.mxu0 %v730
  %3667 = vmatprep.subr.mxu0 0.0
  %3668 = vmatpush1.msra.mxu0 %v731
  %3669 = vmatprep.subr.mxu0 0.0
  %3670 = vmatpush1.msra.mxu0 %v732
  %3671 = vmatprep.subr.mxu0 0.0
  %3672 = vmatpush1.msra.mxu0 %v733
  %3673 = vmatprep.subr.mxu0 0.0
  %3674 = vmatpush1.msra.mxu0 %v734
  %3675 = vmatprep.subr.mxu0 0.0
  %3676 = vmatpush1.msra.mxu0 %v735
  %3677 = vmatprep.subr.mxu0 0.0
  %3678 = vmatpush1.msra.mxu0 %v736
  %3679 = vmatprep.subr.mxu0 0.0
  %3680 = vmatpush1.msra.mxu0 %v737
  %3681 = vmatprep.subr.mxu0 0.0
  %3682 = vmatpush1.msra.mxu0 %v738
  %3683 = vmatprep.subr.mxu0 0.0
  %3684 = vmatpush1.msra.mxu0 %v739
  %3685 = vmatprep.subr.mxu0 0.0
  %3686 = vmatpush1.msra.mxu0 %v740
  %3687 = vmatprep.subr.mxu0 0.0
  %3688 = vmatpush1.msra.mxu0 %v741
  %3689 = vmatprep.subr.mxu0 0.0
  %3690 = vmatpush1.msra.mxu0 %v742
  %3691 = vmatprep.subr.mxu0 0.0
  %3692 = vmatpush1.msra.mxu0 %v743
  %3693 = vmatprep.subr.mxu0 0.0
  %3694 = vmatpush1.msra.mxu0 %v744
  %3695 = vmatprep.subr.mxu0 0.0
  %3696 = vmatpush1.msra.mxu0 %v745
  %3697 = vmatprep.subr.mxu0 0.0
  %3698 = vmatpush1.msra.mxu0 %v746
  %3699 = vmatprep.subr.mxu0 0.0
  %3700 = vmatpush1.msra.mxu0 %v747
  %3701 = vmatprep.subr.mxu0 0.0
  %3702 = vmatpush1.msra.mxu0 %v748
  %3703 = vmatprep.subr.mxu0 0.0
  %3704 = vmatpush1.msra.mxu0 %v749
  %3705 = vmatprep.subr.mxu0 0.0
  %3706 = vmatpush1.msra.mxu0 %v750
  %3707 = vmatprep.subr.mxu0 0.0
  %3708 = vmatpush1.msra.mxu0 %v751
  %3709 = vmatprep.subr.mxu0 0.0
  %3710 = vmatpush1.msra.mxu0 %v752
  %3711 = vmatprep.subr.mxu0 0.0
  %3712 = vmatpush1.msra.mxu0 %v753
  %3713 = vmatprep.subr.mxu0 0.0
  %3714 = vmatpush1.msra.mxu0 %v754
  %3715 = vmatprep.subr.mxu0 0.0
  %3716 = vmatpush1.msra.mxu0 %v755
  %3717 = vmatprep.subr.mxu0 0.0
  %3718 = vmatpush1.msra.mxu0 %v756
  %3719 = vmatprep.subr.mxu0 0.0
  %3720 = vmatpush1.msra.mxu0 %v757
  %3721 = vmatprep.subr.mxu0 0.0
  %3722 = vmatpush1.msra.mxu0 %v758
  %3723 = vmatprep.mubr.f32.mxu0 %v3624
  %3724 = vmatmul.mubr.f32.gmra.mrb[0].mxu0 %v3623
  %v3725 = vpop.f32.mrb[0].mxu0
  %v3726 = vadd.f32 0.0, %v3725
  %v3727 = vpop.f32.mrb[0].mxu0
  %3728 = vmatprep.mubr.f32.mxu0 %v3628
  %3729 = vmatmul.mubr.f32.gmra.mrb[0].mxu0 %v3627
  %v3730 = vpop.f32.mrb[0].mxu0
  %v3731 = vadd.f32 0.0, %v3730
  %v3732 = vpop.f32.mrb[0].mxu0
  %3733 = vmatprep.mubr.f32.mxu0 %v3632
  %3734 = vmatmul.mubr.f32.gmra.mrb[0].mxu0 %v3631
  %v3735 = vpop.f32.mrb[0].mxu0
  %v3736 = vadd.f32 0.0, %v3735
  %v3737 = vpop.f32.mrb[0].mxu0
  %3738 = vmatprep.mubr.f32.mxu0 %v3636
  %3739 = vmatmul.mubr.f32.gmra.mrb[0].mxu0 %v3635
  %v3740 = vpop.f32.mrb[0].mxu0
  %v3741 = vadd.f32 0.0, %v3740
  %v3742 = vpop.f32.mrb[0].mxu0
  %3743 = vmatprep.mubr.f32.mxu0 %v3640
  %3744 = vmatmul.mubr.f32.gmra.mrb[0].mxu0 %v3639
  %v3745 = vpop.f32.mrb[0].mxu0
  %v3746 = vadd.f32 0.0, %v3745
  %v3747 = vpop.f32.mrb[0].mxu0
  %3748 = vmatprep.mubr.f32.mxu0 %v3644
  %3749 = vmatmul.mubr.f32.gmra.mrb[0].mxu0 %v3643
  %v3750 = vpop.f32.mrb[0].mxu0
  %v3751 = vadd.f32 0.0, %v3750
  %v3752 = vpop.f32.mrb[0].mxu0
  %3753 = vmatprep.mubr.f32.mxu0 %v3648
  %3754 = vmatmul.mubr.f32.gmra.mrb[0].mxu0 %v3647
  %v3755 = vpop.f32.mrb[0].mxu0
  %v3756 = vadd.f32 0.0, %v3755
  %v3757 = vpop.f32.mrb[0].mxu0
  %3758 = vmatprep.mubr.f32.mxu0 %v3652
  %3759 = vmatmul.mubr.f32.gmra.mrb[0].mxu0 %v3651
  %v3760 = vpop.f32.mrb[0].mxu0
  %v3761 = vadd.f32 0.0, %v3760
  %v3762 = vpop.f32.mrb[0].mxu0
  %3763 = vmatprep.mubr.f32.mxu0 %v3656
  %3764 = vmatmul.mubr.f32.gmra.mrb[0].mxu0 %v3655
  %v3765 = vpop.f32.mrb[0].mxu0
  %v3766 = vadd.f32 0.0, %v3765
  %v3767 = vpop.f32.mrb[0].mxu0
  %3768 = vdwg.mxu0
  %3769 = vmatprep.subr.mxu0 0.0
  %3770 = vmatpush1.msra.mxu0 %v759
  %3771 = vmatprep.subr.mxu0 0.0
  %3772 = vmatpush1.msra.mxu0 %v760
  %3773 = vmatprep.subr.mxu0 0.0
  %3774 = vmatpush1.msra.mxu0 %v761
  %3775 = vmatprep.subr.mxu0 0.0
  %3776 = vmatpush1.msra.mxu0 %v762
  %3777 = vmatprep.subr.mxu0 0.0
  %3778 = vmatpush1.msra.mxu0 %v763
  %3779 = vmatprep.subr.mxu0 0.0
  %3780 = vmatpush1.msra.mxu0 %v764
  %3781 = vmatprep.subr.mxu0 0.0
  %3782 = vmatpush1.msra.mxu0 %v765
  %3783 = vmatprep.subr.mxu0 0.0
  %3784 = vmatpush1.msra.mxu0 %v766
  %3785 = vmatprep.subr.mxu0 0.0
  %3786 = vmatpush1.msra.mxu0 %v767
  %3787 = vmatprep.subr.mxu0 0.0
  %3788 = vmatpush1.msra.mxu0 %v768
  %3789 = vmatprep.subr.mxu0 0.0
  %3790 = vmatpush1.msra.mxu0 %v769
  %3791 = vmatprep.subr.mxu0 0.0
  %3792 = vmatpush1.msra.mxu0 %v770
  %3793 = vmatprep.subr.mxu0 0.0
  %3794 = vmatpush1.msra.mxu0 %v771
  %3795 = vmatprep.subr.mxu0 0.0
  %3796 = vmatpush1.msra.mxu0 %v772
  %3797 = vmatprep.subr.mxu0 0.0
  %3798 = vmatpush1.msra.mxu0 %v773
  %3799 = vmatprep.subr.mxu0 0.0
  %3800 = vmatpush1.msra.mxu0 %v774
  %3801 = vmatprep.subr.mxu0 0.0
  %3802 = vmatpush1.msra.mxu0 %v775
  %3803 = vmatprep.subr.mxu0 0.0
  %3804 = vmatpush1.msra.mxu0 %v776
  %3805 = vmatprep.subr.mxu0 0.0
  %3806 = vmatpush1.msra.mxu0 %v777
  %3807 = vmatprep.subr.mxu0 0.0
  %3808 = vmatpush1.msra.mxu0 %v778
  %3809 = vmatprep.subr.mxu0 0.0
  %3810 = vmatpush1.msra.mxu0 %v779
  %3811 = vmatprep.subr.mxu0 0.0
  %3812 = vmatpush1.msra.mxu0 %v780
  %3813 = vmatprep.subr.mxu0 0.0
  %3814 = vmatpush1.msra.mxu0 %v781
  %3815 = vmatprep.subr.mxu0 0.0
  %3816 = vmatpush1.msra.mxu0 %v782
  %3817 = vmatprep.subr.mxu0 0.0
  %3818 = vmatpush1.msra.mxu0 %v783
  %3819 = vmatprep.subr.mxu0 0.0
  %3820 = vmatpush1.msra.mxu0 %v784
  %3821 = vmatprep.subr.mxu0 0.0
  %3822 = vmatpush1.msra.mxu0 %v785
  %3823 = vmatprep.subr.mxu0 0.0
  %3824 = vmatpush1.msra.mxu0 %v786
  %3825 = vmatprep.subr.mxu0 0.0
  %3826 = vmatpush1.msra.mxu0 %v787
  %3827 = vmatprep.subr.mxu0 0.0
  %3828 = vmatpush1.msra.mxu0 %v788
  %3829 = vmatprep.subr.mxu0 0.0
  %3830 = vmatpush1.msra.mxu0 %v789
  %3831 = vmatprep.subr.mxu0 0.0
  %3832 = vmatpush1.msra.mxu0 %v790
  %3833 = vmatprep.mubr.f32.mxu0 %v3626
  %3834 = vmatmul.mubr.f32.gmra.mrb[0].mxu0 %v3625
  %v3835 = vpop.f32.mrb[0].mxu0
  %v3836 = vadd.f32 %v3726, %v3835
  %v3837 = vpop.f32.mrb[0].mxu0
  %3838 = vmatprep.mubr.f32.mxu0 %v3630
  %3839 = vmatmul.mubr.f32.gmra.mrb[0].mxu0 %v3629
  %v3840 = vpop.f32.mrb[0].mxu0
  %v3841 = vadd.f32 %v3731, %v3840
  %v3842 = vpop.f32.mrb[0].mxu0
  %3843 = vmatprep.mubr.f32.mxu0 %v3634
  %3844 = vmatmul.mubr.f32.gmra.mrb[0].mxu0 %v3633
  %v3845 = vpop.f32.mrb[0].mxu0
  %v3846 = vadd.f32 %v3736, %v3845
  %v3847 = vpop.f32.mrb[0].mxu0
  %3848 = vmatprep.mubr.f32.mxu0 %v3638
  %3849 = vmatmul.mubr.f32.gmra.mrb[0].mxu0 %v3637
  %v3850 = vpop.f32.mrb[0].mxu0
  %v3851 = vadd.f32 %v3741, %v3850
  %v3852 = vpop.f32.mrb[0].mxu0
  %3853 = vmatprep.mubr.f32.mxu0 %v3642
  %3854 = vmatmul.mubr.f32.gmra.mrb[0].mxu0 %v3641
  %v3855 = vpop.f32.mrb[0].mxu0
  %v3856 = vadd.f32 %v3746, %v3855
  %v3857 = vpop.f32.mrb[0].mxu0
  %3858 = vmatprep.mubr.f32.mxu0 %v3646
  %3859 = vmatmul.mubr.f32.gmra.mrb[0].mxu0 %v3645
  %v3860 = vpop.f32.mrb[0].mxu0
  %v3861 = vadd.f32 %v3751, %v3860
  %v3862 = vpop.f32.mrb[0].mxu0
  %3863 = vmatprep.mubr.f32.mxu0 %v3650
  %3864 = vmatmul.mubr.f32.gmra.mrb[0].mxu0 %v3649
  %v3865 = vpop.f32.mrb[0].mxu0
  %v3866 = vadd.f32 %v3756, %v3865
  %v3867 = vpop.f32.mrb[0].mxu0
  %3868 = vmatprep.mubr.f32.mxu0 %v3654
  %3869 = vmatmul.mubr.f32.gmra.mrb[0].mxu0 %v3653
  %v3870 = vpop.f32.mrb[0].mxu0
  %v3871 = vadd.f32 %v3761, %v3870
  %v3872 = vpop.f32.mrb[0].mxu0
  %3873 = vmatprep.mubr.f32.mxu0 %v3658
  %3874 = vmatmul.mubr.f32.gmra.mrb[0].mxu0 %v3657
  %v3875 = vpop.f32.mrb[0].mxu0
  %v3876 = vadd.f32 %v3766, %v3875
  %v3877 = vpop.f32.mrb[0].mxu0
  %3878 = vdwg.mxu0
  %v3879 = vld [vmem:[%s4 + $0xe0] sm:$0xff]
  %v3880 = vld [vmem:[%s4 + $0xe8] sm:$0xff]
  %v3881 = vld [vmem:[%s4 + $0xf0] sm:$0xff]
  %v3882 = vld [vmem:[%s4 + $0xf8] sm:$0xff]
  %v3884 = vsel %vm1312, %v3836, 0
  %v3887 = vsel %vm1312, %v3841, 0
  %v3890 = vsel %vm1312, %v3846, 0
  %v3893 = vsel %vm1312, %v3851, 0
  %v3896 = vsel %vm1312, %v3856, 0
  %v3899 = vsel %vm1312, %v3861, 0
  %v3902 = vsel %vm1312, %v3866, 0
  %v3905 = vsel %vm1312, %v3871, 0
  %v3908 = vsel %vm1312, %v3876, 0
  %3910 = vmatprep.subr.mxu0 0.0
  %3911 = vmatpush1.msra.mxu0 %v3879
  %3912 = vmatprep.subr.mxu0 0.0
  %3913 = vmatpush1.msra.mxu0 %v3880
  %3914 = vmatprep.subr.mxu0 0.0
  %3915 = vmatpush1.msra.mxu0 %v3881
  %3916 = vmatprep.subr.mxu0 0.0
  %3917 = vmatpush1.msra.mxu0 %v3882
  %3918 = vmatprep.subr.mxu0 0.0
  %3919 = vmatpush1.msra.mxu0 0.0
  %3920 = vmatprep.subr.mxu0 0.0
  %3921 = vmatpush1.msra.mxu0 0.0
  %3922 = vmatprep.subr.mxu0 0.0
  %3923 = vmatpush1.msra.mxu0 0.0
  %3924 = vmatprep.subr.mxu0 0.0
  %3925 = vmatpush1.msra.mxu0 0.0
  %3926 = vmatprep.subr.mxu0 0.0
  %3927 = vmatpush1.msra.mxu0 0.0
  %3928 = vmatprep.subr.mxu0 0.0
  %3929 = vmatpush1.msra.mxu0 0.0
  %3930 = vmatprep.subr.mxu0 0.0
  %3931 = vmatpush1.msra.mxu0 0.0
  %3932 = vmatprep.subr.mxu0 0.0
  %3933 = vmatpush1.msra.mxu0 0.0
  %3934 = vmatprep.subr.mxu0 0.0
  %3935 = vmatpush1.msra.mxu0 0.0
  %3936 = vmatprep.subr.mxu0 0.0
  %3937 = vmatpush1.msra.mxu0 0.0
  %3938 = vmatprep.subr.mxu0 0.0
  %3939 = vmatpush1.msra.mxu0 0.0
  %3940 = vmatprep.subr.mxu0 0.0
  %3941 = vmatpush1.msra.mxu0 0.0
  %3942 = vmatprep.subr.mxu0 0.0
  %3943 = vmatpush1.msra.mxu0 0.0
  %3944 = vmatprep.subr.mxu0 0.0
  %3945 = vmatpush1.msra.mxu0 0.0
  %3946 = vmatprep.subr.mxu0 0.0
  %3947 = vmatpush1.msra.mxu0 0.0
  %3948 = vmatprep.subr.mxu0 0.0
  %3949 = vmatpush1.msra.mxu0 0.0
  %3950 = vmatprep.subr.mxu0 0.0
  %3951 = vmatpush1.msra.mxu0 0.0
  %3952 = vmatprep.subr.mxu0 0.0
  %3953 = vmatpush1.msra.mxu0 0.0
  %3954 = vmatprep.subr.mxu0 0.0
  %3955 = vmatpush1.msra.mxu0 0.0
  %3956 = vmatprep.subr.mxu0 0.0
  %3957 = vmatpush1.msra.mxu0 0.0
  %3958 = vmatprep.subr.mxu0 0.0
  %3959 = vmatpush1.msra.mxu0 0.0
  %3960 = vmatprep.subr.mxu0 0.0
  %3961 = vmatpush1.msra.mxu0 0.0
  %3962 = vmatprep.subr.mxu0 0.0
  %3963 = vmatpush1.msra.mxu0 0.0
  %3964 = vmatprep.subr.mxu0 0.0
  %3965 = vmatpush1.msra.mxu0 0.0
  %3966 = vmatprep.subr.mxu0 0.0
  %3967 = vmatpush1.msra.mxu0 0.0
  %3968 = vmatprep.subr.mxu0 0.0
  %3969 = vmatpush1.msra.mxu0 0.0
  %3970 = vmatprep.subr.mxu0 0.0
  %3971 = vmatpush1.msra.mxu0 0.0
  %3972 = vmatprep.subr.mxu0 0.0
  %3973 = vmatpush1.msra.mxu0 0.0
  %3974 = vmatprep.mubr.f32.mxu0 0.0
  %3975 = vmatmul.mubr.f32.gmra.mrb[0].mxu0 %v3884
  %v3976 = vpop.f32.mrb[0].mxu0
  %v3977 = vadd.f32 0.0, %v3976
  %v3978 = vpop.f32.mrb[0].mxu0
  %3979 = vmatprep.mubr.f32.mxu0 0.0
  %3980 = vmatmul.mubr.f32.gmra.mrb[0].mxu0 %v3887
  %v3981 = vpop.f32.mrb[0].mxu0
  %v3982 = vadd.f32 0.0, %v3981
  %v3983 = vpop.f32.mrb[0].mxu0
  %3984 = vmatprep.mubr.f32.mxu0 0.0
  %3985 = vmatmul.mubr.f32.gmra.mrb[0].mxu0 %v3890
  %v3986 = vpop.f32.mrb[0].mxu0
  %v3987 = vadd.f32 0.0, %v3986
  %v3988 = vpop.f32.mrb[0].mxu0
  %3989 = vmatprep.mubr.f32.mxu0 0.0
  %3990 = vmatmul.mubr.f32.gmra.mrb[0].mxu0 %v3893
  %v3991 = vpop.f32.mrb[0].mxu0
  %v3992 = vadd.f32 0.0, %v3991
  %v3993 = vpop.f32.mrb[0].mxu0
  %3994 = vmatprep.mubr.f32.mxu0 0.0
  %3995 = vmatmul.mubr.f32.gmra.mrb[0].mxu0 %v3896
  %v3996 = vpop.f32.mrb[0].mxu0
  %v3997 = vadd.f32 0.0, %v3996
  %v3998 = vpop.f32.mrb[0].mxu0
  %3999 = vmatprep.mubr.f32.mxu0 0.0
  %4000 = vmatmul.mubr.f32.gmra.mrb[0].mxu0 %v3899
  %v4001 = vpop.f32.mrb[0].mxu0
  %v4002 = vadd.f32 0.0, %v4001
  %v4003 = vpop.f32.mrb[0].mxu0
  %4004 = vmatprep.mubr.f32.mxu0 0.0
  %4005 = vmatmul.mubr.f32.gmra.mrb[0].mxu0 %v3902
  %v4006 = vpop.f32.mrb[0].mxu0
  %v4007 = vadd.f32 0.0, %v4006
  %v4008 = vpop.f32.mrb[0].mxu0
  %4009 = vmatprep.mubr.f32.mxu0 0.0
  %4010 = vmatmul.mubr.f32.gmra.mrb[0].mxu0 %v3905
  %v4011 = vpop.f32.mrb[0].mxu0
  %v4012 = vadd.f32 0.0, %v4011
  %v4013 = vpop.f32.mrb[0].mxu0
  %4014 = vmatprep.mubr.f32.mxu0 0.0
  %4015 = vmatmul.mubr.f32.gmra.mrb[0].mxu0 %v3908
  %v4016 = vpop.f32.mrb[0].mxu0
  %v4017 = vadd.f32 0.0, %v4016
  %v4018 = vpop.f32.mrb[0].mxu0
  %4019 = vdwg.mxu0
  %v4020 = vadd.f32 %v3613, %v3977
  %v4021 = vadd.f32 %v3614, %v3982
  %v4022 = vadd.f32 %v3615, %v3987
  %v4023 = vadd.f32 %v3616, %v3992
  %v4024 = vadd.f32 %v3617, %v3997
  %v4025 = vadd.f32 %v3618, %v4002
  %v4026 = vadd.f32 %v3619, %v4007
  %v4027 = vadd.f32 %v3620, %v4012
  %v4028 = vadd.f32 %v3621, %v4017
  %s4029 = scalar_lea.vmem %s3, 2304
  %v4030 = vld [vmem:[%s4029] sm:$0xff]
  %v4031 = vld [vmem:[%s4029 + $0x8] sm:$0xff]
  %v4032 = vld [vmem:[%s4029 + $0x10] sm:$0xff]
  %v4033 = vld [vmem:[%s4029 + $0x18] sm:$0xff]
  %v4034 = vld [vmem:[%s4029 + $0x20] sm:$0xff]
  %v4035 = vld [vmem:[%s4029 + $0x28] sm:$0xff]
  %v4036 = vld [vmem:[%s4029 + $0x30] sm:$0xff]
  %v4037 = vld [vmem:[%s4029 + $0x38] sm:$0xff]
  %v4038 = vld [vmem:[%s4029 + $0x40] sm:$0xff]
  %v4039 = vld [vmem:[%s4029 + $0x48] sm:$0xff]
  %v4040 = vld [vmem:[%s4029 + $0x50] sm:$0xff]
  %v4041 = vld [vmem:[%s4029 + $0x58] sm:$0xff]
  %v4042 = vld [vmem:[%s4029 + $0x60] sm:$0xff]
  %v4043 = vld [vmem:[%s4029 + $0x68] sm:$0xff]
  %v4044 = vld [vmem:[%s4029 + $0x70] sm:$0xff]
  %v4045 = vld [vmem:[%s4029 + $0x78] sm:$0xff]
  %v4046 = vld [vmem:[%s4029 + $0x80] sm:$0xff]
  %v4047 = vld [vmem:[%s4029 + $0x88] sm:$0xff]
  %v4048 = vld [vmem:[%s4029 + $0x90] sm:$0xff]
  %v4049 = vld [vmem:[%s4029 + $0x98] sm:$0xff]
  %v4050 = vld [vmem:[%s4029 + $0xa0] sm:$0xff]
  %v4051 = vld [vmem:[%s4029 + $0xa8] sm:$0xff]
  %v4052 = vld [vmem:[%s4029 + $0xb0] sm:$0xff]
  %v4053 = vld [vmem:[%s4029 + $0xb8] sm:$0xff]
  %v4054 = vld [vmem:[%s4029 + $0xc0] sm:$0xff]
  %v4055 = vld [vmem:[%s4029 + $0xc8] sm:$0xff]
  %v4056 = vld [vmem:[%s4029 + $0xd0] sm:$0xff]
  %v4057 = vld [vmem:[%s4029 + $0xd8] sm:$0xff]
  %v4058 = vld [vmem:[%s4029 + $0xe0] sm:$0xff]
  %v4059 = vld [vmem:[%s4029 + $0xe8] sm:$0xff]
  %v4060 = vld [vmem:[%s4029 + $0xf0] sm:$0xff]
  %v4061 = vld [vmem:[%s4029 + $0xf8] sm:$0xff]
  %v4062 = vld [vmem:[%s4029 + $0x100] sm:$0xff]
  %v4063 = vld [vmem:[%s4029 + $0x108] sm:$0xff]
  %v4064 = vld [vmem:[%s4029 + $0x110] sm:$0xff]
  %v4065 = vld [vmem:[%s4029 + $0x118] sm:$0xff]
  %4066 = vmatprep.subr.mxu0 0.0
  %4067 = vmatpush1.msra.mxu0 %v727
  %4068 = vmatprep.subr.mxu0 0.0
  %4069 = vmatpush1.msra.mxu0 %v728
  %4070 = vmatprep.subr.mxu0 0.0
  %4071 = vmatpush1.msra.mxu0 %v729
  %4072 = vmatprep.subr.mxu0 0.0
  %4073 = vmatpush1.msra.mxu0 %v730
  %4074 = vmatprep.subr.mxu0 0.0
  %4075 = vmatpush1.msra.mxu0 %v731
  %4076 = vmatprep.subr.mxu0 0.0
  %4077 = vmatpush1.msra.mxu0 %v732
  %4078 = vmatprep.subr.mxu0 0.0
  %4079 = vmatpush1.msra.mxu0 %v733
  %4080 = vmatprep.subr.mxu0 0.0
  %4081 = vmatpush1.msra.mxu0 %v734
  %4082 = vmatprep.subr.mxu0 0.0
  %4083 = vmatpush1.msra.mxu0 %v735
  %4084 = vmatprep.subr.mxu0 0.0
  %4085 = vmatpush1.msra.mxu0 %v736
  %4086 = vmatprep.subr.mxu0 0.0
  %4087 = vmatpush1.msra.mxu0 %v737
  %4088 = vmatprep.subr.mxu0 0.0
  %4089 = vmatpush1.msra.mxu0 %v738
  %4090 = vmatprep.subr.mxu0 0.0
  %4091 = vmatpush1.msra.mxu0 %v739
  %4092 = vmatprep.subr.mxu0 0.0
  %4093 = vmatpush1.msra.mxu0 %v740
  %4094 = vmatprep.subr.mxu0 0.0
  %4095 = vmatpush1.msra.mxu0 %v741
  %4096 = vmatprep.subr.mxu0 0.0
  %4097 = vmatpush1.msra.mxu0 %v742
  %4098 = vmatprep.subr.mxu0 0.0
  %4099 = vmatpush1.msra.mxu0 %v743
  %4100 = vmatprep.subr.mxu0 0.0
  %4101 = vmatpush1.msra.mxu0 %v744
  %4102 = vmatprep.subr.mxu0 0.0
  %4103 = vmatpush1.msra.mxu0 %v745
  %4104 = vmatprep.subr.mxu0 0.0
  %4105 = vmatpush1.msra.mxu0 %v746
  %4106 = vmatprep.subr.mxu0 0.0
  %4107 = vmatpush1.msra.mxu0 %v747
  %4108 = vmatprep.subr.mxu0 0.0
  %4109 = vmatpush1.msra.mxu0 %v748
  %4110 = vmatprep.subr.mxu0 0.0
  %4111 = vmatpush1.msra.mxu0 %v749
  %4112 = vmatprep.subr.mxu0 0.0
  %4113 = vmatpush1.msra.mxu0 %v750
  %4114 = vmatprep.subr.mxu0 0.0
  %4115 = vmatpush1.msra.mxu0 %v751
  %4116 = vmatprep.subr.mxu0 0.0
  %4117 = vmatpush1.msra.mxu0 %v752
  %4118 = vmatprep.subr.mxu0 0.0
  %4119 = vmatpush1.msra.mxu0 %v753
  %4120 = vmatprep.subr.mxu0 0.0
  %4121 = vmatpush1.msra.mxu0 %v754
  %4122 = vmatprep.subr.mxu0 0.0
  %4123 = vmatpush1.msra.mxu0 %v755
  %4124 = vmatprep.subr.mxu0 0.0
  %4125 = vmatpush1.msra.mxu0 %v756
  %4126 = vmatprep.subr.mxu0 0.0
  %4127 = vmatpush1.msra.mxu0 %v757
  %4128 = vmatprep.subr.mxu0 0.0
  %4129 = vmatpush1.msra.mxu0 %v758
  %4130 = vmatprep.mubr.f32.mxu0 %v4031
  %4131 = vmatmul.mubr.f32.gmra.mrb[0].mxu0 %v4030
  %v4132 = vpop.f32.mrb[0].mxu0
  %v4133 = vadd.f32 0.0, %v4132
  %v4134 = vpop.f32.mrb[0].mxu0
  %4135 = vmatprep.mubr.f32.mxu0 %v4035
  %4136 = vmatmul.mubr.f32.gmra.mrb[0].mxu0 %v4034
  %v4137 = vpop.f32.mrb[0].mxu0
  %v4138 = vadd.f32 0.0, %v4137
  %v4139 = vpop.f32.mrb[0].mxu0
  %4140 = vmatprep.mubr.f32.mxu0 %v4039
  %4141 = vmatmul.mubr.f32.gmra.mrb[0].mxu0 %v4038
  %v4142 = vpop.f32.mrb[0].mxu0
  %v4143 = vadd.f32 0.0, %v4142
  %v4144 = vpop.f32.mrb[0].mxu0
  %4145 = vmatprep.mubr.f32.mxu0 %v4043
  %4146 = vmatmul.mubr.f32.gmra.mrb[0].mxu0 %v4042
  %v4147 = vpop.f32.mrb[0].mxu0
  %v4148 = vadd.f32 0.0, %v4147
  %v4149 = vpop.f32.mrb[0].mxu0
  %4150 = vmatprep.mubr.f32.mxu0 %v4047
  %4151 = vmatmul.mubr.f32.gmra.mrb[0].mxu0 %v4046
  %v4152 = vpop.f32.mrb[0].mxu0
  %v4153 = vadd.f32 0.0, %v4152
  %v4154 = vpop.f32.mrb[0].mxu0
  %4155 = vmatprep.mubr.f32.mxu0 %v4051
  %4156 = vmatmul.mubr.f32.gmra.mrb[0].mxu0 %v4050
  %v4157 = vpop.f32.mrb[0].mxu0
  %v4158 = vadd.f32 0.0, %v4157
  %v4159 = vpop.f32.mrb[0].mxu0
  %4160 = vmatprep.mubr.f32.mxu0 %v4055
  %4161 = vmatmul.mubr.f32.gmra.mrb[0].mxu0 %v4054
  %v4162 = vpop.f32.mrb[0].mxu0
  %v4163 = vadd.f32 0.0, %v4162
  %v4164 = vpop.f32.mrb[0].mxu0
  %4165 = vmatprep.mubr.f32.mxu0 %v4059
  %4166 = vmatmul.mubr.f32.gmra.mrb[0].mxu0 %v4058
  %v4167 = vpop.f32.mrb[0].mxu0
  %v4168 = vadd.f32 0.0, %v4167
  %v4169 = vpop.f32.mrb[0].mxu0
  %4170 = vmatprep.mubr.f32.mxu0 %v4063
  %4171 = vmatmul.mubr.f32.gmra.mrb[0].mxu0 %v4062
  %v4172 = vpop.f32.mrb[0].mxu0
  %v4173 = vadd.f32 0.0, %v4172
  %v4174 = vpop.f32.mrb[0].mxu0
  %4175 = vdwg.mxu0
  %4176 = vmatprep.subr.mxu0 0.0
  %4177 = vmatpush1.msra.mxu0 %v759
  %4178 = vmatprep.subr.mxu0 0.0
  %4179 = vmatpush1.msra.mxu0 %v760
  %4180 = vmatprep.subr.mxu0 0.0
  %4181 = vmatpush1.msra.mxu0 %v761
  %4182 = vmatprep.subr.mxu0 0.0
  %4183 = vmatpush1.msra.mxu0 %v762
  %4184 = vmatprep.subr.mxu0 0.0
  %4185 = vmatpush1.msra.mxu0 %v763
  %4186 = vmatprep.subr.mxu0 0.0
  %4187 = vmatpush1.msra.mxu0 %v764
  %4188 = vmatprep.subr.mxu0 0.0
  %4189 = vmatpush1.msra.mxu0 %v765
  %4190 = vmatprep.subr.mxu0 0.0
  %4191 = vmatpush1.msra.mxu0 %v766
  %4192 = vmatprep.subr.mxu0 0.0
  %4193 = vmatpush1.msra.mxu0 %v767
  %4194 = vmatprep.subr.mxu0 0.0
  %4195 = vmatpush1.msra.mxu0 %v768
  %4196 = vmatprep.subr.mxu0 0.0
  %4197 = vmatpush1.msra.mxu0 %v769
  %4198 = vmatprep.subr.mxu0 0.0
  %4199 = vmatpush1.msra.mxu0 %v770
  %4200 = vmatprep.subr.mxu0 0.0
  %4201 = vmatpush1.msra.mxu0 %v771
  %4202 = vmatprep.subr.mxu0 0.0
  %4203 = vmatpush1.msra.mxu0 %v772
  %4204 = vmatprep.subr.mxu0 0.0
  %4205 = vmatpush1.msra.mxu0 %v773
  %4206 = vmatprep.subr.mxu0 0.0
  %4207 = vmatpush1.msra.mxu0 %v774
  %4208 = vmatprep.subr.mxu0 0.0
  %4209 = vmatpush1.msra.mxu0 %v775
  %4210 = vmatprep.subr.mxu0 0.0
  %4211 = vmatpush1.msra.mxu0 %v776
  %4212 = vmatprep.subr.mxu0 0.0
  %4213 = vmatpush1.msra.mxu0 %v777
  %4214 = vmatprep.subr.mxu0 0.0
  %4215 = vmatpush1.msra.mxu0 %v778
  %4216 = vmatprep.subr.mxu0 0.0
  %4217 = vmatpush1.msra.mxu0 %v779
  %4218 = vmatprep.subr.mxu0 0.0
  %4219 = vmatpush1.msra.mxu0 %v780
  %4220 = vmatprep.subr.mxu0 0.0
  %4221 = vmatpush1.msra.mxu0 %v781
  %4222 = vmatprep.subr.mxu0 0.0
  %4223 = vmatpush1.msra.mxu0 %v782
  %4224 = vmatprep.subr.mxu0 0.0
  %4225 = vmatpush1.msra.mxu0 %v783
  %4226 = vmatprep.subr.mxu0 0.0
  %4227 = vmatpush1.msra.mxu0 %v784
  %4228 = vmatprep.subr.mxu0 0.0
  %4229 = vmatpush1.msra.mxu0 %v785
  %4230 = vmatprep.subr.mxu0 0.0
  %4231 = vmatpush1.msra.mxu0 %v786
  %4232 = vmatprep.subr.mxu0 0.0
  %4233 = vmatpush1.msra.mxu0 %v787
  %4234 = vmatprep.subr.mxu0 0.0
  %4235 = vmatpush1.msra.mxu0 %v788
  %4236 = vmatprep.subr.mxu0 0.0
  %4237 = vmatpush1.msra.mxu0 %v789
  %4238 = vmatprep.subr.mxu0 0.0
  %4239 = vmatpush1.msra.mxu0 %v790
  %4240 = vmatprep.mubr.f32.mxu0 %v4033
  %4241 = vmatmul.mubr.f32.gmra.mrb[0].mxu0 %v4032
  %v4242 = vpop.f32.mrb[0].mxu0
  %v4243 = vadd.f32 %v4133, %v4242
  %v4244 = vpop.f32.mrb[0].mxu0
  %4245 = vmatprep.mubr.f32.mxu0 %v4037
  %4246 = vmatmul.mubr.f32.gmra.mrb[0].mxu0 %v4036
  %v4247 = vpop.f32.mrb[0].mxu0
  %v4248 = vadd.f32 %v4138, %v4247
  %v4249 = vpop.f32.mrb[0].mxu0
  %4250 = vmatprep.mubr.f32.mxu0 %v4041
  %4251 = vmatmul.mubr.f32.gmra.mrb[0].mxu0 %v4040
  %v4252 = vpop.f32.mrb[0].mxu0
  %v4253 = vadd.f32 %v4143, %v4252
  %v4254 = vpop.f32.mrb[0].mxu0
  %4255 = vmatprep.mubr.f32.mxu0 %v4045
  %4256 = vmatmul.mubr.f32.gmra.mrb[0].mxu0 %v4044
  %v4257 = vpop.f32.mrb[0].mxu0
  %v4258 = vadd.f32 %v4148, %v4257
  %v4259 = vpop.f32.mrb[0].mxu0
  %4260 = vmatprep.mubr.f32.mxu0 %v4049
  %4261 = vmatmul.mubr.f32.gmra.mrb[0].mxu0 %v4048
  %v4262 = vpop.f32.mrb[0].mxu0
  %v4263 = vadd.f32 %v4153, %v4262
  %v4264 = vpop.f32.mrb[0].mxu0
  %4265 = vmatprep.mubr.f32.mxu0 %v4053
  %4266 = vmatmul.mubr.f32.gmra.mrb[0].mxu0 %v4052
  %v4267 = vpop.f32.mrb[0].mxu0
  %v4268 = vadd.f32 %v4158, %v4267
  %v4269 = vpop.f32.mrb[0].mxu0
  %4270 = vmatprep.mubr.f32.mxu0 %v4057
  %4271 = vmatmul.mubr.f32.gmra.mrb[0].mxu0 %v4056
  %v4272 = vpop.f32.mrb[0].mxu0
  %v4273 = vadd.f32 %v4163, %v4272
  %v4274 = vpop.f32.mrb[0].mxu0
  %4275 = vmatprep.mubr.f32.mxu0 %v4061
  %4276 = vmatmul.mubr.f32.gmra.mrb[0].mxu0 %v4060
  %v4277 = vpop.f32.mrb[0].mxu0
  %v4278 = vadd.f32 %v4168, %v4277
  %v4279 = vpop.f32.mrb[0].mxu0
  %4280 = vmatprep.mubr.f32.mxu0 %v4065
  %4281 = vmatmul.mubr.f32.gmra.mrb[0].mxu0 %v4064
  %v4282 = vpop.f32.mrb[0].mxu0
  %v4283 = vadd.f32 %v4173, %v4282
  %v4284 = vpop.f32.mrb[0].mxu0
  %4285 = vdwg.mxu0
  %v4286 = vld [vmem:[%s4 + $0x100] sm:$0xff]
  %v4287 = vld [vmem:[%s4 + $0x108] sm:$0xff]
  %v4288 = vld [vmem:[%s4 + $0x110] sm:$0xff]
  %v4289 = vld [vmem:[%s4 + $0x118] sm:$0xff]
  %v4291 = vsel %vm1312, %v4243, 0
  %v4294 = vsel %vm1312, %v4248, 0
  %v4297 = vsel %vm1312, %v4253, 0
  %v4300 = vsel %vm1312, %v4258, 0
  %v4303 = vsel %vm1312, %v4263, 0
  %v4306 = vsel %vm1312, %v4268, 0
  %v4309 = vsel %vm1312, %v4273, 0
  %v4312 = vsel %vm1312, %v4278, 0
  %v4315 = vsel %vm1312, %v4283, 0
  %4317 = vmatprep.subr.mxu0 0.0
  %4318 = vmatpush1.msra.mxu0 %v4286
  %4319 = vmatprep.subr.mxu0 0.0
  %4320 = vmatpush1.msra.mxu0 %v4287
  %4321 = vmatprep.subr.mxu0 0.0
  %4322 = vmatpush1.msra.mxu0 %v4288
  %4323 = vmatprep.subr.mxu0 0.0
  %4324 = vmatpush1.msra.mxu0 %v4289
  %4325 = vmatprep.subr.mxu0 0.0
  %4326 = vmatpush1.msra.mxu0 0.0
  %4327 = vmatprep.subr.mxu0 0.0
  %4328 = vmatpush1.msra.mxu0 0.0
  %4329 = vmatprep.subr.mxu0 0.0
  %4330 = vmatpush1.msra.mxu0 0.0
  %4331 = vmatprep.subr.mxu0 0.0
  %4332 = vmatpush1.msra.mxu0 0.0
  %4333 = vmatprep.subr.mxu0 0.0
  %4334 = vmatpush1.msra.mxu0 0.0
  %4335 = vmatprep.subr.mxu0 0.0
  %4336 = vmatpush1.msra.mxu0 0.0
  %4337 = vmatprep.subr.mxu0 0.0
  %4338 = vmatpush1.msra.mxu0 0.0
  %4339 = vmatprep.subr.mxu0 0.0
  %4340 = vmatpush1.msra.mxu0 0.0
  %4341 = vmatprep.subr.mxu0 0.0
  %4342 = vmatpush1.msra.mxu0 0.0
  %4343 = vmatprep.subr.mxu0 0.0
  %4344 = vmatpush1.msra.mxu0 0.0
  %4345 = vmatprep.subr.mxu0 0.0
  %4346 = vmatpush1.msra.mxu0 0.0
  %4347 = vmatprep.subr.mxu0 0.0
  %4348 = vmatpush1.msra.mxu0 0.0
  %4349 = vmatprep.subr.mxu0 0.0
  %4350 = vmatpush1.msra.mxu0 0.0
  %4351 = vmatprep.subr.mxu0 0.0
  %4352 = vmatpush1.msra.mxu0 0.0
  %4353 = vmatprep.subr.mxu0 0.0
  %4354 = vmatpush1.msra.mxu0 0.0
  %4355 = vmatprep.subr.mxu0 0.0
  %4356 = vmatpush1.msra.mxu0 0.0
  %4357 = vmatprep.subr.mxu0 0.0
  %4358 = vmatpush1.msra.mxu0 0.0
  %4359 = vmatprep.subr.mxu0 0.0
  %4360 = vmatpush1.msra.mxu0 0.0
  %4361 = vmatprep.subr.mxu0 0.0
  %4362 = vmatpush1.msra.mxu0 0.0
  %4363 = vmatprep.subr.mxu0 0.0
  %4364 = vmatpush1.msra.mxu0 0.0
  %4365 = vmatprep.subr.mxu0 0.0
  %4366 = vmatpush1.msra.mxu0 0.0
  %4367 = vmatprep.subr.mxu0 0.0
  %4368 = vmatpush1.msra.mxu0 0.0
  %4369 = vmatprep.subr.mxu0 0.0
  %4370 = vmatpush1.msra.mxu0 0.0
  %4371 = vmatprep.subr.mxu0 0.0
  %4372 = vmatpush1.msra.mxu0 0.0
  %4373 = vmatprep.subr.mxu0 0.0
  %4374 = vmatpush1.msra.mxu0 0.0
  %4375 = vmatprep.subr.mxu0 0.0
  %4376 = vmatpush1.msra.mxu0 0.0
  %4377 = vmatprep.subr.mxu0 0.0
  %4378 = vmatpush1.msra.mxu0 0.0
  %4379 = vmatprep.subr.mxu0 0.0
  %4380 = vmatpush1.msra.mxu0 0.0
  %4381 = vmatprep.mubr.f32.mxu0 0.0
  %4382 = vmatmul.mubr.f32.gmra.mrb[0].mxu0 %v4291
  %v4383 = vpop.f32.mrb[0].mxu0
  %v4384 = vadd.f32 0.0, %v4383
  %v4385 = vpop.f32.mrb[0].mxu0
  %4386 = vmatprep.mubr.f32.mxu0 0.0
  %4387 = vmatmul.mubr.f32.gmra.mrb[0].mxu0 %v4294
  %v4388 = vpop.f32.mrb[0].mxu0
  %v4389 = vadd.f32 0.0, %v4388
  %v4390 = vpop.f32.mrb[0].mxu0
  %4391 = vmatprep.mubr.f32.mxu0 0.0
  %4392 = vmatmul.mubr.f32.gmra.mrb[0].mxu0 %v4297
  %v4393 = vpop.f32.mrb[0].mxu0
  %v4394 = vadd.f32 0.0, %v4393
  %v4395 = vpop.f32.mrb[0].mxu0
  %4396 = vmatprep.mubr.f32.mxu0 0.0
  %4397 = vmatmul.mubr.f32.gmra.mrb[0].mxu0 %v4300
  %v4398 = vpop.f32.mrb[0].mxu0
  %v4399 = vadd.f32 0.0, %v4398
  %v4400 = vpop.f32.mrb[0].mxu0
  %4401 = vmatprep.mubr.f32.mxu0 0.0
  %4402 = vmatmul.mubr.f32.gmra.mrb[0].mxu0 %v4303
  %v4403 = vpop.f32.mrb[0].mxu0
  %v4404 = vadd.f32 0.0, %v4403
  %v4405 = vpop.f32.mrb[0].mxu0
  %4406 = vmatprep.mubr.f32.mxu0 0.0
  %4407 = vmatmul.mubr.f32.gmra.mrb[0].mxu0 %v4306
  %v4408 = vpop.f32.mrb[0].mxu0
  %v4409 = vadd.f32 0.0, %v4408
  %v4410 = vpop.f32.mrb[0].mxu0
  %4411 = vmatprep.mubr.f32.mxu0 0.0
  %4412 = vmatmul.mubr.f32.gmra.mrb[0].mxu0 %v4309
  %v4413 = vpop.f32.mrb[0].mxu0
  %v4414 = vadd.f32 0.0, %v4413
  %v4415 = vpop.f32.mrb[0].mxu0
  %4416 = vmatprep.mubr.f32.mxu0 0.0
  %4417 = vmatmul.mubr.f32.gmra.mrb[0].mxu0 %v4312
  %v4418 = vpop.f32.mrb[0].mxu0
  %v4419 = vadd.f32 0.0, %v4418
  %v4420 = vpop.f32.mrb[0].mxu0
  %4421 = vmatprep.mubr.f32.mxu0 0.0
  %4422 = vmatmul.mubr.f32.gmra.mrb[0].mxu0 %v4315
  %v4423 = vpop.f32.mrb[0].mxu0
  %v4424 = vadd.f32 0.0, %v4423
  %v4425 = vpop.f32.mrb[0].mxu0
  %4426 = vdwg.mxu0
  %v4427 = vadd.f32 %v4020, %v4384
  %v4428 = vadd.f32 %v4021, %v4389
  %v4429 = vadd.f32 %v4022, %v4394
  %v4430 = vadd.f32 %v4023, %v4399
  %v4431 = vadd.f32 %v4024, %v4404
  %v4432 = vadd.f32 %v4025, %v4409
  %v4433 = vadd.f32 %v4026, %v4414
  %v4434 = vadd.f32 %v4027, %v4419
  %v4435 = vadd.f32 %v4028, %v4424
  %s4436 = scalar_lea.vmem %s3, 2592
  %v4437 = vld [vmem:[%s4436] sm:$0xff]
  %v4438 = vld [vmem:[%s4436 + $0x8] sm:$0xff]
  %v4439 = vld [vmem:[%s4436 + $0x10] sm:$0xff]
  %v4440 = vld [vmem:[%s4436 + $0x18] sm:$0xff]
  %v4441 = vld [vmem:[%s4436 + $0x20] sm:$0xff]
  %v4442 = vld [vmem:[%s4436 + $0x28] sm:$0xff]
  %v4443 = vld [vmem:[%s4436 + $0x30] sm:$0xff]
  %v4444 = vld [vmem:[%s4436 + $0x38] sm:$0xff]
  %v4445 = vld [vmem:[%s4436 + $0x40] sm:$0xff]
  %v4446 = vld [vmem:[%s4436 + $0x48] sm:$0xff]
  %v4447 = vld [vmem:[%s4436 + $0x50] sm:$0xff]
  %v4448 = vld [vmem:[%s4436 + $0x58] sm:$0xff]
  %v4449 = vld [vmem:[%s4436 + $0x60] sm:$0xff]
  %v4450 = vld [vmem:[%s4436 + $0x68] sm:$0xff]
  %v4451 = vld [vmem:[%s4436 + $0x70] sm:$0xff]
  %v4452 = vld [vmem:[%s4436 + $0x78] sm:$0xff]
  %v4453 = vld [vmem:[%s4436 + $0x80] sm:$0xff]
  %v4454 = vld [vmem:[%s4436 + $0x88] sm:$0xff]
  %v4455 = vld [vmem:[%s4436 + $0x90] sm:$0xff]
  %v4456 = vld [vmem:[%s4436 + $0x98] sm:$0xff]
  %v4457 = vld [vmem:[%s4436 + $0xa0] sm:$0xff]
  %v4458 = vld [vmem:[%s4436 + $0xa8] sm:$0xff]
  %v4459 = vld [vmem:[%s4436 + $0xb0] sm:$0xff]
  %v4460 = vld [vmem:[%s4436 + $0xb8] sm:$0xff]
  %v4461 = vld [vmem:[%s4436 + $0xc0] sm:$0xff]
  %v4462 = vld [vmem:[%s4436 + $0xc8] sm:$0xff]
  %v4463 = vld [vmem:[%s4436 + $0xd0] sm:$0xff]
  %v4464 = vld [vmem:[%s4436 + $0xd8] sm:$0xff]
  %v4465 = vld [vmem:[%s4436 + $0xe0] sm:$0xff]
  %v4466 = vld [vmem:[%s4436 + $0xe8] sm:$0xff]
  %v4467 = vld [vmem:[%s4436 + $0xf0] sm:$0xff]
  %v4468 = vld [vmem:[%s4436 + $0xf8] sm:$0xff]
  %v4469 = vld [vmem:[%s4436 + $0x100] sm:$0xff]
  %v4470 = vld [vmem:[%s4436 + $0x108] sm:$0xff]
  %v4471 = vld [vmem:[%s4436 + $0x110] sm:$0xff]
  %v4472 = vld [vmem:[%s4436 + $0x118] sm:$0xff]
  %4473 = vmatprep.subr.mxu0 0.0
  %4474 = vmatpush1.msra.mxu0 %v727
  %4475 = vmatprep.subr.mxu0 0.0
  %4476 = vmatpush1.msra.mxu0 %v728
  %4477 = vmatprep.subr.mxu0 0.0
  %4478 = vmatpush1.msra.mxu0 %v729
  %4479 = vmatprep.subr.mxu0 0.0
  %4480 = vmatpush1.msra.mxu0 %v730
  %4481 = vmatprep.subr.mxu0 0.0
  %4482 = vmatpush1.msra.mxu0 %v731
  %4483 = vmatprep.subr.mxu0 0.0
  %4484 = vmatpush1.msra.mxu0 %v732
  %4485 = vmatprep.subr.mxu0 0.0
  %4486 = vmatpush1.msra.mxu0 %v733
  %4487 = vmatprep.subr.mxu0 0.0
  %4488 = vmatpush1.msra.mxu0 %v734
  %4489 = vmatprep.subr.mxu0 0.0
  %4490 = vmatpush1.msra.mxu0 %v735
  %4491 = vmatprep.subr.mxu0 0.0
  %4492 = vmatpush1.msra.mxu0 %v736
  %4493 = vmatprep.subr.mxu0 0.0
  %4494 = vmatpush1.msra.mxu0 %v737
  %4495 = vmatprep.subr.mxu0 0.0
  %4496 = vmatpush1.msra.mxu0 %v738
  %4497 = vmatprep.subr.mxu0 0.0
  %4498 = vmatpush1.msra.mxu0 %v739
  %4499 = vmatprep.subr.mxu0 0.0
  %4500 = vmatpush1.msra.mxu0 %v740
  %4501 = vmatprep.subr.mxu0 0.0
  %4502 = vmatpush1.msra.mxu0 %v741
  %4503 = vmatprep.subr.mxu0 0.0
  %4504 = vmatpush1.msra.mxu0 %v742
  %4505 = vmatprep.subr.mxu0 0.0
  %4506 = vmatpush1.msra.mxu0 %v743
  %4507 = vmatprep.subr.mxu0 0.0
  %4508 = vmatpush1.msra.mxu0 %v744
  %4509 = vmatprep.subr.mxu0 0.0
  %4510 = vmatpush1.msra.mxu0 %v745
  %4511 = vmatprep.subr.mxu0 0.0
  %4512 = vmatpush1.msra.mxu0 %v746
  %4513 = vmatprep.subr.mxu0 0.0
  %4514 = vmatpush1.msra.mxu0 %v747
  %4515 = vmatprep.subr.mxu0 0.0
  %4516 = vmatpush1.msra.mxu0 %v748
  %4517 = vmatprep.subr.mxu0 0.0
  %4518 = vmatpush1.msra.mxu0 %v749
  %4519 = vmatprep.subr.mxu0 0.0
  %4520 = vmatpush1.msra.mxu0 %v750
  %4521 = vmatprep.subr.mxu0 0.0
  %4522 = vmatpush1.msra.mxu0 %v751
  %4523 = vmatprep.subr.mxu0 0.0
  %4524 = vmatpush1.msra.mxu0 %v752
  %4525 = vmatprep.subr.mxu0 0.0
  %4526 = vmatpush1.msra.mxu0 %v753
  %4527 = vmatprep.subr.mxu0 0.0
  %4528 = vmatpush1.msra.mxu0 %v754
  %4529 = vmatprep.subr.mxu0 0.0
  %4530 = vmatpush1.msra.mxu0 %v755
  %4531 = vmatprep.subr.mxu0 0.0
  %4532 = vmatpush1.msra.mxu0 %v756
  %4533 = vmatprep.subr.mxu0 0.0
  %4534 = vmatpush1.msra.mxu0 %v757
  %4535 = vmatprep.subr.mxu0 0.0
  %4536 = vmatpush1.msra.mxu0 %v758
  %4537 = vmatprep.mubr.f32.mxu0 %v4438
  %4538 = vmatmul.mubr.f32.gmra.mrb[0].mxu0 %v4437
  %v4539 = vpop.f32.mrb[0].mxu0
  %v4540 = vadd.f32 0.0, %v4539
  %v4541 = vpop.f32.mrb[0].mxu0
  %4542 = vmatprep.mubr.f32.mxu0 %v4442
  %4543 = vmatmul.mubr.f32.gmra.mrb[0].mxu0 %v4441
  %v4544 = vpop.f32.mrb[0].mxu0
  %v4545 = vadd.f32 0.0, %v4544
  %v4546 = vpop.f32.mrb[0].mxu0
  %4547 = vmatprep.mubr.f32.mxu0 %v4446
  %4548 = vmatmul.mubr.f32.gmra.mrb[0].mxu0 %v4445
  %v4549 = vpop.f32.mrb[0].mxu0
  %v4550 = vadd.f32 0.0, %v4549
  %v4551 = vpop.f32.mrb[0].mxu0
  %4552 = vmatprep.mubr.f32.mxu0 %v4450
  %4553 = vmatmul.mubr.f32.gmra.mrb[0].mxu0 %v4449
  %v4554 = vpop.f32.mrb[0].mxu0
  %v4555 = vadd.f32 0.0, %v4554
  %v4556 = vpop.f32.mrb[0].mxu0
  %4557 = vmatprep.mubr.f32.mxu0 %v4454
  %4558 = vmatmul.mubr.f32.gmra.mrb[0].mxu0 %v4453
  %v4559 = vpop.f32.mrb[0].mxu0
  %v4560 = vadd.f32 0.0, %v4559
  %v4561 = vpop.f32.mrb[0].mxu0
  %4562 = vmatprep.mubr.f32.mxu0 %v4458
  %4563 = vmatmul.mubr.f32.gmra.mrb[0].mxu0 %v4457
  %v4564 = vpop.f32.mrb[0].mxu0
  %v4565 = vadd.f32 0.0, %v4564
  %v4566 = vpop.f32.mrb[0].mxu0
  %4567 = vmatprep.mubr.f32.mxu0 %v4462
  %4568 = vmatmul.mubr.f32.gmra.mrb[0].mxu0 %v4461
  %v4569 = vpop.f32.mrb[0].mxu0
  %v4570 = vadd.f32 0.0, %v4569
  %v4571 = vpop.f32.mrb[0].mxu0
  %4572 = vmatprep.mubr.f32.mxu0 %v4466
  %4573 = vmatmul.mubr.f32.gmra.mrb[0].mxu0 %v4465
  %v4574 = vpop.f32.mrb[0].mxu0
  %v4575 = vadd.f32 0.0, %v4574
  %v4576 = vpop.f32.mrb[0].mxu0
  %4577 = vmatprep.mubr.f32.mxu0 %v4470
  %4578 = vmatmul.mubr.f32.gmra.mrb[0].mxu0 %v4469
  %v4579 = vpop.f32.mrb[0].mxu0
  %v4580 = vadd.f32 0.0, %v4579
  %v4581 = vpop.f32.mrb[0].mxu0
  %4582 = vdwg.mxu0
  %4583 = vmatprep.subr.mxu0 0.0
  %4584 = vmatpush1.msra.mxu0 %v759
  %4585 = vmatprep.subr.mxu0 0.0
  %4586 = vmatpush1.msra.mxu0 %v760
  %4587 = vmatprep.subr.mxu0 0.0
  %4588 = vmatpush1.msra.mxu0 %v761
  %4589 = vmatprep.subr.mxu0 0.0
  %4590 = vmatpush1.msra.mxu0 %v762
  %4591 = vmatprep.subr.mxu0 0.0
  %4592 = vmatpush1.msra.mxu0 %v763
  %4593 = vmatprep.subr.mxu0 0.0
  %4594 = vmatpush1.msra.mxu0 %v764
  %4595 = vmatprep.subr.mxu0 0.0
  %4596 = vmatpush1.msra.mxu0 %v765
  %4597 = vmatprep.subr.mxu0 0.0
  %4598 = vmatpush1.msra.mxu0 %v766
  %4599 = vmatprep.subr.mxu0 0.0
  %4600 = vmatpush1.msra.mxu0 %v767
  %4601 = vmatprep.subr.mxu0 0.0
  %4602 = vmatpush1.msra.mxu0 %v768
  %4603 = vmatprep.subr.mxu0 0.0
  %4604 = vmatpush1.msra.mxu0 %v769
  %4605 = vmatprep.subr.mxu0 0.0
  %4606 = vmatpush1.msra.mxu0 %v770
  %4607 = vmatprep.subr.mxu0 0.0
  %4608 = vmatpush1.msra.mxu0 %v771
  %4609 = vmatprep.subr.mxu0 0.0
  %4610 = vmatpush1.msra.mxu0 %v772
  %4611 = vmatprep.subr.mxu0 0.0
  %4612 = vmatpush1.msra.mxu0 %v773
  %4613 = vmatprep.subr.mxu0 0.0
  %4614 = vmatpush1.msra.mxu0 %v774
  %4615 = vmatprep.subr.mxu0 0.0
  %4616 = vmatpush1.msra.mxu0 %v775
  %4617 = vmatprep.subr.mxu0 0.0
  %4618 = vmatpush1.msra.mxu0 %v776
  %4619 = vmatprep.subr.mxu0 0.0
  %4620 = vmatpush1.msra.mxu0 %v777
  %4621 = vmatprep.subr.mxu0 0.0
  %4622 = vmatpush1.msra.mxu0 %v778
  %4623 = vmatprep.subr.mxu0 0.0
  %4624 = vmatpush1.msra.mxu0 %v779
  %4625 = vmatprep.subr.mxu0 0.0
  %4626 = vmatpush1.msra.mxu0 %v780
  %4627 = vmatprep.subr.mxu0 0.0
  %4628 = vmatpush1.msra.mxu0 %v781
  %4629 = vmatprep.subr.mxu0 0.0
  %4630 = vmatpush1.msra.mxu0 %v782
  %4631 = vmatprep.subr.mxu0 0.0
  %4632 = vmatpush1.msra.mxu0 %v783
  %4633 = vmatprep.subr.mxu0 0.0
  %4634 = vmatpush1.msra.mxu0 %v784
  %4635 = vmatprep.subr.mxu0 0.0
  %4636 = vmatpush1.msra.mxu0 %v785
  %4637 = vmatprep.subr.mxu0 0.0
  %4638 = vmatpush1.msra.mxu0 %v786
  %4639 = vmatprep.subr.mxu0 0.0
  %4640 = vmatpush1.msra.mxu0 %v787
  %4641 = vmatprep.subr.mxu0 0.0
  %4642 = vmatpush1.msra.mxu0 %v788
  %4643 = vmatprep.subr.mxu0 0.0
  %4644 = vmatpush1.msra.mxu0 %v789
  %4645 = vmatprep.subr.mxu0 0.0
  %4646 = vmatpush1.msra.mxu0 %v790
  %4647 = vmatprep.mubr.f32.mxu0 %v4440
  %4648 = vmatmul.mubr.f32.gmra.mrb[0].mxu0 %v4439
  %v4649 = vpop.f32.mrb[0].mxu0
  %v4650 = vadd.f32 %v4540, %v4649
  %v4651 = vpop.f32.mrb[0].mxu0
  %4652 = vmatprep.mubr.f32.mxu0 %v4444
  %4653 = vmatmul.mubr.f32.gmra.mrb[0].mxu0 %v4443
  %v4654 = vpop.f32.mrb[0].mxu0
  %v4655 = vadd.f32 %v4545, %v4654
  %v4656 = vpop.f32.mrb[0].mxu0
  %4657 = vmatprep.mubr.f32.mxu0 %v4448
  %4658 = vmatmul.mubr.f32.gmra.mrb[0].mxu0 %v4447
  %v4659 = vpop.f32.mrb[0].mxu0
  %v4660 = vadd.f32 %v4550, %v4659
  %v4661 = vpop.f32.mrb[0].mxu0
  %4662 = vmatprep.mubr.f32.mxu0 %v4452
  %4663 = vmatmul.mubr.f32.gmra.mrb[0].mxu0 %v4451
  %v4664 = vpop.f32.mrb[0].mxu0
  %v4665 = vadd.f32 %v4555, %v4664
  %v4666 = vpop.f32.mrb[0].mxu0
  %4667 = vmatprep.mubr.f32.mxu0 %v4456
  %4668 = vmatmul.mubr.f32.gmra.mrb[0].mxu0 %v4455
  %v4669 = vpop.f32.mrb[0].mxu0
  %v4670 = vadd.f32 %v4560, %v4669
  %v4671 = vpop.f32.mrb[0].mxu0
  %4672 = vmatprep.mubr.f32.mxu0 %v4460
  %4673 = vmatmul.mubr.f32.gmra.mrb[0].mxu0 %v4459
  %v4674 = vpop.f32.mrb[0].mxu0
  %v4675 = vadd.f32 %v4565, %v4674
  %v4676 = vpop.f32.mrb[0].mxu0
  %4677 = vmatprep.mubr.f32.mxu0 %v4464
  %4678 = vmatmul.mubr.f32.gmra.mrb[0].mxu0 %v4463
  %v4679 = vpop.f32.mrb[0].mxu0
  %v4680 = vadd.f32 %v4570, %v4679
  %v4681 = vpop.f32.mrb[0].mxu0
  %4682 = vmatprep.mubr.f32.mxu0 %v4468
  %4683 = vmatmul.mubr.f32.gmra.mrb[0].mxu0 %v4467
  %v4684 = vpop.f32.mrb[0].mxu0
  %v4685 = vadd.f32 %v4575, %v4684
  %v4686 = vpop.f32.mrb[0].mxu0
  %4687 = vmatprep.mubr.f32.mxu0 %v4472
  %4688 = vmatmul.mubr.f32.gmra.mrb[0].mxu0 %v4471
  %v4689 = vpop.f32.mrb[0].mxu0
  %v4690 = vadd.f32 %v4580, %v4689
  %v4691 = vpop.f32.mrb[0].mxu0
  %4692 = vdwg.mxu0
  %v4693 = vld [vmem:[%s4 + $0x120] sm:$0xff]
  %v4694 = vld [vmem:[%s4 + $0x128] sm:$0xff]
  %v4695 = vld [vmem:[%s4 + $0x130] sm:$0xff]
  %v4696 = vld [vmem:[%s4 + $0x138] sm:$0xff]
  %v4698 = vsel %vm1312, %v4650, 0
  %v4701 = vsel %vm1312, %v4655, 0
  %v4704 = vsel %vm1312, %v4660, 0
  %v4707 = vsel %vm1312, %v4665, 0
  %v4710 = vsel %vm1312, %v4670, 0
  %v4713 = vsel %vm1312, %v4675, 0
  %v4716 = vsel %vm1312, %v4680, 0
  %v4719 = vsel %vm1312, %v4685, 0
  %v4722 = vsel %vm1312, %v4690, 0
  %4724 = vmatprep.subr.mxu0 0.0
  %4725 = vmatpush1.msra.mxu0 %v4693
  %4726 = vmatprep.subr.mxu0 0.0
  %4727 = vmatpush1.msra.mxu0 %v4694
  %4728 = vmatprep.subr.mxu0 0.0
  %4729 = vmatpush1.msra.mxu0 %v4695
  %4730 = vmatprep.subr.mxu0 0.0
  %4731 = vmatpush1.msra.mxu0 %v4696
  %4732 = vmatprep.subr.mxu0 0.0
  %4733 = vmatpush1.msra.mxu0 0.0
  %4734 = vmatprep.subr.mxu0 0.0
  %4735 = vmatpush1.msra.mxu0 0.0
  %4736 = vmatprep.subr.mxu0 0.0
  %4737 = vmatpush1.msra.mxu0 0.0
  %4738 = vmatprep.subr.mxu0 0.0
  %4739 = vmatpush1.msra.mxu0 0.0
  %4740 = vmatprep.subr.mxu0 0.0
  %4741 = vmatpush1.msra.mxu0 0.0
  %4742 = vmatprep.subr.mxu0 0.0
  %4743 = vmatpush1.msra.mxu0 0.0
  %4744 = vmatprep.subr.mxu0 0.0
  %4745 = vmatpush1.msra.mxu0 0.0
  %4746 = vmatprep.subr.mxu0 0.0
  %4747 = vmatpush1.msra.mxu0 0.0
  %4748 = vmatprep.subr.mxu0 0.0
  %4749 = vmatpush1.msra.mxu0 0.0
  %4750 = vmatprep.subr.mxu0 0.0
  %4751 = vmatpush1.msra.mxu0 0.0
  %4752 = vmatprep.subr.mxu0 0.0
  %4753 = vmatpush1.msra.mxu0 0.0
  %4754 = vmatprep.subr.mxu0 0.0
  %4755 = vmatpush1.msra.mxu0 0.0
  %4756 = vmatprep.subr.mxu0 0.0
  %4757 = vmatpush1.msra.mxu0 0.0
  %4758 = vmatprep.subr.mxu0 0.0
  %4759 = vmatpush1.msra.mxu0 0.0
  %4760 = vmatprep.subr.mxu0 0.0
  %4761 = vmatpush1.msra.mxu0 0.0
  %4762 = vmatprep.subr.mxu0 0.0
  %4763 = vmatpush1.msra.mxu0 0.0
  %4764 = vmatprep.subr.mxu0 0.0
  %4765 = vmatpush1.msra.mxu0 0.0
  %4766 = vmatprep.subr.mxu0 0.0
  %4767 = vmatpush1.msra.mxu0 0.0
  %4768 = vmatprep.subr.mxu0 0.0
  %4769 = vmatpush1.msra.mxu0 0.0
  %4770 = vmatprep.subr.mxu0 0.0
  %4771 = vmatpush1.msra.mxu0 0.0
  %4772 = vmatprep.subr.mxu0 0.0
  %4773 = vmatpush1.msra.mxu0 0.0
  %4774 = vmatprep.subr.mxu0 0.0
  %4775 = vmatpush1.msra.mxu0 0.0
  %4776 = vmatprep.subr.mxu0 0.0
  %4777 = vmatpush1.msra.mxu0 0.0
  %4778 = vmatprep.subr.mxu0 0.0
  %4779 = vmatpush1.msra.mxu0 0.0
  %4780 = vmatprep.subr.mxu0 0.0
  %4781 = vmatpush1.msra.mxu0 0.0
  %4782 = vmatprep.subr.mxu0 0.0
  %4783 = vmatpush1.msra.mxu0 0.0
  %4784 = vmatprep.subr.mxu0 0.0
  %4785 = vmatpush1.msra.mxu0 0.0
  %4786 = vmatprep.subr.mxu0 0.0
  %4787 = vmatpush1.msra.mxu0 0.0
  %4788 = vmatprep.mubr.f32.mxu0 0.0
  %4789 = vmatmul.mubr.f32.gmra.mrb[0].mxu0 %v4698
  %v4790 = vpop.f32.mrb[0].mxu0
  %v4791 = vadd.f32 0.0, %v4790
  %v4792 = vpop.f32.mrb[0].mxu0
  %4793 = vmatprep.mubr.f32.mxu0 0.0
  %4794 = vmatmul.mubr.f32.gmra.mrb[0].mxu0 %v4701
  %v4795 = vpop.f32.mrb[0].mxu0
  %v4796 = vadd.f32 0.0, %v4795
  %v4797 = vpop.f32.mrb[0].mxu0
  %4798 = vmatprep.mubr.f32.mxu0 0.0
  %4799 = vmatmul.mubr.f32.gmra.mrb[0].mxu0 %v4704
  %v4800 = vpop.f32.mrb[0].mxu0
  %v4801 = vadd.f32 0.0, %v4800
  %v4802 = vpop.f32.mrb[0].mxu0
  %4803 = vmatprep.mubr.f32.mxu0 0.0
  %4804 = vmatmul.mubr.f32.gmra.mrb[0].mxu0 %v4707
  %v4805 = vpop.f32.mrb[0].mxu0
  %v4806 = vadd.f32 0.0, %v4805
  %v4807 = vpop.f32.mrb[0].mxu0
  %4808 = vmatprep.mubr.f32.mxu0 0.0
  %4809 = vmatmul.mubr.f32.gmra.mrb[0].mxu0 %v4710
  %v4810 = vpop.f32.mrb[0].mxu0
  %v4811 = vadd.f32 0.0, %v4810
  %v4812 = vpop.f32.mrb[0].mxu0
  %4813 = vmatprep.mubr.f32.mxu0 0.0
  %4814 = vmatmul.mubr.f32.gmra.mrb[0].mxu0 %v4713
  %v4815 = vpop.f32.mrb[0].mxu0
  %v4816 = vadd.f32 0.0, %v4815
  %v4817 = vpop.f32.mrb[0].mxu0
  %4818 = vmatprep.mubr.f32.mxu0 0.0
  %4819 = vmatmul.mubr.f32.gmra.mrb[0].mxu0 %v4716
  %v4820 = vpop.f32.mrb[0].mxu0
  %v4821 = vadd.f32 0.0, %v4820
  %v4822 = vpop.f32.mrb[0].mxu0
  %4823 = vmatprep.mubr.f32.mxu0 0.0
  %4824 = vmatmul.mubr.f32.gmra.mrb[0].mxu0 %v4719
  %v4825 = vpop.f32.mrb[0].mxu0
  %v4826 = vadd.f32 0.0, %v4825
  %v4827 = vpop.f32.mrb[0].mxu0
  %4828 = vmatprep.mubr.f32.mxu0 0.0
  %4829 = vmatmul.mubr.f32.gmra.mrb[0].mxu0 %v4722
  %v4830 = vpop.f32.mrb[0].mxu0
  %v4831 = vadd.f32 0.0, %v4830
  %v4832 = vpop.f32.mrb[0].mxu0
  %4833 = vdwg.mxu0
  %v4834 = vadd.f32 %v4427, %v4791
  %v4835 = vadd.f32 %v4428, %v4796
  %v4836 = vadd.f32 %v4429, %v4801
  %v4837 = vadd.f32 %v4430, %v4806
  %v4838 = vadd.f32 %v4431, %v4811
  %v4839 = vadd.f32 %v4432, %v4816
  %v4840 = vadd.f32 %v4433, %v4821
  %v4841 = vadd.f32 %v4434, %v4826
  %v4842 = vadd.f32 %v4435, %v4831
  %s4843 = scalar_lea.vmem %s3, 2880
  %v4844 = vld [vmem:[%s4843] sm:$0xff]
  %v4845 = vld [vmem:[%s4843 + $0x8] sm:$0xff]
  %v4846 = vld [vmem:[%s4843 + $0x10] sm:$0xff]
  %v4847 = vld [vmem:[%s4843 + $0x18] sm:$0xff]
  %v4848 = vld [vmem:[%s4843 + $0x20] sm:$0xff]
  %v4849 = vld [vmem:[%s4843 + $0x28] sm:$0xff]
  %v4850 = vld [vmem:[%s4843 + $0x30] sm:$0xff]
  %v4851 = vld [vmem:[%s4843 + $0x38] sm:$0xff]
  %v4852 = vld [vmem:[%s4843 + $0x40] sm:$0xff]
  %v4853 = vld [vmem:[%s4843 + $0x48] sm:$0xff]
  %v4854 = vld [vmem:[%s4843 + $0x50] sm:$0xff]
  %v4855 = vld [vmem:[%s4843 + $0x58] sm:$0xff]
  %v4856 = vld [vmem:[%s4843 + $0x60] sm:$0xff]
  %v4857 = vld [vmem:[%s4843 + $0x68] sm:$0xff]
  %v4858 = vld [vmem:[%s4843 + $0x70] sm:$0xff]
  %v4859 = vld [vmem:[%s4843 + $0x78] sm:$0xff]
  %v4860 = vld [vmem:[%s4843 + $0x80] sm:$0xff]
  %v4861 = vld [vmem:[%s4843 + $0x88] sm:$0xff]
  %v4862 = vld [vmem:[%s4843 + $0x90] sm:$0xff]
  %v4863 = vld [vmem:[%s4843 + $0x98] sm:$0xff]
  %v4864 = vld [vmem:[%s4843 + $0xa0] sm:$0xff]
  %v4865 = vld [vmem:[%s4843 + $0xa8] sm:$0xff]
  %v4866 = vld [vmem:[%s4843 + $0xb0] sm:$0xff]
  %v4867 = vld [vmem:[%s4843 + $0xb8] sm:$0xff]
  %v4868 = vld [vmem:[%s4843 + $0xc0] sm:$0xff]
  %v4869 = vld [vmem:[%s4843 + $0xc8] sm:$0xff]
  %v4870 = vld [vmem:[%s4843 + $0xd0] sm:$0xff]
  %v4871 = vld [vmem:[%s4843 + $0xd8] sm:$0xff]
  %v4872 = vld [vmem:[%s4843 + $0xe0] sm:$0xff]
  %v4873 = vld [vmem:[%s4843 + $0xe8] sm:$0xff]
  %v4874 = vld [vmem:[%s4843 + $0xf0] sm:$0xff]
  %v4875 = vld [vmem:[%s4843 + $0xf8] sm:$0xff]
  %v4876 = vld [vmem:[%s4843 + $0x100] sm:$0xff]
  %v4877 = vld [vmem:[%s4843 + $0x108] sm:$0xff]
  %v4878 = vld [vmem:[%s4843 + $0x110] sm:$0xff]
  %v4879 = vld [vmem:[%s4843 + $0x118] sm:$0xff]
  %4880 = vmatprep.subr.mxu0 0.0
  %4881 = vmatpush1.msra.mxu0 %v727
  %4882 = vmatprep.subr.mxu0 0.0
  %4883 = vmatpush1.msra.mxu0 %v728
  %4884 = vmatprep.subr.mxu0 0.0
  %4885 = vmatpush1.msra.mxu0 %v729
  %4886 = vmatprep.subr.mxu0 0.0
  %4887 = vmatpush1.msra.mxu0 %v730
  %4888 = vmatprep.subr.mxu0 0.0
  %4889 = vmatpush1.msra.mxu0 %v731
  %4890 = vmatprep.subr.mxu0 0.0
  %4891 = vmatpush1.msra.mxu0 %v732
  %4892 = vmatprep.subr.mxu0 0.0
  %4893 = vmatpush1.msra.mxu0 %v733
  %4894 = vmatprep.subr.mxu0 0.0
  %4895 = vmatpush1.msra.mxu0 %v734
  %4896 = vmatprep.subr.mxu0 0.0
  %4897 = vmatpush1.msra.mxu0 %v735
  %4898 = vmatprep.subr.mxu0 0.0
  %4899 = vmatpush1.msra.mxu0 %v736
  %4900 = vmatprep.subr.mxu0 0.0
  %4901 = vmatpush1.msra.mxu0 %v737
  %4902 = vmatprep.subr.mxu0 0.0
  %4903 = vmatpush1.msra.mxu0 %v738
  %4904 = vmatprep.subr.mxu0 0.0
  %4905 = vmatpush1.msra.mxu0 %v739
  %4906 = vmatprep.subr.mxu0 0.0
  %4907 = vmatpush1.msra.mxu0 %v740
  %4908 = vmatprep.subr.mxu0 0.0
  %4909 = vmatpush1.msra.mxu0 %v741
  %4910 = vmatprep.subr.mxu0 0.0
  %4911 = vmatpush1.msra.mxu0 %v742
  %4912 = vmatprep.subr.mxu0 0.0
  %4913 = vmatpush1.msra.mxu0 %v743
  %4914 = vmatprep.subr.mxu0 0.0
  %4915 = vmatpush1.msra.mxu0 %v744
  %4916 = vmatprep.subr.mxu0 0.0
  %4917 = vmatpush1.msra.mxu0 %v745
  %4918 = vmatprep.subr.mxu0 0.0
  %4919 = vmatpush1.msra.mxu0 %v746
  %4920 = vmatprep.subr.mxu0 0.0
  %4921 = vmatpush1.msra.mxu0 %v747
  %4922 = vmatprep.subr.mxu0 0.0
  %4923 = vmatpush1.msra.mxu0 %v748
  %4924 = vmatprep.subr.mxu0 0.0
  %4925 = vmatpush1.msra.mxu0 %v749
  %4926 = vmatprep.subr.mxu0 0.0
  %4927 = vmatpush1.msra.mxu0 %v750
  %4928 = vmatprep.subr.mxu0 0.0
  %4929 = vmatpush1.msra.mxu0 %v751
  %4930 = vmatprep.subr.mxu0 0.0
  %4931 = vmatpush1.msra.mxu0 %v752
  %4932 = vmatprep.subr.mxu0 0.0
  %4933 = vmatpush1.msra.mxu0 %v753
  %4934 = vmatprep.subr.mxu0 0.0
  %4935 = vmatpush1.msra.mxu0 %v754
  %4936 = vmatprep.subr.mxu0 0.0
  %4937 = vmatpush1.msra.mxu0 %v755
  %4938 = vmatprep.subr.mxu0 0.0
  %4939 = vmatpush1.msra.mxu0 %v756
  %4940 = vmatprep.subr.mxu0 0.0
  %4941 = vmatpush1.msra.mxu0 %v757
  %4942 = vmatprep.subr.mxu0 0.0
  %4943 = vmatpush1.msra.mxu0 %v758
  %4944 = vmatprep.mubr.f32.mxu0 %v4845
  %4945 = vmatmul.mubr.f32.gmra.mrb[0].mxu0 %v4844
  %v4946 = vpop.f32.mrb[0].mxu0
  %v4947 = vadd.f32 0.0, %v4946
  %v4948 = vpop.f32.mrb[0].mxu0
  %4949 = vmatprep.mubr.f32.mxu0 %v4849
  %4950 = vmatmul.mubr.f32.gmra.mrb[0].mxu0 %v4848
  %v4951 = vpop.f32.mrb[0].mxu0
  %v4952 = vadd.f32 0.0, %v4951
  %v4953 = vpop.f32.mrb[0].mxu0
  %4954 = vmatprep.mubr.f32.mxu0 %v4853
  %4955 = vmatmul.mubr.f32.gmra.mrb[0].mxu0 %v4852
  %v4956 = vpop.f32.mrb[0].mxu0
  %v4957 = vadd.f32 0.0, %v4956
  %v4958 = vpop.f32.mrb[0].mxu0
  %4959 = vmatprep.mubr.f32.mxu0 %v4857
  %4960 = vmatmul.mubr.f32.gmra.mrb[0].mxu0 %v4856
  %v4961 = vpop.f32.mrb[0].mxu0
  %v4962 = vadd.f32 0.0, %v4961
  %v4963 = vpop.f32.mrb[0].mxu0
  %4964 = vmatprep.mubr.f32.mxu0 %v4861
  %4965 = vmatmul.mubr.f32.gmra.mrb[0].mxu0 %v4860
  %v4966 = vpop.f32.mrb[0].mxu0
  %v4967 = vadd.f32 0.0, %v4966
  %v4968 = vpop.f32.mrb[0].mxu0
  %4969 = vmatprep.mubr.f32.mxu0 %v4865
  %4970 = vmatmul.mubr.f32.gmra.mrb[0].mxu0 %v4864
  %v4971 = vpop.f32.mrb[0].mxu0
  %v4972 = vadd.f32 0.0, %v4971
  %v4973 = vpop.f32.mrb[0].mxu0
  %4974 = vmatprep.mubr.f32.mxu0 %v4869
  %4975 = vmatmul.mubr.f32.gmra.mrb[0].mxu0 %v4868
  %v4976 = vpop.f32.mrb[0].mxu0
  %v4977 = vadd.f32 0.0, %v4976
  %v4978 = vpop.f32.mrb[0].mxu0
  %4979 = vmatprep.mubr.f32.mxu0 %v4873
  %4980 = vmatmul.mubr.f32.gmra.mrb[0].mxu0 %v4872
  %v4981 = vpop.f32.mrb[0].mxu0
  %v4982 = vadd.f32 0.0, %v4981
  %v4983 = vpop.f32.mrb[0].mxu0
  %4984 = vmatprep.mubr.f32.mxu0 %v4877
  %4985 = vmatmul.mubr.f32.gmra.mrb[0].mxu0 %v4876
  %v4986 = vpop.f32.mrb[0].mxu0
  %v4987 = vadd.f32 0.0, %v4986
  %v4988 = vpop.f32.mrb[0].mxu0
  %4989 = vdwg.mxu0
  %4990 = vmatprep.subr.mxu0 0.0
  %4991 = vmatpush1.msra.mxu0 %v759
  %4992 = vmatprep.subr.mxu0 0.0
  %4993 = vmatpush1.msra.mxu0 %v760
  %4994 = vmatprep.subr.mxu0 0.0
  %4995 = vmatpush1.msra.mxu0 %v761
  %4996 = vmatprep.subr.mxu0 0.0
  %4997 = vmatpush1.msra.mxu0 %v762
  %4998 = vmatprep.subr.mxu0 0.0
  %4999 = vmatpush1.msra.mxu0 %v763
  %5000 = vmatprep.subr.mxu0 0.0
  %5001 = vmatpush1.msra.mxu0 %v764
  %5002 = vmatprep.subr.mxu0 0.0
  %5003 = vmatpush1.msra.mxu0 %v765
  %5004 = vmatprep.subr.mxu0 0.0
  %5005 = vmatpush1.msra.mxu0 %v766
  %5006 = vmatprep.subr.mxu0 0.0
  %5007 = vmatpush1.msra.mxu0 %v767
  %5008 = vmatprep.subr.mxu0 0.0
  %5009 = vmatpush1.msra.mxu0 %v768
  %5010 = vmatprep.subr.mxu0 0.0
  %5011 = vmatpush1.msra.mxu0 %v769
  %5012 = vmatprep.subr.mxu0 0.0
  %5013 = vmatpush1.msra.mxu0 %v770
  %5014 = vmatprep.subr.mxu0 0.0
  %5015 = vmatpush1.msra.mxu0 %v771
  %5016 = vmatprep.subr.mxu0 0.0
  %5017 = vmatpush1.msra.mxu0 %v772
  %5018 = vmatprep.subr.mxu0 0.0
  %5019 = vmatpush1.msra.mxu0 %v773
  %5020 = vmatprep.subr.mxu0 0.0
  %5021 = vmatpush1.msra.mxu0 %v774
  %5022 = vmatprep.subr.mxu0 0.0
  %5023 = vmatpush1.msra.mxu0 %v775
  %5024 = vmatprep.subr.mxu0 0.0
  %5025 = vmatpush1.msra.mxu0 %v776
  %5026 = vmatprep.subr.mxu0 0.0
  %5027 = vmatpush1.msra.mxu0 %v777
  %5028 = vmatprep.subr.mxu0 0.0
  %5029 = vmatpush1.msra.mxu0 %v778
  %5030 = vmatprep.subr.mxu0 0.0
  %5031 = vmatpush1.msra.mxu0 %v779
  %5032 = vmatprep.subr.mxu0 0.0
  %5033 = vmatpush1.msra.mxu0 %v780
  %5034 = vmatprep.subr.mxu0 0.0
  %5035 = vmatpush1.msra.mxu0 %v781
  %5036 = vmatprep.subr.mxu0 0.0
  %5037 = vmatpush1.msra.mxu0 %v782
  %5038 = vmatprep.subr.mxu0 0.0
  %5039 = vmatpush1.msra.mxu0 %v783
  %5040 = vmatprep.subr.mxu0 0.0
  %5041 = vmatpush1.msra.mxu0 %v784
  %5042 = vmatprep.subr.mxu0 0.0
  %5043 = vmatpush1.msra.mxu0 %v785
  %5044 = vmatprep.subr.mxu0 0.0
  %5045 = vmatpush1.msra.mxu0 %v786
  %5046 = vmatprep.subr.mxu0 0.0
  %5047 = vmatpush1.msra.mxu0 %v787
  %5048 = vmatprep.subr.mxu0 0.0
  %5049 = vmatpush1.msra.mxu0 %v788
  %5050 = vmatprep.subr.mxu0 0.0
  %5051 = vmatpush1.msra.mxu0 %v789
  %5052 = vmatprep.subr.mxu0 0.0
  %5053 = vmatpush1.msra.mxu0 %v790
  %5054 = vmatprep.mubr.f32.mxu0 %v4847
  %5055 = vmatmul.mubr.f32.gmra.mrb[0].mxu0 %v4846
  %v5056 = vpop.f32.mrb[0].mxu0
  %v5057 = vadd.f32 %v4947, %v5056
  %v5058 = vpop.f32.mrb[0].mxu0
  %5059 = vmatprep.mubr.f32.mxu0 %v4851
  %5060 = vmatmul.mubr.f32.gmra.mrb[0].mxu0 %v4850
  %v5061 = vpop.f32.mrb[0].mxu0
  %v5062 = vadd.f32 %v4952, %v5061
  %v5063 = vpop.f32.mrb[0].mxu0
  %5064 = vmatprep.mubr.f32.mxu0 %v4855
  %5065 = vmatmul.mubr.f32.gmra.mrb[0].mxu0 %v4854
  %v5066 = vpop.f32.mrb[0].mxu0
  %v5067 = vadd.f32 %v4957, %v5066
  %v5068 = vpop.f32.mrb[0].mxu0
  %5069 = vmatprep.mubr.f32.mxu0 %v4859
  %5070 = vmatmul.mubr.f32.gmra.mrb[0].mxu0 %v4858
  %v5071 = vpop.f32.mrb[0].mxu0
  %v5072 = vadd.f32 %v4962, %v5071
  %v5073 = vpop.f32.mrb[0].mxu0
  %5074 = vmatprep.mubr.f32.mxu0 %v4863
  %5075 = vmatmul.mubr.f32.gmra.mrb[0].mxu0 %v4862
  %v5076 = vpop.f32.mrb[0].mxu0
  %v5077 = vadd.f32 %v4967, %v5076
  %v5078 = vpop.f32.mrb[0].mxu0
  %5079 = vmatprep.mubr.f32.mxu0 %v4867
  %5080 = vmatmul.mubr.f32.gmra.mrb[0].mxu0 %v4866
  %v5081 = vpop.f32.mrb[0].mxu0
  %v5082 = vadd.f32 %v4972, %v5081
  %v5083 = vpop.f32.mrb[0].mxu0
  %5084 = vmatprep.mubr.f32.mxu0 %v4871
  %5085 = vmatmul.mubr.f32.gmra.mrb[0].mxu0 %v4870
  %v5086 = vpop.f32.mrb[0].mxu0
  %v5087 = vadd.f32 %v4977, %v5086
  %v5088 = vpop.f32.mrb[0].mxu0
  %5089 = vmatprep.mubr.f32.mxu0 %v4875
  %5090 = vmatmul.mubr.f32.gmra.mrb[0].mxu0 %v4874
  %v5091 = vpop.f32.mrb[0].mxu0
  %v5092 = vadd.f32 %v4982, %v5091
  %v5093 = vpop.f32.mrb[0].mxu0
  %5094 = vmatprep.mubr.f32.mxu0 %v4879
  %5095 = vmatmul.mubr.f32.gmra.mrb[0].mxu0 %v4878
  %v5096 = vpop.f32.mrb[0].mxu0
  %v5097 = vadd.f32 %v4987, %v5096
  %v5098 = vpop.f32.mrb[0].mxu0
  %5099 = vdwg.mxu0
  %v5100 = vld [vmem:[%s4 + $0x140] sm:$0xff]
  %v5101 = vld [vmem:[%s4 + $0x148] sm:$0xff]
  %v5102 = vld [vmem:[%s4 + $0x150] sm:$0xff]
  %v5103 = vld [vmem:[%s4 + $0x158] sm:$0xff]
  %v5105 = vsel %vm1312, %v5057, 0
  %v5108 = vsel %vm1312, %v5062, 0
  %v5111 = vsel %vm1312, %v5067, 0
  %v5114 = vsel %vm1312, %v5072, 0
  %v5117 = vsel %vm1312, %v5077, 0
  %v5120 = vsel %vm1312, %v5082, 0
  %v5123 = vsel %vm1312, %v5087, 0
  %v5126 = vsel %vm1312, %v5092, 0
  %v5129 = vsel %vm1312, %v5097, 0
  %5131 = vmatprep.subr.mxu0 0.0
  %5132 = vmatpush1.msra.mxu0 %v5100
  %5133 = vmatprep.subr.mxu0 0.0
  %5134 = vmatpush1.msra.mxu0 %v5101
  %5135 = vmatprep.subr.mxu0 0.0
  %5136 = vmatpush1.msra.mxu0 %v5102
  %5137 = vmatprep.subr.mxu0 0.0
  %5138 = vmatpush1.msra.mxu0 %v5103
  %5139 = vmatprep.subr.mxu0 0.0
  %5140 = vmatpush1.msra.mxu0 0.0
  %5141 = vmatprep.subr.mxu0 0.0
  %5142 = vmatpush1.msra.mxu0 0.0
  %5143 = vmatprep.subr.mxu0 0.0
  %5144 = vmatpush1.msra.mxu0 0.0
  %5145 = vmatprep.subr.mxu0 0.0
  %5146 = vmatpush1.msra.mxu0 0.0
  %5147 = vmatprep.subr.mxu0 0.0
  %5148 = vmatpush1.msra.mxu0 0.0
  %5149 = vmatprep.subr.mxu0 0.0
  %5150 = vmatpush1.msra.mxu0 0.0
  %5151 = vmatprep.subr.mxu0 0.0
  %5152 = vmatpush1.msra.mxu0 0.0
  %5153 = vmatprep.subr.mxu0 0.0
  %5154 = vmatpush1.msra.mxu0 0.0
  %5155 = vmatprep.subr.mxu0 0.0
  %5156 = vmatpush1.msra.mxu0 0.0
  %5157 = vmatprep.subr.mxu0 0.0
  %5158 = vmatpush1.msra.mxu0 0.0
  %5159 = vmatprep.subr.mxu0 0.0
  %5160 = vmatpush1.msra.mxu0 0.0
  %5161 = vmatprep.subr.mxu0 0.0
  %5162 = vmatpush1.msra.mxu0 0.0
  %5163 = vmatprep.subr.mxu0 0.0
  %5164 = vmatpush1.msra.mxu0 0.0
  %5165 = vmatprep.subr.mxu0 0.0
  %5166 = vmatpush1.msra.mxu0 0.0
  %5167 = vmatprep.subr.mxu0 0.0
  %5168 = vmatpush1.msra.mxu0 0.0
  %5169 = vmatprep.subr.mxu0 0.0
  %5170 = vmatpush1.msra.mxu0 0.0
  %5171 = vmatprep.subr.mxu0 0.0
  %5172 = vmatpush1.msra.mxu0 0.0
  %5173 = vmatprep.subr.mxu0 0.0
  %5174 = vmatpush1.msra.mxu0 0.0
  %5175 = vmatprep.subr.mxu0 0.0
  %5176 = vmatpush1.msra.mxu0 0.0
  %5177 = vmatprep.subr.mxu0 0.0
  %5178 = vmatpush1.msra.mxu0 0.0
  %5179 = vmatprep.subr.mxu0 0.0
  %5180 = vmatpush1.msra.mxu0 0.0
  %5181 = vmatprep.subr.mxu0 0.0
  %5182 = vmatpush1.msra.mxu0 0.0
  %5183 = vmatprep.subr.mxu0 0.0
  %5184 = vmatpush1.msra.mxu0 0.0
  %5185 = vmatprep.subr.mxu0 0.0
  %5186 = vmatpush1.msra.mxu0 0.0
  %5187 = vmatprep.subr.mxu0 0.0
  %5188 = vmatpush1.msra.mxu0 0.0
  %5189 = vmatprep.subr.mxu0 0.0
  %5190 = vmatpush1.msra.mxu0 0.0
  %5191 = vmatprep.subr.mxu0 0.0
  %5192 = vmatpush1.msra.mxu0 0.0
  %5193 = vmatprep.subr.mxu0 0.0
  %5194 = vmatpush1.msra.mxu0 0.0
  %5195 = vmatprep.mubr.f32.mxu0 0.0
  %5196 = vmatmul.mubr.f32.gmra.mrb[0].mxu0 %v5105
  %v5197 = vpop.f32.mrb[0].mxu0
  %v5198 = vadd.f32 0.0, %v5197
  %v5199 = vpop.f32.mrb[0].mxu0
  %5200 = vmatprep.mubr.f32.mxu0 0.0
  %5201 = vmatmul.mubr.f32.gmra.mrb[0].mxu0 %v5108
  %v5202 = vpop.f32.mrb[0].mxu0
  %v5203 = vadd.f32 0.0, %v5202
  %v5204 = vpop.f32.mrb[0].mxu0
  %5205 = vmatprep.mubr.f32.mxu0 0.0
  %5206 = vmatmul.mubr.f32.gmra.mrb[0].mxu0 %v5111
  %v5207 = vpop.f32.mrb[0].mxu0
  %v5208 = vadd.f32 0.0, %v5207
  %v5209 = vpop.f32.mrb[0].mxu0
  %5210 = vmatprep.mubr.f32.mxu0 0.0
  %5211 = vmatmul.mubr.f32.gmra.mrb[0].mxu0 %v5114
  %v5212 = vpop.f32.mrb[0].mxu0
  %v5213 = vadd.f32 0.0, %v5212
  %v5214 = vpop.f32.mrb[0].mxu0
  %5215 = vmatprep.mubr.f32.mxu0 0.0
  %5216 = vmatmul.mubr.f32.gmra.mrb[0].mxu0 %v5117
  %v5217 = vpop.f32.mrb[0].mxu0
  %v5218 = vadd.f32 0.0, %v5217
  %v5219 = vpop.f32.mrb[0].mxu0
  %5220 = vmatprep.mubr.f32.mxu0 0.0
  %5221 = vmatmul.mubr.f32.gmra.mrb[0].mxu0 %v5120
  %v5222 = vpop.f32.mrb[0].mxu0
  %v5223 = vadd.f32 0.0, %v5222
  %v5224 = vpop.f32.mrb[0].mxu0
  %5225 = vmatprep.mubr.f32.mxu0 0.0
  %5226 = vmatmul.mubr.f32.gmra.mrb[0].mxu0 %v5123
  %v5227 = vpop.f32.mrb[0].mxu0
  %v5228 = vadd.f32 0.0, %v5227
  %v5229 = vpop.f32.mrb[0].mxu0
  %5230 = vmatprep.mubr.f32.mxu0 0.0
  %5231 = vmatmul.mubr.f32.gmra.mrb[0].mxu0 %v5126
  %v5232 = vpop.f32.mrb[0].mxu0
  %v5233 = vadd.f32 0.0, %v5232
  %v5234 = vpop.f32.mrb[0].mxu0
  %5235 = vmatprep.mubr.f32.mxu0 0.0
  %5236 = vmatmul.mubr.f32.gmra.mrb[0].mxu0 %v5129
  %v5237 = vpop.f32.mrb[0].mxu0
  %v5238 = vadd.f32 0.0, %v5237
  %v5239 = vpop.f32.mrb[0].mxu0
  %5240 = vdwg.mxu0
  %v5241 = vadd.f32 %v4834, %v5198
  %v5242 = vadd.f32 %v4835, %v5203
  %v5243 = vadd.f32 %v4836, %v5208
  %v5244 = vadd.f32 %v4837, %v5213
  %v5245 = vadd.f32 %v4838, %v5218
  %v5246 = vadd.f32 %v4839, %v5223
  %v5247 = vadd.f32 %v4840, %v5228
  %v5248 = vadd.f32 %v4841, %v5233
  %v5249 = vadd.f32 %v4842, %v5238
  %s5250 = scalar_lea.vmem %s3, 3168
  %v5251 = vld [vmem:[%s5250] sm:$0xff]
  %v5252 = vld [vmem:[%s5250 + $0x8] sm:$0xff]
  %v5253 = vld [vmem:[%s5250 + $0x10] sm:$0xff]
  %v5254 = vld [vmem:[%s5250 + $0x18] sm:$0xff]
  %v5255 = vld [vmem:[%s5250 + $0x20] sm:$0xff]
  %v5256 = vld [vmem:[%s5250 + $0x28] sm:$0xff]
  %v5257 = vld [vmem:[%s5250 + $0x30] sm:$0xff]
  %v5258 = vld [vmem:[%s5250 + $0x38] sm:$0xff]
  %v5259 = vld [vmem:[%s5250 + $0x40] sm:$0xff]
  %v5260 = vld [vmem:[%s5250 + $0x48] sm:$0xff]
  %v5261 = vld [vmem:[%s5250 + $0x50] sm:$0xff]
  %v5262 = vld [vmem:[%s5250 + $0x58] sm:$0xff]
  %v5263 = vld [vmem:[%s5250 + $0x60] sm:$0xff]
  %v5264 = vld [vmem:[%s5250 + $0x68] sm:$0xff]
  %v5265 = vld [vmem:[%s5250 + $0x70] sm:$0xff]
  %v5266 = vld [vmem:[%s5250 + $0x78] sm:$0xff]
  %v5267 = vld [vmem:[%s5250 + $0x80] sm:$0xff]
  %v5268 = vld [vmem:[%s5250 + $0x88] sm:$0xff]
  %v5269 = vld [vmem:[%s5250 + $0x90] sm:$0xff]
  %v5270 = vld [vmem:[%s5250 + $0x98] sm:$0xff]
  %v5271 = vld [vmem:[%s5250 + $0xa0] sm:$0xff]
  %v5272 = vld [vmem:[%s5250 + $0xa8] sm:$0xff]
  %v5273 = vld [vmem:[%s5250 + $0xb0] sm:$0xff]
  %v5274 = vld [vmem:[%s5250 + $0xb8] sm:$0xff]
  %v5275 = vld [vmem:[%s5250 + $0xc0] sm:$0xff]
  %v5276 = vld [vmem:[%s5250 + $0xc8] sm:$0xff]
  %v5277 = vld [vmem:[%s5250 + $0xd0] sm:$0xff]
  %v5278 = vld [vmem:[%s5250 + $0xd8] sm:$0xff]
  %v5279 = vld [vmem:[%s5250 + $0xe0] sm:$0xff]
  %v5280 = vld [vmem:[%s5250 + $0xe8] sm:$0xff]
  %v5281 = vld [vmem:[%s5250 + $0xf0] sm:$0xff]
  %v5282 = vld [vmem:[%s5250 + $0xf8] sm:$0xff]
  %v5283 = vld [vmem:[%s5250 + $0x100] sm:$0xff]
  %v5284 = vld [vmem:[%s5250 + $0x108] sm:$0xff]
  %v5285 = vld [vmem:[%s5250 + $0x110] sm:$0xff]
  %v5286 = vld [vmem:[%s5250 + $0x118] sm:$0xff]
  %5287 = vmatprep.subr.mxu0 0.0
  %5288 = vmatpush1.msra.mxu0 %v727
  %5289 = vmatprep.subr.mxu0 0.0
  %5290 = vmatpush1.msra.mxu0 %v728
  %5291 = vmatprep.subr.mxu0 0.0
  %5292 = vmatpush1.msra.mxu0 %v729
  %5293 = vmatprep.subr.mxu0 0.0
  %5294 = vmatpush1.msra.mxu0 %v730
  %5295 = vmatprep.subr.mxu0 0.0
  %5296 = vmatpush1.msra.mxu0 %v731
  %5297 = vmatprep.subr.mxu0 0.0
  %5298 = vmatpush1.msra.mxu0 %v732
  %5299 = vmatprep.subr.mxu0 0.0
  %5300 = vmatpush1.msra.mxu0 %v733
  %5301 = vmatprep.subr.mxu0 0.0
  %5302 = vmatpush1.msra.mxu0 %v734
  %5303 = vmatprep.subr.mxu0 0.0
  %5304 = vmatpush1.msra.mxu0 %v735
  %5305 = vmatprep.subr.mxu0 0.0
  %5306 = vmatpush1.msra.mxu0 %v736
  %5307 = vmatprep.subr.mxu0 0.0
  %5308 = vmatpush1.msra.mxu0 %v737
  %5309 = vmatprep.subr.mxu0 0.0
  %5310 = vmatpush1.msra.mxu0 %v738
  %5311 = vmatprep.subr.mxu0 0.0
  %5312 = vmatpush1.msra.mxu0 %v739
  %5313 = vmatprep.subr.mxu0 0.0
  %5314 = vmatpush1.msra.mxu0 %v740
  %5315 = vmatprep.subr.mxu0 0.0
  %5316 = vmatpush1.msra.mxu0 %v741
  %5317 = vmatprep.subr.mxu0 0.0
  %5318 = vmatpush1.msra.mxu0 %v742
  %5319 = vmatprep.subr.mxu0 0.0
  %5320 = vmatpush1.msra.mxu0 %v743
  %5321 = vmatprep.subr.mxu0 0.0
  %5322 = vmatpush1.msra.mxu0 %v744
  %5323 = vmatprep.subr.mxu0 0.0
  %5324 = vmatpush1.msra.mxu0 %v745
  %5325 = vmatprep.subr.mxu0 0.0
  %5326 = vmatpush1.msra.mxu0 %v746
  %5327 = vmatprep.subr.mxu0 0.0
  %5328 = vmatpush1.msra.mxu0 %v747
  %5329 = vmatprep.subr.mxu0 0.0
  %5330 = vmatpush1.msra.mxu0 %v748
  %5331 = vmatprep.subr.mxu0 0.0
  %5332 = vmatpush1.msra.mxu0 %v749
  %5333 = vmatprep.subr.mxu0 0.0
  %5334 = vmatpush1.msra.mxu0 %v750
  %5335 = vmatprep.subr.mxu0 0.0
  %5336 = vmatpush1.msra.mxu0 %v751
  %5337 = vmatprep.subr.mxu0 0.0
  %5338 = vmatpush1.msra.mxu0 %v752
  %5339 = vmatprep.subr.mxu0 0.0
  %5340 = vmatpush1.msra.mxu0 %v753
  %5341 = vmatprep.subr.mxu0 0.0
  %5342 = vmatpush1.msra.mxu0 %v754
  %5343 = vmatprep.subr.mxu0 0.0
  %5344 = vmatpush1.msra.mxu0 %v755
  %5345 = vmatprep.subr.mxu0 0.0
  %5346 = vmatpush1.msra.mxu0 %v756
  %5347 = vmatprep.subr.mxu0 0.0
  %5348 = vmatpush1.msra.mxu0 %v757
  %5349 = vmatprep.subr.mxu0 0.0
  %5350 = vmatpush1.msra.mxu0 %v758
  %5351 = vmatprep.mubr.f32.mxu0 %v5252
  %5352 = vmatmul.mubr.f32.gmra.mrb[0].mxu0 %v5251
  %v5353 = vpop.f32.mrb[0].mxu0
  %v5354 = vadd.f32 0.0, %v5353
  %v5355 = vpop.f32.mrb[0].mxu0
  %5356 = vmatprep.mubr.f32.mxu0 %v5256
  %5357 = vmatmul.mubr.f32.gmra.mrb[0].mxu0 %v5255
  %v5358 = vpop.f32.mrb[0].mxu0
  %v5359 = vadd.f32 0.0, %v5358
  %v5360 = vpop.f32.mrb[0].mxu0
  %5361 = vmatprep.mubr.f32.mxu0 %v5260
  %5362 = vmatmul.mubr.f32.gmra.mrb[0].mxu0 %v5259
  %v5363 = vpop.f32.mrb[0].mxu0
  %v5364 = vadd.f32 0.0, %v5363
  %v5365 = vpop.f32.mrb[0].mxu0
  %5366 = vmatprep.mubr.f32.mxu0 %v5264
  %5367 = vmatmul.mubr.f32.gmra.mrb[0].mxu0 %v5263
  %v5368 = vpop.f32.mrb[0].mxu0
  %v5369 = vadd.f32 0.0, %v5368
  %v5370 = vpop.f32.mrb[0].mxu0
  %5371 = vmatprep.mubr.f32.mxu0 %v5268
  %5372 = vmatmul.mubr.f32.gmra.mrb[0].mxu0 %v5267
  %v5373 = vpop.f32.mrb[0].mxu0
  %v5374 = vadd.f32 0.0, %v5373
  %v5375 = vpop.f32.mrb[0].mxu0
  %5376 = vmatprep.mubr.f32.mxu0 %v5272
  %5377 = vmatmul.mubr.f32.gmra.mrb[0].mxu0 %v5271
  %v5378 = vpop.f32.mrb[0].mxu0
  %v5379 = vadd.f32 0.0, %v5378
  %v5380 = vpop.f32.mrb[0].mxu0
  %5381 = vmatprep.mubr.f32.mxu0 %v5276
  %5382 = vmatmul.mubr.f32.gmra.mrb[0].mxu0 %v5275
  %v5383 = vpop.f32.mrb[0].mxu0
  %v5384 = vadd.f32 0.0, %v5383
  %v5385 = vpop.f32.mrb[0].mxu0
  %5386 = vmatprep.mubr.f32.mxu0 %v5280
  %5387 = vmatmul.mubr.f32.gmra.mrb[0].mxu0 %v5279
  %v5388 = vpop.f32.mrb[0].mxu0
  %v5389 = vadd.f32 0.0, %v5388
  %v5390 = vpop.f32.mrb[0].mxu0
  %5391 = vmatprep.mubr.f32.mxu0 %v5284
  %5392 = vmatmul.mubr.f32.gmra.mrb[0].mxu0 %v5283
  %v5393 = vpop.f32.mrb[0].mxu0
  %v5394 = vadd.f32 0.0, %v5393
  %v5395 = vpop.f32.mrb[0].mxu0
  %5396 = vdwg.mxu0
  %5397 = vmatprep.subr.mxu0 0.0
  %5398 = vmatpush1.msra.mxu0 %v759
  %5399 = vmatprep.subr.mxu0 0.0
  %5400 = vmatpush1.msra.mxu0 %v760
  %5401 = vmatprep.subr.mxu0 0.0
  %5402 = vmatpush1.msra.mxu0 %v761
  %5403 = vmatprep.subr.mxu0 0.0
  %5404 = vmatpush1.msra.mxu0 %v762
  %5405 = vmatprep.subr.mxu0 0.0
  %5406 = vmatpush1.msra.mxu0 %v763
  %5407 = vmatprep.subr.mxu0 0.0
  %5408 = vmatpush1.msra.mxu0 %v764
  %5409 = vmatprep.subr.mxu0 0.0
  %5410 = vmatpush1.msra.mxu0 %v765
  %5411 = vmatprep.subr.mxu0 0.0
  %5412 = vmatpush1.msra.mxu0 %v766
  %5413 = vmatprep.subr.mxu0 0.0
  %5414 = vmatpush1.msra.mxu0 %v767
  %5415 = vmatprep.subr.mxu0 0.0
  %5416 = vmatpush1.msra.mxu0 %v768
  %5417 = vmatprep.subr.mxu0 0.0
  %5418 = vmatpush1.msra.mxu0 %v769
  %5419 = vmatprep.subr.mxu0 0.0
  %5420 = vmatpush1.msra.mxu0 %v770
  %5421 = vmatprep.subr.mxu0 0.0
  %5422 = vmatpush1.msra.mxu0 %v771
  %5423 = vmatprep.subr.mxu0 0.0
  %5424 = vmatpush1.msra.mxu0 %v772
  %5425 = vmatprep.subr.mxu0 0.0
  %5426 = vmatpush1.msra.mxu0 %v773
  %5427 = vmatprep.subr.mxu0 0.0
  %5428 = vmatpush1.msra.mxu0 %v774
  %5429 = vmatprep.subr.mxu0 0.0
  %5430 = vmatpush1.msra.mxu0 %v775
  %5431 = vmatprep.subr.mxu0 0.0
  %5432 = vmatpush1.msra.mxu0 %v776
  %5433 = vmatprep.subr.mxu0 0.0
  %5434 = vmatpush1.msra.mxu0 %v777
  %5435 = vmatprep.subr.mxu0 0.0
  %5436 = vmatpush1.msra.mxu0 %v778
  %5437 = vmatprep.subr.mxu0 0.0
  %5438 = vmatpush1.msra.mxu0 %v779
  %5439 = vmatprep.subr.mxu0 0.0
  %5440 = vmatpush1.msra.mxu0 %v780
  %5441 = vmatprep.subr.mxu0 0.0
  %5442 = vmatpush1.msra.mxu0 %v781
  %5443 = vmatprep.subr.mxu0 0.0
  %5444 = vmatpush1.msra.mxu0 %v782
  %5445 = vmatprep.subr.mxu0 0.0
  %5446 = vmatpush1.msra.mxu0 %v783
  %5447 = vmatprep.subr.mxu0 0.0
  %5448 = vmatpush1.msra.mxu0 %v784
  %5449 = vmatprep.subr.mxu0 0.0
  %5450 = vmatpush1.msra.mxu0 %v785
  %5451 = vmatprep.subr.mxu0 0.0
  %5452 = vmatpush1.msra.mxu0 %v786
  %5453 = vmatprep.subr.mxu0 0.0
  %5454 = vmatpush1.msra.mxu0 %v787
  %5455 = vmatprep.subr.mxu0 0.0
  %5456 = vmatpush1.msra.mxu0 %v788
  %5457 = vmatprep.subr.mxu0 0.0
  %5458 = vmatpush1.msra.mxu0 %v789
  %5459 = vmatprep.subr.mxu0 0.0
  %5460 = vmatpush1.msra.mxu0 %v790
  %5461 = vmatprep.mubr.f32.mxu0 %v5254
  %5462 = vmatmul.mubr.f32.gmra.mrb[0].mxu0 %v5253
  %v5463 = vpop.f32.mrb[0].mxu0
  %v5464 = vadd.f32 %v5354, %v5463
  %v5465 = vpop.f32.mrb[0].mxu0
  %5466 = vmatprep.mubr.f32.mxu0 %v5258
  %5467 = vmatmul.mubr.f32.gmra.mrb[0].mxu0 %v5257
  %v5468 = vpop.f32.mrb[0].mxu0
  %v5469 = vadd.f32 %v5359, %v5468
  %v5470 = vpop.f32.mrb[0].mxu0
  %5471 = vmatprep.mubr.f32.mxu0 %v5262
  %5472 = vmatmul.mubr.f32.gmra.mrb[0].mxu0 %v5261
  %v5473 = vpop.f32.mrb[0].mxu0
  %v5474 = vadd.f32 %v5364, %v5473
  %v5475 = vpop.f32.mrb[0].mxu0
  %5476 = vmatprep.mubr.f32.mxu0 %v5266
  %5477 = vmatmul.mubr.f32.gmra.mrb[0].mxu0 %v5265
  %v5478 = vpop.f32.mrb[0].mxu0
  %v5479 = vadd.f32 %v5369, %v5478
  %v5480 = vpop.f32.mrb[0].mxu0
  %5481 = vmatprep.mubr.f32.mxu0 %v5270
  %5482 = vmatmul.mubr.f32.gmra.mrb[0].mxu0 %v5269
  %v5483 = vpop.f32.mrb[0].mxu0
  %v5484 = vadd.f32 %v5374, %v5483
  %v5485 = vpop.f32.mrb[0].mxu0
  %5486 = vmatprep.mubr.f32.mxu0 %v5274
  %5487 = vmatmul.mubr.f32.gmra.mrb[0].mxu0 %v5273
  %v5488 = vpop.f32.mrb[0].mxu0
  %v5489 = vadd.f32 %v5379, %v5488
  %v5490 = vpop.f32.mrb[0].mxu0
  %5491 = vmatprep.mubr.f32.mxu0 %v5278
  %5492 = vmatmul.mubr.f32.gmra.mrb[0].mxu0 %v5277
  %v5493 = vpop.f32.mrb[0].mxu0
  %v5494 = vadd.f32 %v5384, %v5493
  %v5495 = vpop.f32.mrb[0].mxu0
  %5496 = vmatprep.mubr.f32.mxu0 %v5282
  %5497 = vmatmul.mubr.f32.gmra.mrb[0].mxu0 %v5281
  %v5498 = vpop.f32.mrb[0].mxu0
  %v5499 = vadd.f32 %v5389, %v5498
  %v5500 = vpop.f32.mrb[0].mxu0
  %5501 = vmatprep.mubr.f32.mxu0 %v5286
  %5502 = vmatmul.mubr.f32.gmra.mrb[0].mxu0 %v5285
  %v5503 = vpop.f32.mrb[0].mxu0
  %v5504 = vadd.f32 %v5394, %v5503
  %v5505 = vpop.f32.mrb[0].mxu0
  %5506 = vdwg.mxu0
  %v5507 = vld [vmem:[%s4 + $0x160] sm:$0xff]
  %v5508 = vld [vmem:[%s4 + $0x168] sm:$0xff]
  %v5509 = vld [vmem:[%s4 + $0x170] sm:$0xff]
  %v5510 = vld [vmem:[%s4 + $0x178] sm:$0xff]
  %v5512 = vsel %vm1312, %v5464, 0
  %v5515 = vsel %vm1312, %v5469, 0
  %v5518 = vsel %vm1312, %v5474, 0
  %v5521 = vsel %vm1312, %v5479, 0
  %v5524 = vsel %vm1312, %v5484, 0
  %v5527 = vsel %vm1312, %v5489, 0
  %v5530 = vsel %vm1312, %v5494, 0
  %v5533 = vsel %vm1312, %v5499, 0
  %v5536 = vsel %vm1312, %v5504, 0
  %5538 = vmatprep.subr.mxu0 0.0
  %5539 = vmatpush1.msra.mxu0 %v5507
  %5540 = vmatprep.subr.mxu0 0.0
  %5541 = vmatpush1.msra.mxu0 %v5508
  %5542 = vmatprep.subr.mxu0 0.0
  %5543 = vmatpush1.msra.mxu0 %v5509
  %5544 = vmatprep.subr.mxu0 0.0
  %5545 = vmatpush1.msra.mxu0 %v5510
  %5546 = vmatprep.subr.mxu0 0.0
  %5547 = vmatpush1.msra.mxu0 0.0
  %5548 = vmatprep.subr.mxu0 0.0
  %5549 = vmatpush1.msra.mxu0 0.0
  %5550 = vmatprep.subr.mxu0 0.0
  %5551 = vmatpush1.msra.mxu0 0.0
  %5552 = vmatprep.subr.mxu0 0.0
  %5553 = vmatpush1.msra.mxu0 0.0
  %5554 = vmatprep.subr.mxu0 0.0
  %5555 = vmatpush1.msra.mxu0 0.0
  %5556 = vmatprep.subr.mxu0 0.0
  %5557 = vmatpush1.msra.mxu0 0.0
  %5558 = vmatprep.subr.mxu0 0.0
  %5559 = vmatpush1.msra.mxu0 0.0
  %5560 = vmatprep.subr.mxu0 0.0
  %5561 = vmatpush1.msra.mxu0 0.0
  %5562 = vmatprep.subr.mxu0 0.0
  %5563 = vmatpush1.msra.mxu0 0.0
  %5564 = vmatprep.subr.mxu0 0.0
  %5565 = vmatpush1.msra.mxu0 0.0
  %5566 = vmatprep.subr.mxu0 0.0
  %5567 = vmatpush1.msra.mxu0 0.0
  %5568 = vmatprep.subr.mxu0 0.0
  %5569 = vmatpush1.msra.mxu0 0.0
  %5570 = vmatprep.subr.mxu0 0.0
  %5571 = vmatpush1.msra.mxu0 0.0
  %5572 = vmatprep.subr.mxu0 0.0
  %5573 = vmatpush1.msra.mxu0 0.0
  %5574 = vmatprep.subr.mxu0 0.0
  %5575 = vmatpush1.msra.mxu0 0.0
  %5576 = vmatprep.subr.mxu0 0.0
  %5577 = vmatpush1.msra.mxu0 0.0
  %5578 = vmatprep.subr.mxu0 0.0
  %5579 = vmatpush1.msra.mxu0 0.0
  %5580 = vmatprep.subr.mxu0 0.0
  %5581 = vmatpush1.msra.mxu0 0.0
  %5582 = vmatprep.subr.mxu0 0.0
  %5583 = vmatpush1.msra.mxu0 0.0
  %5584 = vmatprep.subr.mxu0 0.0
  %5585 = vmatpush1.msra.mxu0 0.0
  %5586 = vmatprep.subr.mxu0 0.0
  %5587 = vmatpush1.msra.mxu0 0.0
  %5588 = vmatprep.subr.mxu0 0.0
  %5589 = vmatpush1.msra.mxu0 0.0
  %5590 = vmatprep.subr.mxu0 0.0
  %5591 = vmatpush1.msra.mxu0 0.0
  %5592 = vmatprep.subr.mxu0 0.0
  %5593 = vmatpush1.msra.mxu0 0.0
  %5594 = vmatprep.subr.mxu0 0.0
  %5595 = vmatpush1.msra.mxu0 0.0
  %5596 = vmatprep.subr.mxu0 0.0
  %5597 = vmatpush1.msra.mxu0 0.0
  %5598 = vmatprep.subr.mxu0 0.0
  %5599 = vmatpush1.msra.mxu0 0.0
  %5600 = vmatprep.subr.mxu0 0.0
  %5601 = vmatpush1.msra.mxu0 0.0
  %5602 = vmatprep.mubr.f32.mxu0 0.0
  %5603 = vmatmul.mubr.f32.gmra.mrb[0].mxu0 %v5512
  %v5604 = vpop.f32.mrb[0].mxu0
  %v5605 = vadd.f32 0.0, %v5604
  %v5606 = vpop.f32.mrb[0].mxu0
  %5607 = vmatprep.mubr.f32.mxu0 0.0
  %5608 = vmatmul.mubr.f32.gmra.mrb[0].mxu0 %v5515
  %v5609 = vpop.f32.mrb[0].mxu0
  %v5610 = vadd.f32 0.0, %v5609
  %v5611 = vpop.f32.mrb[0].mxu0
  %5612 = vmatprep.mubr.f32.mxu0 0.0
  %5613 = vmatmul.mubr.f32.gmra.mrb[0].mxu0 %v5518
  %v5614 = vpop.f32.mrb[0].mxu0
  %v5615 = vadd.f32 0.0, %v5614
  %v5616 = vpop.f32.mrb[0].mxu0
  %5617 = vmatprep.mubr.f32.mxu0 0.0
  %5618 = vmatmul.mubr.f32.gmra.mrb[0].mxu0 %v5521
  %v5619 = vpop.f32.mrb[0].mxu0
  %v5620 = vadd.f32 0.0, %v5619
  %v5621 = vpop.f32.mrb[0].mxu0
  %5622 = vmatprep.mubr.f32.mxu0 0.0
  %5623 = vmatmul.mubr.f32.gmra.mrb[0].mxu0 %v5524
  %v5624 = vpop.f32.mrb[0].mxu0
  %v5625 = vadd.f32 0.0, %v5624
  %v5626 = vpop.f32.mrb[0].mxu0
  %5627 = vmatprep.mubr.f32.mxu0 0.0
  %5628 = vmatmul.mubr.f32.gmra.mrb[0].mxu0 %v5527
  %v5629 = vpop.f32.mrb[0].mxu0
  %v5630 = vadd.f32 0.0, %v5629
  %v5631 = vpop.f32.mrb[0].mxu0
  %5632 = vmatprep.mubr.f32.mxu0 0.0
  %5633 = vmatmul.mubr.f32.gmra.mrb[0].mxu0 %v5530
  %v5634 = vpop.f32.mrb[0].mxu0
  %v5635 = vadd.f32 0.0, %v5634
  %v5636 = vpop.f32.mrb[0].mxu0
  %5637 = vmatprep.mubr.f32.mxu0 0.0
  %5638 = vmatmul.mubr.f32.gmra.mrb[0].mxu0 %v5533
  %v5639 = vpop.f32.mrb[0].mxu0
  %v5640 = vadd.f32 0.0, %v5639
  %v5641 = vpop.f32.mrb[0].mxu0
  %5642 = vmatprep.mubr.f32.mxu0 0.0
  %5643 = vmatmul.mubr.f32.gmra.mrb[0].mxu0 %v5536
  %v5644 = vpop.f32.mrb[0].mxu0
  %v5645 = vadd.f32 0.0, %v5644
  %v5646 = vpop.f32.mrb[0].mxu0
  %5647 = vdwg.mxu0
  %v5648 = vadd.f32 %v5241, %v5605
  %v5649 = vadd.f32 %v5242, %v5610
  %v5650 = vadd.f32 %v5243, %v5615
  %v5651 = vadd.f32 %v5244, %v5620
  %v5652 = vadd.f32 %v5245, %v5625
  %v5653 = vadd.f32 %v5246, %v5630
  %v5654 = vadd.f32 %v5247, %v5635
  %v5655 = vadd.f32 %v5248, %v5640
  %v5656 = vadd.f32 %v5249, %v5645
  %s5657 = scalar_lea.vmem %s3, 3456
  %v5658 = vld [vmem:[%s5657] sm:$0xff]
  %v5659 = vld [vmem:[%s5657 + $0x8] sm:$0xff]
  %v5660 = vld [vmem:[%s5657 + $0x10] sm:$0xff]
  %v5661 = vld [vmem:[%s5657 + $0x18] sm:$0xff]
  %v5662 = vld [vmem:[%s5657 + $0x20] sm:$0xff]
  %v5663 = vld [vmem:[%s5657 + $0x28] sm:$0xff]
  %v5664 = vld [vmem:[%s5657 + $0x30] sm:$0xff]
  %v5665 = vld [vmem:[%s5657 + $0x38] sm:$0xff]
  %v5666 = vld [vmem:[%s5657 + $0x40] sm:$0xff]
  %v5667 = vld [vmem:[%s5657 + $0x48] sm:$0xff]
  %v5668 = vld [vmem:[%s5657 + $0x50] sm:$0xff]
  %v5669 = vld [vmem:[%s5657 + $0x58] sm:$0xff]
  %v5670 = vld [vmem:[%s5657 + $0x60] sm:$0xff]
  %v5671 = vld [vmem:[%s5657 + $0x68] sm:$0xff]
  %v5672 = vld [vmem:[%s5657 + $0x70] sm:$0xff]
  %v5673 = vld [vmem:[%s5657 + $0x78] sm:$0xff]
  %v5674 = vld [vmem:[%s5657 + $0x80] sm:$0xff]
  %v5675 = vld [vmem:[%s5657 + $0x88] sm:$0xff]
  %v5676 = vld [vmem:[%s5657 + $0x90] sm:$0xff]
  %v5677 = vld [vmem:[%s5657 + $0x98] sm:$0xff]
  %v5678 = vld [vmem:[%s5657 + $0xa0] sm:$0xff]
  %v5679 = vld [vmem:[%s5657 + $0xa8] sm:$0xff]
  %v5680 = vld [vmem:[%s5657 + $0xb0] sm:$0xff]
  %v5681 = vld [vmem:[%s5657 + $0xb8] sm:$0xff]
  %v5682 = vld [vmem:[%s5657 + $0xc0] sm:$0xff]
  %v5683 = vld [vmem:[%s5657 + $0xc8] sm:$0xff]
  %v5684 = vld [vmem:[%s5657 + $0xd0] sm:$0xff]
  %v5685 = vld [vmem:[%s5657 + $0xd8] sm:$0xff]
  %v5686 = vld [vmem:[%s5657 + $0xe0] sm:$0xff]
  %v5687 = vld [vmem:[%s5657 + $0xe8] sm:$0xff]
  %v5688 = vld [vmem:[%s5657 + $0xf0] sm:$0xff]
  %v5689 = vld [vmem:[%s5657 + $0xf8] sm:$0xff]
  %v5690 = vld [vmem:[%s5657 + $0x100] sm:$0xff]
  %v5691 = vld [vmem:[%s5657 + $0x108] sm:$0xff]
  %v5692 = vld [vmem:[%s5657 + $0x110] sm:$0xff]
  %v5693 = vld [vmem:[%s5657 + $0x118] sm:$0xff]
  %5694 = vmatprep.subr.mxu0 0.0
  %5695 = vmatpush1.msra.mxu0 %v727
  %5696 = vmatprep.subr.mxu0 0.0
  %5697 = vmatpush1.msra.mxu0 %v728
  %5698 = vmatprep.subr.mxu0 0.0
  %5699 = vmatpush1.msra.mxu0 %v729
  %5700 = vmatprep.subr.mxu0 0.0
  %5701 = vmatpush1.msra.mxu0 %v730
  %5702 = vmatprep.subr.mxu0 0.0
  %5703 = vmatpush1.msra.mxu0 %v731
  %5704 = vmatprep.subr.mxu0 0.0
  %5705 = vmatpush1.msra.mxu0 %v732
  %5706 = vmatprep.subr.mxu0 0.0
  %5707 = vmatpush1.msra.mxu0 %v733
  %5708 = vmatprep.subr.mxu0 0.0
  %5709 = vmatpush1.msra.mxu0 %v734
  %5710 = vmatprep.subr.mxu0 0.0
  %5711 = vmatpush1.msra.mxu0 %v735
  %5712 = vmatprep.subr.mxu0 0.0
  %5713 = vmatpush1.msra.mxu0 %v736
  %5714 = vmatprep.subr.mxu0 0.0
  %5715 = vmatpush1.msra.mxu0 %v737
  %5716 = vmatprep.subr.mxu0 0.0
  %5717 = vmatpush1.msra.mxu0 %v738
  %5718 = vmatprep.subr.mxu0 0.0
  %5719 = vmatpush1.msra.mxu0 %v739
  %5720 = vmatprep.subr.mxu0 0.0
  %5721 = vmatpush1.msra.mxu0 %v740
  %5722 = vmatprep.subr.mxu0 0.0
  %5723 = vmatpush1.msra.mxu0 %v741
  %5724 = vmatprep.subr.mxu0 0.0
  %5725 = vmatpush1.msra.mxu0 %v742
  %5726 = vmatprep.subr.mxu0 0.0
  %5727 = vmatpush1.msra.mxu0 %v743
  %5728 = vmatprep.subr.mxu0 0.0
  %5729 = vmatpush1.msra.mxu0 %v744
  %5730 = vmatprep.subr.mxu0 0.0
  %5731 = vmatpush1.msra.mxu0 %v745
  %5732 = vmatprep.subr.mxu0 0.0
  %5733 = vmatpush1.msra.mxu0 %v746
  %5734 = vmatprep.subr.mxu0 0.0
  %5735 = vmatpush1.msra.mxu0 %v747
  %5736 = vmatprep.subr.mxu0 0.0
  %5737 = vmatpush1.msra.mxu0 %v748
  %5738 = vmatprep.subr.mxu0 0.0
  %5739 = vmatpush1.msra.mxu0 %v749
  %5740 = vmatprep.subr.mxu0 0.0
  %5741 = vmatpush1.msra.mxu0 %v750
  %5742 = vmatprep.subr.mxu0 0.0
  %5743 = vmatpush1.msra.mxu0 %v751
  %5744 = vmatprep.subr.mxu0 0.0
  %5745 = vmatpush1.msra.mxu0 %v752
  %5746 = vmatprep.subr.mxu0 0.0
  %5747 = vmatpush1.msra.mxu0 %v753
  %5748 = vmatprep.subr.mxu0 0.0
  %5749 = vmatpush1.msra.mxu0 %v754
  %5750 = vmatprep.subr.mxu0 0.0
  %5751 = vmatpush1.msra.mxu0 %v755
  %5752 = vmatprep.subr.mxu0 0.0
  %5753 = vmatpush1.msra.mxu0 %v756
  %5754 = vmatprep.subr.mxu0 0.0
  %5755 = vmatpush1.msra.mxu0 %v757
  %5756 = vmatprep.subr.mxu0 0.0
  %5757 = vmatpush1.msra.mxu0 %v758
  %5758 = vmatprep.mubr.f32.mxu0 %v5659
  %5759 = vmatmul.mubr.f32.gmra.mrb[0].mxu0 %v5658
  %v5760 = vpop.f32.mrb[0].mxu0
  %v5761 = vadd.f32 0.0, %v5760
  %v5762 = vpop.f32.mrb[0].mxu0
  %5763 = vmatprep.mubr.f32.mxu0 %v5663
  %5764 = vmatmul.mubr.f32.gmra.mrb[0].mxu0 %v5662
  %v5765 = vpop.f32.mrb[0].mxu0
  %v5766 = vadd.f32 0.0, %v5765
  %v5767 = vpop.f32.mrb[0].mxu0
  %5768 = vmatprep.mubr.f32.mxu0 %v5667
  %5769 = vmatmul.mubr.f32.gmra.mrb[0].mxu0 %v5666
  %v5770 = vpop.f32.mrb[0].mxu0
  %v5771 = vadd.f32 0.0, %v5770
  %v5772 = vpop.f32.mrb[0].mxu0
  %5773 = vmatprep.mubr.f32.mxu0 %v5671
  %5774 = vmatmul.mubr.f32.gmra.mrb[0].mxu0 %v5670
  %v5775 = vpop.f32.mrb[0].mxu0
  %v5776 = vadd.f32 0.0, %v5775
  %v5777 = vpop.f32.mrb[0].mxu0
  %5778 = vmatprep.mubr.f32.mxu0 %v5675
  %5779 = vmatmul.mubr.f32.gmra.mrb[0].mxu0 %v5674
  %v5780 = vpop.f32.mrb[0].mxu0
  %v5781 = vadd.f32 0.0, %v5780
  %v5782 = vpop.f32.mrb[0].mxu0
  %5783 = vmatprep.mubr.f32.mxu0 %v5679
  %5784 = vmatmul.mubr.f32.gmra.mrb[0].mxu0 %v5678
  %v5785 = vpop.f32.mrb[0].mxu0
  %v5786 = vadd.f32 0.0, %v5785
  %v5787 = vpop.f32.mrb[0].mxu0
  %5788 = vmatprep.mubr.f32.mxu0 %v5683
  %5789 = vmatmul.mubr.f32.gmra.mrb[0].mxu0 %v5682
  %v5790 = vpop.f32.mrb[0].mxu0
  %v5791 = vadd.f32 0.0, %v5790
  %v5792 = vpop.f32.mrb[0].mxu0
  %5793 = vmatprep.mubr.f32.mxu0 %v5687
  %5794 = vmatmul.mubr.f32.gmra.mrb[0].mxu0 %v5686
  %v5795 = vpop.f32.mrb[0].mxu0
  %v5796 = vadd.f32 0.0, %v5795
  %v5797 = vpop.f32.mrb[0].mxu0
  %5798 = vmatprep.mubr.f32.mxu0 %v5691
  %5799 = vmatmul.mubr.f32.gmra.mrb[0].mxu0 %v5690
  %v5800 = vpop.f32.mrb[0].mxu0
  %v5801 = vadd.f32 0.0, %v5800
  %v5802 = vpop.f32.mrb[0].mxu0
  %5803 = vdwg.mxu0
  %5804 = vmatprep.subr.mxu0 0.0
  %5805 = vmatpush1.msra.mxu0 %v759
  %5806 = vmatprep.subr.mxu0 0.0
  %5807 = vmatpush1.msra.mxu0 %v760
  %5808 = vmatprep.subr.mxu0 0.0
  %5809 = vmatpush1.msra.mxu0 %v761
  %5810 = vmatprep.subr.mxu0 0.0
  %5811 = vmatpush1.msra.mxu0 %v762
  %5812 = vmatprep.subr.mxu0 0.0
  %5813 = vmatpush1.msra.mxu0 %v763
  %5814 = vmatprep.subr.mxu0 0.0
  %5815 = vmatpush1.msra.mxu0 %v764
  %5816 = vmatprep.subr.mxu0 0.0
  %5817 = vmatpush1.msra.mxu0 %v765
  %5818 = vmatprep.subr.mxu0 0.0
  %5819 = vmatpush1.msra.mxu0 %v766
  %5820 = vmatprep.subr.mxu0 0.0
  %5821 = vmatpush1.msra.mxu0 %v767
  %5822 = vmatprep.subr.mxu0 0.0
  %5823 = vmatpush1.msra.mxu0 %v768
  %5824 = vmatprep.subr.mxu0 0.0
  %5825 = vmatpush1.msra.mxu0 %v769
  %5826 = vmatprep.subr.mxu0 0.0
  %5827 = vmatpush1.msra.mxu0 %v770
  %5828 = vmatprep.subr.mxu0 0.0
  %5829 = vmatpush1.msra.mxu0 %v771
  %5830 = vmatprep.subr.mxu0 0.0
  %5831 = vmatpush1.msra.mxu0 %v772
  %5832 = vmatprep.subr.mxu0 0.0
  %5833 = vmatpush1.msra.mxu0 %v773
  %5834 = vmatprep.subr.mxu0 0.0
  %5835 = vmatpush1.msra.mxu0 %v774
  %5836 = vmatprep.subr.mxu0 0.0
  %5837 = vmatpush1.msra.mxu0 %v775
  %5838 = vmatprep.subr.mxu0 0.0
  %5839 = vmatpush1.msra.mxu0 %v776
  %5840 = vmatprep.subr.mxu0 0.0
  %5841 = vmatpush1.msra.mxu0 %v777
  %5842 = vmatprep.subr.mxu0 0.0
  %5843 = vmatpush1.msra.mxu0 %v778
  %5844 = vmatprep.subr.mxu0 0.0
  %5845 = vmatpush1.msra.mxu0 %v779
  %5846 = vmatprep.subr.mxu0 0.0
  %5847 = vmatpush1.msra.mxu0 %v780
  %5848 = vmatprep.subr.mxu0 0.0
  %5849 = vmatpush1.msra.mxu0 %v781
  %5850 = vmatprep.subr.mxu0 0.0
  %5851 = vmatpush1.msra.mxu0 %v782
  %5852 = vmatprep.subr.mxu0 0.0
  %5853 = vmatpush1.msra.mxu0 %v783
  %5854 = vmatprep.subr.mxu0 0.0
  %5855 = vmatpush1.msra.mxu0 %v784
  %5856 = vmatprep.subr.mxu0 0.0
  %5857 = vmatpush1.msra.mxu0 %v785
  %5858 = vmatprep.subr.mxu0 0.0
  %5859 = vmatpush1.msra.mxu0 %v786
  %5860 = vmatprep.subr.mxu0 0.0
  %5861 = vmatpush1.msra.mxu0 %v787
  %5862 = vmatprep.subr.mxu0 0.0
  %5863 = vmatpush1.msra.mxu0 %v788
  %5864 = vmatprep.subr.mxu0 0.0
  %5865 = vmatpush1.msra.mxu0 %v789
  %5866 = vmatprep.subr.mxu0 0.0
  %5867 = vmatpush1.msra.mxu0 %v790
  %5868 = vmatprep.mubr.f32.mxu0 %v5661
  %5869 = vmatmul.mubr.f32.gmra.mrb[0].mxu0 %v5660
  %v5870 = vpop.f32.mrb[0].mxu0
  %v5871 = vadd.f32 %v5761, %v5870
  %v5872 = vpop.f32.mrb[0].mxu0
  %5873 = vmatprep.mubr.f32.mxu0 %v5665
  %5874 = vmatmul.mubr.f32.gmra.mrb[0].mxu0 %v5664
  %v5875 = vpop.f32.mrb[0].mxu0
  %v5876 = vadd.f32 %v5766, %v5875
  %v5877 = vpop.f32.mrb[0].mxu0
  %5878 = vmatprep.mubr.f32.mxu0 %v5669
  %5879 = vmatmul.mubr.f32.gmra.mrb[0].mxu0 %v5668
  %v5880 = vpop.f32.mrb[0].mxu0
  %v5881 = vadd.f32 %v5771, %v5880
  %v5882 = vpop.f32.mrb[0].mxu0
  %5883 = vmatprep.mubr.f32.mxu0 %v5673
  %5884 = vmatmul.mubr.f32.gmra.mrb[0].mxu0 %v5672
  %v5885 = vpop.f32.mrb[0].mxu0
  %v5886 = vadd.f32 %v5776, %v5885
  %v5887 = vpop.f32.mrb[0].mxu0
  %5888 = vmatprep.mubr.f32.mxu0 %v5677
  %5889 = vmatmul.mubr.f32.gmra.mrb[0].mxu0 %v5676
  %v5890 = vpop.f32.mrb[0].mxu0
  %v5891 = vadd.f32 %v5781, %v5890
  %v5892 = vpop.f32.mrb[0].mxu0
  %5893 = vmatprep.mubr.f32.mxu0 %v5681
  %5894 = vmatmul.mubr.f32.gmra.mrb[0].mxu0 %v5680
  %v5895 = vpop.f32.mrb[0].mxu0
  %v5896 = vadd.f32 %v5786, %v5895
  %v5897 = vpop.f32.mrb[0].mxu0
  %5898 = vmatprep.mubr.f32.mxu0 %v5685
  %5899 = vmatmul.mubr.f32.gmra.mrb[0].mxu0 %v5684
  %v5900 = vpop.f32.mrb[0].mxu0
  %v5901 = vadd.f32 %v5791, %v5900
  %v5902 = vpop.f32.mrb[0].mxu0
  %5903 = vmatprep.mubr.f32.mxu0 %v5689
  %5904 = vmatmul.mubr.f32.gmra.mrb[0].mxu0 %v5688
  %v5905 = vpop.f32.mrb[0].mxu0
  %v5906 = vadd.f32 %v5796, %v5905
  %v5907 = vpop.f32.mrb[0].mxu0
  %5908 = vmatprep.mubr.f32.mxu0 %v5693
  %5909 = vmatmul.mubr.f32.gmra.mrb[0].mxu0 %v5692
  %v5910 = vpop.f32.mrb[0].mxu0
  %v5911 = vadd.f32 %v5801, %v5910
  %v5912 = vpop.f32.mrb[0].mxu0
  %5913 = vdwg.mxu0
  %v5914 = vld [vmem:[%s4 + $0x180] sm:$0xff]
  %v5915 = vld [vmem:[%s4 + $0x188] sm:$0xff]
  %v5916 = vld [vmem:[%s4 + $0x190] sm:$0xff]
  %v5917 = vld [vmem:[%s4 + $0x198] sm:$0xff]
  %v5919 = vsel %vm1312, %v5871, 0
  %v5922 = vsel %vm1312, %v5876, 0
  %v5925 = vsel %vm1312, %v5881, 0
  %v5928 = vsel %vm1312, %v5886, 0
  %v5931 = vsel %vm1312, %v5891, 0
  %v5934 = vsel %vm1312, %v5896, 0
  %v5937 = vsel %vm1312, %v5901, 0
  %v5940 = vsel %vm1312, %v5906, 0
  %v5943 = vsel %vm1312, %v5911, 0
  %5945 = vmatprep.subr.mxu0 0.0
  %5946 = vmatpush1.msra.mxu0 %v5914
  %5947 = vmatprep.subr.mxu0 0.0
  %5948 = vmatpush1.msra.mxu0 %v5915
  %5949 = vmatprep.subr.mxu0 0.0
  %5950 = vmatpush1.msra.mxu0 %v5916
  %5951 = vmatprep.subr.mxu0 0.0
  %5952 = vmatpush1.msra.mxu0 %v5917
  %5953 = vmatprep.subr.mxu0 0.0
  %5954 = vmatpush1.msra.mxu0 0.0
  %5955 = vmatprep.subr.mxu0 0.0
  %5956 = vmatpush1.msra.mxu0 0.0
  %5957 = vmatprep.subr.mxu0 0.0
  %5958 = vmatpush1.msra.mxu0 0.0
  %5959 = vmatprep.subr.mxu0 0.0
  %5960 = vmatpush1.msra.mxu0 0.0
  %5961 = vmatprep.subr.mxu0 0.0
  %5962 = vmatpush1.msra.mxu0 0.0
  %5963 = vmatprep.subr.mxu0 0.0
  %5964 = vmatpush1.msra.mxu0 0.0
  %5965 = vmatprep.subr.mxu0 0.0
  %5966 = vmatpush1.msra.mxu0 0.0
  %5967 = vmatprep.subr.mxu0 0.0
  %5968 = vmatpush1.msra.mxu0 0.0
  %5969 = vmatprep.subr.mxu0 0.0
  %5970 = vmatpush1.msra.mxu0 0.0
  %5971 = vmatprep.subr.mxu0 0.0
  %5972 = vmatpush1.msra.mxu0 0.0
  %5973 = vmatprep.subr.mxu0 0.0
  %5974 = vmatpush1.msra.mxu0 0.0
  %5975 = vmatprep.subr.mxu0 0.0
  %5976 = vmatpush1.msra.mxu0 0.0
  %5977 = vmatprep.subr.mxu0 0.0
  %5978 = vmatpush1.msra.mxu0 0.0
  %5979 = vmatprep.subr.mxu0 0.0
  %5980 = vmatpush1.msra.mxu0 0.0
  %5981 = vmatprep.subr.mxu0 0.0
  %5982 = vmatpush1.msra.mxu0 0.0
  %5983 = vmatprep.subr.mxu0 0.0
  %5984 = vmatpush1.msra.mxu0 0.0
  %5985 = vmatprep.subr.mxu0 0.0
  %5986 = vmatpush1.msra.mxu0 0.0
  %5987 = vmatprep.subr.mxu0 0.0
  %5988 = vmatpush1.msra.mxu0 0.0
  %5989 = vmatprep.subr.mxu0 0.0
  %5990 = vmatpush1.msra.mxu0 0.0
  %5991 = vmatprep.subr.mxu0 0.0
  %5992 = vmatpush1.msra.mxu0 0.0
  %5993 = vmatprep.subr.mxu0 0.0
  %5994 = vmatpush1.msra.mxu0 0.0
  %5995 = vmatprep.subr.mxu0 0.0
  %5996 = vmatpush1.msra.mxu0 0.0
  %5997 = vmatprep.subr.mxu0 0.0
  %5998 = vmatpush1.msra.mxu0 0.0
  %5999 = vmatprep.subr.mxu0 0.0
  %6000 = vmatpush1.msra.mxu0 0.0
  %6001 = vmatprep.subr.mxu0 0.0
  %6002 = vmatpush1.msra.mxu0 0.0
  %6003 = vmatprep.subr.mxu0 0.0
  %6004 = vmatpush1.msra.mxu0 0.0
  %6005 = vmatprep.subr.mxu0 0.0
  %6006 = vmatpush1.msra.mxu0 0.0
  %6007 = vmatprep.subr.mxu0 0.0
  %6008 = vmatpush1.msra.mxu0 0.0
  %6009 = vmatprep.mubr.f32.mxu0 0.0
  %6010 = vmatmul.mubr.f32.gmra.mrb[0].mxu0 %v5919
  %v6011 = vpop.f32.mrb[0].mxu0
  %v6012 = vadd.f32 0.0, %v6011
  %v6013 = vpop.f32.mrb[0].mxu0
  %6014 = vmatprep.mubr.f32.mxu0 0.0
  %6015 = vmatmul.mubr.f32.gmra.mrb[0].mxu0 %v5922
  %v6016 = vpop.f32.mrb[0].mxu0
  %v6017 = vadd.f32 0.0, %v6016
  %v6018 = vpop.f32.mrb[0].mxu0
  %6019 = vmatprep.mubr.f32.mxu0 0.0
  %6020 = vmatmul.mubr.f32.gmra.mrb[0].mxu0 %v5925
  %v6021 = vpop.f32.mrb[0].mxu0
  %v6022 = vadd.f32 0.0, %v6021
  %v6023 = vpop.f32.mrb[0].mxu0
  %6024 = vmatprep.mubr.f32.mxu0 0.0
  %6025 = vmatmul.mubr.f32.gmra.mrb[0].mxu0 %v5928
  %v6026 = vpop.f32.mrb[0].mxu0
  %v6027 = vadd.f32 0.0, %v6026
  %v6028 = vpop.f32.mrb[0].mxu0
  %6029 = vmatprep.mubr.f32.mxu0 0.0
  %6030 = vmatmul.mubr.f32.gmra.mrb[0].mxu0 %v5931
  %v6031 = vpop.f32.mrb[0].mxu0
  %v6032 = vadd.f32 0.0, %v6031
  %v6033 = vpop.f32.mrb[0].mxu0
  %6034 = vmatprep.mubr.f32.mxu0 0.0
  %6035 = vmatmul.mubr.f32.gmra.mrb[0].mxu0 %v5934
  %v6036 = vpop.f32.mrb[0].mxu0
  %v6037 = vadd.f32 0.0, %v6036
  %v6038 = vpop.f32.mrb[0].mxu0
  %6039 = vmatprep.mubr.f32.mxu0 0.0
  %6040 = vmatmul.mubr.f32.gmra.mrb[0].mxu0 %v5937
  %v6041 = vpop.f32.mrb[0].mxu0
  %v6042 = vadd.f32 0.0, %v6041
  %v6043 = vpop.f32.mrb[0].mxu0
  %6044 = vmatprep.mubr.f32.mxu0 0.0
  %6045 = vmatmul.mubr.f32.gmra.mrb[0].mxu0 %v5940
  %v6046 = vpop.f32.mrb[0].mxu0
  %v6047 = vadd.f32 0.0, %v6046
  %v6048 = vpop.f32.mrb[0].mxu0
  %6049 = vmatprep.mubr.f32.mxu0 0.0
  %6050 = vmatmul.mubr.f32.gmra.mrb[0].mxu0 %v5943
  %v6051 = vpop.f32.mrb[0].mxu0
  %v6052 = vadd.f32 0.0, %v6051
  %v6053 = vpop.f32.mrb[0].mxu0
  %6054 = vdwg.mxu0
  %v6055 = vadd.f32 %v5648, %v6012
  %v6056 = vadd.f32 %v5649, %v6017
  %v6057 = vadd.f32 %v5650, %v6022
  %v6058 = vadd.f32 %v5651, %v6027
  %v6059 = vadd.f32 %v5652, %v6032
  %v6060 = vadd.f32 %v5653, %v6037
  %v6061 = vadd.f32 %v5654, %v6042
  %v6062 = vadd.f32 %v5655, %v6047
  %v6063 = vadd.f32 %v5656, %v6052
  %s6064 = scalar_lea.vmem %s3, 3744
  %v6065 = vld [vmem:[%s6064] sm:$0xff]
  %v6066 = vld [vmem:[%s6064 + $0x8] sm:$0xff]
  %v6067 = vld [vmem:[%s6064 + $0x10] sm:$0xff]
  %v6068 = vld [vmem:[%s6064 + $0x18] sm:$0xff]
  %v6069 = vld [vmem:[%s6064 + $0x20] sm:$0xff]
  %v6070 = vld [vmem:[%s6064 + $0x28] sm:$0xff]
  %v6071 = vld [vmem:[%s6064 + $0x30] sm:$0xff]
  %v6072 = vld [vmem:[%s6064 + $0x38] sm:$0xff]
  %v6073 = vld [vmem:[%s6064 + $0x40] sm:$0xff]
  %v6074 = vld [vmem:[%s6064 + $0x48] sm:$0xff]
  %v6075 = vld [vmem:[%s6064 + $0x50] sm:$0xff]
  %v6076 = vld [vmem:[%s6064 + $0x58] sm:$0xff]
  %v6077 = vld [vmem:[%s6064 + $0x60] sm:$0xff]
  %v6078 = vld [vmem:[%s6064 + $0x68] sm:$0xff]
  %v6079 = vld [vmem:[%s6064 + $0x70] sm:$0xff]
  %v6080 = vld [vmem:[%s6064 + $0x78] sm:$0xff]
  %v6081 = vld [vmem:[%s6064 + $0x80] sm:$0xff]
  %v6082 = vld [vmem:[%s6064 + $0x88] sm:$0xff]
  %v6083 = vld [vmem:[%s6064 + $0x90] sm:$0xff]
  %v6084 = vld [vmem:[%s6064 + $0x98] sm:$0xff]
  %v6085 = vld [vmem:[%s6064 + $0xa0] sm:$0xff]
  %v6086 = vld [vmem:[%s6064 + $0xa8] sm:$0xff]
  %v6087 = vld [vmem:[%s6064 + $0xb0] sm:$0xff]
  %v6088 = vld [vmem:[%s6064 + $0xb8] sm:$0xff]
  %v6089 = vld [vmem:[%s6064 + $0xc0] sm:$0xff]
  %v6090 = vld [vmem:[%s6064 + $0xc8] sm:$0xff]
  %v6091 = vld [vmem:[%s6064 + $0xd0] sm:$0xff]
  %v6092 = vld [vmem:[%s6064 + $0xd8] sm:$0xff]
  %v6093 = vld [vmem:[%s6064 + $0xe0] sm:$0xff]
  %v6094 = vld [vmem:[%s6064 + $0xe8] sm:$0xff]
  %v6095 = vld [vmem:[%s6064 + $0xf0] sm:$0xff]
  %v6096 = vld [vmem:[%s6064 + $0xf8] sm:$0xff]
  %v6097 = vld [vmem:[%s6064 + $0x100] sm:$0xff]
  %v6098 = vld [vmem:[%s6064 + $0x108] sm:$0xff]
  %v6099 = vld [vmem:[%s6064 + $0x110] sm:$0xff]
  %v6100 = vld [vmem:[%s6064 + $0x118] sm:$0xff]
  %6101 = vmatprep.subr.mxu0 0.0
  %6102 = vmatpush1.msra.mxu0 %v727
  %6103 = vmatprep.subr.mxu0 0.0
  %6104 = vmatpush1.msra.mxu0 %v728
  %6105 = vmatprep.subr.mxu0 0.0
  %6106 = vmatpush1.msra.mxu0 %v729
  %6107 = vmatprep.subr.mxu0 0.0
  %6108 = vmatpush1.msra.mxu0 %v730
  %6109 = vmatprep.subr.mxu0 0.0
  %6110 = vmatpush1.msra.mxu0 %v731
  %6111 = vmatprep.subr.mxu0 0.0
  %6112 = vmatpush1.msra.mxu0 %v732
  %6113 = vmatprep.subr.mxu0 0.0
  %6114 = vmatpush1.msra.mxu0 %v733
  %6115 = vmatprep.subr.mxu0 0.0
  %6116 = vmatpush1.msra.mxu0 %v734
  %6117 = vmatprep.subr.mxu0 0.0
  %6118 = vmatpush1.msra.mxu0 %v735
  %6119 = vmatprep.subr.mxu0 0.0
  %6120 = vmatpush1.msra.mxu0 %v736
  %6121 = vmatprep.subr.mxu0 0.0
  %6122 = vmatpush1.msra.mxu0 %v737
  %6123 = vmatprep.subr.mxu0 0.0
  %6124 = vmatpush1.msra.mxu0 %v738
  %6125 = vmatprep.subr.mxu0 0.0
  %6126 = vmatpush1.msra.mxu0 %v739
  %6127 = vmatprep.subr.mxu0 0.0
  %6128 = vmatpush1.msra.mxu0 %v740
  %6129 = vmatprep.subr.mxu0 0.0
  %6130 = vmatpush1.msra.mxu0 %v741
  %6131 = vmatprep.subr.mxu0 0.0
  %6132 = vmatpush1.msra.mxu0 %v742
  %6133 = vmatprep.subr.mxu0 0.0
  %6134 = vmatpush1.msra.mxu0 %v743
  %6135 = vmatprep.subr.mxu0 0.0
  %6136 = vmatpush1.msra.mxu0 %v744
  %6137 = vmatprep.subr.mxu0 0.0
  %6138 = vmatpush1.msra.mxu0 %v745
  %6139 = vmatprep.subr.mxu0 0.0
  %6140 = vmatpush1.msra.mxu0 %v746
  %6141 = vmatprep.subr.mxu0 0.0
  %6142 = vmatpush1.msra.mxu0 %v747
  %6143 = vmatprep.subr.mxu0 0.0
  %6144 = vmatpush1.msra.mxu0 %v748
  %6145 = vmatprep.subr.mxu0 0.0
  %6146 = vmatpush1.msra.mxu0 %v749
  %6147 = vmatprep.subr.mxu0 0.0
  %6148 = vmatpush1.msra.mxu0 %v750
  %6149 = vmatprep.subr.mxu0 0.0
  %6150 = vmatpush1.msra.mxu0 %v751
  %6151 = vmatprep.subr.mxu0 0.0
  %6152 = vmatpush1.msra.mxu0 %v752
  %6153 = vmatprep.subr.mxu0 0.0
  %6154 = vmatpush1.msra.mxu0 %v753
  %6155 = vmatprep.subr.mxu0 0.0
  %6156 = vmatpush1.msra.mxu0 %v754
  %6157 = vmatprep.subr.mxu0 0.0
  %6158 = vmatpush1.msra.mxu0 %v755
  %6159 = vmatprep.subr.mxu0 0.0
  %6160 = vmatpush1.msra.mxu0 %v756
  %6161 = vmatprep.subr.mxu0 0.0
  %6162 = vmatpush1.msra.mxu0 %v757
  %6163 = vmatprep.subr.mxu0 0.0
  %6164 = vmatpush1.msra.mxu0 %v758
  %6165 = vmatprep.mubr.f32.mxu0 %v6066
  %6166 = vmatmul.mubr.f32.gmra.mrb[0].mxu0 %v6065
  %v6167 = vpop.f32.mrb[0].mxu0
  %v6168 = vadd.f32 0.0, %v6167
  %v6169 = vpop.f32.mrb[0].mxu0
  %6170 = vmatprep.mubr.f32.mxu0 %v6070
  %6171 = vmatmul.mubr.f32.gmra.mrb[0].mxu0 %v6069
  %v6172 = vpop.f32.mrb[0].mxu0
  %v6173 = vadd.f32 0.0, %v6172
  %v6174 = vpop.f32.mrb[0].mxu0
  %6175 = vmatprep.mubr.f32.mxu0 %v6074
  %6176 = vmatmul.mubr.f32.gmra.mrb[0].mxu0 %v6073
  %v6177 = vpop.f32.mrb[0].mxu0
  %v6178 = vadd.f32 0.0, %v6177
  %v6179 = vpop.f32.mrb[0].mxu0
  %6180 = vmatprep.mubr.f32.mxu0 %v6078
  %6181 = vmatmul.mubr.f32.gmra.mrb[0].mxu0 %v6077
  %v6182 = vpop.f32.mrb[0].mxu0
  %v6183 = vadd.f32 0.0, %v6182
  %v6184 = vpop.f32.mrb[0].mxu0
  %6185 = vmatprep.mubr.f32.mxu0 %v6082
  %6186 = vmatmul.mubr.f32.gmra.mrb[0].mxu0 %v6081
  %v6187 = vpop.f32.mrb[0].mxu0
  %v6188 = vadd.f32 0.0, %v6187
  %v6189 = vpop.f32.mrb[0].mxu0
  %6190 = vmatprep.mubr.f32.mxu0 %v6086
  %6191 = vmatmul.mubr.f32.gmra.mrb[0].mxu0 %v6085
  %v6192 = vpop.f32.mrb[0].mxu0
  %v6193 = vadd.f32 0.0, %v6192
  %v6194 = vpop.f32.mrb[0].mxu0
  %6195 = vmatprep.mubr.f32.mxu0 %v6090
  %6196 = vmatmul.mubr.f32.gmra.mrb[0].mxu0 %v6089
  %v6197 = vpop.f32.mrb[0].mxu0
  %v6198 = vadd.f32 0.0, %v6197
  %v6199 = vpop.f32.mrb[0].mxu0
  %6200 = vmatprep.mubr.f32.mxu0 %v6094
  %6201 = vmatmul.mubr.f32.gmra.mrb[0].mxu0 %v6093
  %v6202 = vpop.f32.mrb[0].mxu0
  %v6203 = vadd.f32 0.0, %v6202
  %v6204 = vpop.f32.mrb[0].mxu0
  %6205 = vmatprep.mubr.f32.mxu0 %v6098
  %6206 = vmatmul.mubr.f32.gmra.mrb[0].mxu0 %v6097
  %v6207 = vpop.f32.mrb[0].mxu0
  %v6208 = vadd.f32 0.0, %v6207
  %v6209 = vpop.f32.mrb[0].mxu0
  %6210 = vdwg.mxu0
  %6211 = vmatprep.subr.mxu0 0.0
  %6212 = vmatpush1.msra.mxu0 %v759
  %6213 = vmatprep.subr.mxu0 0.0
  %6214 = vmatpush1.msra.mxu0 %v760
  %6215 = vmatprep.subr.mxu0 0.0
  %6216 = vmatpush1.msra.mxu0 %v761
  %6217 = vmatprep.subr.mxu0 0.0
  %6218 = vmatpush1.msra.mxu0 %v762
  %6219 = vmatprep.subr.mxu0 0.0
  %6220 = vmatpush1.msra.mxu0 %v763
  %6221 = vmatprep.subr.mxu0 0.0
  %6222 = vmatpush1.msra.mxu0 %v764
  %6223 = vmatprep.subr.mxu0 0.0
  %6224 = vmatpush1.msra.mxu0 %v765
  %6225 = vmatprep.subr.mxu0 0.0
  %6226 = vmatpush1.msra.mxu0 %v766
  %6227 = vmatprep.subr.mxu0 0.0
  %6228 = vmatpush1.msra.mxu0 %v767
  %6229 = vmatprep.subr.mxu0 0.0
  %6230 = vmatpush1.msra.mxu0 %v768
  %6231 = vmatprep.subr.mxu0 0.0
  %6232 = vmatpush1.msra.mxu0 %v769
  %6233 = vmatprep.subr.mxu0 0.0
  %6234 = vmatpush1.msra.mxu0 %v770
  %6235 = vmatprep.subr.mxu0 0.0
  %6236 = vmatpush1.msra.mxu0 %v771
  %6237 = vmatprep.subr.mxu0 0.0
  %6238 = vmatpush1.msra.mxu0 %v772
  %6239 = vmatprep.subr.mxu0 0.0
  %6240 = vmatpush1.msra.mxu0 %v773
  %6241 = vmatprep.subr.mxu0 0.0
  %6242 = vmatpush1.msra.mxu0 %v774
  %6243 = vmatprep.subr.mxu0 0.0
  %6244 = vmatpush1.msra.mxu0 %v775
  %6245 = vmatprep.subr.mxu0 0.0
  %6246 = vmatpush1.msra.mxu0 %v776
  %6247 = vmatprep.subr.mxu0 0.0
  %6248 = vmatpush1.msra.mxu0 %v777
  %6249 = vmatprep.subr.mxu0 0.0
  %6250 = vmatpush1.msra.mxu0 %v778
  %6251 = vmatprep.subr.mxu0 0.0
  %6252 = vmatpush1.msra.mxu0 %v779
  %6253 = vmatprep.subr.mxu0 0.0
  %6254 = vmatpush1.msra.mxu0 %v780
  %6255 = vmatprep.subr.mxu0 0.0
  %6256 = vmatpush1.msra.mxu0 %v781
  %6257 = vmatprep.subr.mxu0 0.0
  %6258 = vmatpush1.msra.mxu0 %v782
  %6259 = vmatprep.subr.mxu0 0.0
  %6260 = vmatpush1.msra.mxu0 %v783
  %6261 = vmatprep.subr.mxu0 0.0
  %6262 = vmatpush1.msra.mxu0 %v784
  %6263 = vmatprep.subr.mxu0 0.0
  %6264 = vmatpush1.msra.mxu0 %v785
  %6265 = vmatprep.subr.mxu0 0.0
  %6266 = vmatpush1.msra.mxu0 %v786
  %6267 = vmatprep.subr.mxu0 0.0
  %6268 = vmatpush1.msra.mxu0 %v787
  %6269 = vmatprep.subr.mxu0 0.0
  %6270 = vmatpush1.msra.mxu0 %v788
  %6271 = vmatprep.subr.mxu0 0.0
  %6272 = vmatpush1.msra.mxu0 %v789
  %6273 = vmatprep.subr.mxu0 0.0
  %6274 = vmatpush1.msra.mxu0 %v790
  %6275 = vmatprep.mubr.f32.mxu0 %v6068
  %6276 = vmatmul.mubr.f32.gmra.mrb[0].mxu0 %v6067
  %v6277 = vpop.f32.mrb[0].mxu0
  %v6278 = vadd.f32 %v6168, %v6277
  %v6279 = vpop.f32.mrb[0].mxu0
  %6280 = vmatprep.mubr.f32.mxu0 %v6072
  %6281 = vmatmul.mubr.f32.gmra.mrb[0].mxu0 %v6071
  %v6282 = vpop.f32.mrb[0].mxu0
  %v6283 = vadd.f32 %v6173, %v6282
  %v6284 = vpop.f32.mrb[0].mxu0
  %6285 = vmatprep.mubr.f32.mxu0 %v6076
  %6286 = vmatmul.mubr.f32.gmra.mrb[0].mxu0 %v6075
  %v6287 = vpop.f32.mrb[0].mxu0
  %v6288 = vadd.f32 %v6178, %v6287
  %v6289 = vpop.f32.mrb[0].mxu0
  %6290 = vmatprep.mubr.f32.mxu0 %v6080
  %6291 = vmatmul.mubr.f32.gmra.mrb[0].mxu0 %v6079
  %v6292 = vpop.f32.mrb[0].mxu0
  %v6293 = vadd.f32 %v6183, %v6292
  %v6294 = vpop.f32.mrb[0].mxu0
  %6295 = vmatprep.mubr.f32.mxu0 %v6084
  %6296 = vmatmul.mubr.f32.gmra.mrb[0].mxu0 %v6083
  %v6297 = vpop.f32.mrb[0].mxu0
  %v6298 = vadd.f32 %v6188, %v6297
  %v6299 = vpop.f32.mrb[0].mxu0
  %6300 = vmatprep.mubr.f32.mxu0 %v6088
  %6301 = vmatmul.mubr.f32.gmra.mrb[0].mxu0 %v6087
  %v6302 = vpop.f32.mrb[0].mxu0
  %v6303 = vadd.f32 %v6193, %v6302
  %v6304 = vpop.f32.mrb[0].mxu0
  %6305 = vmatprep.mubr.f32.mxu0 %v6092
  %6306 = vmatmul.mubr.f32.gmra.mrb[0].mxu0 %v6091
  %v6307 = vpop.f32.mrb[0].mxu0
  %v6308 = vadd.f32 %v6198, %v6307
  %v6309 = vpop.f32.mrb[0].mxu0
  %6310 = vmatprep.mubr.f32.mxu0 %v6096
  %6311 = vmatmul.mubr.f32.gmra.mrb[0].mxu0 %v6095
  %v6312 = vpop.f32.mrb[0].mxu0
  %v6313 = vadd.f32 %v6203, %v6312
  %v6314 = vpop.f32.mrb[0].mxu0
  %6315 = vmatprep.mubr.f32.mxu0 %v6100
  %6316 = vmatmul.mubr.f32.gmra.mrb[0].mxu0 %v6099
  %v6317 = vpop.f32.mrb[0].mxu0
  %v6318 = vadd.f32 %v6208, %v6317
  %v6319 = vpop.f32.mrb[0].mxu0
  %6320 = vdwg.mxu0
  %v6321 = vld [vmem:[%s4 + $0x1a0] sm:$0xff]
  %v6322 = vld [vmem:[%s4 + $0x1a8] sm:$0xff]
  %v6323 = vld [vmem:[%s4 + $0x1b0] sm:$0xff]
  %v6324 = vld [vmem:[%s4 + $0x1b8] sm:$0xff]
  %v6326 = vsel %vm1312, %v6278, 0
  %v6329 = vsel %vm1312, %v6283, 0
  %v6332 = vsel %vm1312, %v6288, 0
  %v6335 = vsel %vm1312, %v6293, 0
  %v6338 = vsel %vm1312, %v6298, 0
  %v6341 = vsel %vm1312, %v6303, 0
  %v6344 = vsel %vm1312, %v6308, 0
  %v6347 = vsel %vm1312, %v6313, 0
  %v6350 = vsel %vm1312, %v6318, 0
  %6352 = vmatprep.subr.mxu0 0.0
  %6353 = vmatpush1.msra.mxu0 %v6321
  %6354 = vmatprep.subr.mxu0 0.0
  %6355 = vmatpush1.msra.mxu0 %v6322
  %6356 = vmatprep.subr.mxu0 0.0
  %6357 = vmatpush1.msra.mxu0 %v6323
  %6358 = vmatprep.subr.mxu0 0.0
  %6359 = vmatpush1.msra.mxu0 %v6324
  %6360 = vmatprep.subr.mxu0 0.0
  %6361 = vmatpush1.msra.mxu0 0.0
  %6362 = vmatprep.subr.mxu0 0.0
  %6363 = vmatpush1.msra.mxu0 0.0
  %6364 = vmatprep.subr.mxu0 0.0
  %6365 = vmatpush1.msra.mxu0 0.0
  %6366 = vmatprep.subr.mxu0 0.0
  %6367 = vmatpush1.msra.mxu0 0.0
  %6368 = vmatprep.subr.mxu0 0.0
  %6369 = vmatpush1.msra.mxu0 0.0
  %6370 = vmatprep.subr.mxu0 0.0
  %6371 = vmatpush1.msra.mxu0 0.0
  %6372 = vmatprep.subr.mxu0 0.0
  %6373 = vmatpush1.msra.mxu0 0.0
  %6374 = vmatprep.subr.mxu0 0.0
  %6375 = vmatpush1.msra.mxu0 0.0
  %6376 = vmatprep.subr.mxu0 0.0
  %6377 = vmatpush1.msra.mxu0 0.0
  %6378 = vmatprep.subr.mxu0 0.0
  %6379 = vmatpush1.msra.mxu0 0.0
  %6380 = vmatprep.subr.mxu0 0.0
  %6381 = vmatpush1.msra.mxu0 0.0
  %6382 = vmatprep.subr.mxu0 0.0
  %6383 = vmatpush1.msra.mxu0 0.0
  %6384 = vmatprep.subr.mxu0 0.0
  %6385 = vmatpush1.msra.mxu0 0.0
  %6386 = vmatprep.subr.mxu0 0.0
  %6387 = vmatpush1.msra.mxu0 0.0
  %6388 = vmatprep.subr.mxu0 0.0
  %6389 = vmatpush1.msra.mxu0 0.0
  %6390 = vmatprep.subr.mxu0 0.0
  %6391 = vmatpush1.msra.mxu0 0.0
  %6392 = vmatprep.subr.mxu0 0.0
  %6393 = vmatpush1.msra.mxu0 0.0
  %6394 = vmatprep.subr.mxu0 0.0
  %6395 = vmatpush1.msra.mxu0 0.0
  %6396 = vmatprep.subr.mxu0 0.0
  %6397 = vmatpush1.msra.mxu0 0.0
  %6398 = vmatprep.subr.mxu0 0.0
  %6399 = vmatpush1.msra.mxu0 0.0
  %6400 = vmatprep.subr.mxu0 0.0
  %6401 = vmatpush1.msra.mxu0 0.0
  %6402 = vmatprep.subr.mxu0 0.0
  %6403 = vmatpush1.msra.mxu0 0.0
  %6404 = vmatprep.subr.mxu0 0.0
  %6405 = vmatpush1.msra.mxu0 0.0
  %6406 = vmatprep.subr.mxu0 0.0
  %6407 = vmatpush1.msra.mxu0 0.0
  %6408 = vmatprep.subr.mxu0 0.0
  %6409 = vmatpush1.msra.mxu0 0.0
  %6410 = vmatprep.subr.mxu0 0.0
  %6411 = vmatpush1.msra.mxu0 0.0
  %6412 = vmatprep.subr.mxu0 0.0
  %6413 = vmatpush1.msra.mxu0 0.0
  %6414 = vmatprep.subr.mxu0 0.0
  %6415 = vmatpush1.msra.mxu0 0.0
  %6416 = vmatprep.mubr.f32.mxu0 0.0
  %6417 = vmatmul.mubr.f32.gmra.mrb[0].mxu0 %v6326
  %v6418 = vpop.f32.mrb[0].mxu0
  %v6419 = vadd.f32 0.0, %v6418
  %v6420 = vpop.f32.mrb[0].mxu0
  %6421 = vmatprep.mubr.f32.mxu0 0.0
  %6422 = vmatmul.mubr.f32.gmra.mrb[0].mxu0 %v6329
  %v6423 = vpop.f32.mrb[0].mxu0
  %v6424 = vadd.f32 0.0, %v6423
  %v6425 = vpop.f32.mrb[0].mxu0
  %6426 = vmatprep.mubr.f32.mxu0 0.0
  %6427 = vmatmul.mubr.f32.gmra.mrb[0].mxu0 %v6332
  %v6428 = vpop.f32.mrb[0].mxu0
  %v6429 = vadd.f32 0.0, %v6428
  %v6430 = vpop.f32.mrb[0].mxu0
  %6431 = vmatprep.mubr.f32.mxu0 0.0
  %6432 = vmatmul.mubr.f32.gmra.mrb[0].mxu0 %v6335
  %v6433 = vpop.f32.mrb[0].mxu0
  %v6434 = vadd.f32 0.0, %v6433
  %v6435 = vpop.f32.mrb[0].mxu0
  %6436 = vmatprep.mubr.f32.mxu0 0.0
  %6437 = vmatmul.mubr.f32.gmra.mrb[0].mxu0 %v6338
  %v6438 = vpop.f32.mrb[0].mxu0
  %v6439 = vadd.f32 0.0, %v6438
  %v6440 = vpop.f32.mrb[0].mxu0
  %6441 = vmatprep.mubr.f32.mxu0 0.0
  %6442 = vmatmul.mubr.f32.gmra.mrb[0].mxu0 %v6341
  %v6443 = vpop.f32.mrb[0].mxu0
  %v6444 = vadd.f32 0.0, %v6443
  %v6445 = vpop.f32.mrb[0].mxu0
  %6446 = vmatprep.mubr.f32.mxu0 0.0
  %6447 = vmatmul.mubr.f32.gmra.mrb[0].mxu0 %v6344
  %v6448 = vpop.f32.mrb[0].mxu0
  %v6449 = vadd.f32 0.0, %v6448
  %v6450 = vpop.f32.mrb[0].mxu0
  %6451 = vmatprep.mubr.f32.mxu0 0.0
  %6452 = vmatmul.mubr.f32.gmra.mrb[0].mxu0 %v6347
  %v6453 = vpop.f32.mrb[0].mxu0
  %v6454 = vadd.f32 0.0, %v6453
  %v6455 = vpop.f32.mrb[0].mxu0
  %6456 = vmatprep.mubr.f32.mxu0 0.0
  %6457 = vmatmul.mubr.f32.gmra.mrb[0].mxu0 %v6350
  %v6458 = vpop.f32.mrb[0].mxu0
  %v6459 = vadd.f32 0.0, %v6458
  %v6460 = vpop.f32.mrb[0].mxu0
  %6461 = vdwg.mxu0
  %v6462 = vadd.f32 %v6055, %v6419
  %v6463 = vadd.f32 %v6056, %v6424
  %v6464 = vadd.f32 %v6057, %v6429
  %v6465 = vadd.f32 %v6058, %v6434
  %v6466 = vadd.f32 %v6059, %v6439
  %v6467 = vadd.f32 %v6060, %v6444
  %v6468 = vadd.f32 %v6061, %v6449
  %v6469 = vadd.f32 %v6062, %v6454
  %v6470 = vadd.f32 %v6063, %v6459
  %s6471 = scalar_lea.vmem %s3, 4032
  %v6472 = vld [vmem:[%s6471] sm:$0xff]
  %v6473 = vld [vmem:[%s6471 + $0x8] sm:$0xff]
  %v6474 = vld [vmem:[%s6471 + $0x10] sm:$0xff]
  %v6475 = vld [vmem:[%s6471 + $0x18] sm:$0xff]
  %v6476 = vld [vmem:[%s6471 + $0x20] sm:$0xff]
  %v6477 = vld [vmem:[%s6471 + $0x28] sm:$0xff]
  %v6478 = vld [vmem:[%s6471 + $0x30] sm:$0xff]
  %v6479 = vld [vmem:[%s6471 + $0x38] sm:$0xff]
  %v6480 = vld [vmem:[%s6471 + $0x40] sm:$0xff]
  %v6481 = vld [vmem:[%s6471 + $0x48] sm:$0xff]
  %v6482 = vld [vmem:[%s6471 + $0x50] sm:$0xff]
  %v6483 = vld [vmem:[%s6471 + $0x58] sm:$0xff]
  %v6484 = vld [vmem:[%s6471 + $0x60] sm:$0xff]
  %v6485 = vld [vmem:[%s6471 + $0x68] sm:$0xff]
  %v6486 = vld [vmem:[%s6471 + $0x70] sm:$0xff]
  %v6487 = vld [vmem:[%s6471 + $0x78] sm:$0xff]
  %v6488 = vld [vmem:[%s6471 + $0x80] sm:$0xff]
  %v6489 = vld [vmem:[%s6471 + $0x88] sm:$0xff]
  %v6490 = vld [vmem:[%s6471 + $0x90] sm:$0xff]
  %v6491 = vld [vmem:[%s6471 + $0x98] sm:$0xff]
  %v6492 = vld [vmem:[%s6471 + $0xa0] sm:$0xff]
  %v6493 = vld [vmem:[%s6471 + $0xa8] sm:$0xff]
  %v6494 = vld [vmem:[%s6471 + $0xb0] sm:$0xff]
  %v6495 = vld [vmem:[%s6471 + $0xb8] sm:$0xff]
  %v6496 = vld [vmem:[%s6471 + $0xc0] sm:$0xff]
  %v6497 = vld [vmem:[%s6471 + $0xc8] sm:$0xff]
  %v6498 = vld [vmem:[%s6471 + $0xd0] sm:$0xff]
  %v6499 = vld [vmem:[%s6471 + $0xd8] sm:$0xff]
  %v6500 = vld [vmem:[%s6471 + $0xe0] sm:$0xff]
  %v6501 = vld [vmem:[%s6471 + $0xe8] sm:$0xff]
  %v6502 = vld [vmem:[%s6471 + $0xf0] sm:$0xff]
  %v6503 = vld [vmem:[%s6471 + $0xf8] sm:$0xff]
  %v6504 = vld [vmem:[%s6471 + $0x100] sm:$0xff]
  %v6505 = vld [vmem:[%s6471 + $0x108] sm:$0xff]
  %v6506 = vld [vmem:[%s6471 + $0x110] sm:$0xff]
  %v6507 = vld [vmem:[%s6471 + $0x118] sm:$0xff]
  %6508 = vmatprep.subr.mxu0 0.0
  %6509 = vmatpush1.msra.mxu0 %v727
  %6510 = vmatprep.subr.mxu0 0.0
  %6511 = vmatpush1.msra.mxu0 %v728
  %6512 = vmatprep.subr.mxu0 0.0
  %6513 = vmatpush1.msra.mxu0 %v729
  %6514 = vmatprep.subr.mxu0 0.0
  %6515 = vmatpush1.msra.mxu0 %v730
  %6516 = vmatprep.subr.mxu0 0.0
  %6517 = vmatpush1.msra.mxu0 %v731
  %6518 = vmatprep.subr.mxu0 0.0
  %6519 = vmatpush1.msra.mxu0 %v732
  %6520 = vmatprep.subr.mxu0 0.0
  %6521 = vmatpush1.msra.mxu0 %v733
  %6522 = vmatprep.subr.mxu0 0.0
  %6523 = vmatpush1.msra.mxu0 %v734
  %6524 = vmatprep.subr.mxu0 0.0
  %6525 = vmatpush1.msra.mxu0 %v735
  %6526 = vmatprep.subr.mxu0 0.0
  %6527 = vmatpush1.msra.mxu0 %v736
  %6528 = vmatprep.subr.mxu0 0.0
  %6529 = vmatpush1.msra.mxu0 %v737
  %6530 = vmatprep.subr.mxu0 0.0
  %6531 = vmatpush1.msra.mxu0 %v738
  %6532 = vmatprep.subr.mxu0 0.0
  %6533 = vmatpush1.msra.mxu0 %v739
  %6534 = vmatprep.subr.mxu0 0.0
  %6535 = vmatpush1.msra.mxu0 %v740
  %6536 = vmatprep.subr.mxu0 0.0
  %6537 = vmatpush1.msra.mxu0 %v741
  %6538 = vmatprep.subr.mxu0 0.0
  %6539 = vmatpush1.msra.mxu0 %v742
  %6540 = vmatprep.subr.mxu0 0.0
  %6541 = vmatpush1.msra.mxu0 %v743
  %6542 = vmatprep.subr.mxu0 0.0
  %6543 = vmatpush1.msra.mxu0 %v744
  %6544 = vmatprep.subr.mxu0 0.0
  %6545 = vmatpush1.msra.mxu0 %v745
  %6546 = vmatprep.subr.mxu0 0.0
  %6547 = vmatpush1.msra.mxu0 %v746
  %6548 = vmatprep.subr.mxu0 0.0
  %6549 = vmatpush1.msra.mxu0 %v747
  %6550 = vmatprep.subr.mxu0 0.0
  %6551 = vmatpush1.msra.mxu0 %v748
  %6552 = vmatprep.subr.mxu0 0.0
  %6553 = vmatpush1.msra.mxu0 %v749
  %6554 = vmatprep.subr.mxu0 0.0
  %6555 = vmatpush1.msra.mxu0 %v750
  %6556 = vmatprep.subr.mxu0 0.0
  %6557 = vmatpush1.msra.mxu0 %v751
  %6558 = vmatprep.subr.mxu0 0.0
  %6559 = vmatpush1.msra.mxu0 %v752
  %6560 = vmatprep.subr.mxu0 0.0
  %6561 = vmatpush1.msra.mxu0 %v753
  %6562 = vmatprep.subr.mxu0 0.0
  %6563 = vmatpush1.msra.mxu0 %v754
  %6564 = vmatprep.subr.mxu0 0.0
  %6565 = vmatpush1.msra.mxu0 %v755
  %6566 = vmatprep.subr.mxu0 0.0
  %6567 = vmatpush1.msra.mxu0 %v756
  %6568 = vmatprep.subr.mxu0 0.0
  %6569 = vmatpush1.msra.mxu0 %v757
  %6570 = vmatprep.subr.mxu0 0.0
  %6571 = vmatpush1.msra.mxu0 %v758
  %6572 = vmatprep.mubr.f32.mxu0 %v6473
  %6573 = vmatmul.mubr.f32.gmra.mrb[0].mxu0 %v6472
  %v6574 = vpop.f32.mrb[0].mxu0
  %v6575 = vadd.f32 0.0, %v6574
  %v6576 = vpop.f32.mrb[0].mxu0
  %6577 = vmatprep.mubr.f32.mxu0 %v6477
  %6578 = vmatmul.mubr.f32.gmra.mrb[0].mxu0 %v6476
  %v6579 = vpop.f32.mrb[0].mxu0
  %v6580 = vadd.f32 0.0, %v6579
  %v6581 = vpop.f32.mrb[0].mxu0
  %6582 = vmatprep.mubr.f32.mxu0 %v6481
  %6583 = vmatmul.mubr.f32.gmra.mrb[0].mxu0 %v6480
  %v6584 = vpop.f32.mrb[0].mxu0
  %v6585 = vadd.f32 0.0, %v6584
  %v6586 = vpop.f32.mrb[0].mxu0
  %6587 = vmatprep.mubr.f32.mxu0 %v6485
  %6588 = vmatmul.mubr.f32.gmra.mrb[0].mxu0 %v6484
  %v6589 = vpop.f32.mrb[0].mxu0
  %v6590 = vadd.f32 0.0, %v6589
  %v6591 = vpop.f32.mrb[0].mxu0
  %6592 = vmatprep.mubr.f32.mxu0 %v6489
  %6593 = vmatmul.mubr.f32.gmra.mrb[0].mxu0 %v6488
  %v6594 = vpop.f32.mrb[0].mxu0
  %v6595 = vadd.f32 0.0, %v6594
  %v6596 = vpop.f32.mrb[0].mxu0
  %6597 = vmatprep.mubr.f32.mxu0 %v6493
  %6598 = vmatmul.mubr.f32.gmra.mrb[0].mxu0 %v6492
  %v6599 = vpop.f32.mrb[0].mxu0
  %v6600 = vadd.f32 0.0, %v6599
  %v6601 = vpop.f32.mrb[0].mxu0
  %6602 = vmatprep.mubr.f32.mxu0 %v6497
  %6603 = vmatmul.mubr.f32.gmra.mrb[0].mxu0 %v6496
  %v6604 = vpop.f32.mrb[0].mxu0
  %v6605 = vadd.f32 0.0, %v6604
  %v6606 = vpop.f32.mrb[0].mxu0
  %6607 = vmatprep.mubr.f32.mxu0 %v6501
  %6608 = vmatmul.mubr.f32.gmra.mrb[0].mxu0 %v6500
  %v6609 = vpop.f32.mrb[0].mxu0
  %v6610 = vadd.f32 0.0, %v6609
  %v6611 = vpop.f32.mrb[0].mxu0
  %6612 = vmatprep.mubr.f32.mxu0 %v6505
  %6613 = vmatmul.mubr.f32.gmra.mrb[0].mxu0 %v6504
  %v6614 = vpop.f32.mrb[0].mxu0
  %v6615 = vadd.f32 0.0, %v6614
  %v6616 = vpop.f32.mrb[0].mxu0
  %6617 = vdwg.mxu0
  %6618 = vmatprep.subr.mxu0 0.0
  %6619 = vmatpush1.msra.mxu0 %v759
  %6620 = vmatprep.subr.mxu0 0.0
  %6621 = vmatpush1.msra.mxu0 %v760
  %6622 = vmatprep.subr.mxu0 0.0
  %6623 = vmatpush1.msra.mxu0 %v761
  %6624 = vmatprep.subr.mxu0 0.0
  %6625 = vmatpush1.msra.mxu0 %v762
  %6626 = vmatprep.subr.mxu0 0.0
  %6627 = vmatpush1.msra.mxu0 %v763
  %6628 = vmatprep.subr.mxu0 0.0
  %6629 = vmatpush1.msra.mxu0 %v764
  %6630 = vmatprep.subr.mxu0 0.0
  %6631 = vmatpush1.msra.mxu0 %v765
  %6632 = vmatprep.subr.mxu0 0.0
  %6633 = vmatpush1.msra.mxu0 %v766
  %6634 = vmatprep.subr.mxu0 0.0
  %6635 = vmatpush1.msra.mxu0 %v767
  %6636 = vmatprep.subr.mxu0 0.0
  %6637 = vmatpush1.msra.mxu0 %v768
  %6638 = vmatprep.subr.mxu0 0.0
  %6639 = vmatpush1.msra.mxu0 %v769
  %6640 = vmatprep.subr.mxu0 0.0
  %6641 = vmatpush1.msra.mxu0 %v770
  %6642 = vmatprep.subr.mxu0 0.0
  %6643 = vmatpush1.msra.mxu0 %v771
  %6644 = vmatprep.subr.mxu0 0.0
  %6645 = vmatpush1.msra.mxu0 %v772
  %6646 = vmatprep.subr.mxu0 0.0
  %6647 = vmatpush1.msra.mxu0 %v773
  %6648 = vmatprep.subr.mxu0 0.0
  %6649 = vmatpush1.msra.mxu0 %v774
  %6650 = vmatprep.subr.mxu0 0.0
  %6651 = vmatpush1.msra.mxu0 %v775
  %6652 = vmatprep.subr.mxu0 0.0
  %6653 = vmatpush1.msra.mxu0 %v776
  %6654 = vmatprep.subr.mxu0 0.0
  %6655 = vmatpush1.msra.mxu0 %v777
  %6656 = vmatprep.subr.mxu0 0.0
  %6657 = vmatpush1.msra.mxu0 %v778
  %6658 = vmatprep.subr.mxu0 0.0
  %6659 = vmatpush1.msra.mxu0 %v779
  %6660 = vmatprep.subr.mxu0 0.0
  %6661 = vmatpush1.msra.mxu0 %v780
  %6662 = vmatprep.subr.mxu0 0.0
  %6663 = vmatpush1.msra.mxu0 %v781
  %6664 = vmatprep.subr.mxu0 0.0
  %6665 = vmatpush1.msra.mxu0 %v782
  %6666 = vmatprep.subr.mxu0 0.0
  %6667 = vmatpush1.msra.mxu0 %v783
  %6668 = vmatprep.subr.mxu0 0.0
  %6669 = vmatpush1.msra.mxu0 %v784
  %6670 = vmatprep.subr.mxu0 0.0
  %6671 = vmatpush1.msra.mxu0 %v785
  %6672 = vmatprep.subr.mxu0 0.0
  %6673 = vmatpush1.msra.mxu0 %v786
  %6674 = vmatprep.subr.mxu0 0.0
  %6675 = vmatpush1.msra.mxu0 %v787
  %6676 = vmatprep.subr.mxu0 0.0
  %6677 = vmatpush1.msra.mxu0 %v788
  %6678 = vmatprep.subr.mxu0 0.0
  %6679 = vmatpush1.msra.mxu0 %v789
  %6680 = vmatprep.subr.mxu0 0.0
  %6681 = vmatpush1.msra.mxu0 %v790
  %6682 = vmatprep.mubr.f32.mxu0 %v6475
  %6683 = vmatmul.mubr.f32.gmra.mrb[0].mxu0 %v6474
  %v6684 = vpop.f32.mrb[0].mxu0
  %v6685 = vadd.f32 %v6575, %v6684
  %v6686 = vpop.f32.mrb[0].mxu0
  %6687 = vmatprep.mubr.f32.mxu0 %v6479
  %6688 = vmatmul.mubr.f32.gmra.mrb[0].mxu0 %v6478
  %v6689 = vpop.f32.mrb[0].mxu0
  %v6690 = vadd.f32 %v6580, %v6689
  %v6691 = vpop.f32.mrb[0].mxu0
  %6692 = vmatprep.mubr.f32.mxu0 %v6483
  %6693 = vmatmul.mubr.f32.gmra.mrb[0].mxu0 %v6482
  %v6694 = vpop.f32.mrb[0].mxu0
  %v6695 = vadd.f32 %v6585, %v6694
  %v6696 = vpop.f32.mrb[0].mxu0
  %6697 = vmatprep.mubr.f32.mxu0 %v6487
  %6698 = vmatmul.mubr.f32.gmra.mrb[0].mxu0 %v6486
  %v6699 = vpop.f32.mrb[0].mxu0
  %v6700 = vadd.f32 %v6590, %v6699
  %v6701 = vpop.f32.mrb[0].mxu0
  %6702 = vmatprep.mubr.f32.mxu0 %v6491
  %6703 = vmatmul.mubr.f32.gmra.mrb[0].mxu0 %v6490
  %v6704 = vpop.f32.mrb[0].mxu0
  %v6705 = vadd.f32 %v6595, %v6704
  %v6706 = vpop.f32.mrb[0].mxu0
  %6707 = vmatprep.mubr.f32.mxu0 %v6495
  %6708 = vmatmul.mubr.f32.gmra.mrb[0].mxu0 %v6494
  %v6709 = vpop.f32.mrb[0].mxu0
  %v6710 = vadd.f32 %v6600, %v6709
  %v6711 = vpop.f32.mrb[0].mxu0
  %6712 = vmatprep.mubr.f32.mxu0 %v6499
  %6713 = vmatmul.mubr.f32.gmra.mrb[0].mxu0 %v6498
  %v6714 = vpop.f32.mrb[0].mxu0
  %v6715 = vadd.f32 %v6605, %v6714
  %v6716 = vpop.f32.mrb[0].mxu0
  %6717 = vmatprep.mubr.f32.mxu0 %v6503
  %6718 = vmatmul.mubr.f32.gmra.mrb[0].mxu0 %v6502
  %v6719 = vpop.f32.mrb[0].mxu0
  %v6720 = vadd.f32 %v6610, %v6719
  %v6721 = vpop.f32.mrb[0].mxu0
  %6722 = vmatprep.mubr.f32.mxu0 %v6507
  %6723 = vmatmul.mubr.f32.gmra.mrb[0].mxu0 %v6506
  %v6724 = vpop.f32.mrb[0].mxu0
  %v6725 = vadd.f32 %v6615, %v6724
  %v6726 = vpop.f32.mrb[0].mxu0
  %6727 = vdwg.mxu0
  %v6728 = vld [vmem:[%s4 + $0x1c0] sm:$0xff]
  %v6729 = vld [vmem:[%s4 + $0x1c8] sm:$0xff]
  %v6730 = vld [vmem:[%s4 + $0x1d0] sm:$0xff]
  %v6731 = vld [vmem:[%s4 + $0x1d8] sm:$0xff]
  %v6733 = vsel %vm1312, %v6685, 0
  %v6736 = vsel %vm1312, %v6690, 0
  %v6739 = vsel %vm1312, %v6695, 0
  %v6742 = vsel %vm1312, %v6700, 0
  %v6745 = vsel %vm1312, %v6705, 0
  %v6748 = vsel %vm1312, %v6710, 0
  %v6751 = vsel %vm1312, %v6715, 0
  %v6754 = vsel %vm1312, %v6720, 0
  %v6757 = vsel %vm1312, %v6725, 0
  %6759 = vmatprep.subr.mxu0 0.0
  %6760 = vmatpush1.msra.mxu0 %v6728
  %6761 = vmatprep.subr.mxu0 0.0
  %6762 = vmatpush1.msra.mxu0 %v6729
  %6763 = vmatprep.subr.mxu0 0.0
  %6764 = vmatpush1.msra.mxu0 %v6730
  %6765 = vmatprep.subr.mxu0 0.0
  %6766 = vmatpush1.msra.mxu0 %v6731
  %6767 = vmatprep.subr.mxu0 0.0
  %6768 = vmatpush1.msra.mxu0 0.0
  %6769 = vmatprep.subr.mxu0 0.0
  %6770 = vmatpush1.msra.mxu0 0.0
  %6771 = vmatprep.subr.mxu0 0.0
  %6772 = vmatpush1.msra.mxu0 0.0
  %6773 = vmatprep.subr.mxu0 0.0
  %6774 = vmatpush1.msra.mxu0 0.0
  %6775 = vmatprep.subr.mxu0 0.0
  %6776 = vmatpush1.msra.mxu0 0.0
  %6777 = vmatprep.subr.mxu0 0.0
  %6778 = vmatpush1.msra.mxu0 0.0
  %6779 = vmatprep.subr.mxu0 0.0
  %6780 = vmatpush1.msra.mxu0 0.0
  %6781 = vmatprep.subr.mxu0 0.0
  %6782 = vmatpush1.msra.mxu0 0.0
  %6783 = vmatprep.subr.mxu0 0.0
  %6784 = vmatpush1.msra.mxu0 0.0
  %6785 = vmatprep.subr.mxu0 0.0
  %6786 = vmatpush1.msra.mxu0 0.0
  %6787 = vmatprep.subr.mxu0 0.0
  %6788 = vmatpush1.msra.mxu0 0.0
  %6789 = vmatprep.subr.mxu0 0.0
  %6790 = vmatpush1.msra.mxu0 0.0
  %6791 = vmatprep.subr.mxu0 0.0
  %6792 = vmatpush1.msra.mxu0 0.0
  %6793 = vmatprep.subr.mxu0 0.0
  %6794 = vmatpush1.msra.mxu0 0.0
  %6795 = vmatprep.subr.mxu0 0.0
  %6796 = vmatpush1.msra.mxu0 0.0
  %6797 = vmatprep.subr.mxu0 0.0
  %6798 = vmatpush1.msra.mxu0 0.0
  %6799 = vmatprep.subr.mxu0 0.0
  %6800 = vmatpush1.msra.mxu0 0.0
  %6801 = vmatprep.subr.mxu0 0.0
  %6802 = vmatpush1.msra.mxu0 0.0
  %6803 = vmatprep.subr.mxu0 0.0
  %6804 = vmatpush1.msra.mxu0 0.0
  %6805 = vmatprep.subr.mxu0 0.0
  %6806 = vmatpush1.msra.mxu0 0.0
  %6807 = vmatprep.subr.mxu0 0.0
  %6808 = vmatpush1.msra.mxu0 0.0
  %6809 = vmatprep.subr.mxu0 0.0
  %6810 = vmatpush1.msra.mxu0 0.0
  %6811 = vmatprep.subr.mxu0 0.0
  %6812 = vmatpush1.msra.mxu0 0.0
  %6813 = vmatprep.subr.mxu0 0.0
  %6814 = vmatpush1.msra.mxu0 0.0
  %6815 = vmatprep.subr.mxu0 0.0
  %6816 = vmatpush1.msra.mxu0 0.0
  %6817 = vmatprep.subr.mxu0 0.0
  %6818 = vmatpush1.msra.mxu0 0.0
  %6819 = vmatprep.subr.mxu0 0.0
  %6820 = vmatpush1.msra.mxu0 0.0
  %6821 = vmatprep.subr.mxu0 0.0
  %6822 = vmatpush1.msra.mxu0 0.0
  %6823 = vmatprep.mubr.f32.mxu0 0.0
  %6824 = vmatmul.mubr.f32.gmra.mrb[0].mxu0 %v6733
  %v6825 = vpop.f32.mrb[0].mxu0
  %v6826 = vadd.f32 0.0, %v6825
  %v6827 = vpop.f32.mrb[0].mxu0
  %6828 = vmatprep.mubr.f32.mxu0 0.0
  %6829 = vmatmul.mubr.f32.gmra.mrb[0].mxu0 %v6736
  %v6830 = vpop.f32.mrb[0].mxu0
  %v6831 = vadd.f32 0.0, %v6830
  %v6832 = vpop.f32.mrb[0].mxu0
  %6833 = vmatprep.mubr.f32.mxu0 0.0
  %6834 = vmatmul.mubr.f32.gmra.mrb[0].mxu0 %v6739
  %v6835 = vpop.f32.mrb[0].mxu0
  %v6836 = vadd.f32 0.0, %v6835
  %v6837 = vpop.f32.mrb[0].mxu0
  %6838 = vmatprep.mubr.f32.mxu0 0.0
  %6839 = vmatmul.mubr.f32.gmra.mrb[0].mxu0 %v6742
  %v6840 = vpop.f32.mrb[0].mxu0
  %v6841 = vadd.f32 0.0, %v6840
  %v6842 = vpop.f32.mrb[0].mxu0
  %6843 = vmatprep.mubr.f32.mxu0 0.0
  %6844 = vmatmul.mubr.f32.gmra.mrb[0].mxu0 %v6745
  %v6845 = vpop.f32.mrb[0].mxu0
  %v6846 = vadd.f32 0.0, %v6845
  %v6847 = vpop.f32.mrb[0].mxu0
  %6848 = vmatprep.mubr.f32.mxu0 0.0
  %6849 = vmatmul.mubr.f32.gmra.mrb[0].mxu0 %v6748
  %v6850 = vpop.f32.mrb[0].mxu0
  %v6851 = vadd.f32 0.0, %v6850
  %v6852 = vpop.f32.mrb[0].mxu0
  %6853 = vmatprep.mubr.f32.mxu0 0.0
  %6854 = vmatmul.mubr.f32.gmra.mrb[0].mxu0 %v6751
  %v6855 = vpop.f32.mrb[0].mxu0
  %v6856 = vadd.f32 0.0, %v6855
  %v6857 = vpop.f32.mrb[0].mxu0
  %6858 = vmatprep.mubr.f32.mxu0 0.0
  %6859 = vmatmul.mubr.f32.gmra.mrb[0].mxu0 %v6754
  %v6860 = vpop.f32.mrb[0].mxu0
  %v6861 = vadd.f32 0.0, %v6860
  %v6862 = vpop.f32.mrb[0].mxu0
  %6863 = vmatprep.mubr.f32.mxu0 0.0
  %6864 = vmatmul.mubr.f32.gmra.mrb[0].mxu0 %v6757
  %v6865 = vpop.f32.mrb[0].mxu0
  %v6866 = vadd.f32 0.0, %v6865
  %v6867 = vpop.f32.mrb[0].mxu0
  %6868 = vdwg.mxu0
  %v6869 = vadd.f32 %v6462, %v6826
  %v6870 = vadd.f32 %v6463, %v6831
  %v6871 = vadd.f32 %v6464, %v6836
  %v6872 = vadd.f32 %v6465, %v6841
  %v6873 = vadd.f32 %v6466, %v6846
  %v6874 = vadd.f32 %v6467, %v6851
  %v6875 = vadd.f32 %v6468, %v6856
  %v6876 = vadd.f32 %v6469, %v6861
  %v6877 = vadd.f32 %v6470, %v6866
  %s6878 = scalar_lea.vmem %s3, 4320
  %v6879 = vld [vmem:[%s6878] sm:$0xff]
  %v6880 = vld [vmem:[%s6878 + $0x8] sm:$0xff]
  %v6881 = vld [vmem:[%s6878 + $0x10] sm:$0xff]
  %v6882 = vld [vmem:[%s6878 + $0x18] sm:$0xff]
  %v6883 = vld [vmem:[%s6878 + $0x20] sm:$0xff]
  %v6884 = vld [vmem:[%s6878 + $0x28] sm:$0xff]
  %v6885 = vld [vmem:[%s6878 + $0x30] sm:$0xff]
  %v6886 = vld [vmem:[%s6878 + $0x38] sm:$0xff]
  %v6887 = vld [vmem:[%s6878 + $0x40] sm:$0xff]
  %v6888 = vld [vmem:[%s6878 + $0x48] sm:$0xff]
  %v6889 = vld [vmem:[%s6878 + $0x50] sm:$0xff]
  %v6890 = vld [vmem:[%s6878 + $0x58] sm:$0xff]
  %v6891 = vld [vmem:[%s6878 + $0x60] sm:$0xff]
  %v6892 = vld [vmem:[%s6878 + $0x68] sm:$0xff]
  %v6893 = vld [vmem:[%s6878 + $0x70] sm:$0xff]
  %v6894 = vld [vmem:[%s6878 + $0x78] sm:$0xff]
  %v6895 = vld [vmem:[%s6878 + $0x80] sm:$0xff]
  %v6896 = vld [vmem:[%s6878 + $0x88] sm:$0xff]
  %v6897 = vld [vmem:[%s6878 + $0x90] sm:$0xff]
  %v6898 = vld [vmem:[%s6878 + $0x98] sm:$0xff]
  %v6899 = vld [vmem:[%s6878 + $0xa0] sm:$0xff]
  %v6900 = vld [vmem:[%s6878 + $0xa8] sm:$0xff]
  %v6901 = vld [vmem:[%s6878 + $0xb0] sm:$0xff]
  %v6902 = vld [vmem:[%s6878 + $0xb8] sm:$0xff]
  %v6903 = vld [vmem:[%s6878 + $0xc0] sm:$0xff]
  %v6904 = vld [vmem:[%s6878 + $0xc8] sm:$0xff]
  %v6905 = vld [vmem:[%s6878 + $0xd0] sm:$0xff]
  %v6906 = vld [vmem:[%s6878 + $0xd8] sm:$0xff]
  %v6907 = vld [vmem:[%s6878 + $0xe0] sm:$0xff]
  %v6908 = vld [vmem:[%s6878 + $0xe8] sm:$0xff]
  %v6909 = vld [vmem:[%s6878 + $0xf0] sm:$0xff]
  %v6910 = vld [vmem:[%s6878 + $0xf8] sm:$0xff]
  %v6911 = vld [vmem:[%s6878 + $0x100] sm:$0xff]
  %v6912 = vld [vmem:[%s6878 + $0x108] sm:$0xff]
  %v6913 = vld [vmem:[%s6878 + $0x110] sm:$0xff]
  %v6914 = vld [vmem:[%s6878 + $0x118] sm:$0xff]
  %6915 = vmatprep.subr.mxu0 0.0
  %6916 = vmatpush1.msra.mxu0 %v727
  %6917 = vmatprep.subr.mxu0 0.0
  %6918 = vmatpush1.msra.mxu0 %v728
  %6919 = vmatprep.subr.mxu0 0.0
  %6920 = vmatpush1.msra.mxu0 %v729
  %6921 = vmatprep.subr.mxu0 0.0
  %6922 = vmatpush1.msra.mxu0 %v730
  %6923 = vmatprep.subr.mxu0 0.0
  %6924 = vmatpush1.msra.mxu0 %v731
  %6925 = vmatprep.subr.mxu0 0.0
  %6926 = vmatpush1.msra.mxu0 %v732
  %6927 = vmatprep.subr.mxu0 0.0
  %6928 = vmatpush1.msra.mxu0 %v733
  %6929 = vmatprep.subr.mxu0 0.0
  %6930 = vmatpush1.msra.mxu0 %v734
  %6931 = vmatprep.subr.mxu0 0.0
  %6932 = vmatpush1.msra.mxu0 %v735
  %6933 = vmatprep.subr.mxu0 0.0
  %6934 = vmatpush1.msra.mxu0 %v736
  %6935 = vmatprep.subr.mxu0 0.0
  %6936 = vmatpush1.msra.mxu0 %v737
  %6937 = vmatprep.subr.mxu0 0.0
  %6938 = vmatpush1.msra.mxu0 %v738
  %6939 = vmatprep.subr.mxu0 0.0
  %6940 = vmatpush1.msra.mxu0 %v739
  %6941 = vmatprep.subr.mxu0 0.0
  %6942 = vmatpush1.msra.mxu0 %v740
  %6943 = vmatprep.subr.mxu0 0.0
  %6944 = vmatpush1.msra.mxu0 %v741
  %6945 = vmatprep.subr.mxu0 0.0
  %6946 = vmatpush1.msra.mxu0 %v742
  %6947 = vmatprep.subr.mxu0 0.0
  %6948 = vmatpush1.msra.mxu0 %v743
  %6949 = vmatprep.subr.mxu0 0.0
  %6950 = vmatpush1.msra.mxu0 %v744
  %6951 = vmatprep.subr.mxu0 0.0
  %6952 = vmatpush1.msra.mxu0 %v745
  %6953 = vmatprep.subr.mxu0 0.0
  %6954 = vmatpush1.msra.mxu0 %v746
  %6955 = vmatprep.subr.mxu0 0.0
  %6956 = vmatpush1.msra.mxu0 %v747
  %6957 = vmatprep.subr.mxu0 0.0
  %6958 = vmatpush1.msra.mxu0 %v748
  %6959 = vmatprep.subr.mxu0 0.0
  %6960 = vmatpush1.msra.mxu0 %v749
  %6961 = vmatprep.subr.mxu0 0.0
  %6962 = vmatpush1.msra.mxu0 %v750
  %6963 = vmatprep.subr.mxu0 0.0
  %6964 = vmatpush1.msra.mxu0 %v751
  %6965 = vmatprep.subr.mxu0 0.0
  %6966 = vmatpush1.msra.mxu0 %v752
  %6967 = vmatprep.subr.mxu0 0.0
  %6968 = vmatpush1.msra.mxu0 %v753
  %6969 = vmatprep.subr.mxu0 0.0
  %6970 = vmatpush1.msra.mxu0 %v754
  %6971 = vmatprep.subr.mxu0 0.0
  %6972 = vmatpush1.msra.mxu0 %v755
  %6973 = vmatprep.subr.mxu0 0.0
  %6974 = vmatpush1.msra.mxu0 %v756
  %6975 = vmatprep.subr.mxu0 0.0
  %6976 = vmatpush1.msra.mxu0 %v757
  %6977 = vmatprep.subr.mxu0 0.0
  %6978 = vmatpush1.msra.mxu0 %v758
  %6979 = vmatprep.mubr.f32.mxu0 %v6880
  %6980 = vmatmul.mubr.f32.gmra.mrb[0].mxu0 %v6879
  %v6981 = vpop.f32.mrb[0].mxu0
  %v6982 = vadd.f32 0.0, %v6981
  %v6983 = vpop.f32.mrb[0].mxu0
  %6984 = vmatprep.mubr.f32.mxu0 %v6884
  %6985 = vmatmul.mubr.f32.gmra.mrb[0].mxu0 %v6883
  %v6986 = vpop.f32.mrb[0].mxu0
  %v6987 = vadd.f32 0.0, %v6986
  %v6988 = vpop.f32.mrb[0].mxu0
  %6989 = vmatprep.mubr.f32.mxu0 %v6888
  %6990 = vmatmul.mubr.f32.gmra.mrb[0].mxu0 %v6887
  %v6991 = vpop.f32.mrb[0].mxu0
  %v6992 = vadd.f32 0.0, %v6991
  %v6993 = vpop.f32.mrb[0].mxu0
  %6994 = vmatprep.mubr.f32.mxu0 %v6892
  %6995 = vmatmul.mubr.f32.gmra.mrb[0].mxu0 %v6891
  %v6996 = vpop.f32.mrb[0].mxu0
  %v6997 = vadd.f32 0.0, %v6996
  %v6998 = vpop.f32.mrb[0].mxu0
  %6999 = vmatprep.mubr.f32.mxu0 %v6896
  %7000 = vmatmul.mubr.f32.gmra.mrb[0].mxu0 %v6895
  %v7001 = vpop.f32.mrb[0].mxu0
  %v7002 = vadd.f32 0.0, %v7001
  %v7003 = vpop.f32.mrb[0].mxu0
  %7004 = vmatprep.mubr.f32.mxu0 %v6900
  %7005 = vmatmul.mubr.f32.gmra.mrb[0].mxu0 %v6899
  %v7006 = vpop.f32.mrb[0].mxu0
  %v7007 = vadd.f32 0.0, %v7006
  %v7008 = vpop.f32.mrb[0].mxu0
  %7009 = vmatprep.mubr.f32.mxu0 %v6904
  %7010 = vmatmul.mubr.f32.gmra.mrb[0].mxu0 %v6903
  %v7011 = vpop.f32.mrb[0].mxu0
  %v7012 = vadd.f32 0.0, %v7011
  %v7013 = vpop.f32.mrb[0].mxu0
  %7014 = vmatprep.mubr.f32.mxu0 %v6908
  %7015 = vmatmul.mubr.f32.gmra.mrb[0].mxu0 %v6907
  %v7016 = vpop.f32.mrb[0].mxu0
  %v7017 = vadd.f32 0.0, %v7016
  %v7018 = vpop.f32.mrb[0].mxu0
  %7019 = vmatprep.mubr.f32.mxu0 %v6912
  %7020 = vmatmul.mubr.f32.gmra.mrb[0].mxu0 %v6911
  %v7021 = vpop.f32.mrb[0].mxu0
  %v7022 = vadd.f32 0.0, %v7021
  %v7023 = vpop.f32.mrb[0].mxu0
  %7024 = vdwg.mxu0
  %7025 = vmatprep.subr.mxu0 0.0
  %7026 = vmatpush1.msra.mxu0 %v759
  %7027 = vmatprep.subr.mxu0 0.0
  %7028 = vmatpush1.msra.mxu0 %v760
  %7029 = vmatprep.subr.mxu0 0.0
  %7030 = vmatpush1.msra.mxu0 %v761
  %7031 = vmatprep.subr.mxu0 0.0
  %7032 = vmatpush1.msra.mxu0 %v762
  %7033 = vmatprep.subr.mxu0 0.0
  %7034 = vmatpush1.msra.mxu0 %v763
  %7035 = vmatprep.subr.mxu0 0.0
  %7036 = vmatpush1.msra.mxu0 %v764
  %7037 = vmatprep.subr.mxu0 0.0
  %7038 = vmatpush1.msra.mxu0 %v765
  %7039 = vmatprep.subr.mxu0 0.0
  %7040 = vmatpush1.msra.mxu0 %v766
  %7041 = vmatprep.subr.mxu0 0.0
  %7042 = vmatpush1.msra.mxu0 %v767
  %7043 = vmatprep.subr.mxu0 0.0
  %7044 = vmatpush1.msra.mxu0 %v768
  %7045 = vmatprep.subr.mxu0 0.0
  %7046 = vmatpush1.msra.mxu0 %v769
  %7047 = vmatprep.subr.mxu0 0.0
  %7048 = vmatpush1.msra.mxu0 %v770
  %7049 = vmatprep.subr.mxu0 0.0
  %7050 = vmatpush1.msra.mxu0 %v771
  %7051 = vmatprep.subr.mxu0 0.0
  %7052 = vmatpush1.msra.mxu0 %v772
  %7053 = vmatprep.subr.mxu0 0.0
  %7054 = vmatpush1.msra.mxu0 %v773
  %7055 = vmatprep.subr.mxu0 0.0
  %7056 = vmatpush1.msra.mxu0 %v774
  %7057 = vmatprep.subr.mxu0 0.0
  %7058 = vmatpush1.msra.mxu0 %v775
  %7059 = vmatprep.subr.mxu0 0.0
  %7060 = vmatpush1.msra.mxu0 %v776
  %7061 = vmatprep.subr.mxu0 0.0
  %7062 = vmatpush1.msra.mxu0 %v777
  %7063 = vmatprep.subr.mxu0 0.0
  %7064 = vmatpush1.msra.mxu0 %v778
  %7065 = vmatprep.subr.mxu0 0.0
  %7066 = vmatpush1.msra.mxu0 %v779
  %7067 = vmatprep.subr.mxu0 0.0
  %7068 = vmatpush1.msra.mxu0 %v780
  %7069 = vmatprep.subr.mxu0 0.0
  %7070 = vmatpush1.msra.mxu0 %v781
  %7071 = vmatprep.subr.mxu0 0.0
  %7072 = vmatpush1.msra.mxu0 %v782
  %7073 = vmatprep.subr.mxu0 0.0
  %7074 = vmatpush1.msra.mxu0 %v783
  %7075 = vmatprep.subr.mxu0 0.0
  %7076 = vmatpush1.msra.mxu0 %v784
  %7077 = vmatprep.subr.mxu0 0.0
  %7078 = vmatpush1.msra.mxu0 %v785
  %7079 = vmatprep.subr.mxu0 0.0
  %7080 = vmatpush1.msra.mxu0 %v786
  %7081 = vmatprep.subr.mxu0 0.0
  %7082 = vmatpush1.msra.mxu0 %v787
  %7083 = vmatprep.subr.mxu0 0.0
  %7084 = vmatpush1.msra.mxu0 %v788
  %7085 = vmatprep.subr.mxu0 0.0
  %7086 = vmatpush1.msra.mxu0 %v789
  %7087 = vmatprep.subr.mxu0 0.0
  %7088 = vmatpush1.msra.mxu0 %v790
  %7089 = vmatprep.mubr.f32.mxu0 %v6882
  %7090 = vmatmul.mubr.f32.gmra.mrb[0].mxu0 %v6881
  %v7091 = vpop.f32.mrb[0].mxu0
  %v7092 = vadd.f32 %v6982, %v7091
  %v7093 = vpop.f32.mrb[0].mxu0
  %7094 = vmatprep.mubr.f32.mxu0 %v6886
  %7095 = vmatmul.mubr.f32.gmra.mrb[0].mxu0 %v6885
  %v7096 = vpop.f32.mrb[0].mxu0
  %v7097 = vadd.f32 %v6987, %v7096
  %v7098 = vpop.f32.mrb[0].mxu0
  %7099 = vmatprep.mubr.f32.mxu0 %v6890
  %7100 = vmatmul.mubr.f32.gmra.mrb[0].mxu0 %v6889
  %v7101 = vpop.f32.mrb[0].mxu0
  %v7102 = vadd.f32 %v6992, %v7101
  %v7103 = vpop.f32.mrb[0].mxu0
  %7104 = vmatprep.mubr.f32.mxu0 %v6894
  %7105 = vmatmul.mubr.f32.gmra.mrb[0].mxu0 %v6893
  %v7106 = vpop.f32.mrb[0].mxu0
  %v7107 = vadd.f32 %v6997, %v7106
  %v7108 = vpop.f32.mrb[0].mxu0
  %7109 = vmatprep.mubr.f32.mxu0 %v6898
  %7110 = vmatmul.mubr.f32.gmra.mrb[0].mxu0 %v6897
  %v7111 = vpop.f32.mrb[0].mxu0
  %v7112 = vadd.f32 %v7002, %v7111
  %v7113 = vpop.f32.mrb[0].mxu0
  %7114 = vmatprep.mubr.f32.mxu0 %v6902
  %7115 = vmatmul.mubr.f32.gmra.mrb[0].mxu0 %v6901
  %v7116 = vpop.f32.mrb[0].mxu0
  %v7117 = vadd.f32 %v7007, %v7116
  %v7118 = vpop.f32.mrb[0].mxu0
  %7119 = vmatprep.mubr.f32.mxu0 %v6906
  %7120 = vmatmul.mubr.f32.gmra.mrb[0].mxu0 %v6905
  %v7121 = vpop.f32.mrb[0].mxu0
  %v7122 = vadd.f32 %v7012, %v7121
  %v7123 = vpop.f32.mrb[0].mxu0
  %7124 = vmatprep.mubr.f32.mxu0 %v6910
  %7125 = vmatmul.mubr.f32.gmra.mrb[0].mxu0 %v6909
  %v7126 = vpop.f32.mrb[0].mxu0
  %v7127 = vadd.f32 %v7017, %v7126
  %v7128 = vpop.f32.mrb[0].mxu0
  %7129 = vmatprep.mubr.f32.mxu0 %v6914
  %7130 = vmatmul.mubr.f32.gmra.mrb[0].mxu0 %v6913
  %v7131 = vpop.f32.mrb[0].mxu0
  %v7132 = vadd.f32 %v7022, %v7131
  %v7133 = vpop.f32.mrb[0].mxu0
  %7134 = vdwg.mxu0
  %v7135 = vld [vmem:[%s4 + $0x1e0] sm:$0xff]
  %v7136 = vld [vmem:[%s4 + $0x1e8] sm:$0xff]
  %v7137 = vld [vmem:[%s4 + $0x1f0] sm:$0xff]
  %v7138 = vld [vmem:[%s4 + $0x1f8] sm:$0xff]
  %v7140 = vsel %vm1312, %v7092, 0
  %v7143 = vsel %vm1312, %v7097, 0
  %v7146 = vsel %vm1312, %v7102, 0
  %v7149 = vsel %vm1312, %v7107, 0
  %v7152 = vsel %vm1312, %v7112, 0
  %v7155 = vsel %vm1312, %v7117, 0
  %v7158 = vsel %vm1312, %v7122, 0
  %v7161 = vsel %vm1312, %v7127, 0
  %v7164 = vsel %vm1312, %v7132, 0
  %7166 = vmatprep.subr.mxu0 0.0
  %7167 = vmatpush1.msra.mxu0 %v7135
  %7168 = vmatprep.subr.mxu0 0.0
  %7169 = vmatpush1.msra.mxu0 %v7136
  %7170 = vmatprep.subr.mxu0 0.0
  %7171 = vmatpush1.msra.mxu0 %v7137
  %7172 = vmatprep.subr.mxu0 0.0
  %7173 = vmatpush1.msra.mxu0 %v7138
  %7174 = vmatprep.subr.mxu0 0.0
  %7175 = vmatpush1.msra.mxu0 0.0
  %7176 = vmatprep.subr.mxu0 0.0
  %7177 = vmatpush1.msra.mxu0 0.0
  %7178 = vmatprep.subr.mxu0 0.0
  %7179 = vmatpush1.msra.mxu0 0.0
  %7180 = vmatprep.subr.mxu0 0.0
  %7181 = vmatpush1.msra.mxu0 0.0
  %7182 = vmatprep.subr.mxu0 0.0
  %7183 = vmatpush1.msra.mxu0 0.0
  %7184 = vmatprep.subr.mxu0 0.0
  %7185 = vmatpush1.msra.mxu0 0.0
  %7186 = vmatprep.subr.mxu0 0.0
  %7187 = vmatpush1.msra.mxu0 0.0
  %7188 = vmatprep.subr.mxu0 0.0
  %7189 = vmatpush1.msra.mxu0 0.0
  %7190 = vmatprep.subr.mxu0 0.0
  %7191 = vmatpush1.msra.mxu0 0.0
  %7192 = vmatprep.subr.mxu0 0.0
  %7193 = vmatpush1.msra.mxu0 0.0
  %7194 = vmatprep.subr.mxu0 0.0
  %7195 = vmatpush1.msra.mxu0 0.0
  %7196 = vmatprep.subr.mxu0 0.0
  %7197 = vmatpush1.msra.mxu0 0.0
  %7198 = vmatprep.subr.mxu0 0.0
  %7199 = vmatpush1.msra.mxu0 0.0
  %7200 = vmatprep.subr.mxu0 0.0
  %7201 = vmatpush1.msra.mxu0 0.0
  %7202 = vmatprep.subr.mxu0 0.0
  %7203 = vmatpush1.msra.mxu0 0.0
  %7204 = vmatprep.subr.mxu0 0.0
  %7205 = vmatpush1.msra.mxu0 0.0
  %7206 = vmatprep.subr.mxu0 0.0
  %7207 = vmatpush1.msra.mxu0 0.0
  %7208 = vmatprep.subr.mxu0 0.0
  %7209 = vmatpush1.msra.mxu0 0.0
  %7210 = vmatprep.subr.mxu0 0.0
  %7211 = vmatpush1.msra.mxu0 0.0
  %7212 = vmatprep.subr.mxu0 0.0
  %7213 = vmatpush1.msra.mxu0 0.0
  %7214 = vmatprep.subr.mxu0 0.0
  %7215 = vmatpush1.msra.mxu0 0.0
  %7216 = vmatprep.subr.mxu0 0.0
  %7217 = vmatpush1.msra.mxu0 0.0
  %7218 = vmatprep.subr.mxu0 0.0
  %7219 = vmatpush1.msra.mxu0 0.0
  %7220 = vmatprep.subr.mxu0 0.0
  %7221 = vmatpush1.msra.mxu0 0.0
  %7222 = vmatprep.subr.mxu0 0.0
  %7223 = vmatpush1.msra.mxu0 0.0
  %7224 = vmatprep.subr.mxu0 0.0
  %7225 = vmatpush1.msra.mxu0 0.0
  %7226 = vmatprep.subr.mxu0 0.0
  %7227 = vmatpush1.msra.mxu0 0.0
  %7228 = vmatprep.subr.mxu0 0.0
  %7229 = vmatpush1.msra.mxu0 0.0
  %7230 = vmatprep.mubr.f32.mxu0 0.0
  %7231 = vmatmul.mubr.f32.gmra.mrb[0].mxu0 %v7140
  %v7232 = vpop.f32.mrb[0].mxu0
  %v7233 = vadd.f32 0.0, %v7232
  %v7234 = vpop.f32.mrb[0].mxu0
  %7235 = vmatprep.mubr.f32.mxu0 0.0
  %7236 = vmatmul.mubr.f32.gmra.mrb[0].mxu0 %v7143
  %v7237 = vpop.f32.mrb[0].mxu0
  %v7238 = vadd.f32 0.0, %v7237
  %v7239 = vpop.f32.mrb[0].mxu0
  %7240 = vmatprep.mubr.f32.mxu0 0.0
  %7241 = vmatmul.mubr.f32.gmra.mrb[0].mxu0 %v7146
  %v7242 = vpop.f32.mrb[0].mxu0
  %v7243 = vadd.f32 0.0, %v7242
  %v7244 = vpop.f32.mrb[0].mxu0
  %7245 = vmatprep.mubr.f32.mxu0 0.0
  %7246 = vmatmul.mubr.f32.gmra.mrb[0].mxu0 %v7149
  %v7247 = vpop.f32.mrb[0].mxu0
  %v7248 = vadd.f32 0.0, %v7247
  %v7249 = vpop.f32.mrb[0].mxu0
  %7250 = vmatprep.mubr.f32.mxu0 0.0
  %7251 = vmatmul.mubr.f32.gmra.mrb[0].mxu0 %v7152
  %v7252 = vpop.f32.mrb[0].mxu0
  %v7253 = vadd.f32 0.0, %v7252
  %v7254 = vpop.f32.mrb[0].mxu0
  %7255 = vmatprep.mubr.f32.mxu0 0.0
  %7256 = vmatmul.mubr.f32.gmra.mrb[0].mxu0 %v7155
  %v7257 = vpop.f32.mrb[0].mxu0
  %v7258 = vadd.f32 0.0, %v7257
  %v7259 = vpop.f32.mrb[0].mxu0
  %7260 = vmatprep.mubr.f32.mxu0 0.0
  %7261 = vmatmul.mubr.f32.gmra.mrb[0].mxu0 %v7158
  %v7262 = vpop.f32.mrb[0].mxu0
  %v7263 = vadd.f32 0.0, %v7262
  %v7264 = vpop.f32.mrb[0].mxu0
  %7265 = vmatprep.mubr.f32.mxu0 0.0
  %7266 = vmatmul.mubr.f32.gmra.mrb[0].mxu0 %v7161
  %v7267 = vpop.f32.mrb[0].mxu0
  %v7268 = vadd.f32 0.0, %v7267
  %v7269 = vpop.f32.mrb[0].mxu0
  %7270 = vmatprep.mubr.f32.mxu0 0.0
  %7271 = vmatmul.mubr.f32.gmra.mrb[0].mxu0 %v7164
  %v7272 = vpop.f32.mrb[0].mxu0
  %v7273 = vadd.f32 0.0, %v7272
  %v7274 = vpop.f32.mrb[0].mxu0
  %7275 = vdwg.mxu0
  %v7276 = vadd.f32 %v6869, %v7233
  %v7277 = vadd.f32 %v6870, %v7238
  %v7278 = vadd.f32 %v6871, %v7243
  %v7279 = vadd.f32 %v6872, %v7248
  %v7280 = vadd.f32 %v6873, %v7253
  %v7281 = vadd.f32 %v6874, %v7258
  %v7282 = vadd.f32 %v6875, %v7263
  %v7283 = vadd.f32 %v6876, %v7268
  %v7284 = vadd.f32 %v6877, %v7273
  %v7285 = vld [vmem:[%s5] sm:$0x1]
  %v7287 = vlaneseq
  %v7288 = vshrl.u32 %v7287, 7
  %v7289 = vsub.s32 0, %v7288
  %v7290 = vrot.slane %v7285, %v7289
  %v7292 = vadd.f32 %v7276, %v7290
  %v7293 = vadd.f32 %v7277, %v7290
  %v7294 = vadd.f32 %v7278, %v7290
  %v7295 = vadd.f32 %v7279, %v7290
  %v7296 = vadd.f32 %v7280, %v7290
  %v7297 = vadd.f32 %v7281, %v7290
  %v7298 = vadd.f32 %v7282, %v7290
  %v7299 = vadd.f32 %v7283, %v7290
  %v7300 = vadd.f32 %v7284, %v7290
  %v7301 = vmax.f32 %v7292, 0.0
  %v7302 = vmax.f32 %v7293, 0.0
  %v7303 = vmax.f32 %v7294, 0.0
  %v7304 = vmax.f32 %v7295, 0.0
  %v7305 = vmax.f32 %v7296, 0.0
  %v7306 = vmax.f32 %v7297, 0.0
  %v7307 = vmax.f32 %v7298, 0.0
  %v7308 = vmax.f32 %v7299, 0.0
  %v7309 = vmax.f32 %v7300, 0.0
  %v7310 = vld [vmem:[%s6] sm:$0xff]
  %vm7311 = vcmask 588800
  %v7313 = vsel %vm7311, %v7310, 0
  %7315 = vmatprep.subr.mxu0 0.0
  %7316 = vmatpush1.msra.mxu0 %v7301
  %7317 = vmatprep.subr.mxu0 0.0
  %7318 = vmatpush1.msra.mxu0 %v7302
  %7319 = vmatprep.subr.mxu0 0.0
  %7320 = vmatpush1.msra.mxu0 %v7303
  %7321 = vmatprep.subr.mxu0 0.0
  %7322 = vmatpush1.msra.mxu0 %v7304
  %7323 = vmatprep.subr.mxu0 0.0
  %7324 = vmatpush1.msra.mxu0 %v7305
  %7325 = vmatprep.subr.mxu0 0.0
  %7326 = vmatpush1.msra.mxu0 %v7306
  %7327 = vmatprep.subr.mxu0 0.0
  %7328 = vmatpush1.msra.mxu0 %v7307
  %7329 = vmatprep.subr.mxu0 0.0
  %7330 = vmatpush1.msra.mxu0 %v7308
  %7331 = vmatprep.subr.mxu0 0.0
  %7332 = vmatpush1.msra.mxu0 %v7309
  %7333 = vmatprep.subr.mxu0 0.0
  %7334 = vmatpush1.msra.mxu0 0.0
  %7335 = vmatprep.subr.mxu0 0.0
  %7336 = vmatpush1.msra.mxu0 0.0
  %7337 = vmatprep.subr.mxu0 0.0
  %7338 = vmatpush1.msra.mxu0 0.0
  %7339 = vmatprep.subr.mxu0 0.0
  %7340 = vmatpush1.msra.mxu0 0.0
  %7341 = vmatprep.subr.mxu0 0.0
  %7342 = vmatpush1.msra.mxu0 0.0
  %7343 = vmatprep.subr.mxu0 0.0
  %7344 = vmatpush1.msra.mxu0 0.0
  %7345 = vmatprep.subr.mxu0 0.0
  %7346 = vmatpush1.msra.mxu0 0.0
  %7347 = vmatprep.subr.mxu0 0.0
  %7348 = vmatpush1.msra.mxu0 0.0
  %7349 = vmatprep.subr.mxu0 0.0
  %7350 = vmatpush1.msra.mxu0 0.0
  %7351 = vmatprep.subr.mxu0 0.0
  %7352 = vmatpush1.msra.mxu0 0.0
  %7353 = vmatprep.subr.mxu0 0.0
  %7354 = vmatpush1.msra.mxu0 0.0
  %7355 = vmatprep.subr.mxu0 0.0
  %7356 = vmatpush1.msra.mxu0 0.0
  %7357 = vmatprep.subr.mxu0 0.0
  %7358 = vmatpush1.msra.mxu0 0.0
  %7359 = vmatprep.subr.mxu0 0.0
  %7360 = vmatpush1.msra.mxu0 0.0
  %7361 = vmatprep.subr.mxu0 0.0
  %7362 = vmatpush1.msra.mxu0 0.0
  %7363 = vmatprep.subr.mxu0 0.0
  %7364 = vmatpush1.msra.mxu0 0.0
  %7365 = vmatprep.subr.mxu0 0.0
  %7366 = vmatpush1.msra.mxu0 0.0
  %7367 = vmatprep.subr.mxu0 0.0
  %7368 = vmatpush1.msra.mxu0 0.0
  %7369 = vmatprep.subr.mxu0 0.0
  %7370 = vmatpush1.msra.mxu0 0.0
  %7371 = vmatprep.subr.mxu0 0.0
  %7372 = vmatpush1.msra.mxu0 0.0
  %7373 = vmatprep.subr.mxu0 0.0
  %7374 = vmatpush1.msra.mxu0 0.0
  %7375 = vmatprep.subr.mxu0 0.0
  %7376 = vmatpush1.msra.mxu0 0.0
  %7377 = vmatprep.subr.mxu0 0.0
  %7378 = vmatpush1.msra.mxu0 0.0
  %7379 = vmatprep.mubr.f32.mxu0 0.0
  %7380 = vmatmul.mubr.f32.gmra.mrb[0].mxu0 %v7313
  %v7381 = vpop.f32.mrb[0].mxu0
  %v7382 = vadd.f32 0.0, %v7381
  %v7383 = vpop.f32.mrb[0].mxu0
  %7384 = vdwg.mxu0
  %v7385 = vld [vmem:[%s7] sm:$0xff]
  %v7386 = vld [vmem:[%s7 + $0x8] sm:$0xff]
  %v7387 = vld [vmem:[%s7 + $0x10] sm:$0xff]
  %v7388 = vld [vmem:[%s7 + $0x18] sm:$0xff]
  %v7389 = vld [vmem:[%s7 + $0x20] sm:$0xff]
  %v7390 = vld [vmem:[%s7 + $0x28] sm:$0xff]
  %v7391 = vld [vmem:[%s7 + $0x30] sm:$0xff]
  %v7392 = vld [vmem:[%s7 + $0x38] sm:$0xff]
  %s7393 = scalar_lea.vmem %s6, 8
  %v7394 = vld [vmem:[%s7393] sm:$0xff]
  %v7396 = vsel %vm7311, %v7394, 0
  %7398 = vmatprep.subr.mxu0 0.0
  %7399 = vmatpush1.msra.mxu0 %v7301
  %7400 = vmatprep.subr.mxu0 0.0
  %7401 = vmatpush1.msra.mxu0 %v7302
  %7402 = vmatprep.subr.mxu0 0.0
  %7403 = vmatpush1.msra.mxu0 %v7303
  %7404 = vmatprep.subr.mxu0 0.0
  %7405 = vmatpush1.msra.mxu0 %v7304
  %7406 = vmatprep.subr.mxu0 0.0
  %7407 = vmatpush1.msra.mxu0 %v7305
  %7408 = vmatprep.subr.mxu0 0.0
  %7409 = vmatpush1.msra.mxu0 %v7306
  %7410 = vmatprep.subr.mxu0 0.0
  %7411 = vmatpush1.msra.mxu0 %v7307
  %7412 = vmatprep.subr.mxu0 0.0
  %7413 = vmatpush1.msra.mxu0 %v7308
  %7414 = vmatprep.subr.mxu0 0.0
  %7415 = vmatpush1.msra.mxu0 %v7309
  %7416 = vmatprep.subr.mxu0 0.0
  %7417 = vmatpush1.msra.mxu0 0.0
  %7418 = vmatprep.subr.mxu0 0.0
  %7419 = vmatpush1.msra.mxu0 0.0
  %7420 = vmatprep.subr.mxu0 0.0
  %7421 = vmatpush1.msra.mxu0 0.0
  %7422 = vmatprep.subr.mxu0 0.0
  %7423 = vmatpush1.msra.mxu0 0.0
  %7424 = vmatprep.subr.mxu0 0.0
  %7425 = vmatpush1.msra.mxu0 0.0
  %7426 = vmatprep.subr.mxu0 0.0
  %7427 = vmatpush1.msra.mxu0 0.0
  %7428 = vmatprep.subr.mxu0 0.0
  %7429 = vmatpush1.msra.mxu0 0.0
  %7430 = vmatprep.subr.mxu0 0.0
  %7431 = vmatpush1.msra.mxu0 0.0
  %7432 = vmatprep.subr.mxu0 0.0
  %7433 = vmatpush1.msra.mxu0 0.0
  %7434 = vmatprep.subr.mxu0 0.0
  %7435 = vmatpush1.msra.mxu0 0.0
  %7436 = vmatprep.subr.mxu0 0.0
  %7437 = vmatpush1.msra.mxu0 0.0
  %7438 = vmatprep.subr.mxu0 0.0
  %7439 = vmatpush1.msra.mxu0 0.0
  %7440 = vmatprep.subr.mxu0 0.0
  %7441 = vmatpush1.msra.mxu0 0.0
  %7442 = vmatprep.subr.mxu0 0.0
  %7443 = vmatpush1.msra.mxu0 0.0
  %7444 = vmatprep.subr.mxu0 0.0
  %7445 = vmatpush1.msra.mxu0 0.0
  %7446 = vmatprep.subr.mxu0 0.0
  %7447 = vmatpush1.msra.mxu0 0.0
  %7448 = vmatprep.subr.mxu0 0.0
  %7449 = vmatpush1.msra.mxu0 0.0
  %7450 = vmatprep.subr.mxu0 0.0
  %7451 = vmatpush1.msra.mxu0 0.0
  %7452 = vmatprep.subr.mxu0 0.0
  %7453 = vmatpush1.msra.mxu0 0.0
  %7454 = vmatprep.subr.mxu0 0.0
  %7455 = vmatpush1.msra.mxu0 0.0
  %7456 = vmatprep.subr.mxu0 0.0
  %7457 = vmatpush1.msra.mxu0 0.0
  %7458 = vmatprep.subr.mxu0 0.0
  %7459 = vmatpush1.msra.mxu0 0.0
  %7460 = vmatprep.subr.mxu0 0.0
  %7461 = vmatpush1.msra.mxu0 0.0
  %7462 = vmatprep.mubr.f32.mxu0 0.0
  %7463 = vmatmul.mubr.f32.gmra.mrb[0].mxu0 %v7396
  %v7464 = vpop.f32.mrb[0].mxu0
  %v7465 = vadd.f32 0.0, %v7464
  %v7466 = vpop.f32.mrb[0].mxu0
  %7467 = vdwg.mxu0
  %v7468 = vld [vmem:[%s7 + $0x40] sm:$0xff]
  %v7469 = vld [vmem:[%s7 + $0x48] sm:$0xff]
  %v7470 = vld [vmem:[%s7 + $0x50] sm:$0xff]
  %v7471 = vld [vmem:[%s7 + $0x58] sm:$0xff]
  %v7472 = vld [vmem:[%s7 + $0x60] sm:$0xff]
  %v7473 = vld [vmem:[%s7 + $0x68] sm:$0xff]
  %v7474 = vld [vmem:[%s7 + $0x70] sm:$0xff]
  %v7475 = vld [vmem:[%s7 + $0x78] sm:$0xff]
  %vm7476 = vcmask 523264
  %v7478 = vsel %vm7476, %v7465, 0
  %7480 = vmatprep.subr.mxu0 0.0
  %7481 = vmatpush1.msra.mxu0 %v7468
  %7482 = vmatprep.subr.mxu0 0.0
  %7483 = vmatpush1.msra.mxu0 %v7469
  %7484 = vmatprep.subr.mxu0 0.0
  %7485 = vmatpush1.msra.mxu0 %v7470
  %7486 = vmatprep.subr.mxu0 0.0
  %7487 = vmatpush1.msra.mxu0 %v7471
  %7488 = vmatprep.subr.mxu0 0.0
  %7489 = vmatpush1.msra.mxu0 %v7472
  %7490 = vmatprep.subr.mxu0 0.0
  %7491 = vmatpush1.msra.mxu0 %v7473
  %7492 = vmatprep.subr.mxu0 0.0
  %7493 = vmatpush1.msra.mxu0 %v7474
  %7494 = vmatprep.subr.mxu0 0.0
  %7495 = vmatpush1.msra.mxu0 %v7475
  %7496 = vmatprep.subr.mxu0 0.0
  %7497 = vmatpush1.msra.mxu0 0.0
  %7498 = vmatprep.subr.mxu0 0.0
  %7499 = vmatpush1.msra.mxu0 0.0
  %7500 = vmatprep.subr.mxu0 0.0
  %7501 = vmatpush1.msra.mxu0 0.0
  %7502 = vmatprep.subr.mxu0 0.0
  %7503 = vmatpush1.msra.mxu0 0.0
  %7504 = vmatprep.subr.mxu0 0.0
  %7505 = vmatpush1.msra.mxu0 0.0
  %7506 = vmatprep.subr.mxu0 0.0
  %7507 = vmatpush1.msra.mxu0 0.0
  %7508 = vmatprep.subr.mxu0 0.0
  %7509 = vmatpush1.msra.mxu0 0.0
  %7510 = vmatprep.subr.mxu0 0.0
  %7511 = vmatpush1.msra.mxu0 0.0
  %7512 = vmatprep.subr.mxu0 0.0
  %7513 = vmatpush1.msra.mxu0 0.0
  %7514 = vmatprep.subr.mxu0 0.0
  %7515 = vmatpush1.msra.mxu0 0.0
  %7516 = vmatprep.subr.mxu0 0.0
  %7517 = vmatpush1.msra.mxu0 0.0
  %7518 = vmatprep.subr.mxu0 0.0
  %7519 = vmatpush1.msra.mxu0 0.0
  %7520 = vmatprep.subr.mxu0 0.0
  %7521 = vmatpush1.msra.mxu0 0.0
  %7522 = vmatprep.subr.mxu0 0.0
  %7523 = vmatpush1.msra.mxu0 0.0
  %7524 = vmatprep.subr.mxu0 0.0
  %7525 = vmatpush1.msra.mxu0 0.0
  %7526 = vmatprep.subr.mxu0 0.0
  %7527 = vmatpush1.msra.mxu0 0.0
  %7528 = vmatprep.subr.mxu0 0.0
  %7529 = vmatpush1.msra.mxu0 0.0
  %7530 = vmatprep.subr.mxu0 0.0
  %7531 = vmatpush1.msra.mxu0 0.0
  %7532 = vmatprep.subr.mxu0 0.0
  %7533 = vmatpush1.msra.mxu0 0.0
  %7534 = vmatprep.subr.mxu0 0.0
  %7535 = vmatpush1.msra.mxu0 0.0
  %7536 = vmatprep.subr.mxu0 0.0
  %7537 = vmatpush1.msra.mxu0 0.0
  %7538 = vmatprep.subr.mxu0 0.0
  %7539 = vmatpush1.msra.mxu0 0.0
  %7540 = vmatprep.subr.mxu0 0.0
  %7541 = vmatpush1.msra.mxu0 0.0
  %7542 = vmatprep.subr.mxu0 0.0
  %7543 = vmatpush1.msra.mxu0 0.0
  %7544 = vmatprep.mubr.f32.mxu0 0.0
  %7545 = vmatmul.mubr.f32.gmra.mrb[0].mxu0 %v7478
  %v7546 = vpop.f32.mrb[0].mxu0
  %v7547 = vadd.f32 0.0, %v7546
  %v7548 = vpop.f32.mrb[0].mxu0
  %7549 = vdwg.mxu0
  %v7551 = vsel %vm7476, %v7382, 0
  %7553 = vmatprep.subr.mxu0 0.0
  %7554 = vmatpush1.msra.mxu0 %v7385
  %7555 = vmatprep.subr.mxu0 0.0
  %7556 = vmatpush1.msra.mxu0 %v7386
  %7557 = vmatprep.subr.mxu0 0.0
  %7558 = vmatpush1.msra.mxu0 %v7387
  %7559 = vmatprep.subr.mxu0 0.0
  %7560 = vmatpush1.msra.mxu0 %v7388
  %7561 = vmatprep.subr.mxu0 0.0
  %7562 = vmatpush1.msra.mxu0 %v7389
  %7563 = vmatprep.subr.mxu0 0.0
  %7564 = vmatpush1.msra.mxu0 %v7390
  %7565 = vmatprep.subr.mxu0 0.0
  %7566 = vmatpush1.msra.mxu0 %v7391
  %7567 = vmatprep.subr.mxu0 0.0
  %7568 = vmatpush1.msra.mxu0 %v7392
  %7569 = vmatprep.subr.mxu0 0.0
  %7570 = vmatpush1.msra.mxu0 0.0
  %7571 = vmatprep.subr.mxu0 0.0
  %7572 = vmatpush1.msra.mxu0 0.0
  %7573 = vmatprep.subr.mxu0 0.0
  %7574 = vmatpush1.msra.mxu0 0.0
  %7575 = vmatprep.subr.mxu0 0.0
  %7576 = vmatpush1.msra.mxu0 0.0
  %7577 = vmatprep.subr.mxu0 0.0
  %7578 = vmatpush1.msra.mxu0 0.0
  %7579 = vmatprep.subr.mxu0 0.0
  %7580 = vmatpush1.msra.mxu0 0.0
  %7581 = vmatprep.subr.mxu0 0.0
  %7582 = vmatpush1.msra.mxu0 0.0
  %7583 = vmatprep.subr.mxu0 0.0
  %7584 = vmatpush1.msra.mxu0 0.0
  %7585 = vmatprep.subr.mxu0 0.0
  %7586 = vmatpush1.msra.mxu0 0.0
  %7587 = vmatprep.subr.mxu0 0.0
  %7588 = vmatpush1.msra.mxu0 0.0
  %7589 = vmatprep.subr.mxu0 0.0
  %7590 = vmatpush1.msra.mxu0 0.0
  %7591 = vmatprep.subr.mxu0 0.0
  %7592 = vmatpush1.msra.mxu0 0.0
  %7593 = vmatprep.subr.mxu0 0.0
  %7594 = vmatpush1.msra.mxu0 0.0
  %7595 = vmatprep.subr.mxu0 0.0
  %7596 = vmatpush1.msra.mxu0 0.0
  %7597 = vmatprep.subr.mxu0 0.0
  %7598 = vmatpush1.msra.mxu0 0.0
  %7599 = vmatprep.subr.mxu0 0.0
  %7600 = vmatpush1.msra.mxu0 0.0
  %7601 = vmatprep.subr.mxu0 0.0
  %7602 = vmatpush1.msra.mxu0 0.0
  %7603 = vmatprep.subr.mxu0 0.0
  %7604 = vmatpush1.msra.mxu0 0.0
  %7605 = vmatprep.subr.mxu0 0.0
  %7606 = vmatpush1.msra.mxu0 0.0
  %7607 = vmatprep.subr.mxu0 0.0
  %7608 = vmatpush1.msra.mxu0 0.0
  %7609 = vmatprep.subr.mxu0 0.0
  %7610 = vmatpush1.msra.mxu0 0.0
  %7611 = vmatprep.subr.mxu0 0.0
  %7612 = vmatpush1.msra.mxu0 0.0
  %7613 = vmatprep.subr.mxu0 0.0
  %7614 = vmatpush1.msra.mxu0 0.0
  %7615 = vmatprep.subr.mxu0 0.0
  %7616 = vmatpush1.msra.mxu0 0.0
  %7617 = vmatprep.mubr.f32.mxu0 0.0
  %7618 = vmatmul.mubr.f32.gmra.mrb[0].mxu0 %v7551
  %v7619 = vpop.f32.mrb[0].mxu0
  %v7620 = vadd.f32 %v7547, %v7619
  %v7621 = vpop.f32.mrb[0].mxu0
  %7622 = vdwg.mxu0
  %s7623 = scalar_lea.vmem %s6, 16
  %v7624 = vld [vmem:[%s7623] sm:$0xff]
  %v7626 = vsel %vm7311, %v7624, 0
  %7628 = vmatprep.subr.mxu0 0.0
  %7629 = vmatpush1.msra.mxu0 %v7301
  %7630 = vmatprep.subr.mxu0 0.0
  %7631 = vmatpush1.msra.mxu0 %v7302
  %7632 = vmatprep.subr.mxu0 0.0
  %7633 = vmatpush1.msra.mxu0 %v7303
  %7634 = vmatprep.subr.mxu0 0.0
  %7635 = vmatpush1.msra.mxu0 %v7304
  %7636 = vmatprep.subr.mxu0 0.0
  %7637 = vmatpush1.msra.mxu0 %v7305
  %7638 = vmatprep.subr.mxu0 0.0
  %7639 = vmatpush1.msra.mxu0 %v7306
  %7640 = vmatprep.subr.mxu0 0.0
  %7641 = vmatpush1.msra.mxu0 %v7307
  %7642 = vmatprep.subr.mxu0 0.0
  %7643 = vmatpush1.msra.mxu0 %v7308
  %7644 = vmatprep.subr.mxu0 0.0
  %7645 = vmatpush1.msra.mxu0 %v7309
  %7646 = vmatprep.subr.mxu0 0.0
  %7647 = vmatpush1.msra.mxu0 0.0
  %7648 = vmatprep.subr.mxu0 0.0
  %7649 = vmatpush1.msra.mxu0 0.0
  %7650 = vmatprep.subr.mxu0 0.0
  %7651 = vmatpush1.msra.mxu0 0.0
  %7652 = vmatprep.subr.mxu0 0.0
  %7653 = vmatpush1.msra.mxu0 0.0
  %7654 = vmatprep.subr.mxu0 0.0
  %7655 = vmatpush1.msra.mxu0 0.0
  %7656 = vmatprep.subr.mxu0 0.0
  %7657 = vmatpush1.msra.mxu0 0.0
  %7658 = vmatprep.subr.mxu0 0.0
  %7659 = vmatpush1.msra.mxu0 0.0
  %7660 = vmatprep.subr.mxu0 0.0
  %7661 = vmatpush1.msra.mxu0 0.0
  %7662 = vmatprep.subr.mxu0 0.0
  %7663 = vmatpush1.msra.mxu0 0.0
  %7664 = vmatprep.subr.mxu0 0.0
  %7665 = vmatpush1.msra.mxu0 0.0
  %7666 = vmatprep.subr.mxu0 0.0
  %7667 = vmatpush1.msra.mxu0 0.0
  %7668 = vmatprep.subr.mxu0 0.0
  %7669 = vmatpush1.msra.mxu0 0.0
  %7670 = vmatprep.subr.mxu0 0.0
  %7671 = vmatpush1.msra.mxu0 0.0
  %7672 = vmatprep.subr.mxu0 0.0
  %7673 = vmatpush1.msra.mxu0 0.0
  %7674 = vmatprep.subr.mxu0 0.0
  %7675 = vmatpush1.msra.mxu0 0.0
  %7676 = vmatprep.subr.mxu0 0.0
  %7677 = vmatpush1.msra.mxu0 0.0
  %7678 = vmatprep.subr.mxu0 0.0
  %7679 = vmatpush1.msra.mxu0 0.0
  %7680 = vmatprep.subr.mxu0 0.0
  %7681 = vmatpush1.msra.mxu0 0.0
  %7682 = vmatprep.subr.mxu0 0.0
  %7683 = vmatpush1.msra.mxu0 0.0
  %7684 = vmatprep.subr.mxu0 0.0
  %7685 = vmatpush1.msra.mxu0 0.0
  %7686 = vmatprep.subr.mxu0 0.0
  %7687 = vmatpush1.msra.mxu0 0.0
  %7688 = vmatprep.subr.mxu0 0.0
  %7689 = vmatpush1.msra.mxu0 0.0
  %7690 = vmatprep.subr.mxu0 0.0
  %7691 = vmatpush1.msra.mxu0 0.0
  %7692 = vmatprep.mubr.f32.mxu0 0.0
  %7693 = vmatmul.mubr.f32.gmra.mrb[0].mxu0 %v7626
  %v7694 = vpop.f32.mrb[0].mxu0
  %v7695 = vadd.f32 0.0, %v7694
  %v7696 = vpop.f32.mrb[0].mxu0
  %7697 = vdwg.mxu0
  %v7698 = vld [vmem:[%s7 + $0x80] sm:$0xff]
  %v7699 = vld [vmem:[%s7 + $0x88] sm:$0xff]
  %v7700 = vld [vmem:[%s7 + $0x90] sm:$0xff]
  %v7701 = vld [vmem:[%s7 + $0x98] sm:$0xff]
  %v7702 = vld [vmem:[%s7 + $0xa0] sm:$0xff]
  %v7703 = vld [vmem:[%s7 + $0xa8] sm:$0xff]
  %v7704 = vld [vmem:[%s7 + $0xb0] sm:$0xff]
  %v7705 = vld [vmem:[%s7 + $0xb8] sm:$0xff]
  %v7707 = vsel %vm7476, %v7695, 0
  %7709 = vmatprep.subr.mxu0 0.0
  %7710 = vmatpush1.msra.mxu0 %v7698
  %7711 = vmatprep.subr.mxu0 0.0
  %7712 = vmatpush1.msra.mxu0 %v7699
  %7713 = vmatprep.subr.mxu0 0.0
  %7714 = vmatpush1.msra.mxu0 %v7700
  %7715 = vmatprep.subr.mxu0 0.0
  %7716 = vmatpush1.msra.mxu0 %v7701
  %7717 = vmatprep.subr.mxu0 0.0
  %7718 = vmatpush1.msra.mxu0 %v7702
  %7719 = vmatprep.subr.mxu0 0.0
  %7720 = vmatpush1.msra.mxu0 %v7703
  %7721 = vmatprep.subr.mxu0 0.0
  %7722 = vmatpush1.msra.mxu0 %v7704
  %7723 = vmatprep.subr.mxu0 0.0
  %7724 = vmatpush1.msra.mxu0 %v7705
  %7725 = vmatprep.subr.mxu0 0.0
  %7726 = vmatpush1.msra.mxu0 0.0
  %7727 = vmatprep.subr.mxu0 0.0
  %7728 = vmatpush1.msra.mxu0 0.0
  %7729 = vmatprep.subr.mxu0 0.0
  %7730 = vmatpush1.msra.mxu0 0.0
  %7731 = vmatprep.subr.mxu0 0.0
  %7732 = vmatpush1.msra.mxu0 0.0
  %7733 = vmatprep.subr.mxu0 0.0
  %7734 = vmatpush1.msra.mxu0 0.0
  %7735 = vmatprep.subr.mxu0 0.0
  %7736 = vmatpush1.msra.mxu0 0.0
  %7737 = vmatprep.subr.mxu0 0.0
  %7738 = vmatpush1.msra.mxu0 0.0
  %7739 = vmatprep.subr.mxu0 0.0
  %7740 = vmatpush1.msra.mxu0 0.0
  %7741 = vmatprep.subr.mxu0 0.0
  %7742 = vmatpush1.msra.mxu0 0.0
  %7743 = vmatprep.subr.mxu0 0.0
  %7744 = vmatpush1.msra.mxu0 0.0
  %7745 = vmatprep.subr.mxu0 0.0
  %7746 = vmatpush1.msra.mxu0 0.0
  %7747 = vmatprep.subr.mxu0 0.0
  %7748 = vmatpush1.msra.mxu0 0.0
  %7749 = vmatprep.subr.mxu0 0.0
  %7750 = vmatpush1.msra.mxu0 0.0
  %7751 = vmatprep.subr.mxu0 0.0
  %7752 = vmatpush1.msra.mxu0 0.0
  %7753 = vmatprep.subr.mxu0 0.0
  %7754 = vmatpush1.msra.mxu0 0.0
  %7755 = vmatprep.subr.mxu0 0.0
  %7756 = vmatpush1.msra.mxu0 0.0
  %7757 = vmatprep.subr.mxu0 0.0
  %7758 = vmatpush1.msra.mxu0 0.0
  %7759 = vmatprep.subr.mxu0 0.0
  %7760 = vmatpush1.msra.mxu0 0.0
  %7761 = vmatprep.subr.mxu0 0.0
  %7762 = vmatpush1.msra.mxu0 0.0
  %7763 = vmatprep.subr.mxu0 0.0
  %7764 = vmatpush1.msra.mxu0 0.0
  %7765 = vmatprep.subr.mxu0 0.0
  %7766 = vmatpush1.msra.mxu0 0.0
  %7767 = vmatprep.subr.mxu0 0.0
  %7768 = vmatpush1.msra.mxu0 0.0
  %7769 = vmatprep.subr.mxu0 0.0
  %7770 = vmatpush1.msra.mxu0 0.0
  %7771 = vmatprep.subr.mxu0 0.0
  %7772 = vmatpush1.msra.mxu0 0.0
  %7773 = vmatprep.mubr.f32.mxu0 0.0
  %7774 = vmatmul.mubr.f32.gmra.mrb[0].mxu0 %v7707
  %v7775 = vpop.f32.mrb[0].mxu0
  %v7776 = vadd.f32 0.0, %v7775
  %v7777 = vpop.f32.mrb[0].mxu0
  %7778 = vdwg.mxu0
  %v7779 = vadd.f32 %v7620, %v7776
  %s7780 = scalar_lea.vmem %s6, 24
  %v7781 = vld [vmem:[%s7780] sm:$0xff]
  %v7783 = vsel %vm7311, %v7781, 0
  %7785 = vmatprep.subr.mxu0 0.0
  %7786 = vmatpush1.msra.mxu0 %v7301
  %7787 = vmatprep.subr.mxu0 0.0
  %7788 = vmatpush1.msra.mxu0 %v7302
  %7789 = vmatprep.subr.mxu0 0.0
  %7790 = vmatpush1.msra.mxu0 %v7303
  %7791 = vmatprep.subr.mxu0 0.0
  %7792 = vmatpush1.msra.mxu0 %v7304
  %7793 = vmatprep.subr.mxu0 0.0
  %7794 = vmatpush1.msra.mxu0 %v7305
  %7795 = vmatprep.subr.mxu0 0.0
  %7796 = vmatpush1.msra.mxu0 %v7306
  %7797 = vmatprep.subr.mxu0 0.0
  %7798 = vmatpush1.msra.mxu0 %v7307
  %7799 = vmatprep.subr.mxu0 0.0
  %7800 = vmatpush1.msra.mxu0 %v7308
  %7801 = vmatprep.subr.mxu0 0.0
  %7802 = vmatpush1.msra.mxu0 %v7309
  %7803 = vmatprep.subr.mxu0 0.0
  %7804 = vmatpush1.msra.mxu0 0.0
  %7805 = vmatprep.subr.mxu0 0.0
  %7806 = vmatpush1.msra.mxu0 0.0
  %7807 = vmatprep.subr.mxu0 0.0
  %7808 = vmatpush1.msra.mxu0 0.0
  %7809 = vmatprep.subr.mxu0 0.0
  %7810 = vmatpush1.msra.mxu0 0.0
  %7811 = vmatprep.subr.mxu0 0.0
  %7812 = vmatpush1.msra.mxu0 0.0
  %7813 = vmatprep.subr.mxu0 0.0
  %7814 = vmatpush1.msra.mxu0 0.0
  %7815 = vmatprep.subr.mxu0 0.0
  %7816 = vmatpush1.msra.mxu0 0.0
  %7817 = vmatprep.subr.mxu0 0.0
  %7818 = vmatpush1.msra.mxu0 0.0
  %7819 = vmatprep.subr.mxu0 0.0
  %7820 = vmatpush1.msra.mxu0 0.0
  %7821 = vmatprep.subr.mxu0 0.0
  %7822 = vmatpush1.msra.mxu0 0.0
  %7823 = vmatprep.subr.mxu0 0.0
  %7824 = vmatpush1.msra.mxu0 0.0
  %7825 = vmatprep.subr.mxu0 0.0
  %7826 = vmatpush1.msra.mxu0 0.0
  %7827 = vmatprep.subr.mxu0 0.0
  %7828 = vmatpush1.msra.mxu0 0.0
  %7829 = vmatprep.subr.mxu0 0.0
  %7830 = vmatpush1.msra.mxu0 0.0
  %7831 = vmatprep.subr.mxu0 0.0
  %7832 = vmatpush1.msra.mxu0 0.0
  %7833 = vmatprep.subr.mxu0 0.0
  %7834 = vmatpush1.msra.mxu0 0.0
  %7835 = vmatprep.subr.mxu0 0.0
  %7836 = vmatpush1.msra.mxu0 0.0
  %7837 = vmatprep.subr.mxu0 0.0
  %7838 = vmatpush1.msra.mxu0 0.0
  %7839 = vmatprep.subr.mxu0 0.0
  %7840 = vmatpush1.msra.mxu0 0.0
  %7841 = vmatprep.subr.mxu0 0.0
  %7842 = vmatpush1.msra.mxu0 0.0
  %7843 = vmatprep.subr.mxu0 0.0
  %7844 = vmatpush1.msra.mxu0 0.0
  %7845 = vmatprep.subr.mxu0 0.0
  %7846 = vmatpush1.msra.mxu0 0.0
  %7847 = vmatprep.subr.mxu0 0.0
  %7848 = vmatpush1.msra.mxu0 0.0
  %7849 = vmatprep.mubr.f32.mxu0 0.0
  %7850 = vmatmul.mubr.f32.gmra.mrb[0].mxu0 %v7783
  %v7851 = vpop.f32.mrb[0].mxu0
  %v7852 = vadd.f32 0.0, %v7851
  %v7853 = vpop.f32.mrb[0].mxu0
  %7854 = vdwg.mxu0
  %v7855 = vld [vmem:[%s7 + $0xc0] sm:$0xff]
  %v7856 = vld [vmem:[%s7 + $0xc8] sm:$0xff]
  %v7857 = vld [vmem:[%s7 + $0xd0] sm:$0xff]
  %v7858 = vld [vmem:[%s7 + $0xd8] sm:$0xff]
  %v7859 = vld [vmem:[%s7 + $0xe0] sm:$0xff]
  %v7860 = vld [vmem:[%s7 + $0xe8] sm:$0xff]
  %v7861 = vld [vmem:[%s7 + $0xf0] sm:$0xff]
  %v7862 = vld [vmem:[%s7 + $0xf8] sm:$0xff]
  %v7864 = vsel %vm7476, %v7852, 0
  %7866 = vmatprep.subr.mxu0 0.0
  %7867 = vmatpush1.msra.mxu0 %v7855
  %7868 = vmatprep.subr.mxu0 0.0
  %7869 = vmatpush1.msra.mxu0 %v7856
  %7870 = vmatprep.subr.mxu0 0.0
  %7871 = vmatpush1.msra.mxu0 %v7857
  %7872 = vmatprep.subr.mxu0 0.0
  %7873 = vmatpush1.msra.mxu0 %v7858
  %7874 = vmatprep.subr.mxu0 0.0
  %7875 = vmatpush1.msra.mxu0 %v7859
  %7876 = vmatprep.subr.mxu0 0.0
  %7877 = vmatpush1.msra.mxu0 %v7860
  %7878 = vmatprep.subr.mxu0 0.0
  %7879 = vmatpush1.msra.mxu0 %v7861
  %7880 = vmatprep.subr.mxu0 0.0
  %7881 = vmatpush1.msra.mxu0 %v7862
  %7882 = vmatprep.subr.mxu0 0.0
  %7883 = vmatpush1.msra.mxu0 0.0
  %7884 = vmatprep.subr.mxu0 0.0
  %7885 = vmatpush1.msra.mxu0 0.0
  %7886 = vmatprep.subr.mxu0 0.0
  %7887 = vmatpush1.msra.mxu0 0.0
  %7888 = vmatprep.subr.mxu0 0.0
  %7889 = vmatpush1.msra.mxu0 0.0
  %7890 = vmatprep.subr.mxu0 0.0
  %7891 = vmatpush1.msra.mxu0 0.0
  %7892 = vmatprep.subr.mxu0 0.0
  %7893 = vmatpush1.msra.mxu0 0.0
  %7894 = vmatprep.subr.mxu0 0.0
  %7895 = vmatpush1.msra.mxu0 0.0
  %7896 = vmatprep.subr.mxu0 0.0
  %7897 = vmatpush1.msra.mxu0 0.0
  %7898 = vmatprep.subr.mxu0 0.0
  %7899 = vmatpush1.msra.mxu0 0.0
  %7900 = vmatprep.subr.mxu0 0.0
  %7901 = vmatpush1.msra.mxu0 0.0
  %7902 = vmatprep.subr.mxu0 0.0
  %7903 = vmatpush1.msra.mxu0 0.0
  %7904 = vmatprep.subr.mxu0 0.0
  %7905 = vmatpush1.msra.mxu0 0.0
  %7906 = vmatprep.subr.mxu0 0.0
  %7907 = vmatpush1.msra.mxu0 0.0
  %7908 = vmatprep.subr.mxu0 0.0
  %7909 = vmatpush1.msra.mxu0 0.0
  %7910 = vmatprep.subr.mxu0 0.0
  %7911 = vmatpush1.msra.mxu0 0.0
  %7912 = vmatprep.subr.mxu0 0.0
  %7913 = vmatpush1.msra.mxu0 0.0
  %7914 = vmatprep.subr.mxu0 0.0
  %7915 = vmatpush1.msra.mxu0 0.0
  %7916 = vmatprep.subr.mxu0 0.0
  %7917 = vmatpush1.msra.mxu0 0.0
  %7918 = vmatprep.subr.mxu0 0.0
  %7919 = vmatpush1.msra.mxu0 0.0
  %7920 = vmatprep.subr.mxu0 0.0
  %7921 = vmatpush1.msra.mxu0 0.0
  %7922 = vmatprep.subr.mxu0 0.0
  %7923 = vmatpush1.msra.mxu0 0.0
  %7924 = vmatprep.subr.mxu0 0.0
  %7925 = vmatpush1.msra.mxu0 0.0
  %7926 = vmatprep.subr.mxu0 0.0
  %7927 = vmatpush1.msra.mxu0 0.0
  %7928 = vmatprep.subr.mxu0 0.0
  %7929 = vmatpush1.msra.mxu0 0.0
  %7930 = vmatprep.mubr.f32.mxu0 0.0
  %7931 = vmatmul.mubr.f32.gmra.mrb[0].mxu0 %v7864
  %v7932 = vpop.f32.mrb[0].mxu0
  %v7933 = vadd.f32 0.0, %v7932
  %v7934 = vpop.f32.mrb[0].mxu0
  %7935 = vdwg.mxu0
  %v7936 = vadd.f32 %v7779, %v7933
  %s7937 = scalar_lea.vmem %s6, 32
  %v7938 = vld [vmem:[%s7937] sm:$0xff]
  %v7940 = vsel %vm7311, %v7938, 0
  %7942 = vmatprep.subr.mxu0 0.0
  %7943 = vmatpush1.msra.mxu0 %v7301
  %7944 = vmatprep.subr.mxu0 0.0
  %7945 = vmatpush1.msra.mxu0 %v7302
  %7946 = vmatprep.subr.mxu0 0.0
  %7947 = vmatpush1.msra.mxu0 %v7303
  %7948 = vmatprep.subr.mxu0 0.0
  %7949 = vmatpush1.msra.mxu0 %v7304
  %7950 = vmatprep.subr.mxu0 0.0
  %7951 = vmatpush1.msra.mxu0 %v7305
  %7952 = vmatprep.subr.mxu0 0.0
  %7953 = vmatpush1.msra.mxu0 %v7306
  %7954 = vmatprep.subr.mxu0 0.0
  %7955 = vmatpush1.msra.mxu0 %v7307
  %7956 = vmatprep.subr.mxu0 0.0
  %7957 = vmatpush1.msra.mxu0 %v7308
  %7958 = vmatprep.subr.mxu0 0.0
  %7959 = vmatpush1.msra.mxu0 %v7309
  %7960 = vmatprep.subr.mxu0 0.0
  %7961 = vmatpush1.msra.mxu0 0.0
  %7962 = vmatprep.subr.mxu0 0.0
  %7963 = vmatpush1.msra.mxu0 0.0
  %7964 = vmatprep.subr.mxu0 0.0
  %7965 = vmatpush1.msra.mxu0 0.0
  %7966 = vmatprep.subr.mxu0 0.0
  %7967 = vmatpush1.msra.mxu0 0.0
  %7968 = vmatprep.subr.mxu0 0.0
  %7969 = vmatpush1.msra.mxu0 0.0
  %7970 = vmatprep.subr.mxu0 0.0
  %7971 = vmatpush1.msra.mxu0 0.0
  %7972 = vmatprep.subr.mxu0 0.0
  %7973 = vmatpush1.msra.mxu0 0.0
  %7974 = vmatprep.subr.mxu0 0.0
  %7975 = vmatpush1.msra.mxu0 0.0
  %7976 = vmatprep.subr.mxu0 0.0
  %7977 = vmatpush1.msra.mxu0 0.0
  %7978 = vmatprep.subr.mxu0 0.0
  %7979 = vmatpush1.msra.mxu0 0.0
  %7980 = vmatprep.subr.mxu0 0.0
  %7981 = vmatpush1.msra.mxu0 0.0
  %7982 = vmatprep.subr.mxu0 0.0
  %7983 = vmatpush1.msra.mxu0 0.0
  %7984 = vmatprep.subr.mxu0 0.0
  %7985 = vmatpush1.msra.mxu0 0.0
  %7986 = vmatprep.subr.mxu0 0.0
  %7987 = vmatpush1.msra.mxu0 0.0
  %7988 = vmatprep.subr.mxu0 0.0
  %7989 = vmatpush1.msra.mxu0 0.0
  %7990 = vmatprep.subr.mxu0 0.0
  %7991 = vmatpush1.msra.mxu0 0.0
  %7992 = vmatprep.subr.mxu0 0.0
  %7993 = vmatpush1.msra.mxu0 0.0
  %7994 = vmatprep.subr.mxu0 0.0
  %7995 = vmatpush1.msra.mxu0 0.0
  %7996 = vmatprep.subr.mxu0 0.0
  %7997 = vmatpush1.msra.mxu0 0.0
  %7998 = vmatprep.subr.mxu0 0.0
  %7999 = vmatpush1.msra.mxu0 0.0
  %8000 = vmatprep.subr.mxu0 0.0
  %8001 = vmatpush1.msra.mxu0 0.0
  %8002 = vmatprep.subr.mxu0 0.0
  %8003 = vmatpush1.msra.mxu0 0.0
  %8004 = vmatprep.subr.mxu0 0.0
  %8005 = vmatpush1.msra.mxu0 0.0
  %8006 = vmatprep.mubr.f32.mxu0 0.0
  %8007 = vmatmul.mubr.f32.gmra.mrb[0].mxu0 %v7940
  %v8008 = vpop.f32.mrb[0].mxu0
  %v8009 = vadd.f32 0.0, %v8008
  %v8010 = vpop.f32.mrb[0].mxu0
  %8011 = vdwg.mxu0
  %v8012 = vld [vmem:[%s7 + $0x100] sm:$0xff]
  %v8013 = vld [vmem:[%s7 + $0x108] sm:$0xff]
  %v8014 = vld [vmem:[%s7 + $0x110] sm:$0xff]
  %v8015 = vld [vmem:[%s7 + $0x118] sm:$0xff]
  %v8016 = vld [vmem:[%s7 + $0x120] sm:$0xff]
  %v8017 = vld [vmem:[%s7 + $0x128] sm:$0xff]
  %v8018 = vld [vmem:[%s7 + $0x130] sm:$0xff]
  %v8019 = vld [vmem:[%s7 + $0x138] sm:$0xff]
  %v8021 = vsel %vm7476, %v8009, 0
  %8023 = vmatprep.subr.mxu0 0.0
  %8024 = vmatpush1.msra.mxu0 %v8012
  %8025 = vmatprep.subr.mxu0 0.0
  %8026 = vmatpush1.msra.mxu0 %v8013
  %8027 = vmatprep.subr.mxu0 0.0
  %8028 = vmatpush1.msra.mxu0 %v8014
  %8029 = vmatprep.subr.mxu0 0.0
  %8030 = vmatpush1.msra.mxu0 %v8015
  %8031 = vmatprep.subr.mxu0 0.0
  %8032 = vmatpush1.msra.mxu0 %v8016
  %8033 = vmatprep.subr.mxu0 0.0
  %8034 = vmatpush1.msra.mxu0 %v8017
  %8035 = vmatprep.subr.mxu0 0.0
  %8036 = vmatpush1.msra.mxu0 %v8018
  %8037 = vmatprep.subr.mxu0 0.0
  %8038 = vmatpush1.msra.mxu0 %v8019
  %8039 = vmatprep.subr.mxu0 0.0
  %8040 = vmatpush1.msra.mxu0 0.0
  %8041 = vmatprep.subr.mxu0 0.0
  %8042 = vmatpush1.msra.mxu0 0.0
  %8043 = vmatprep.subr.mxu0 0.0
  %8044 = vmatpush1.msra.mxu0 0.0
  %8045 = vmatprep.subr.mxu0 0.0
  %8046 = vmatpush1.msra.mxu0 0.0
  %8047 = vmatprep.subr.mxu0 0.0
  %8048 = vmatpush1.msra.mxu0 0.0
  %8049 = vmatprep.subr.mxu0 0.0
  %8050 = vmatpush1.msra.mxu0 0.0
  %8051 = vmatprep.subr.mxu0 0.0
  %8052 = vmatpush1.msra.mxu0 0.0
  %8053 = vmatprep.subr.mxu0 0.0
  %8054 = vmatpush1.msra.mxu0 0.0
  %8055 = vmatprep.subr.mxu0 0.0
  %8056 = vmatpush1.msra.mxu0 0.0
  %8057 = vmatprep.subr.mxu0 0.0
  %8058 = vmatpush1.msra.mxu0 0.0
  %8059 = vmatprep.subr.mxu0 0.0
  %8060 = vmatpush1.msra.mxu0 0.0
  %8061 = vmatprep.subr.mxu0 0.0
  %8062 = vmatpush1.msra.mxu0 0.0
  %8063 = vmatprep.subr.mxu0 0.0
  %8064 = vmatpush1.msra.mxu0 0.0
  %8065 = vmatprep.subr.mxu0 0.0
  %8066 = vmatpush1.msra.mxu0 0.0
  %8067 = vmatprep.subr.mxu0 0.0
  %8068 = vmatpush1.msra.mxu0 0.0
  %8069 = vmatprep.subr.mxu0 0.0
  %8070 = vmatpush1.msra.mxu0 0.0
  %8071 = vmatprep.subr.mxu0 0.0
  %8072 = vmatpush1.msra.mxu0 0.0
  %8073 = vmatprep.subr.mxu0 0.0
  %8074 = vmatpush1.msra.mxu0 0.0
  %8075 = vmatprep.subr.mxu0 0.0
  %8076 = vmatpush1.msra.mxu0 0.0
  %8077 = vmatprep.subr.mxu0 0.0
  %8078 = vmatpush1.msra.mxu0 0.0
  %8079 = vmatprep.subr.mxu0 0.0
  %8080 = vmatpush1.msra.mxu0 0.0
  %8081 = vmatprep.subr.mxu0 0.0
  %8082 = vmatpush1.msra.mxu0 0.0
  %8083 = vmatprep.subr.mxu0 0.0
  %8084 = vmatpush1.msra.mxu0 0.0
  %8085 = vmatprep.subr.mxu0 0.0
  %8086 = vmatpush1.msra.mxu0 0.0
  %8087 = vmatprep.mubr.f32.mxu0 0.0
  %8088 = vmatmul.mubr.f32.gmra.mrb[0].mxu0 %v8021
  %v8089 = vpop.f32.mrb[0].mxu0
  %v8090 = vadd.f32 0.0, %v8089
  %v8091 = vpop.f32.mrb[0].mxu0
  %8092 = vdwg.mxu0
  %v8093 = vadd.f32 %v7936, %v8090
  %s8094 = scalar_lea.vmem %s6, 40
  %v8095 = vld [vmem:[%s8094] sm:$0xff]
  %v8097 = vsel %vm7311, %v8095, 0
  %8099 = vmatprep.subr.mxu0 0.0
  %8100 = vmatpush1.msra.mxu0 %v7301
  %8101 = vmatprep.subr.mxu0 0.0
  %8102 = vmatpush1.msra.mxu0 %v7302
  %8103 = vmatprep.subr.mxu0 0.0
  %8104 = vmatpush1.msra.mxu0 %v7303
  %8105 = vmatprep.subr.mxu0 0.0
  %8106 = vmatpush1.msra.mxu0 %v7304
  %8107 = vmatprep.subr.mxu0 0.0
  %8108 = vmatpush1.msra.mxu0 %v7305
  %8109 = vmatprep.subr.mxu0 0.0
  %8110 = vmatpush1.msra.mxu0 %v7306
  %8111 = vmatprep.subr.mxu0 0.0
  %8112 = vmatpush1.msra.mxu0 %v7307
  %8113 = vmatprep.subr.mxu0 0.0
  %8114 = vmatpush1.msra.mxu0 %v7308
  %8115 = vmatprep.subr.mxu0 0.0
  %8116 = vmatpush1.msra.mxu0 %v7309
  %8117 = vmatprep.subr.mxu0 0.0
  %8118 = vmatpush1.msra.mxu0 0.0
  %8119 = vmatprep.subr.mxu0 0.0
  %8120 = vmatpush1.msra.mxu0 0.0
  %8121 = vmatprep.subr.mxu0 0.0
  %8122 = vmatpush1.msra.mxu0 0.0
  %8123 = vmatprep.subr.mxu0 0.0
  %8124 = vmatpush1.msra.mxu0 0.0
  %8125 = vmatprep.subr.mxu0 0.0
  %8126 = vmatpush1.msra.mxu0 0.0
  %8127 = vmatprep.subr.mxu0 0.0
  %8128 = vmatpush1.msra.mxu0 0.0
  %8129 = vmatprep.subr.mxu0 0.0
  %8130 = vmatpush1.msra.mxu0 0.0
  %8131 = vmatprep.subr.mxu0 0.0
  %8132 = vmatpush1.msra.mxu0 0.0
  %8133 = vmatprep.subr.mxu0 0.0
  %8134 = vmatpush1.msra.mxu0 0.0
  %8135 = vmatprep.subr.mxu0 0.0
  %8136 = vmatpush1.msra.mxu0 0.0
  %8137 = vmatprep.subr.mxu0 0.0
  %8138 = vmatpush1.msra.mxu0 0.0
  %8139 = vmatprep.subr.mxu0 0.0
  %8140 = vmatpush1.msra.mxu0 0.0
  %8141 = vmatprep.subr.mxu0 0.0
  %8142 = vmatpush1.msra.mxu0 0.0
  %8143 = vmatprep.subr.mxu0 0.0
  %8144 = vmatpush1.msra.mxu0 0.0
  %8145 = vmatprep.subr.mxu0 0.0
  %8146 = vmatpush1.msra.mxu0 0.0
  %8147 = vmatprep.subr.mxu0 0.0
  %8148 = vmatpush1.msra.mxu0 0.0
  %8149 = vmatprep.subr.mxu0 0.0
  %8150 = vmatpush1.msra.mxu0 0.0
  %8151 = vmatprep.subr.mxu0 0.0
  %8152 = vmatpush1.msra.mxu0 0.0
  %8153 = vmatprep.subr.mxu0 0.0
  %8154 = vmatpush1.msra.mxu0 0.0
  %8155 = vmatprep.subr.mxu0 0.0
  %8156 = vmatpush1.msra.mxu0 0.0
  %8157 = vmatprep.subr.mxu0 0.0
  %8158 = vmatpush1.msra.mxu0 0.0
  %8159 = vmatprep.subr.mxu0 0.0
  %8160 = vmatpush1.msra.mxu0 0.0
  %8161 = vmatprep.subr.mxu0 0.0
  %8162 = vmatpush1.msra.mxu0 0.0
  %8163 = vmatprep.mubr.f32.mxu0 0.0
  %8164 = vmatmul.mubr.f32.gmra.mrb[0].mxu0 %v8097
  %v8165 = vpop.f32.mrb[0].mxu0
  %v8166 = vadd.f32 0.0, %v8165
  %v8167 = vpop.f32.mrb[0].mxu0
  %8168 = vdwg.mxu0
  %v8169 = vld [vmem:[%s7 + $0x140] sm:$0xff]
  %v8170 = vld [vmem:[%s7 + $0x148] sm:$0xff]
  %v8171 = vld [vmem:[%s7 + $0x150] sm:$0xff]
  %v8172 = vld [vmem:[%s7 + $0x158] sm:$0xff]
  %v8173 = vld [vmem:[%s7 + $0x160] sm:$0xff]
  %v8174 = vld [vmem:[%s7 + $0x168] sm:$0xff]
  %v8175 = vld [vmem:[%s7 + $0x170] sm:$0xff]
  %v8176 = vld [vmem:[%s7 + $0x178] sm:$0xff]
  %v8178 = vsel %vm7476, %v8166, 0
  %8180 = vmatprep.subr.mxu0 0.0
  %8181 = vmatpush1.msra.mxu0 %v8169
  %8182 = vmatprep.subr.mxu0 0.0
  %8183 = vmatpush1.msra.mxu0 %v8170
  %8184 = vmatprep.subr.mxu0 0.0
  %8185 = vmatpush1.msra.mxu0 %v8171
  %8186 = vmatprep.subr.mxu0 0.0
  %8187 = vmatpush1.msra.mxu0 %v8172
  %8188 = vmatprep.subr.mxu0 0.0
  %8189 = vmatpush1.msra.mxu0 %v8173
  %8190 = vmatprep.subr.mxu0 0.0
  %8191 = vmatpush1.msra.mxu0 %v8174
  %8192 = vmatprep.subr.mxu0 0.0
  %8193 = vmatpush1.msra.mxu0 %v8175
  %8194 = vmatprep.subr.mxu0 0.0
  %8195 = vmatpush1.msra.mxu0 %v8176
  %8196 = vmatprep.subr.mxu0 0.0
  %8197 = vmatpush1.msra.mxu0 0.0
  %8198 = vmatprep.subr.mxu0 0.0
  %8199 = vmatpush1.msra.mxu0 0.0
  %8200 = vmatprep.subr.mxu0 0.0
  %8201 = vmatpush1.msra.mxu0 0.0
  %8202 = vmatprep.subr.mxu0 0.0
  %8203 = vmatpush1.msra.mxu0 0.0
  %8204 = vmatprep.subr.mxu0 0.0
  %8205 = vmatpush1.msra.mxu0 0.0
  %8206 = vmatprep.subr.mxu0 0.0
  %8207 = vmatpush1.msra.mxu0 0.0
  %8208 = vmatprep.subr.mxu0 0.0
  %8209 = vmatpush1.msra.mxu0 0.0
  %8210 = vmatprep.subr.mxu0 0.0
  %8211 = vmatpush1.msra.mxu0 0.0
  %8212 = vmatprep.subr.mxu0 0.0
  %8213 = vmatpush1.msra.mxu0 0.0
  %8214 = vmatprep.subr.mxu0 0.0
  %8215 = vmatpush1.msra.mxu0 0.0
  %8216 = vmatprep.subr.mxu0 0.0
  %8217 = vmatpush1.msra.mxu0 0.0
  %8218 = vmatprep.subr.mxu0 0.0
  %8219 = vmatpush1.msra.mxu0 0.0
  %8220 = vmatprep.subr.mxu0 0.0
  %8221 = vmatpush1.msra.mxu0 0.0
  %8222 = vmatprep.subr.mxu0 0.0
  %8223 = vmatpush1.msra.mxu0 0.0
  %8224 = vmatprep.subr.mxu0 0.0
  %8225 = vmatpush1.msra.mxu0 0.0
  %8226 = vmatprep.subr.mxu0 0.0
  %8227 = vmatpush1.msra.mxu0 0.0
  %8228 = vmatprep.subr.mxu0 0.0
  %8229 = vmatpush1.msra.mxu0 0.0
  %8230 = vmatprep.subr.mxu0 0.0
  %8231 = vmatpush1.msra.mxu0 0.0
  %8232 = vmatprep.subr.mxu0 0.0
  %8233 = vmatpush1.msra.mxu0 0.0
  %8234 = vmatprep.subr.mxu0 0.0
  %8235 = vmatpush1.msra.mxu0 0.0
  %8236 = vmatprep.subr.mxu0 0.0
  %8237 = vmatpush1.msra.mxu0 0.0
  %8238 = vmatprep.subr.mxu0 0.0
  %8239 = vmatpush1.msra.mxu0 0.0
  %8240 = vmatprep.subr.mxu0 0.0
  %8241 = vmatpush1.msra.mxu0 0.0
  %8242 = vmatprep.subr.mxu0 0.0
  %8243 = vmatpush1.msra.mxu0 0.0
  %8244 = vmatprep.mubr.f32.mxu0 0.0
  %8245 = vmatmul.mubr.f32.gmra.mrb[0].mxu0 %v8178
  %v8246 = vpop.f32.mrb[0].mxu0
  %v8247 = vadd.f32 0.0, %v8246
  %v8248 = vpop.f32.mrb[0].mxu0
  %8249 = vdwg.mxu0
  %v8250 = vadd.f32 %v8093, %v8247
  %s8251 = scalar_lea.vmem %s6, 48
  %v8252 = vld [vmem:[%s8251] sm:$0xff]
  %v8254 = vsel %vm7311, %v8252, 0
  %8256 = vmatprep.subr.mxu0 0.0
  %8257 = vmatpush1.msra.mxu0 %v7301
  %8258 = vmatprep.subr.mxu0 0.0
  %8259 = vmatpush1.msra.mxu0 %v7302
  %8260 = vmatprep.subr.mxu0 0.0
  %8261 = vmatpush1.msra.mxu0 %v7303
  %8262 = vmatprep.subr.mxu0 0.0
  %8263 = vmatpush1.msra.mxu0 %v7304
  %8264 = vmatprep.subr.mxu0 0.0
  %8265 = vmatpush1.msra.mxu0 %v7305
  %8266 = vmatprep.subr.mxu0 0.0
  %8267 = vmatpush1.msra.mxu0 %v7306
  %8268 = vmatprep.subr.mxu0 0.0
  %8269 = vmatpush1.msra.mxu0 %v7307
  %8270 = vmatprep.subr.mxu0 0.0
  %8271 = vmatpush1.msra.mxu0 %v7308
  %8272 = vmatprep.subr.mxu0 0.0
  %8273 = vmatpush1.msra.mxu0 %v7309
  %8274 = vmatprep.subr.mxu0 0.0
  %8275 = vmatpush1.msra.mxu0 0.0
  %8276 = vmatprep.subr.mxu0 0.0
  %8277 = vmatpush1.msra.mxu0 0.0
  %8278 = vmatprep.subr.mxu0 0.0
  %8279 = vmatpush1.msra.mxu0 0.0
  %8280 = vmatprep.subr.mxu0 0.0
  %8281 = vmatpush1.msra.mxu0 0.0
  %8282 = vmatprep.subr.mxu0 0.0
  %8283 = vmatpush1.msra.mxu0 0.0
  %8284 = vmatprep.subr.mxu0 0.0
  %8285 = vmatpush1.msra.mxu0 0.0
  %8286 = vmatprep.subr.mxu0 0.0
  %8287 = vmatpush1.msra.mxu0 0.0
  %8288 = vmatprep.subr.mxu0 0.0
  %8289 = vmatpush1.msra.mxu0 0.0
  %8290 = vmatprep.subr.mxu0 0.0
  %8291 = vmatpush1.msra.mxu0 0.0
  %8292 = vmatprep.subr.mxu0 0.0
  %8293 = vmatpush1.msra.mxu0 0.0
  %8294 = vmatprep.subr.mxu0 0.0
  %8295 = vmatpush1.msra.mxu0 0.0
  %8296 = vmatprep.subr.mxu0 0.0
  %8297 = vmatpush1.msra.mxu0 0.0
  %8298 = vmatprep.subr.mxu0 0.0
  %8299 = vmatpush1.msra.mxu0 0.0
  %8300 = vmatprep.subr.mxu0 0.0
  %8301 = vmatpush1.msra.mxu0 0.0
  %8302 = vmatprep.subr.mxu0 0.0
  %8303 = vmatpush1.msra.mxu0 0.0
  %8304 = vmatprep.subr.mxu0 0.0
  %8305 = vmatpush1.msra.mxu0 0.0
  %8306 = vmatprep.subr.mxu0 0.0
  %8307 = vmatpush1.msra.mxu0 0.0
  %8308 = vmatprep.subr.mxu0 0.0
  %8309 = vmatpush1.msra.mxu0 0.0
  %8310 = vmatprep.subr.mxu0 0.0
  %8311 = vmatpush1.msra.mxu0 0.0
  %8312 = vmatprep.subr.mxu0 0.0
  %8313 = vmatpush1.msra.mxu0 0.0
  %8314 = vmatprep.subr.mxu0 0.0
  %8315 = vmatpush1.msra.mxu0 0.0
  %8316 = vmatprep.subr.mxu0 0.0
  %8317 = vmatpush1.msra.mxu0 0.0
  %8318 = vmatprep.subr.mxu0 0.0
  %8319 = vmatpush1.msra.mxu0 0.0
  %8320 = vmatprep.mubr.f32.mxu0 0.0
  %8321 = vmatmul.mubr.f32.gmra.mrb[0].mxu0 %v8254
  %v8322 = vpop.f32.mrb[0].mxu0
  %v8323 = vadd.f32 0.0, %v8322
  %v8324 = vpop.f32.mrb[0].mxu0
  %8325 = vdwg.mxu0
  %v8326 = vld [vmem:[%s7 + $0x180] sm:$0xff]
  %v8327 = vld [vmem:[%s7 + $0x188] sm:$0xff]
  %v8328 = vld [vmem:[%s7 + $0x190] sm:$0xff]
  %v8329 = vld [vmem:[%s7 + $0x198] sm:$0xff]
  %v8330 = vld [vmem:[%s7 + $0x1a0] sm:$0xff]
  %v8331 = vld [vmem:[%s7 + $0x1a8] sm:$0xff]
  %v8332 = vld [vmem:[%s7 + $0x1b0] sm:$0xff]
  %v8333 = vld [vmem:[%s7 + $0x1b8] sm:$0xff]
  %v8335 = vsel %vm7476, %v8323, 0
  %8337 = vmatprep.subr.mxu0 0.0
  %8338 = vmatpush1.msra.mxu0 %v8326
  %8339 = vmatprep.subr.mxu0 0.0
  %8340 = vmatpush1.msra.mxu0 %v8327
  %8341 = vmatprep.subr.mxu0 0.0
  %8342 = vmatpush1.msra.mxu0 %v8328
  %8343 = vmatprep.subr.mxu0 0.0
  %8344 = vmatpush1.msra.mxu0 %v8329
  %8345 = vmatprep.subr.mxu0 0.0
  %8346 = vmatpush1.msra.mxu0 %v8330
  %8347 = vmatprep.subr.mxu0 0.0
  %8348 = vmatpush1.msra.mxu0 %v8331
  %8349 = vmatprep.subr.mxu0 0.0
  %8350 = vmatpush1.msra.mxu0 %v8332
  %8351 = vmatprep.subr.mxu0 0.0
  %8352 = vmatpush1.msra.mxu0 %v8333
  %8353 = vmatprep.subr.mxu0 0.0
  %8354 = vmatpush1.msra.mxu0 0.0
  %8355 = vmatprep.subr.mxu0 0.0
  %8356 = vmatpush1.msra.mxu0 0.0
  %8357 = vmatprep.subr.mxu0 0.0
  %8358 = vmatpush1.msra.mxu0 0.0
  %8359 = vmatprep.subr.mxu0 0.0
  %8360 = vmatpush1.msra.mxu0 0.0
  %8361 = vmatprep.subr.mxu0 0.0
  %8362 = vmatpush1.msra.mxu0 0.0
  %8363 = vmatprep.subr.mxu0 0.0
  %8364 = vmatpush1.msra.mxu0 0.0
  %8365 = vmatprep.subr.mxu0 0.0
  %8366 = vmatpush1.msra.mxu0 0.0
  %8367 = vmatprep.subr.mxu0 0.0
  %8368 = vmatpush1.msra.mxu0 0.0
  %8369 = vmatprep.subr.mxu0 0.0
  %8370 = vmatpush1.msra.mxu0 0.0
  %8371 = vmatprep.subr.mxu0 0.0
  %8372 = vmatpush1.msra.mxu0 0.0
  %8373 = vmatprep.subr.mxu0 0.0
  %8374 = vmatpush1.msra.mxu0 0.0
  %8375 = vmatprep.subr.mxu0 0.0
  %8376 = vmatpush1.msra.mxu0 0.0
  %8377 = vmatprep.subr.mxu0 0.0
  %8378 = vmatpush1.msra.mxu0 0.0
  %8379 = vmatprep.subr.mxu0 0.0
  %8380 = vmatpush1.msra.mxu0 0.0
  %8381 = vmatprep.subr.mxu0 0.0
  %8382 = vmatpush1.msra.mxu0 0.0
  %8383 = vmatprep.subr.mxu0 0.0
  %8384 = vmatpush1.msra.mxu0 0.0
  %8385 = vmatprep.subr.mxu0 0.0
  %8386 = vmatpush1.msra.mxu0 0.0
  %8387 = vmatprep.subr.mxu0 0.0
  %8388 = vmatpush1.msra.mxu0 0.0
  %8389 = vmatprep.subr.mxu0 0.0
  %8390 = vmatpush1.msra.mxu0 0.0
  %8391 = vmatprep.subr.mxu0 0.0
  %8392 = vmatpush1.msra.mxu0 0.0
  %8393 = vmatprep.subr.mxu0 0.0
  %8394 = vmatpush1.msra.mxu0 0.0
  %8395 = vmatprep.subr.mxu0 0.0
  %8396 = vmatpush1.msra.mxu0 0.0
  %8397 = vmatprep.subr.mxu0 0.0
  %8398 = vmatpush1.msra.mxu0 0.0
  %8399 = vmatprep.subr.mxu0 0.0
  %8400 = vmatpush1.msra.mxu0 0.0
  %8401 = vmatprep.mubr.f32.mxu0 0.0
  %8402 = vmatmul.mubr.f32.gmra.mrb[0].mxu0 %v8335
  %v8403 = vpop.f32.mrb[0].mxu0
  %v8404 = vadd.f32 0.0, %v8403
  %v8405 = vpop.f32.mrb[0].mxu0
  %8406 = vdwg.mxu0
  %v8407 = vadd.f32 %v8250, %v8404
  %s8408 = scalar_lea.vmem %s6, 56
  %v8409 = vld [vmem:[%s8408] sm:$0xff]
  %v8411 = vsel %vm7311, %v8409, 0
  %8413 = vmatprep.subr.mxu0 0.0
  %8414 = vmatpush1.msra.mxu0 %v7301
  %8415 = vmatprep.subr.mxu0 0.0
  %8416 = vmatpush1.msra.mxu0 %v7302
  %8417 = vmatprep.subr.mxu0 0.0
  %8418 = vmatpush1.msra.mxu0 %v7303
  %8419 = vmatprep.subr.mxu0 0.0
  %8420 = vmatpush1.msra.mxu0 %v7304
  %8421 = vmatprep.subr.mxu0 0.0
  %8422 = vmatpush1.msra.mxu0 %v7305
  %8423 = vmatprep.subr.mxu0 0.0
  %8424 = vmatpush1.msra.mxu0 %v7306
  %8425 = vmatprep.subr.mxu0 0.0
  %8426 = vmatpush1.msra.mxu0 %v7307
  %8427 = vmatprep.subr.mxu0 0.0
  %8428 = vmatpush1.msra.mxu0 %v7308
  %8429 = vmatprep.subr.mxu0 0.0
  %8430 = vmatpush1.msra.mxu0 %v7309
  %8431 = vmatprep.subr.mxu0 0.0
  %8432 = vmatpush1.msra.mxu0 0.0
  %8433 = vmatprep.subr.mxu0 0.0
  %8434 = vmatpush1.msra.mxu0 0.0
  %8435 = vmatprep.subr.mxu0 0.0
  %8436 = vmatpush1.msra.mxu0 0.0
  %8437 = vmatprep.subr.mxu0 0.0
  %8438 = vmatpush1.msra.mxu0 0.0
  %8439 = vmatprep.subr.mxu0 0.0
  %8440 = vmatpush1.msra.mxu0 0.0
  %8441 = vmatprep.subr.mxu0 0.0
  %8442 = vmatpush1.msra.mxu0 0.0
  %8443 = vmatprep.subr.mxu0 0.0
  %8444 = vmatpush1.msra.mxu0 0.0
  %8445 = vmatprep.subr.mxu0 0.0
  %8446 = vmatpush1.msra.mxu0 0.0
  %8447 = vmatprep.subr.mxu0 0.0
  %8448 = vmatpush1.msra.mxu0 0.0
  %8449 = vmatprep.subr.mxu0 0.0
  %8450 = vmatpush1.msra.mxu0 0.0
  %8451 = vmatprep.subr.mxu0 0.0
  %8452 = vmatpush1.msra.mxu0 0.0
  %8453 = vmatprep.subr.mxu0 0.0
  %8454 = vmatpush1.msra.mxu0 0.0
  %8455 = vmatprep.subr.mxu0 0.0
  %8456 = vmatpush1.msra.mxu0 0.0
  %8457 = vmatprep.subr.mxu0 0.0
  %8458 = vmatpush1.msra.mxu0 0.0
  %8459 = vmatprep.subr.mxu0 0.0
  %8460 = vmatpush1.msra.mxu0 0.0
  %8461 = vmatprep.subr.mxu0 0.0
  %8462 = vmatpush1.msra.mxu0 0.0
  %8463 = vmatprep.subr.mxu0 0.0
  %8464 = vmatpush1.msra.mxu0 0.0
  %8465 = vmatprep.subr.mxu0 0.0
  %8466 = vmatpush1.msra.mxu0 0.0
  %8467 = vmatprep.subr.mxu0 0.0
  %8468 = vmatpush1.msra.mxu0 0.0
  %8469 = vmatprep.subr.mxu0 0.0
  %8470 = vmatpush1.msra.mxu0 0.0
  %8471 = vmatprep.subr.mxu0 0.0
  %8472 = vmatpush1.msra.mxu0 0.0
  %8473 = vmatprep.subr.mxu0 0.0
  %8474 = vmatpush1.msra.mxu0 0.0
  %8475 = vmatprep.subr.mxu0 0.0
  %8476 = vmatpush1.msra.mxu0 0.0
  %8477 = vmatprep.mubr.f32.mxu0 0.0
  %8478 = vmatmul.mubr.f32.gmra.mrb[0].mxu0 %v8411
  %v8479 = vpop.f32.mrb[0].mxu0
  %v8480 = vadd.f32 0.0, %v8479
  %v8481 = vpop.f32.mrb[0].mxu0
  %8482 = vdwg.mxu0
  %v8483 = vld [vmem:[%s7 + $0x1c0] sm:$0xff]
  %v8484 = vld [vmem:[%s7 + $0x1c8] sm:$0xff]
  %v8485 = vld [vmem:[%s7 + $0x1d0] sm:$0xff]
  %v8486 = vld [vmem:[%s7 + $0x1d8] sm:$0xff]
  %v8487 = vld [vmem:[%s7 + $0x1e0] sm:$0xff]
  %v8488 = vld [vmem:[%s7 + $0x1e8] sm:$0xff]
  %v8489 = vld [vmem:[%s7 + $0x1f0] sm:$0xff]
  %v8490 = vld [vmem:[%s7 + $0x1f8] sm:$0xff]
  %v8492 = vsel %vm7476, %v8480, 0
  %8494 = vmatprep.subr.mxu0 0.0
  %8495 = vmatpush1.msra.mxu0 %v8483
  %8496 = vmatprep.subr.mxu0 0.0
  %8497 = vmatpush1.msra.mxu0 %v8484
  %8498 = vmatprep.subr.mxu0 0.0
  %8499 = vmatpush1.msra.mxu0 %v8485
  %8500 = vmatprep.subr.mxu0 0.0
  %8501 = vmatpush1.msra.mxu0 %v8486
  %8502 = vmatprep.subr.mxu0 0.0
  %8503 = vmatpush1.msra.mxu0 %v8487
  %8504 = vmatprep.subr.mxu0 0.0
  %8505 = vmatpush1.msra.mxu0 %v8488
  %8506 = vmatprep.subr.mxu0 0.0
  %8507 = vmatpush1.msra.mxu0 %v8489
  %8508 = vmatprep.subr.mxu0 0.0
  %8509 = vmatpush1.msra.mxu0 %v8490
  %8510 = vmatprep.subr.mxu0 0.0
  %8511 = vmatpush1.msra.mxu0 0.0
  %8512 = vmatprep.subr.mxu0 0.0
  %8513 = vmatpush1.msra.mxu0 0.0
  %8514 = vmatprep.subr.mxu0 0.0
  %8515 = vmatpush1.msra.mxu0 0.0
  %8516 = vmatprep.subr.mxu0 0.0
  %8517 = vmatpush1.msra.mxu0 0.0
  %8518 = vmatprep.subr.mxu0 0.0
  %8519 = vmatpush1.msra.mxu0 0.0
  %8520 = vmatprep.subr.mxu0 0.0
  %8521 = vmatpush1.msra.mxu0 0.0
  %8522 = vmatprep.subr.mxu0 0.0
  %8523 = vmatpush1.msra.mxu0 0.0
  %8524 = vmatprep.subr.mxu0 0.0
  %8525 = vmatpush1.msra.mxu0 0.0
  %8526 = vmatprep.subr.mxu0 0.0
  %8527 = vmatpush1.msra.mxu0 0.0
  %8528 = vmatprep.subr.mxu0 0.0
  %8529 = vmatpush1.msra.mxu0 0.0
  %8530 = vmatprep.subr.mxu0 0.0
  %8531 = vmatpush1.msra.mxu0 0.0
  %8532 = vmatprep.subr.mxu0 0.0
  %8533 = vmatpush1.msra.mxu0 0.0
  %8534 = vmatprep.subr.mxu0 0.0
  %8535 = vmatpush1.msra.mxu0 0.0
  %8536 = vmatprep.subr.mxu0 0.0
  %8537 = vmatpush1.msra.mxu0 0.0
  %8538 = vmatprep.subr.mxu0 0.0
  %8539 = vmatpush1.msra.mxu0 0.0
  %8540 = vmatprep.subr.mxu0 0.0
  %8541 = vmatpush1.msra.mxu0 0.0
  %8542 = vmatprep.subr.mxu0 0.0
  %8543 = vmatpush1.msra.mxu0 0.0
  %8544 = vmatprep.subr.mxu0 0.0
  %8545 = vmatpush1.msra.mxu0 0.0
  %8546 = vmatprep.subr.mxu0 0.0
  %8547 = vmatpush1.msra.mxu0 0.0
  %8548 = vmatprep.subr.mxu0 0.0
  %8549 = vmatpush1.msra.mxu0 0.0
  %8550 = vmatprep.subr.mxu0 0.0
  %8551 = vmatpush1.msra.mxu0 0.0
  %8552 = vmatprep.subr.mxu0 0.0
  %8553 = vmatpush1.msra.mxu0 0.0
  %8554 = vmatprep.subr.mxu0 0.0
  %8555 = vmatpush1.msra.mxu0 0.0
  %8556 = vmatprep.subr.mxu0 0.0
  %8557 = vmatpush1.msra.mxu0 0.0
  %8558 = vmatprep.mubr.f32.mxu0 0.0
  %8559 = vmatmul.mubr.f32.gmra.mrb[0].mxu0 %v8492
  %v8560 = vpop.f32.mrb[0].mxu0
  %v8561 = vadd.f32 0.0, %v8560
  %v8562 = vpop.f32.mrb[0].mxu0
  %8563 = vdwg.mxu0
  %v8564 = vadd.f32 %v8407, %v8561
  %s8565 = scalar_lea.vmem %s6, 64
  %v8566 = vld [vmem:[%s8565] sm:$0xff]
  %v8568 = vsel %vm7311, %v8566, 0
  %8570 = vmatprep.subr.mxu0 0.0
  %8571 = vmatpush1.msra.mxu0 %v7301
  %8572 = vmatprep.subr.mxu0 0.0
  %8573 = vmatpush1.msra.mxu0 %v7302
  %8574 = vmatprep.subr.mxu0 0.0
  %8575 = vmatpush1.msra.mxu0 %v7303
  %8576 = vmatprep.subr.mxu0 0.0
  %8577 = vmatpush1.msra.mxu0 %v7304
  %8578 = vmatprep.subr.mxu0 0.0
  %8579 = vmatpush1.msra.mxu0 %v7305
  %8580 = vmatprep.subr.mxu0 0.0
  %8581 = vmatpush1.msra.mxu0 %v7306
  %8582 = vmatprep.subr.mxu0 0.0
  %8583 = vmatpush1.msra.mxu0 %v7307
  %8584 = vmatprep.subr.mxu0 0.0
  %8585 = vmatpush1.msra.mxu0 %v7308
  %8586 = vmatprep.subr.mxu0 0.0
  %8587 = vmatpush1.msra.mxu0 %v7309
  %8588 = vmatprep.subr.mxu0 0.0
  %8589 = vmatpush1.msra.mxu0 0.0
  %8590 = vmatprep.subr.mxu0 0.0
  %8591 = vmatpush1.msra.mxu0 0.0
  %8592 = vmatprep.subr.mxu0 0.0
  %8593 = vmatpush1.msra.mxu0 0.0
  %8594 = vmatprep.subr.mxu0 0.0
  %8595 = vmatpush1.msra.mxu0 0.0
  %8596 = vmatprep.subr.mxu0 0.0
  %8597 = vmatpush1.msra.mxu0 0.0
  %8598 = vmatprep.subr.mxu0 0.0
  %8599 = vmatpush1.msra.mxu0 0.0
  %8600 = vmatprep.subr.mxu0 0.0
  %8601 = vmatpush1.msra.mxu0 0.0
  %8602 = vmatprep.subr.mxu0 0.0
  %8603 = vmatpush1.msra.mxu0 0.0
  %8604 = vmatprep.subr.mxu0 0.0
  %8605 = vmatpush1.msra.mxu0 0.0
  %8606 = vmatprep.subr.mxu0 0.0
  %8607 = vmatpush1.msra.mxu0 0.0
  %8608 = vmatprep.subr.mxu0 0.0
  %8609 = vmatpush1.msra.mxu0 0.0
  %8610 = vmatprep.subr.mxu0 0.0
  %8611 = vmatpush1.msra.mxu0 0.0
  %8612 = vmatprep.subr.mxu0 0.0
  %8613 = vmatpush1.msra.mxu0 0.0
  %8614 = vmatprep.subr.mxu0 0.0
  %8615 = vmatpush1.msra.mxu0 0.0
  %8616 = vmatprep.subr.mxu0 0.0
  %8617 = vmatpush1.msra.mxu0 0.0
  %8618 = vmatprep.subr.mxu0 0.0
  %8619 = vmatpush1.msra.mxu0 0.0
  %8620 = vmatprep.subr.mxu0 0.0
  %8621 = vmatpush1.msra.mxu0 0.0
  %8622 = vmatprep.subr.mxu0 0.0
  %8623 = vmatpush1.msra.mxu0 0.0
  %8624 = vmatprep.subr.mxu0 0.0
  %8625 = vmatpush1.msra.mxu0 0.0
  %8626 = vmatprep.subr.mxu0 0.0
  %8627 = vmatpush1.msra.mxu0 0.0
  %8628 = vmatprep.subr.mxu0 0.0
  %8629 = vmatpush1.msra.mxu0 0.0
  %8630 = vmatprep.subr.mxu0 0.0
  %8631 = vmatpush1.msra.mxu0 0.0
  %8632 = vmatprep.subr.mxu0 0.0
  %8633 = vmatpush1.msra.mxu0 0.0
  %8634 = vmatprep.mubr.f32.mxu0 0.0
  %8635 = vmatmul.mubr.f32.gmra.mrb[0].mxu0 %v8568
  %v8636 = vpop.f32.mrb[0].mxu0
  %v8637 = vadd.f32 0.0, %v8636
  %v8638 = vpop.f32.mrb[0].mxu0
  %8639 = vdwg.mxu0
  %v8640 = vld [vmem:[%s7 + $0x200] sm:$0xff]
  %v8641 = vld [vmem:[%s7 + $0x208] sm:$0xff]
  %v8642 = vld [vmem:[%s7 + $0x210] sm:$0xff]
  %v8643 = vld [vmem:[%s7 + $0x218] sm:$0xff]
  %v8644 = vld [vmem:[%s7 + $0x220] sm:$0xff]
  %v8645 = vld [vmem:[%s7 + $0x228] sm:$0xff]
  %v8646 = vld [vmem:[%s7 + $0x230] sm:$0xff]
  %v8647 = vld [vmem:[%s7 + $0x238] sm:$0xff]
  %v8649 = vsel %vm7476, %v8637, 0
  %8651 = vmatprep.subr.mxu0 0.0
  %8652 = vmatpush1.msra.mxu0 %v8640
  %8653 = vmatprep.subr.mxu0 0.0
  %8654 = vmatpush1.msra.mxu0 %v8641
  %8655 = vmatprep.subr.mxu0 0.0
  %8656 = vmatpush1.msra.mxu0 %v8642
  %8657 = vmatprep.subr.mxu0 0.0
  %8658 = vmatpush1.msra.mxu0 %v8643
  %8659 = vmatprep.subr.mxu0 0.0
  %8660 = vmatpush1.msra.mxu0 %v8644
  %8661 = vmatprep.subr.mxu0 0.0
  %8662 = vmatpush1.msra.mxu0 %v8645
  %8663 = vmatprep.subr.mxu0 0.0
  %8664 = vmatpush1.msra.mxu0 %v8646
  %8665 = vmatprep.subr.mxu0 0.0
  %8666 = vmatpush1.msra.mxu0 %v8647
  %8667 = vmatprep.subr.mxu0 0.0
  %8668 = vmatpush1.msra.mxu0 0.0
  %8669 = vmatprep.subr.mxu0 0.0
  %8670 = vmatpush1.msra.mxu0 0.0
  %8671 = vmatprep.subr.mxu0 0.0
  %8672 = vmatpush1.msra.mxu0 0.0
  %8673 = vmatprep.subr.mxu0 0.0
  %8674 = vmatpush1.msra.mxu0 0.0
  %8675 = vmatprep.subr.mxu0 0.0
  %8676 = vmatpush1.msra.mxu0 0.0
  %8677 = vmatprep.subr.mxu0 0.0
  %8678 = vmatpush1.msra.mxu0 0.0
  %8679 = vmatprep.subr.mxu0 0.0
  %8680 = vmatpush1.msra.mxu0 0.0
  %8681 = vmatprep.subr.mxu0 0.0
  %8682 = vmatpush1.msra.mxu0 0.0
  %8683 = vmatprep.subr.mxu0 0.0
  %8684 = vmatpush1.msra.mxu0 0.0
  %8685 = vmatprep.subr.mxu0 0.0
  %8686 = vmatpush1.msra.mxu0 0.0
  %8687 = vmatprep.subr.mxu0 0.0
  %8688 = vmatpush1.msra.mxu0 0.0
  %8689 = vmatprep.subr.mxu0 0.0
  %8690 = vmatpush1.msra.mxu0 0.0
  %8691 = vmatprep.subr.mxu0 0.0
  %8692 = vmatpush1.msra.mxu0 0.0
  %8693 = vmatprep.subr.mxu0 0.0
  %8694 = vmatpush1.msra.mxu0 0.0
  %8695 = vmatprep.subr.mxu0 0.0
  %8696 = vmatpush1.msra.mxu0 0.0
  %8697 = vmatprep.subr.mxu0 0.0
  %8698 = vmatpush1.msra.mxu0 0.0
  %8699 = vmatprep.subr.mxu0 0.0
  %8700 = vmatpush1.msra.mxu0 0.0
  %8701 = vmatprep.subr.mxu0 0.0
  %8702 = vmatpush1.msra.mxu0 0.0
  %8703 = vmatprep.subr.mxu0 0.0
  %8704 = vmatpush1.msra.mxu0 0.0
  %8705 = vmatprep.subr.mxu0 0.0
  %8706 = vmatpush1.msra.mxu0 0.0
  %8707 = vmatprep.subr.mxu0 0.0
  %8708 = vmatpush1.msra.mxu0 0.0
  %8709 = vmatprep.subr.mxu0 0.0
  %8710 = vmatpush1.msra.mxu0 0.0
  %8711 = vmatprep.subr.mxu0 0.0
  %8712 = vmatpush1.msra.mxu0 0.0
  %8713 = vmatprep.subr.mxu0 0.0
  %8714 = vmatpush1.msra.mxu0 0.0
  %8715 = vmatprep.mubr.f32.mxu0 0.0
  %8716 = vmatmul.mubr.f32.gmra.mrb[0].mxu0 %v8649
  %v8717 = vpop.f32.mrb[0].mxu0
  %v8718 = vadd.f32 0.0, %v8717
  %v8719 = vpop.f32.mrb[0].mxu0
  %8720 = vdwg.mxu0
  %v8721 = vadd.f32 %v8564, %v8718
  %v8722 = vld [vmem:[%s8] sm:$0x1]
  %v8724 = vlaneseq
  %v8725 = vshrl.u32 %v8724, 7
  %v8726 = vsub.s32 0, %v8725
  %v8727 = vrot.slane %v8722, %v8726
  %v8729 = vadd.f32 %v8721, %v8727
  %v8730 = vmax.f32 %v8729, 0.0
  %v8731 = vld [vmem:[%s9] sm:$0xff]
  %vm8732 = vcmask 64512
  %v8734 = vsel %vm8732, %v8731, 0
  %8736 = vmatprep.subr.mxu0 0.0
  %8737 = vmatpush1.msra.mxu0 %v8730
  %8738 = vmatprep.subr.mxu0 0.0
  %8739 = vmatpush1.msra.mxu0 0.0
  %8740 = vmatprep.subr.mxu0 0.0
  %8741 = vmatpush1.msra.mxu0 0.0
  %8742 = vmatprep.subr.mxu0 0.0
  %8743 = vmatpush1.msra.mxu0 0.0
  %8744 = vmatprep.subr.mxu0 0.0
  %8745 = vmatpush1.msra.mxu0 0.0
  %8746 = vmatprep.subr.mxu0 0.0
  %8747 = vmatpush1.msra.mxu0 0.0
  %8748 = vmatprep.subr.mxu0 0.0
  %8749 = vmatpush1.msra.mxu0 0.0
  %8750 = vmatprep.subr.mxu0 0.0
  %8751 = vmatpush1.msra.mxu0 0.0
  %8752 = vmatprep.subr.mxu0 0.0
  %8753 = vmatpush1.msra.mxu0 0.0
  %8754 = vmatprep.subr.mxu0 0.0
  %8755 = vmatpush1.msra.mxu0 0.0
  %8756 = vmatprep.subr.mxu0 0.0
  %8757 = vmatpush1.msra.mxu0 0.0
  %8758 = vmatprep.subr.mxu0 0.0
  %8759 = vmatpush1.msra.mxu0 0.0
  %8760 = vmatprep.subr.mxu0 0.0
  %8761 = vmatpush1.msra.mxu0 0.0
  %8762 = vmatprep.subr.mxu0 0.0
  %8763 = vmatpush1.msra.mxu0 0.0
  %8764 = vmatprep.subr.mxu0 0.0
  %8765 = vmatpush1.msra.mxu0 0.0
  %8766 = vmatprep.subr.mxu0 0.0
  %8767 = vmatpush1.msra.mxu0 0.0
  %8768 = vmatprep.subr.mxu0 0.0
  %8769 = vmatpush1.msra.mxu0 0.0
  %8770 = vmatprep.subr.mxu0 0.0
  %8771 = vmatpush1.msra.mxu0 0.0
  %8772 = vmatprep.subr.mxu0 0.0
  %8773 = vmatpush1.msra.mxu0 0.0
  %8774 = vmatprep.subr.mxu0 0.0
  %8775 = vmatpush1.msra.mxu0 0.0
  %8776 = vmatprep.subr.mxu0 0.0
  %8777 = vmatpush1.msra.mxu0 0.0
  %8778 = vmatprep.subr.mxu0 0.0
  %8779 = vmatpush1.msra.mxu0 0.0
  %8780 = vmatprep.subr.mxu0 0.0
  %8781 = vmatpush1.msra.mxu0 0.0
  %8782 = vmatprep.subr.mxu0 0.0
  %8783 = vmatpush1.msra.mxu0 0.0
  %8784 = vmatprep.subr.mxu0 0.0
  %8785 = vmatpush1.msra.mxu0 0.0
  %8786 = vmatprep.subr.mxu0 0.0
  %8787 = vmatpush1.msra.mxu0 0.0
  %8788 = vmatprep.subr.mxu0 0.0
  %8789 = vmatpush1.msra.mxu0 0.0
  %8790 = vmatprep.subr.mxu0 0.0
  %8791 = vmatpush1.msra.mxu0 0.0
  %8792 = vmatprep.subr.mxu0 0.0
  %8793 = vmatpush1.msra.mxu0 0.0
  %8794 = vmatprep.subr.mxu0 0.0
  %8795 = vmatpush1.msra.mxu0 0.0
  %8796 = vmatprep.subr.mxu0 0.0
  %8797 = vmatpush1.msra.mxu0 0.0
  %8798 = vmatprep.subr.mxu0 0.0
  %8799 = vmatpush1.msra.mxu0 0.0
  %8800 = vmatprep.mubr.f32.mxu0 0.0
  %8801 = vmatmul.mubr.f32.gmra.mrb[0].mxu0 %v8734
  %v8802 = vpop.f32.mrb[0].mxu0
  %v8803 = vadd.f32 0.0, %v8802
  %v8804 = vpop.f32.mrb[0].mxu0
  %8805 = vdwg.mxu0
  %v8806 = vld [vmem:[%s10] sm:$0xff]
  %v8807 = vld [vmem:[%s10 + $0x8] sm:$0xff]
  %v8808 = vld [vmem:[%s10 + $0x10] sm:$0xff]
  %v8809 = vld [vmem:[%s10 + $0x18] sm:$0xff]
  %v8810 = vld [vmem:[%s10 + $0x20] sm:$0xff]
  %v8811 = vld [vmem:[%s10 + $0x28] sm:$0xff]
  %v8812 = vld [vmem:[%s10 + $0x30] sm:$0xff]
  %v8813 = vld [vmem:[%s10 + $0x38] sm:$0xff]
  %v8814 = vld [vmem:[%s11] sm:$0x1]
  %v8816 = vlaneseq
  %v8817 = vshrl.u32 %v8816, 7
  %v8818 = vsub.s32 0, %v8817
  %v8819 = vrot.slane %v8814, %v8818
  %v8822 = vsel %vm7476, %v8803, 0
  %8824 = vmatprep.subr.mxu0 0.0
  %8825 = vmatpush1.msra.mxu0 %v8806
  %8826 = vmatprep.subr.mxu0 0.0
  %8827 = vmatpush1.msra.mxu0 %v8807
  %8828 = vmatprep.subr.mxu0 0.0
  %8829 = vmatpush1.msra.mxu0 %v8808
  %8830 = vmatprep.subr.mxu0 0.0
  %8831 = vmatpush1.msra.mxu0 %v8809
  %8832 = vmatprep.subr.mxu0 0.0
  %8833 = vmatpush1.msra.mxu0 %v8810
  %8834 = vmatprep.subr.mxu0 0.0
  %8835 = vmatpush1.msra.mxu0 %v8811
  %8836 = vmatprep.subr.mxu0 0.0
  %8837 = vmatpush1.msra.mxu0 %v8812
  %8838 = vmatprep.subr.mxu0 0.0
  %8839 = vmatpush1.msra.mxu0 %v8813
  %8840 = vmatprep.subr.mxu0 0.0
  %8841 = vmatpush1.msra.mxu0 0.0
  %8842 = vmatprep.subr.mxu0 0.0
  %8843 = vmatpush1.msra.mxu0 0.0
  %8844 = vmatprep.subr.mxu0 0.0
  %8845 = vmatpush1.msra.mxu0 0.0
  %8846 = vmatprep.subr.mxu0 0.0
  %8847 = vmatpush1.msra.mxu0 0.0
  %8848 = vmatprep.subr.mxu0 0.0
  %8849 = vmatpush1.msra.mxu0 0.0
  %8850 = vmatprep.subr.mxu0 0.0
  %8851 = vmatpush1.msra.mxu0 0.0
  %8852 = vmatprep.subr.mxu0 0.0
  %8853 = vmatpush1.msra.mxu0 0.0
  %8854 = vmatprep.subr.mxu0 0.0
  %8855 = vmatpush1.msra.mxu0 0.0
  %8856 = vmatprep.subr.mxu0 0.0
  %8857 = vmatpush1.msra.mxu0 0.0
  %8858 = vmatprep.subr.mxu0 0.0
  %8859 = vmatpush1.msra.mxu0 0.0
  %8860 = vmatprep.subr.mxu0 0.0
  %8861 = vmatpush1.msra.mxu0 0.0
  %8862 = vmatprep.subr.mxu0 0.0
  %8863 = vmatpush1.msra.mxu0 0.0
  %8864 = vmatprep.subr.mxu0 0.0
  %8865 = vmatpush1.msra.mxu0 0.0
  %8866 = vmatprep.subr.mxu0 0.0
  %8867 = vmatpush1.msra.mxu0 0.0
  %8868 = vmatprep.subr.mxu0 0.0
  %8869 = vmatpush1.msra.mxu0 0.0
  %8870 = vmatprep.subr.mxu0 0.0
  %8871 = vmatpush1.msra.mxu0 0.0
  %8872 = vmatprep.subr.mxu0 0.0
  %8873 = vmatpush1.msra.mxu0 0.0
  %8874 = vmatprep.subr.mxu0 0.0
  %8875 = vmatpush1.msra.mxu0 0.0
  %8876 = vmatprep.subr.mxu0 0.0
  %8877 = vmatpush1.msra.mxu0 0.0
  %8878 = vmatprep.subr.mxu0 0.0
  %8879 = vmatpush1.msra.mxu0 0.0
  %8880 = vmatprep.subr.mxu0 0.0
  %8881 = vmatpush1.msra.mxu0 0.0
  %8882 = vmatprep.subr.mxu0 0.0
  %8883 = vmatpush1.msra.mxu0 0.0
  %8884 = vmatprep.subr.mxu0 0.0
  %8885 = vmatpush1.msra.mxu0 0.0
  %8886 = vmatprep.subr.mxu0 0.0
  %8887 = vmatpush1.msra.mxu0 0.0
  %8888 = vmatprep.mubr.f32.mxu0 0.0
  %8889 = vmatmul.mubr.f32.gmra.mrb[0].mxu0 %v8822
  %v8890 = vpop.f32.mrb[0].mxu0
  %v8891 = vadd.f32 %v8819, %v8890
  %v8892 = vpop.f32.mrb[0].mxu0
  %8893 = vdwg.mxu0
  %v8894 = vmax.f32 %v8891, 0.0
  %v8895 = vld [vmem:[%s12] sm:$0xff]
  %v8896 = vld [vmem:[%s12 + $0x8] sm:$0xff]
  %v8897 = vld [vmem:[%s12 + $0x10] sm:$0xff]
  %v8898 = vld [vmem:[%s12 + $0x18] sm:$0xff]
  %v8899 = vld [vmem:[%s12 + $0x20] sm:$0xff]
  %v8900 = vld [vmem:[%s12 + $0x28] sm:$0xff]
  %v8901 = vld [vmem:[%s12 + $0x30] sm:$0xff]
  %v8902 = vld [vmem:[%s12 + $0x38] sm:$0xff]
  %v8903 = vld [vmem:[%s12 + $0x40] sm:$0xff]
  %v8904 = vld [vmem:[%s12 + $0x48] sm:$0xff]
  %v8905 = vld [vmem:[%s12 + $0x50] sm:$0xff]
  %v8906 = vld [vmem:[%s12 + $0x58] sm:$0xff]
  %v8907 = vld [vmem:[%s12 + $0x60] sm:$0xff]
  %v8908 = vld [vmem:[%s12 + $0x68] sm:$0xff]
  %v8909 = vld [vmem:[%s12 + $0x70] sm:$0xff]
  %v8910 = vld [vmem:[%s12 + $0x78] sm:$0xff]
  %v8911 = vld [vmem:[%s13] sm:$0x1]
  %v8913 = vlaneseq
  %v8914 = vshrl.u32 %v8913, 7
  %v8915 = vsub.s32 0, %v8914
  %v8916 = vrot.slane %v8911, %v8915
  %8918 = vmatprep.subr.mxu0 0.0
  %8919 = vmatpush1.msra.mxu0 %v8895
  %8920 = vmatprep.subr.mxu0 0.0
  %8921 = vmatpush1.msra.mxu0 %v8896
  %8922 = vmatprep.subr.mxu0 0.0
  %8923 = vmatpush1.msra.mxu0 %v8897
  %8924 = vmatprep.subr.mxu0 0.0
  %8925 = vmatpush1.msra.mxu0 %v8898
  %8926 = vmatprep.subr.mxu0 0.0
  %8927 = vmatpush1.msra.mxu0 %v8899
  %8928 = vmatprep.subr.mxu0 0.0
  %8929 = vmatpush1.msra.mxu0 %v8900
  %8930 = vmatprep.subr.mxu0 0.0
  %8931 = vmatpush1.msra.mxu0 %v8901
  %8932 = vmatprep.subr.mxu0 0.0
  %8933 = vmatpush1.msra.mxu0 %v8902
  %8934 = vmatprep.subr.mxu0 0.0
  %8935 = vmatpush1.msra.mxu0 %v8903
  %8936 = vmatprep.subr.mxu0 0.0
  %8937 = vmatpush1.msra.mxu0 %v8904
  %8938 = vmatprep.subr.mxu0 0.0
  %8939 = vmatpush1.msra.mxu0 %v8905
  %8940 = vmatprep.subr.mxu0 0.0
  %8941 = vmatpush1.msra.mxu0 %v8906
  %8942 = vmatprep.subr.mxu0 0.0
  %8943 = vmatpush1.msra.mxu0 %v8907
  %8944 = vmatprep.subr.mxu0 0.0
  %8945 = vmatpush1.msra.mxu0 %v8908
  %8946 = vmatprep.subr.mxu0 0.0
  %8947 = vmatpush1.msra.mxu0 %v8909
  %8948 = vmatprep.subr.mxu0 0.0
  %8949 = vmatpush1.msra.mxu0 %v8910
  %8950 = vmatprep.subr.mxu0 0.0
  %8951 = vmatpush1.msra.mxu0 0.0
  %8952 = vmatprep.subr.mxu0 0.0
  %8953 = vmatpush1.msra.mxu0 0.0
  %8954 = vmatprep.subr.mxu0 0.0
  %8955 = vmatpush1.msra.mxu0 0.0
  %8956 = vmatprep.subr.mxu0 0.0
  %8957 = vmatpush1.msra.mxu0 0.0
  %8958 = vmatprep.subr.mxu0 0.0
  %8959 = vmatpush1.msra.mxu0 0.0
  %8960 = vmatprep.subr.mxu0 0.0
  %8961 = vmatpush1.msra.mxu0 0.0
  %8962 = vmatprep.subr.mxu0 0.0
  %8963 = vmatpush1.msra.mxu0 0.0
  %8964 = vmatprep.subr.mxu0 0.0
  %8965 = vmatpush1.msra.mxu0 0.0
  %8966 = vmatprep.subr.mxu0 0.0
  %8967 = vmatpush1.msra.mxu0 0.0
  %8968 = vmatprep.subr.mxu0 0.0
  %8969 = vmatpush1.msra.mxu0 0.0
  %8970 = vmatprep.subr.mxu0 0.0
  %8971 = vmatpush1.msra.mxu0 0.0
  %8972 = vmatprep.subr.mxu0 0.0
  %8973 = vmatpush1.msra.mxu0 0.0
  %8974 = vmatprep.subr.mxu0 0.0
  %8975 = vmatpush1.msra.mxu0 0.0
  %8976 = vmatprep.subr.mxu0 0.0
  %8977 = vmatpush1.msra.mxu0 0.0
  %8978 = vmatprep.subr.mxu0 0.0
  %8979 = vmatpush1.msra.mxu0 0.0
  %8980 = vmatprep.subr.mxu0 0.0
  %8981 = vmatpush1.msra.mxu0 0.0
  %8982 = vmatprep.mubr.f32.mxu0 0.0
  %8983 = vmatmul.mubr.f32.gmra.mrb[0].mxu0 %v8894
  %v8984 = vpop.f32.mrb[0].mxu0
  %v8985 = vadd.f32 %v8916, %v8984
  %v8986 = vpop.f32.mrb[0].mxu0
  %8987 = vdwg.mxu0
  %vm8988 = vcmask 48128
  %v8989 = vsel %vm8988, %v8985, -inf
  %8990 = vmax.xlane.f32.xlu0 %v8989
  %v8991 = vpop.xlane.xlu0 %8990
  %v8992 = vsub.f32 %v8985, %v8991
  %v8993 = vmul.f32 %v8992, 1.442695
  %v8994 = vpow.pop %v8993
  %v8995 = vsel %vm8988, %v8994, 0.0
  %8996 = vadd.xlane.f32.xlu0 %v8995
  %v8997 = vpop.xlane.xlu0 %8996
  %v8998 = vrcp.pop %v8997
  %v8999 = vmul.f32 %v8994, %v8998
  %9000 = vst.msk [vmem:[%s14] sm:$0xff] %vm8988, %v8999
  %vm9001 = vcmask 56368
  %9002 = vst.msk [vmem:[%s14] sm:$0xff] %vm9001, %v8985
  // Predicated region
  $region58: #{conv_pong_forward.1} parent=0 // pred_check
    _
  $region59: #{conv_pong_forward.1} parent=0 // pred_check_branch
    %9004 = sbr.rel (0) target = $region61
  $region60: #{conv_pong_forward.1} parent=0 // pred_region
    _
  $region61: #{conv_pong_forward.1} parent=0 // pred_fallthru
    _
  // Predicated region
  $region62: #{conv_pong_forward.1} parent=0 // pred_check
    _
  $region63: #{conv_pong_forward.1} parent=0 // pred_check_branch
    %9006 = sbr.rel (0) target = $region65
  $region64: #{conv_pong_forward.1} parent=0 // pred_region
    _
  $region65: #{conv_pong_forward.1} parent=0 // pred_fallthru
    _

</llo_original>
